<compile_context>
chip_gen: v7x
topology: tpu7x:2x2x1
jax: 0.10.0
libtpu: 0.0.40
codegen_flags: <defaults>
</compile_context>

<pallas_src>
import functools

import jax
import jax.numpy as jnp
from jax.experimental import pallas as pl
from jax.experimental.pallas import tpu as pltpu

EMBEDDING_DIM = 64      # D: two rows pack into one 128-lane row (2*D == 128)
NUM_EMBEDDINGS = 128    # K: multiple of 128
COMMITMENT_COST = 0.25


def _vq_kernel(x_ref, wdist_ref, c2_ref, cbbd_ref, q_ref, idx_ref, stats_ref,
               *, n_valid, tile_n, num_codes, emb_dim, dist_dtype, needs_mask):
    """One tile of packed row-pairs: distances -> argmin -> quantize -> partials.

    x_ref:     (TP, 2D)       input rows, packed two-per-row (TP = tile_n // 2)
    wdist_ref: (2D, 2K)       block-diagonal (-2 * codebook)^T   (resident)
    c2_ref:    (1, 2K)        [||c||^2, ||c||^2]                 (resident)
    cbbd_ref:  (2K, 2D)       block-diagonal codebook            (resident)
    q_ref:     (TP, 2D)       quantized rows, packed layout
    idx_ref:   (1, 2, TP//128, 128) int32 indices (even half, odd half)
    stats_ref: (1, 2, 2K)     row 0: per-code counts, row 1: SSE (broadcast)
    """
    K = num_codes
    D = emb_dim
    tp = x_ref.shape[0]
    tpl = tp // 128

    # Per-tile upcast; inputs stay in their native dtype in HBM.
    x_pk = x_ref[...].astype(jnp.float32)                          # (TP, 2D)

    # Distances (argmin-equivalent): ||c||^2 - 2 x.c for the even/odd member of
    # every packed pair, via one MXU matmul against the block-diagonal weight.
    xc = jnp.dot(x_pk.astype(dist_dtype), wdist_ref[...],
                 preferred_element_type=jnp.float32)               # (TP, 2K)
    dist = c2_ref[...] + xc

    # Per-half argmin with first-occurrence tie-break (matches torch.argmin).
    iota2 = jax.lax.broadcasted_iota(jnp.int32, dist.shape, 1)     # (TP, 2K)
    in_a = iota2 < K                                               # even-row lanes
    inf = jnp.float32(jnp.inf)
    d_a = jnp.where(in_a, dist, inf)
    d_b = jnp.where(in_a, inf, dist)
    min_a = jnp.min(d_a, axis=1, keepdims=True)
    min_b = jnp.min(d_b, axis=1, keepdims=True)
    sent = jnp.int32(2 * K)
    idx_a = jnp.min(jnp.where(d_a == min_a, iota2, sent), axis=1)      # (TP,)
    idx_b = jnp.min(jnp.where(d_b == min_b, iota2 - K, sent), axis=1)  # (TP,)

    # Codebook gather as a one-hot MXU matmul against the block-diagonal
    # codebook: produces the quantized rows directly in the packed layout.
    onehot = jnp.logical_or(iota2 == idx_a[:, None],
                            iota2 == idx_b[:, None] + K).astype(jnp.float32)
    quant = jnp.dot(onehot, cbbd_ref[...],
                    preferred_element_type=jnp.float32)            # (TP, 2D)
    q_ref[...] = quant.astype(q_ref.dtype)

    # Lane-dense encoding indices (same 1-D -> (rows,128) reshape that the
    # previous, validated version used).
    idx_ref[0, 0] = idx_a.astype(jnp.int32).reshape(tpl, 128)
    idx_ref[0, 1] = idx_b.astype(jnp.int32).reshape(tpl, 128)

    # Per-tile partial reductions (summed in the wrapper; grid stays parallel).
    if needs_mask:
        # Only the last tile can contain padded rows; masks are cheap VPU work.
        jrow = jax.lax.broadcasted_iota(jnp.int32, (tp, 1), 0)
        g_even = pl.program_id(0) * tile_n + 2 * jrow
        mask_a = (g_even < n_valid).astype(jnp.float32)            # (TP, 1)
        mask_b = (g_even + 1 < n_valid).astype(jnp.float32)        # (TP, 1)
        lane = jax.lax.broadcasted_iota(jnp.int32, quant.shape, 1)
        diff = (quant - x_pk) * jnp.where(lane < D, mask_a, mask_b)
        counts = jnp.sum(onehot * jnp.where(in_a, mask_a, mask_b),
                         axis=0, keepdims=True)                    # (1, 2K)
    else:
        diff = quant - x_pk
        counts = jnp.sum(onehot, axis=0, keepdims=True)            # (1, 2K)
    sse = jnp.sum(diff * diff)

    # Pack counts (row 0) and SSE (row 1, broadcast) into one stats block.
    row2 = jax.lax.broadcasted_iota(jnp.int32, (2, 2 * K), 0)
    stats = jnp.where(row2 == 0, counts, sse)                      # (2, 2K)
    stats_ref[...] = stats.reshape(stats_ref.shape)


def _round_up(x, m):
    return -(-x // m) * m


def _pick_tile_n(n, max_tile_n):
    """Row tile: multiple of 256 (so tile_n//2 packed rows stay 128-lane /
    8-sublane aligned), as big as max_tile_n allows; prefer >= 2 grid steps when
    the tiles stay large (feeds both v7x TensorCores, harmless on v5e/v6e)."""
    max_tile_n = max(256, max_tile_n - max_tile_n % 256)
    n_min = _round_up(max(n, 1), 256)
    tile_n = min(max_tile_n, n_min)
    if tile_n == n_min and n_min >= 1024 and n_min % 512 == 0:
        tile_n = n_min // 2            # split a single big tile across two cores
    return tile_n


def vector_quantizer_forward(inputs, codebook,
                             commitment_cost=COMMITMENT_COST,
                             max_tile_n=2048,
                             distance_in_bf16=False):
    """Forward pass of VectorQuantizer.

    Returns (loss, quantized_stopped, perplexity, encoding_indices), matching
    the PyTorch module's forward values.
    """
    K, D = codebook.shape
    if D != EMBEDDING_DIM or K % 128 != 0:
        # TODO(synk): generalize the row-pair packing for other embedding dims.
        raise ValueError("kernel assumes embedding_dim == 64 and K % 128 == 0")

    flat = inputs.reshape(-1, D)            # channels-last => free reshape
    N = flat.shape[0]

    tile_n = _pick_tile_n(N, max_tile_n)
    num_tiles = _round_up(N, tile_n) // tile_n
    n_pad = num_tiles * tile_n
    if n_pad != N:
        flat = jnp.pad(flat, ((0, n_pad - N), (0, 0)))
    # Row-major (n_pad, 64) == (n_pad//2, 128): lane-dense packed view, free.
    x_packed = flat.reshape(n_pad // 2, 2 * D)

    cb = codebook.astype(jnp.float32)
    c2 = jnp.sum(cb * cb, axis=1)                                   # (K,)
    c2_2 = jnp.concatenate([c2, c2])[None, :]                       # (1, 2K)
    dist_dtype = jnp.bfloat16 if distance_in_bf16 else jnp.float32
    z_dk = jnp.zeros((D, K), jnp.float32)
    z_kd = jnp.zeros((K, D), jnp.float32)
    # block-diagonal (-2*cb)^T: even rows use lanes [0,K), odd rows lanes [K,2K)
    wdist = jnp.block([[-2.0 * cb.T, z_dk],
                       [z_dk, -2.0 * cb.T]]).astype(dist_dtype)     # (2D, 2K)
    # block-diagonal codebook for the one-hot gather (kept f32: exact values)
    cb_bd = jnp.block([[cb, z_kd],
                       [z_kd, cb]])                                 # (2K, 2D)

    tp = tile_n // 2
    q_dtype = codebook.dtype   # matches torch: quantized = codebook(idx)
    kernel = functools.partial(
        _vq_kernel, n_valid=N, tile_n=tile_n, num_codes=K, emb_dim=D,
        dist_dtype=dist_dtype, needs_mask=(n_pad != N))

    q_packed, idx4, stats = pl.pallas_call(
        kernel,
        out_shape=(
            jax.ShapeDtypeStruct((n_pad // 2, 2 * D), q_dtype),
            jax.ShapeDtypeStruct((num_tiles, 2, tp // 128, 128), jnp.int32),
            jax.ShapeDtypeStruct((num_tiles, 2, 2 * K), jnp.float32),
        ),
        grid_spec=pltpu.PrefetchScalarGridSpec(
            num_scalar_prefetch=0,
            grid=(num_tiles,),
            in_specs=[
                pl.BlockSpec((tp, 2 * D), lambda i: (i, 0)),      # packed inputs
                pl.BlockSpec((2 * D, 2 * K), lambda i: (0, 0)),   # blockdiag -2*cb^T
                pl.BlockSpec((1, 2 * K), lambda i: (0, 0)),       # ||c||^2
                pl.BlockSpec((2 * K, 2 * D), lambda i: (0, 0)),   # blockdiag cb
            ],
            out_specs=[
                pl.BlockSpec((tp, 2 * D), lambda i: (i, 0)),              # quantized
                pl.BlockSpec((1, 2, tp // 128, 128), lambda i: (i, 0, 0, 0)),  # indices
                pl.BlockSpec((1, 2, 2 * K), lambda i: (i, 0, 0)),         # counts/SSE
            ],
        ),
        compiler_params=pltpu.CompilerParams(
            dimension_semantics=("parallel",),
            vmem_limit_bytes=32 * 1024 * 1024,
        ),
    )(x_packed, wdist, c2_2, cb_bd)

    # Unpack (all free / tiny wrapper ops).
    quantized = q_packed.reshape(n_pad, D)[:N].reshape(inputs.shape)
    encoding_indices = jnp.transpose(
        idx4.reshape(num_tiles, 2, tp), (0, 2, 1)).reshape(-1)[:N]

    sse = jnp.sum(stats[:, 1, 0])
    mse = sse / jnp.float32(N * D)            # mean((quantized - inputs)^2)
    e_latent_loss = mse                       # mse(quantized.detach(), inputs)
    q_latent_loss = mse                       # mse(quantized, inputs.detach())
    loss = q_latent_loss + commitment_cost * e_latent_loss

    # straight-through estimator; forward value equals `quantized`
    quantized_stopped = inputs + jax.lax.stop_gradient(quantized - inputs)

    counts2k = jnp.sum(stats[:, 0, :], axis=0)
    counts = counts2k[:K] + counts2k[K:]
    avg_probs = counts / jnp.float32(N)
    perplexity = jnp.exp(-jnp.sum(avg_probs * jnp.log(avg_probs + 1e-10)))

    return loss, quantized_stopped, perplexity, encoding_indices


def _reference_forward(inputs, codebook, commitment_cost=COMMITMENT_COST):
    """Pure-JAX reference mirroring the PyTorch module forward."""
    D = codebook.shape[1]
    flat = inputs.reshape(-1, D).astype(jnp.float32)
    cb = codebook.astype(jnp.float32)
    dist = (jnp.sum(flat * flat, axis=1, keepdims=True)
            + jnp.sum(cb * cb, axis=1)
            - 2.0 * jnp.dot(flat, cb.T, precision=jax.lax.Precision.HIGHEST))
    idx = jnp.argmin(dist, axis=1)
    quant = cb[idx].reshape(inputs.shape)
    mse = jnp.mean((quant - inputs) ** 2)
    loss = mse * (1.0 + commitment_cost)
    onehot = jax.nn.one_hot(idx, codebook.shape[0], dtype=jnp.float32)
    p = jnp.mean(onehot, axis=0)
    perp = jnp.exp(-jnp.sum(p * jnp.log(p + 1e-10)))
    return loss, quant, perp, idx


if __name__ == "__main__":
    key = jax.random.PRNGKey(0)
    k_in, k_cb = jax.random.split(key)

    B, H, W = 2, 32, 32   # channels-last; N = B*H*W = 2048 rows -> 2 tiles of 1024
    inputs = jax.random.normal(k_in, (B, H, W, EMBEDDING_DIM), dtype=jnp.float32)

    # nn.Embedding(num_embeddings, embedding_dim).weight ~ U(-1/K, 1/K)
    codebook = jax.random.uniform(
        k_cb, (NUM_EMBEDDINGS, EMBEDDING_DIM),
        minval=-1.0 / NUM_EMBEDDINGS, maxval=1.0 / NUM_EMBEDDINGS,
        dtype=jnp.float32)

    fwd = jax.jit(vector_quantizer_forward)
    loss, quantized_stopped, perplexity, encoding_indices = jax.block_until_ready(
        fwd(inputs, codebook))

    # Light correctness check vs. the pure-JAX reference (tolerant to near-tie
    # argmin differences from the rearranged distance expression).
    r_loss, r_quant, r_perp, r_idx = _reference_forward(inputs, codebook)
    assert jnp.allclose(loss, r_loss, rtol=1e-3, atol=1e-5), (loss, r_loss)
    assert jnp.allclose(perplexity, r_perp, rtol=1e-3, atol=1e-3), (perplexity, r_perp)
    match = jnp.mean((encoding_indices == r_idx).astype(jnp.float32))
    assert match >= 0.99, float(match)

    print("KERNEL_OK")
</pallas_src>

<mosaic_0001>
module attributes {stable_mosaic.version = 11 : i64} {
  func.func @_vq_kernel(%arg0: i32, %arg1: memref<512x128xf32, #tpu.memory_space<vmem>>, %arg2: memref<128x256xf32, #tpu.memory_space<vmem>>, %arg3: memref<1x256xf32, #tpu.memory_space<vmem>>, %arg4: memref<256x128xf32, #tpu.memory_space<vmem>>, %arg5: memref<512x128xf32, #tpu.memory_space<vmem>>, %arg6: memref<1x2x4x128xi32, #tpu.memory_space<vmem>>, %arg7: memref<1x2x256xf32, #tpu.memory_space<vmem>>) attributes {dimension_semantics = [#tpu.dimension_semantics<parallel>], iteration_bounds = array<i64: 2>, scalar_prefetch = 0 : i64, scratch_operands = 0 : i64, tpu.core_type = #tpu.core_type<tc>, window_params = [{transform_indices = @transform_0, window_bounds = array<i64: 512, 128>}, {pipeline_mode = #tpu.pipeline_mode<synchronous>, transform_indices = @transform_1, window_bounds = array<i64: 128, 256>}, {pipeline_mode = #tpu.pipeline_mode<synchronous>, transform_indices = @transform_2, window_bounds = array<i64: 1, 256>}, {pipeline_mode = #tpu.pipeline_mode<synchronous>, transform_indices = @transform_3, window_bounds = array<i64: 256, 128>}, {transform_indices = @transform_4, window_bounds = array<i64: 512, 128>}, {transform_indices = @transform_5, window_bounds = array<i64: 1, 2, 4, 128>}, {transform_indices = @transform_6, window_bounds = array<i64: 1, 2, 256>}]} {
    %c0 = arith.constant 0 : index
    %c0_0 = arith.constant 0 : index
    %0 = vector.load %arg1[%c0, %c0_0] : memref<512x128xf32, #tpu.memory_space<vmem>>, vector<512x128xf32>
    %c0_1 = arith.constant 0 : index
    %c0_2 = arith.constant 0 : index
    %1 = vector.load %arg2[%c0_1, %c0_2] : memref<128x256xf32, #tpu.memory_space<vmem>>, vector<128x256xf32>
    %cst = arith.constant dense<0.000000e+00> : vector<512x256xf32>
    %2 = tpu.matmul %0, %1, %cst {dimension_numbers = #tpu.dot_dimension_numbers<[1], [0], [0], [1], [0, 0, 1, 1], [], []>} : vector<512x128xf32>, vector<128x256xf32>, vector<512x256xf32> -> vector<512x256xf32>
    %c0_3 = arith.constant 0 : index
    %c0_4 = arith.constant 0 : index
    %3 = vector.load %arg3[%c0_3, %c0_4] : memref<1x256xf32, #tpu.memory_space<vmem>>, vector<1x256xf32>
    %4 = vector.broadcast %3 : vector<1x256xf32> to vector<512x256xf32>
    %5 = arith.addf %4, %2 : vector<512x256xf32>
    %6 = tpu.iota {dimensions = array<i32: 1>} : vector<512x256xi32>
    %c128_i32 = arith.constant 128 : i32
    %7 = vector.broadcast %c128_i32 : i32 to vector<512x256xi32>
    %8 = arith.cmpi slt, %6, %7 : vector<512x256xi32>
    %cst_5 = arith.constant 0x7F800000 : f32
    %9 = vector.broadcast %cst_5 : f32 to vector<512x256xf32>
    %10 = arith.select %8, %5, %9 : vector<512x256xi1>, vector<512x256xf32>
    %cst_6 = arith.constant 0x7F800000 : f32
    %11 = vector.broadcast %cst_6 : f32 to vector<512x256xf32>
    %12 = arith.select %8, %11, %5 : vector<512x256xi1>, vector<512x256xf32>
    %cst_7 = arith.constant dense<0x7F800000> : vector<512xf32>
    %13 = vector.multi_reduction <minimumf>, %10, %cst_7 [1] : vector<512x256xf32> to vector<512xf32>
    %14 = vector.shape_cast %13 : vector<512xf32> to vector<512x1xf32>
    %cst_8 = arith.constant dense<0x7F800000> : vector<512xf32>
    %15 = vector.multi_reduction <minimumf>, %12, %cst_8 [1] : vector<512x256xf32> to vector<512xf32>
    %16 = vector.shape_cast %15 : vector<512xf32> to vector<512x1xf32>
    %17 = vector.broadcast %14 : vector<512x1xf32> to vector<512x256xf32>
    %18 = arith.cmpf oeq, %10, %17 : vector<512x256xf32>
    %c256_i32 = arith.constant 256 : i32
    %19 = vector.broadcast %c256_i32 : i32 to vector<512x256xi32>
    %20 = arith.select %18, %6, %19 : vector<512x256xi1>, vector<512x256xi32>
    %cst_9 = arith.constant dense<2147483647> : vector<512xi32>
    %21 = vector.multi_reduction <minsi>, %20, %cst_9 [1] : vector<512x256xi32> to vector<512xi32>
    %22 = vector.broadcast %16 : vector<512x1xf32> to vector<512x256xf32>
    %23 = arith.cmpf oeq, %12, %22 : vector<512x256xf32>
    %c128_i32_10 = arith.constant 128 : i32
    %24 = vector.broadcast %c128_i32_10 : i32 to vector<512x256xi32>
    %25 = arith.subi %6, %24 : vector<512x256xi32>
    %c256_i32_11 = arith.constant 256 : i32
    %26 = vector.broadcast %c256_i32_11 : i32 to vector<512x256xi32>
    %27 = arith.select %23, %25, %26 : vector<512x256xi1>, vector<512x256xi32>
    %cst_12 = arith.constant dense<2147483647> : vector<512xi32>
    %28 = vector.multi_reduction <minsi>, %27, %cst_12 [1] : vector<512x256xi32> to vector<512xi32>
    %29 = vector.shape_cast %21 : vector<512xi32> to vector<512x1xi32>
    %30 = vector.broadcast %29 : vector<512x1xi32> to vector<512x256xi32>
    %31 = arith.cmpi eq, %6, %30 : vector<512x256xi32>
    %32 = vector.shape_cast %28 : vector<512xi32> to vector<512x1xi32>
    %c128_i32_13 = arith.constant 128 : i32
    %33 = vector.broadcast %c128_i32_13 : i32 to vector<512x1xi32>
    %34 = arith.addi %32, %33 : vector<512x1xi32>
    %35 = vector.broadcast %34 : vector<512x1xi32> to vector<512x256xi32>
    %36 = arith.cmpi eq, %6, %35 : vector<512x256xi32>
    %37 = arith.ori %31, %36 : vector<512x256xi1>
    %38 = arith.extui %37 : vector<512x256xi1> to vector<512x256xi32>
    %39 = arith.sitofp %38 : vector<512x256xi32> to vector<512x256xf32>
    %c0_14 = arith.constant 0 : index
    %c0_15 = arith.constant 0 : index
    %40 = vector.load %arg4[%c0_14, %c0_15] : memref<256x128xf32, #tpu.memory_space<vmem>>, vector<256x128xf32>
    %cst_16 = arith.constant dense<0.000000e+00> : vector<512x128xf32>
    %41 = tpu.matmul %39, %40, %cst_16 {dimension_numbers = #tpu.dot_dimension_numbers<[1], [0], [0], [1], [0, 0, 1, 1], [], []>} : vector<512x256xf32>, vector<256x128xf32>, vector<512x128xf32> -> vector<512x128xf32>
    %c0_17 = arith.constant 0 : index
    %c0_18 = arith.constant 0 : index
    %42 = vector.load %arg5[%c0_17, %c0_18] : memref<512x128xf32, #tpu.memory_space<vmem>>, vector<512x128xf32>
    tpu.vector_store %arg5[%c0_17, %c0_18], %41 {strides = array<i32>} : memref<512x128xf32, #tpu.memory_space<vmem>>, vector<512x128xf32>,
    %43 = vector.shape_cast %21 : vector<512xi32> to vector<4x128xi32>
    %c0_19 = arith.constant 0 : index
    %c0_20 = arith.constant 0 : index
    %c0_21 = arith.constant 0 : index
    %c0_22 = arith.constant 0 : index
    %44 = vector.load %arg6[%c0_19, %c0_20, %c0_21, %c0_22] : memref<1x2x4x128xi32, #tpu.memory_space<vmem>>, vector<1x1x4x128xi32>
    %45 = vector.shape_cast %44 : vector<1x1x4x128xi32> to vector<4x128xi32>
    %46 = vector.shape_cast %43 : vector<4x128xi32> to vector<1x1x4x128xi32>
    tpu.vector_store %arg6[%c0_19, %c0_20, %c0_21, %c0_22], %46 {strides = array<i32>} : memref<1x2x4x128xi32, #tpu.memory_space<vmem>>, vector<1x1x4x128xi32>,
    %47 = vector.shape_cast %28 : vector<512xi32> to vector<4x128xi32>
    %c0_23 = arith.constant 0 : index
    %c1 = arith.constant 1 : index
    %c0_24 = arith.constant 0 : index
    %c0_25 = arith.constant 0 : index
    %48 = vector.load %arg6[%c0_23, %c1, %c0_24, %c0_25] : memref<1x2x4x128xi32, #tpu.memory_space<vmem>>, vector<1x1x4x128xi32>
    %49 = vector.shape_cast %48 : vector<1x1x4x128xi32> to vector<4x128xi32>
    %50 = vector.shape_cast %47 : vector<4x128xi32> to vector<1x1x4x128xi32>
    tpu.vector_store %arg6[%c0_23, %c1, %c0_24, %c0_25], %50 {strides = array<i32>} : memref<1x2x4x128xi32, #tpu.memory_space<vmem>>, vector<1x1x4x128xi32>,
    %51 = arith.subf %41, %0 : vector<512x128xf32>
    %cst_26 = arith.constant dense<0.000000e+00> : vector<256xf32>
    %52 = vector.multi_reduction <add>, %39, %cst_26 [0] : vector<512x256xf32> to vector<256xf32>
    %53 = vector.shape_cast %52 : vector<256xf32> to vector<1x256xf32>
    %54 = arith.mulf %51, %51 : vector<512x128xf32>
    %55 = vector.shape_cast %54 : vector<512x128xf32> to vector<1x512x128xf32>
    %cst_27 = arith.constant dense<0.000000e+00> : vector<1xf32>
    %56 = vector.multi_reduction <add>, %55, %cst_27 [1, 2] : vector<1x512x128xf32> to vector<1xf32>
    %57 = vector.shape_cast %56 : vector<1xf32> to vector<1x1x1xf32>
    %58 = vector.extract %57[0, 0, 0] : f32 from vector<1x1x1xf32>
    %59 = tpu.iota {dimensions = array<i32: 0>} : vector<2x256xi32>
    %c0_i32 = arith.constant 0 : i32
    %60 = vector.broadcast %c0_i32 : i32 to vector<2x256xi32>
    %61 = arith.cmpi eq, %59, %60 : vector<2x256xi32>
    %62 = vector.shape_cast %53 : vector<1x256xf32> to vector<1x256xf32>
    %63 = vector.broadcast %62 : vector<1x256xf32> to vector<2x256xf32>
    %64 = vector.broadcast %58 : f32 to vector<2x256xf32>
    %65 = arith.select %61, %63, %64 : vector<2x256xi1>, vector<2x256xf32>
    %66 = vector.shape_cast %65 : vector<2x256xf32> to vector<1x2x256xf32>
    %c0_28 = arith.constant 0 : index
    %c0_29 = arith.constant 0 : index
    %c0_30 = arith.constant 0 : index
    %67 = vector.load %arg7[%c0_28, %c0_29, %c0_30] : memref<1x2x256xf32, #tpu.memory_space<vmem>>, vector<1x2x256xf32>
    tpu.vector_store %arg7[%c0_28, %c0_29, %c0_30], %66 {strides = array<i32>} : memref<1x2x256xf32, #tpu.memory_space<vmem>>, vector<1x2x256xf32>,
    return
  }
  func.func @transform_0(%arg0: i32) -> (i32, i32) {
    %c0_i32 = arith.constant 0 : i32
    %c0_i32_0 = arith.constant 0 : i32
    return %arg0, %c0_i32 : i32, i32
  }
  func.func @transform_1(%arg0: i32) -> (i32, i32) {
    %c0_i32 = arith.constant 0 : i32
    %c0_i32_0 = arith.constant 0 : i32
    %c0_i32_1 = arith.constant 0 : i32
    return %c0_i32, %c0_i32_0 : i32, i32
  }
  func.func @transform_2(%arg0: i32) -> (i32, i32) {
    %c0_i32 = arith.constant 0 : i32
    %c0_i32_0 = arith.constant 0 : i32
    %c0_i32_1 = arith.constant 0 : i32
    return %c0_i32, %c0_i32_0 : i32, i32
  }
  func.func @transform_3(%arg0: i32) -> (i32, i32) {
    %c0_i32 = arith.constant 0 : i32
    %c0_i32_0 = arith.constant 0 : i32
    %c0_i32_1 = arith.constant 0 : i32
    return %c0_i32, %c0_i32_0 : i32, i32
  }
  func.func @transform_4(%arg0: i32) -> (i32, i32) {
    %c0_i32 = arith.constant 0 : i32
    %c0_i32_0 = arith.constant 0 : i32
    return %arg0, %c0_i32 : i32, i32
  }
  func.func @transform_5(%arg0: i32) -> (i32, i32, i32, i32) {
    %c0_i32 = arith.constant 0 : i32
    %c0_i32_0 = arith.constant 0 : i32
    %c0_i32_1 = arith.constant 0 : i32
    %c0_i32_2 = arith.constant 0 : i32
    return %arg0, %c0_i32, %c0_i32_0, %c0_i32_1 : i32, i32, i32, i32
  }
  func.func @transform_6(%arg0: i32) -> (i32, i32, i32) {
    %c0_i32 = arith.constant 0 : i32
    %c0_i32_0 = arith.constant 0 : i32
    %c0_i32_1 = arith.constant 0 : i32
    return %arg0, %c0_i32, %c0_i32_0 : i32, i32, i32
  }
}

</mosaic_0001>

<llo_original>
// kernel: vector_quantizer_forward.1
$region0: #{vector_quantizer_forward.1}
  #allocation0 [shape = 'u32[]', space=smem, size = 0x4, offset = 0x4, fixed_abs, tag = 'smem constant byte address 0x4 - core index']
  #allocation1 [shape = 'u32[144,128]{1,0:T(1,128)}', space=vmem, size = 0x12000, scoped, tag = 'internal scratch']
  %s0 = inlined_call_operand.vmem [shape: f32[1024,128], index: 0, kind: input, shape index: {}]
  %s1 = inlined_call_operand.vmem [shape: f32[128,256], index: 1, kind: input, shape index: {}]
  %s2 = inlined_call_operand.vmem [shape: f32[1,256], index: 2, kind: input, shape index: {}]
  %s3 = inlined_call_operand.vmem [shape: f32[256,128], index: 3, kind: input, shape index: {}]
  %s4 = inlined_call_operand.vmem [shape: f32[1024,128], index: 4, kind: output, shape index: {0}]
  %s5 = inlined_call_operand.vmem [shape: s32[2,2,4,128], index: 5, kind: output, shape index: {1}]
  %s6 = inlined_call_operand.vmem [shape: f32[2,2,256], index: 6, kind: output, shape index: {2}]
  %7 = xla_tuple %s4, %s5, %s6
  %s8 = sld [smem:[#allocation0]]
  $region65: #{vector_quantizer_forward.1} parent=0
    _
  %s10 = ssub.s32 1, %s8
  %s11 = scalar_select 0, %s10, %s8
  loop: start=0, step=1, limit=4
  $region2: #{vector_quantizer_forward.1} parent=0 // loop_pre_header
    _
  $region3: #{vector_quantizer_forward.1} parent=0 // loop_header
    %s13 = sphi 0, %s17
    %p14 = scmp.ge.s32.totalorder %s13, 4
    %s23 = sphi 0, %s25
    %s26 = sphi 0, %s23
    %s27 = sphi 0, %s26
    %s43 = sphi 0, %s27
    %s47 = sphi 0, %s47
    %s49 = sphi 0, %s47
    %s50 = sphi 0, %s49
    %s64 = sphi 0, %s50
    %s68 = sphi 0, %s68
    %s70 = sphi 0, %s68
    %s71 = sphi 0, %s70
    %s85 = sphi 0, %s71
    %s89 = sphi 0, %s89
    %s91 = sphi 0, %s89
    %s92 = sphi 0, %s91
    %s106 = sphi 0, %s92
    %s112 = sphi 0, %s114
    %s115 = sphi 0, %s112
    %s116 = sphi 0, %s115
    %s132 = sphi 0, %s116
    %s138 = sphi 0, %s140
    %s141 = sphi 0, %s138
    %s142 = sphi 0, %s141
    %s158 = sphi 0, %s142
    %s164 = sphi 0, %s166
    %s167 = sphi 0, %s164
    %s168 = sphi 0, %s167
    %s184 = sphi 0, %s168
  $region4: #{vector_quantizer_forward.1} parent=0 // loop_header_branch
    %16 = sbr.rel (%p14) target = $region8
  $region5: #{vector_quantizer_forward.1} parent=0 // loop_body
    %s18 = ssub.s32 %s13, 1
    %s19 = ssub.s32 %s13, 2
    %s20 = sadd.s32 %s13, 1
    %s21 = ssub.s32 %s13, %s20
    %p22 = scmp.eq.s32.totalorder %s21, 0
    %s24 = sadd.s32 %s23, 1
    %s25 = scalar_select %p22, %s23, %s24
    %p28 = pneg %p22
    %p29 = scmp.eq.s32.totalorder %s13, 1
    %p30 = por %p28, %p29
    %p31 = scmp.ne.s32.totalorder %s23, %s26
    %p32 = scmp.eq.s32.totalorder %s13, 0
    %p33 = por %p31, %p32
    %p34 = scmp.ne.s32.totalorder %s23, %s26
    %p35 = scmp.eq.s32.totalorder %s18, 1
    %p36 = por %p34, %p35
    %p37 = scmp.ne.s32.totalorder %s26, %s27
    %p38 = scmp.eq.s32.totalorder %s18, 0
    %p39 = por %p37, %p38
    %p40 = scmp.ne.s32.totalorder %s26, %s27
    %p41 = scmp.eq.s32.totalorder %s19, 1
    %p42 = por %p40, %p41
    %p44 = scmp.ne.s32.totalorder %s27, %s43
    %p45 = scmp.eq.s32.totalorder %s19, 0
    %p46 = por %p44, %p45
    %s48 = sadd.s32 %s47, 1
    %p51 = scmp.eq.s32.totalorder %s13, 1
    %p52 = scmp.ne.s32.totalorder %s47, %s49
    %p53 = scmp.eq.s32.totalorder %s13, 0
    %p54 = por %p52, %p53
    %p55 = scmp.ne.s32.totalorder %s47, %s49
    %p56 = scmp.eq.s32.totalorder %s18, 1
    %p57 = por %p55, %p56
    %p58 = scmp.ne.s32.totalorder %s49, %s50
    %p59 = scmp.eq.s32.totalorder %s18, 0
    %p60 = por %p58, %p59
    %p61 = scmp.ne.s32.totalorder %s49, %s50
    %p62 = scmp.eq.s32.totalorder %s19, 1
    %p63 = por %p61, %p62
    %p65 = scmp.ne.s32.totalorder %s50, %s64
    %p66 = scmp.eq.s32.totalorder %s19, 0
    %p67 = por %p65, %p66
    %s69 = sadd.s32 %s68, 1
    %p72 = scmp.eq.s32.totalorder %s13, 1
    %p73 = scmp.ne.s32.totalorder %s68, %s70
    %p74 = scmp.eq.s32.totalorder %s13, 0
    %p75 = por %p73, %p74
    %p76 = scmp.ne.s32.totalorder %s68, %s70
    %p77 = scmp.eq.s32.totalorder %s18, 1
    %p78 = por %p76, %p77
    %p79 = scmp.ne.s32.totalorder %s70, %s71
    %p80 = scmp.eq.s32.totalorder %s18, 0
    %p81 = por %p79, %p80
    %p82 = scmp.ne.s32.totalorder %s70, %s71
    %p83 = scmp.eq.s32.totalorder %s19, 1
    %p84 = por %p82, %p83
    %p86 = scmp.ne.s32.totalorder %s71, %s85
    %p87 = scmp.eq.s32.totalorder %s19, 0
    %p88 = por %p86, %p87
    %s90 = sadd.s32 %s89, 1
    %p93 = scmp.eq.s32.totalorder %s13, 1
    %p94 = scmp.ne.s32.totalorder %s89, %s91
    %p95 = scmp.eq.s32.totalorder %s13, 0
    %p96 = por %p94, %p95
    %p97 = scmp.ne.s32.totalorder %s89, %s91
    %p98 = scmp.eq.s32.totalorder %s18, 1
    %p99 = por %p97, %p98
    %p100 = scmp.ne.s32.totalorder %s91, %s92
    %p101 = scmp.eq.s32.totalorder %s18, 0
    %p102 = por %p100, %p101
    %p103 = scmp.ne.s32.totalorder %s91, %s92
    %p104 = scmp.eq.s32.totalorder %s19, 1
    %p105 = por %p103, %p104
    %p107 = scmp.ne.s32.totalorder %s92, %s106
    %p108 = scmp.eq.s32.totalorder %s19, 0
    %p109 = por %p107, %p108
    %s110 = ssub.s32 %s13, %s20
    %p111 = scmp.eq.s32.totalorder %s110, 0
    %s113 = sadd.s32 %s112, 1
    %s114 = scalar_select %p111, %s112, %s113
    %p117 = pneg %p111
    %p118 = scmp.eq.s32.totalorder %s13, 1
    %p119 = por %p117, %p118
    %p120 = scmp.ne.s32.totalorder %s112, %s115
    %p121 = scmp.eq.s32.totalorder %s13, 0
    %p122 = por %p120, %p121
    %p123 = scmp.ne.s32.totalorder %s112, %s115
    %p124 = scmp.eq.s32.totalorder %s18, 1
    %p125 = por %p123, %p124
    %p126 = scmp.ne.s32.totalorder %s115, %s116
    %p127 = scmp.eq.s32.totalorder %s18, 0
    %p128 = por %p126, %p127
    %p129 = scmp.ne.s32.totalorder %s115, %s116
    %p130 = scmp.eq.s32.totalorder %s19, 1
    %p131 = por %p129, %p130
    %p133 = scmp.ne.s32.totalorder %s116, %s132
    %p134 = scmp.eq.s32.totalorder %s19, 0
    %p135 = por %p133, %p134
    %s136 = ssub.s32 %s13, %s20
    %p137 = scmp.eq.s32.totalorder %s136, 0
    %s139 = sadd.s32 %s138, 1
    %s140 = scalar_select %p137, %s138, %s139
    %p143 = pneg %p137
    %p144 = scmp.eq.s32.totalorder %s13, 1
    %p145 = por %p143, %p144
    %p146 = scmp.ne.s32.totalorder %s138, %s141
    %p147 = scmp.eq.s32.totalorder %s13, 0
    %p148 = por %p146, %p147
    %p149 = scmp.ne.s32.totalorder %s138, %s141
    %p150 = scmp.eq.s32.totalorder %s18, 1
    %p151 = por %p149, %p150
    %p152 = scmp.ne.s32.totalorder %s141, %s142
    %p153 = scmp.eq.s32.totalorder %s18, 0
    %p154 = por %p152, %p153
    %p155 = scmp.ne.s32.totalorder %s141, %s142
    %p156 = scmp.eq.s32.totalorder %s19, 1
    %p157 = por %p155, %p156
    %p159 = scmp.ne.s32.totalorder %s142, %s158
    %p160 = scmp.eq.s32.totalorder %s19, 0
    %p161 = por %p159, %p160
    %s162 = ssub.s32 %s13, %s20
    %p163 = scmp.eq.s32.totalorder %s162, 0
    %s165 = sadd.s32 %s164, 1
    %s166 = scalar_select %p163, %s164, %s165
    %p169 = pneg %p163
    %p170 = scmp.eq.s32.totalorder %s13, 1
    %p171 = por %p169, %p170
    %p172 = scmp.ne.s32.totalorder %s164, %s167
    %p173 = scmp.eq.s32.totalorder %s13, 0
    %p174 = por %p172, %p173
    %p175 = scmp.ne.s32.totalorder %s164, %s167
    %p176 = scmp.eq.s32.totalorder %s18, 1
    %p177 = por %p175, %p176
    %p178 = scmp.ne.s32.totalorder %s167, %s168
    %p179 = scmp.eq.s32.totalorder %s18, 0
    %p180 = por %p178, %p179
    %p181 = scmp.ne.s32.totalorder %s167, %s168
    %p182 = scmp.eq.s32.totalorder %s19, 1
    %p183 = por %p181, %p182
    %p185 = scmp.ne.s32.totalorder %s168, %s184
    %p186 = scmp.eq.s32.totalorder %s19, 0
    %p187 = por %p185, %p186
    %p188 = scmp.le.s32.totalorder 1, %s13
    %p189 = scmp.lt.s32.totalorder %s13, 3
    %p190 = pnand %p188, %p189
    %p191 = pneg %p190
    // Predicated region
    $region9: #{vector_quantizer_forward.1} parent=5 // pred_check
      _
    $region10: #{vector_quantizer_forward.1} parent=5 // pred_check_branch
      %193 = sbr.rel (%p190) target = $region12
    $region11: #{vector_quantizer_forward.1} parent=5 // pred_region
      %s194 = ssub.s32 %s13, 1
      // Predicated region
      $region13: #{vector_quantizer_forward.1} parent=11 // pred_check
        %p195 = pneg %p60
      $region14: #{vector_quantizer_forward.1} parent=11 // pred_check_branch
        %197 = sbr.rel (%p195) target = $region16
      $region15: #{vector_quantizer_forward.1} parent=11 // pred_region
        _
      $region16: #{vector_quantizer_forward.1} parent=11 // pred_fallthru
        _
      // Predicated region
      $region17: #{vector_quantizer_forward.1} parent=11 // pred_check
        %p198 = pneg %p81
      $region18: #{vector_quantizer_forward.1} parent=11 // pred_check_branch
        %200 = sbr.rel (%p198) target = $region20
      $region19: #{vector_quantizer_forward.1} parent=11 // pred_region
        _
      $region20: #{vector_quantizer_forward.1} parent=11 // pred_fallthru
        _
      // Predicated region
      $region21: #{vector_quantizer_forward.1} parent=11 // pred_check
        %p201 = pneg %p102
      $region22: #{vector_quantizer_forward.1} parent=11 // pred_check_branch
        %203 = sbr.rel (%p201) target = $region24
      $region23: #{vector_quantizer_forward.1} parent=11 // pred_region
        _
      $region24: #{vector_quantizer_forward.1} parent=11 // pred_fallthru
        _
    $region12: #{vector_quantizer_forward.1} parent=5 // pred_fallthru
      _
    %p204 = scmp.lt.s32.totalorder %s13, 2
    // Predicated region
    $region25: #{vector_quantizer_forward.1} parent=5 // pred_check
      %p205 = pneg %p204
    $region26: #{vector_quantizer_forward.1} parent=5 // pred_check_branch
      %207 = sbr.rel (%p205) target = $region28
    $region27: #{vector_quantizer_forward.1} parent=5 // pred_region
      // Predicated region
      $region29: #{vector_quantizer_forward.1} parent=27 // pred_check
        %p208 = pneg %p33
      $region30: #{vector_quantizer_forward.1} parent=27 // pred_check_branch
        %210 = sbr.rel (%p208) target = $region32
      $region31: #{vector_quantizer_forward.1} parent=27 // pred_region
        %s211 = smul.u32 64, %s13
        %p212 = scmp.lt.s32.totalorder %s211, 127
        %s213 = scalar_select %p212, %s211, 127
        %s214 = smul.addr %s213, 8
        %s215 = scalar_lea.vmem %s0, %s214
        %s216 = smul.u32 64, %s13
      $region32: #{vector_quantizer_forward.1} parent=27 // pred_fallthru
        _
    $region28: #{vector_quantizer_forward.1} parent=5 // pred_fallthru
      _
    %p217 = scmp.le.s32.totalorder 1, %s13
    %p218 = scmp.lt.s32.totalorder %s13, 3
    %p219 = pnand %p217, %p218
    %p220 = pneg %p219
    // Predicated region
    $region33: #{vector_quantizer_forward.1} parent=5 // pred_check
      _
    $region34: #{vector_quantizer_forward.1} parent=5 // pred_check_branch
      %222 = sbr.rel (%p219) target = $region36
    $region35: #{vector_quantizer_forward.1} parent=5 // pred_region
      %s223 = ssub.s32 %s13, 1
      %s224 = smul.u32 64, %s18
      %p225 = scmp.lt.s32.totalorder %s224, 127
      %s226 = scalar_select %p225, %s224, 127
      %s227 = smul.addr %s226, 8
      %s228 = scalar_lea.vmem %s0, %s227
      %p229 = pneg %p39
      %p230 = pneg %p36
      %p231 = pneg %p60
      %p232 = pneg %p57
      %p233 = pneg %p81
      %p234 = pneg %p78
      %p235 = pneg %p102
      %p236 = pneg %p99
      %p237 = pneg %p128
      %p238 = pneg %p125
      %s239 = smul.u32 64, %s18
      %p240 = scmp.lt.s32.totalorder %s239, 127
      %s241 = scalar_select %p240, %s239, 127
      %s242 = smul.addr %s241, 8
      %s243 = scalar_lea.vmem %s4, %s242
      %p244 = pneg %p154
      %p245 = pneg %p151
      %p246 = scmp.lt.s32.totalorder %s18, 1
      %s247 = scalar_select %p246, %s18, 1
      %s248 = smul.addr %s247, 2
      %s249 = smul.addr %s248, 4
      %s250 = scalar_lea.vmem %s5, %s249
      %p251 = pneg %p180
      %p252 = pneg %p177
      %p253 = scmp.lt.s32.totalorder %s18, 1
      %s254 = scalar_select %p253, %s18, 1
      %s255 = smul.addr %s254, 2
      %s256 = smul.addr %s255, 2
      %s257 = scalar_lea.vmem %s6, %s256
      %s258 = smul.u32 64, %s18
      %p259 = scmp.lt.s32.totalorder %s258, 127
      %s260 = scalar_select %p259, %s258, 127
      %s261 = smul.addr %s260, 8
      %s262 = scalar_lea.vmem %s0, %s261
      %s263 = smul.u32 64, %s18
      %s264 = smul.u32 64, %s18
      %p265 = scmp.lt.s32.totalorder %s264, 127
      %s266 = scalar_select %p265, %s264, 127
      %s267 = smul.addr %s266, 8
      %s268 = scalar_lea.vmem %s4, %s267
      %s269 = smul.u32 64, %s18
      %p270 = scmp.lt.s32.totalorder %s18, 1
      %s271 = scalar_select %p270, %s18, 1
      %s272 = smul.addr %s271, 2
      %s273 = smul.addr %s272, 4
      %s274 = scalar_lea.vmem %s5, %s273
      %p275 = scmp.lt.s32.totalorder %s18, 1
      %s276 = scalar_select %p275, %s18, 1
      %s277 = smul.addr %s276, 2
      %s278 = smul.addr %s277, 2
      %s279 = scalar_lea.vmem %s6, %s278
      %v280 = vld [vmem:[%s262] sm:$0xff]
      %v281 = vld [vmem:[%s262 + $0x8] sm:$0xff]
      %v282 = vld [vmem:[%s262 + $0x10] sm:$0xff]
      %v283 = vld [vmem:[%s262 + $0x18] sm:$0xff]
      %v284 = vld [vmem:[%s262 + $0x20] sm:$0xff]
      %v285 = vld [vmem:[%s262 + $0x28] sm:$0xff]
      %v286 = vld [vmem:[%s262 + $0x30] sm:$0xff]
      %v287 = vld [vmem:[%s262 + $0x38] sm:$0xff]
      %v288 = vld [vmem:[%s262 + $0x40] sm:$0xff]
      %v289 = vld [vmem:[%s262 + $0x48] sm:$0xff]
      %v290 = vld [vmem:[%s262 + $0x50] sm:$0xff]
      %v291 = vld [vmem:[%s262 + $0x58] sm:$0xff]
      %v292 = vld [vmem:[%s262 + $0x60] sm:$0xff]
      %v293 = vld [vmem:[%s262 + $0x68] sm:$0xff]
      %v294 = vld [vmem:[%s262 + $0x70] sm:$0xff]
      %v295 = vld [vmem:[%s262 + $0x78] sm:$0xff]
      %v296 = vld [vmem:[%s262 + $0x80] sm:$0xff]
      %v297 = vld [vmem:[%s262 + $0x88] sm:$0xff]
      %v298 = vld [vmem:[%s262 + $0x90] sm:$0xff]
      %v299 = vld [vmem:[%s262 + $0x98] sm:$0xff]
      %v300 = vld [vmem:[%s262 + $0xa0] sm:$0xff]
      %v301 = vld [vmem:[%s262 + $0xa8] sm:$0xff]
      %v302 = vld [vmem:[%s262 + $0xb0] sm:$0xff]
      %v303 = vld [vmem:[%s262 + $0xb8] sm:$0xff]
      %v304 = vld [vmem:[%s262 + $0xc0] sm:$0xff]
      %v305 = vld [vmem:[%s262 + $0xc8] sm:$0xff]
      %v306 = vld [vmem:[%s262 + $0xd0] sm:$0xff]
      %v307 = vld [vmem:[%s262 + $0xd8] sm:$0xff]
      %v308 = vld [vmem:[%s262 + $0xe0] sm:$0xff]
      %v309 = vld [vmem:[%s262 + $0xe8] sm:$0xff]
      %v310 = vld [vmem:[%s262 + $0xf0] sm:$0xff]
      %v311 = vld [vmem:[%s262 + $0xf8] sm:$0xff]
      %v312 = vld [vmem:[%s262 + $0x100] sm:$0xff]
      %v313 = vld [vmem:[%s262 + $0x108] sm:$0xff]
      %v314 = vld [vmem:[%s262 + $0x110] sm:$0xff]
      %v315 = vld [vmem:[%s262 + $0x118] sm:$0xff]
      %v316 = vld [vmem:[%s262 + $0x120] sm:$0xff]
      %v317 = vld [vmem:[%s262 + $0x128] sm:$0xff]
      %v318 = vld [vmem:[%s262 + $0x130] sm:$0xff]
      %v319 = vld [vmem:[%s262 + $0x138] sm:$0xff]
      %v320 = vld [vmem:[%s262 + $0x140] sm:$0xff]
      %v321 = vld [vmem:[%s262 + $0x148] sm:$0xff]
      %v322 = vld [vmem:[%s262 + $0x150] sm:$0xff]
      %v323 = vld [vmem:[%s262 + $0x158] sm:$0xff]
      %v324 = vld [vmem:[%s262 + $0x160] sm:$0xff]
      %v325 = vld [vmem:[%s262 + $0x168] sm:$0xff]
      %v326 = vld [vmem:[%s262 + $0x170] sm:$0xff]
      %v327 = vld [vmem:[%s262 + $0x178] sm:$0xff]
      %v328 = vld [vmem:[%s262 + $0x180] sm:$0xff]
      %v329 = vld [vmem:[%s262 + $0x188] sm:$0xff]
      %v330 = vld [vmem:[%s262 + $0x190] sm:$0xff]
      %v331 = vld [vmem:[%s262 + $0x198] sm:$0xff]
      %v332 = vld [vmem:[%s262 + $0x1a0] sm:$0xff]
      %v333 = vld [vmem:[%s262 + $0x1a8] sm:$0xff]
      %v334 = vld [vmem:[%s262 + $0x1b0] sm:$0xff]
      %v335 = vld [vmem:[%s262 + $0x1b8] sm:$0xff]
      %v336 = vld [vmem:[%s262 + $0x1c0] sm:$0xff]
      %v337 = vld [vmem:[%s262 + $0x1c8] sm:$0xff]
      %v338 = vld [vmem:[%s262 + $0x1d0] sm:$0xff]
      %v339 = vld [vmem:[%s262 + $0x1d8] sm:$0xff]
      %v340 = vld [vmem:[%s262 + $0x1e0] sm:$0xff]
      %v341 = vld [vmem:[%s262 + $0x1e8] sm:$0xff]
      %v342 = vld [vmem:[%s262 + $0x1f0] sm:$0xff]
      %v343 = vld [vmem:[%s262 + $0x1f8] sm:$0xff]
      %v344 = vld [vmem:[%s1] sm:$0xff]
      %v345 = vld [vmem:[%s1 + $0x8] sm:$0xff]
      %v346 = vld [vmem:[%s1 + $0x10] sm:$0xff]
      %v347 = vld [vmem:[%s1 + $0x18] sm:$0xff]
      %v348 = vld [vmem:[%s1 + $0x20] sm:$0xff]
      %v349 = vld [vmem:[%s1 + $0x28] sm:$0xff]
      %v350 = vld [vmem:[%s1 + $0x30] sm:$0xff]
      %v351 = vld [vmem:[%s1 + $0x38] sm:$0xff]
      %v352 = vld [vmem:[%s1 + $0x40] sm:$0xff]
      %v353 = vld [vmem:[%s1 + $0x48] sm:$0xff]
      %v354 = vld [vmem:[%s1 + $0x50] sm:$0xff]
      %v355 = vld [vmem:[%s1 + $0x58] sm:$0xff]
      %v356 = vld [vmem:[%s1 + $0x60] sm:$0xff]
      %v357 = vld [vmem:[%s1 + $0x68] sm:$0xff]
      %v358 = vld [vmem:[%s1 + $0x70] sm:$0xff]
      %v359 = vld [vmem:[%s1 + $0x78] sm:$0xff]
      %v360 = vld [vmem:[%s1 + $0x80] sm:$0xff]
      %v361 = vld [vmem:[%s1 + $0x88] sm:$0xff]
      %v362 = vld [vmem:[%s1 + $0x90] sm:$0xff]
      %v363 = vld [vmem:[%s1 + $0x98] sm:$0xff]
      %v364 = vld [vmem:[%s1 + $0xa0] sm:$0xff]
      %v365 = vld [vmem:[%s1 + $0xa8] sm:$0xff]
      %v366 = vld [vmem:[%s1 + $0xb0] sm:$0xff]
      %v367 = vld [vmem:[%s1 + $0xb8] sm:$0xff]
      %v368 = vld [vmem:[%s1 + $0xc0] sm:$0xff]
      %v369 = vld [vmem:[%s1 + $0xc8] sm:$0xff]
      %v370 = vld [vmem:[%s1 + $0xd0] sm:$0xff]
      %v371 = vld [vmem:[%s1 + $0xd8] sm:$0xff]
      %v372 = vld [vmem:[%s1 + $0xe0] sm:$0xff]
      %v373 = vld [vmem:[%s1 + $0xe8] sm:$0xff]
      %v374 = vld [vmem:[%s1 + $0xf0] sm:$0xff]
      %v375 = vld [vmem:[%s1 + $0xf8] sm:$0xff]
      %376 = vmatprep.subr.mxu0 %v345
      %377 = vmatpush1.msra.mxu0 %v344
      %378 = vmatprep.subr.mxu0 %v347
      %379 = vmatpush1.msra.mxu0 %v346
      %380 = vmatprep.subr.mxu0 %v349
      %381 = vmatpush1.msra.mxu0 %v348
      %382 = vmatprep.subr.mxu0 %v351
      %383 = vmatpush1.msra.mxu0 %v350
      %384 = vmatprep.subr.mxu0 %v353
      %385 = vmatpush1.msra.mxu0 %v352
      %386 = vmatprep.subr.mxu0 %v355
      %387 = vmatpush1.msra.mxu0 %v354
      %388 = vmatprep.subr.mxu0 %v357
      %389 = vmatpush1.msra.mxu0 %v356
      %390 = vmatprep.subr.mxu0 %v359
      %391 = vmatpush1.msra.mxu0 %v358
      %392 = vmatprep.subr.mxu0 %v361
      %393 = vmatpush1.msra.mxu0 %v360
      %394 = vmatprep.subr.mxu0 %v363
      %395 = vmatpush1.msra.mxu0 %v362
      %396 = vmatprep.subr.mxu0 %v365
      %397 = vmatpush1.msra.mxu0 %v364
      %398 = vmatprep.subr.mxu0 %v367
      %399 = vmatpush1.msra.mxu0 %v366
      %400 = vmatprep.subr.mxu0 %v369
      %401 = vmatpush1.msra.mxu0 %v368
      %402 = vmatprep.subr.mxu0 %v371
      %403 = vmatpush1.msra.mxu0 %v370
      %404 = vmatprep.subr.mxu0 %v373
      %405 = vmatpush1.msra.mxu0 %v372
      %406 = vmatprep.subr.mxu0 %v375
      %407 = vmatpush1.msra.mxu0 %v374
      %408 = vmatprep.subr.mxu0 0.0
      %409 = vmatpush1.msra.mxu0 0.0
      %410 = vmatprep.subr.mxu0 0.0
      %411 = vmatpush1.msra.mxu0 0.0
      %412 = vmatprep.subr.mxu0 0.0
      %413 = vmatpush1.msra.mxu0 0.0
      %414 = vmatprep.subr.mxu0 0.0
      %415 = vmatpush1.msra.mxu0 0.0
      %416 = vmatprep.subr.mxu0 0.0
      %417 = vmatpush1.msra.mxu0 0.0
      %418 = vmatprep.subr.mxu0 0.0
      %419 = vmatpush1.msra.mxu0 0.0
      %420 = vmatprep.subr.mxu0 0.0
      %421 = vmatpush1.msra.mxu0 0.0
      %422 = vmatprep.subr.mxu0 0.0
      %423 = vmatpush1.msra.mxu0 0.0
      %424 = vmatprep.subr.mxu0 0.0
      %425 = vmatpush1.msra.mxu0 0.0
      %426 = vmatprep.subr.mxu0 0.0
      %427 = vmatpush1.msra.mxu0 0.0
      %428 = vmatprep.subr.mxu0 0.0
      %429 = vmatpush1.msra.mxu0 0.0
      %430 = vmatprep.subr.mxu0 0.0
      %431 = vmatpush1.msra.mxu0 0.0
      %432 = vmatprep.subr.mxu0 0.0
      %433 = vmatpush1.msra.mxu0 0.0
      %434 = vmatprep.subr.mxu0 0.0
      %435 = vmatpush1.msra.mxu0 0.0
      %436 = vmatprep.subr.mxu0 0.0
      %437 = vmatpush1.msra.mxu0 0.0
      %438 = vmatprep.subr.mxu0 0.0
      %439 = vmatpush1.msra.mxu0 0.0
      %440 = vmatprep.mubr.f32.mxu0 0.0
      %441 = vmatmul.mubr.f32.gmra.mrb[0].mxu0 %v280
      %v442 = vpop.f32.mrb[0].mxu0
      %v443 = vadd.f32 0.0, %v442
      %v444 = vpop.f32.mrb[0].mxu0
      %v445 = vadd.f32 0.0, %v444
      %446 = vmatprep.mubr.f32.mxu0 0.0
      %447 = vmatmul.mubr.f32.gmra.mrb[0].mxu0 %v281
      %v448 = vpop.f32.mrb[0].mxu0
      %v449 = vadd.f32 0.0, %v448
      %v450 = vpop.f32.mrb[0].mxu0
      %v451 = vadd.f32 0.0, %v450
      %452 = vmatprep.mubr.f32.mxu0 0.0
      %453 = vmatmul.mubr.f32.gmra.mrb[0].mxu0 %v282
      %v454 = vpop.f32.mrb[0].mxu0
      %v455 = vadd.f32 0.0, %v454
      %v456 = vpop.f32.mrb[0].mxu0
      %v457 = vadd.f32 0.0, %v456
      %458 = vmatprep.mubr.f32.mxu0 0.0
      %459 = vmatmul.mubr.f32.gmra.mrb[0].mxu0 %v283
      %v460 = vpop.f32.mrb[0].mxu0
      %v461 = vadd.f32 0.0, %v460
      %v462 = vpop.f32.mrb[0].mxu0
      %v463 = vadd.f32 0.0, %v462
      %464 = vmatprep.mubr.f32.mxu0 0.0
      %465 = vmatmul.mubr.f32.gmra.mrb[0].mxu0 %v284
      %v466 = vpop.f32.mrb[0].mxu0
      %v467 = vadd.f32 0.0, %v466
      %v468 = vpop.f32.mrb[0].mxu0
      %v469 = vadd.f32 0.0, %v468
      %470 = vmatprep.mubr.f32.mxu0 0.0
      %471 = vmatmul.mubr.f32.gmra.mrb[0].mxu0 %v285
      %v472 = vpop.f32.mrb[0].mxu0
      %v473 = vadd.f32 0.0, %v472
      %v474 = vpop.f32.mrb[0].mxu0
      %v475 = vadd.f32 0.0, %v474
      %476 = vmatprep.mubr.f32.mxu0 0.0
      %477 = vmatmul.mubr.f32.gmra.mrb[0].mxu0 %v286
      %v478 = vpop.f32.mrb[0].mxu0
      %v479 = vadd.f32 0.0, %v478
      %v480 = vpop.f32.mrb[0].mxu0
      %v481 = vadd.f32 0.0, %v480
      %482 = vmatprep.mubr.f32.mxu0 0.0
      %483 = vmatmul.mubr.f32.gmra.mrb[0].mxu0 %v287
      %v484 = vpop.f32.mrb[0].mxu0
      %v485 = vadd.f32 0.0, %v484
      %v486 = vpop.f32.mrb[0].mxu0
      %v487 = vadd.f32 0.0, %v486
      %488 = vmatprep.mubr.f32.mxu0 0.0
      %489 = vmatmul.mubr.f32.gmra.mrb[0].mxu0 %v288
      %v490 = vpop.f32.mrb[0].mxu0
      %v491 = vadd.f32 0.0, %v490
      %v492 = vpop.f32.mrb[0].mxu0
      %v493 = vadd.f32 0.0, %v492
      %494 = vmatprep.mubr.f32.mxu0 0.0
      %495 = vmatmul.mubr.f32.gmra.mrb[0].mxu0 %v289
      %v496 = vpop.f32.mrb[0].mxu0
      %v497 = vadd.f32 0.0, %v496
      %v498 = vpop.f32.mrb[0].mxu0
      %v499 = vadd.f32 0.0, %v498
      %500 = vmatprep.mubr.f32.mxu0 0.0
      %501 = vmatmul.mubr.f32.gmra.mrb[0].mxu0 %v290
      %v502 = vpop.f32.mrb[0].mxu0
      %v503 = vadd.f32 0.0, %v502
      %v504 = vpop.f32.mrb[0].mxu0
      %v505 = vadd.f32 0.0, %v504
      %506 = vmatprep.mubr.f32.mxu0 0.0
      %507 = vmatmul.mubr.f32.gmra.mrb[0].mxu0 %v291
      %v508 = vpop.f32.mrb[0].mxu0
      %v509 = vadd.f32 0.0, %v508
      %v510 = vpop.f32.mrb[0].mxu0
      %v511 = vadd.f32 0.0, %v510
      %512 = vmatprep.mubr.f32.mxu0 0.0
      %513 = vmatmul.mubr.f32.gmra.mrb[0].mxu0 %v292
      %v514 = vpop.f32.mrb[0].mxu0
      %v515 = vadd.f32 0.0, %v514
      %v516 = vpop.f32.mrb[0].mxu0
      %v517 = vadd.f32 0.0, %v516
      %518 = vmatprep.mubr.f32.mxu0 0.0
      %519 = vmatmul.mubr.f32.gmra.mrb[0].mxu0 %v293
      %v520 = vpop.f32.mrb[0].mxu0
      %v521 = vadd.f32 0.0, %v520
      %v522 = vpop.f32.mrb[0].mxu0
      %v523 = vadd.f32 0.0, %v522
      %524 = vmatprep.mubr.f32.mxu0 0.0
      %525 = vmatmul.mubr.f32.gmra.mrb[0].mxu0 %v294
      %v526 = vpop.f32.mrb[0].mxu0
      %v527 = vadd.f32 0.0, %v526
      %v528 = vpop.f32.mrb[0].mxu0
      %v529 = vadd.f32 0.0, %v528
      %530 = vmatprep.mubr.f32.mxu0 0.0
      %531 = vmatmul.mubr.f32.gmra.mrb[0].mxu0 %v295
      %v532 = vpop.f32.mrb[0].mxu0
      %v533 = vadd.f32 0.0, %v532
      %v534 = vpop.f32.mrb[0].mxu0
      %v535 = vadd.f32 0.0, %v534
      %536 = vmatprep.mubr.f32.mxu0 0.0
      %537 = vmatmul.mubr.f32.gmra.mrb[0].mxu0 %v296
      %v538 = vpop.f32.mrb[0].mxu0
      %v539 = vadd.f32 0.0, %v538
      %v540 = vpop.f32.mrb[0].mxu0
      %v541 = vadd.f32 0.0, %v540
      %542 = vmatprep.mubr.f32.mxu0 0.0
      %543 = vmatmul.mubr.f32.gmra.mrb[0].mxu0 %v297
      %v544 = vpop.f32.mrb[0].mxu0
      %v545 = vadd.f32 0.0, %v544
      %v546 = vpop.f32.mrb[0].mxu0
      %v547 = vadd.f32 0.0, %v546
      %548 = vmatprep.mubr.f32.mxu0 0.0
      %549 = vmatmul.mubr.f32.gmra.mrb[0].mxu0 %v298
      %v550 = vpop.f32.mrb[0].mxu0
      %v551 = vadd.f32 0.0, %v550
      %v552 = vpop.f32.mrb[0].mxu0
      %v553 = vadd.f32 0.0, %v552
      %554 = vmatprep.mubr.f32.mxu0 0.0
      %555 = vmatmul.mubr.f32.gmra.mrb[0].mxu0 %v299
      %v556 = vpop.f32.mrb[0].mxu0
      %v557 = vadd.f32 0.0, %v556
      %v558 = vpop.f32.mrb[0].mxu0
      %v559 = vadd.f32 0.0, %v558
      %560 = vmatprep.mubr.f32.mxu0 0.0
      %561 = vmatmul.mubr.f32.gmra.mrb[0].mxu0 %v300
      %v562 = vpop.f32.mrb[0].mxu0
      %v563 = vadd.f32 0.0, %v562
      %v564 = vpop.f32.mrb[0].mxu0
      %v565 = vadd.f32 0.0, %v564
      %566 = vmatprep.mubr.f32.mxu0 0.0
      %567 = vmatmul.mubr.f32.gmra.mrb[0].mxu0 %v301
      %v568 = vpop.f32.mrb[0].mxu0
      %v569 = vadd.f32 0.0, %v568
      %v570 = vpop.f32.mrb[0].mxu0
      %v571 = vadd.f32 0.0, %v570
      %572 = vmatprep.mubr.f32.mxu0 0.0
      %573 = vmatmul.mubr.f32.gmra.mrb[0].mxu0 %v302
      %v574 = vpop.f32.mrb[0].mxu0
      %v575 = vadd.f32 0.0, %v574
      %v576 = vpop.f32.mrb[0].mxu0
      %v577 = vadd.f32 0.0, %v576
      %578 = vmatprep.mubr.f32.mxu0 0.0
      %579 = vmatmul.mubr.f32.gmra.mrb[0].mxu0 %v303
      %v580 = vpop.f32.mrb[0].mxu0
      %v581 = vadd.f32 0.0, %v580
      %v582 = vpop.f32.mrb[0].mxu0
      %v583 = vadd.f32 0.0, %v582
      %584 = vmatprep.mubr.f32.mxu0 0.0
      %585 = vmatmul.mubr.f32.gmra.mrb[0].mxu0 %v304
      %v586 = vpop.f32.mrb[0].mxu0
      %v587 = vadd.f32 0.0, %v586
      %v588 = vpop.f32.mrb[0].mxu0
      %v589 = vadd.f32 0.0, %v588
      %590 = vmatprep.mubr.f32.mxu0 0.0
      %591 = vmatmul.mubr.f32.gmra.mrb[0].mxu0 %v305
      %v592 = vpop.f32.mrb[0].mxu0
      %v593 = vadd.f32 0.0, %v592
      %v594 = vpop.f32.mrb[0].mxu0
      %v595 = vadd.f32 0.0, %v594
      %596 = vmatprep.mubr.f32.mxu0 0.0
      %597 = vmatmul.mubr.f32.gmra.mrb[0].mxu0 %v306
      %v598 = vpop.f32.mrb[0].mxu0
      %v599 = vadd.f32 0.0, %v598
      %v600 = vpop.f32.mrb[0].mxu0
      %v601 = vadd.f32 0.0, %v600
      %602 = vmatprep.mubr.f32.mxu0 0.0
      %603 = vmatmul.mubr.f32.gmra.mrb[0].mxu0 %v307
      %v604 = vpop.f32.mrb[0].mxu0
      %v605 = vadd.f32 0.0, %v604
      %v606 = vpop.f32.mrb[0].mxu0
      %v607 = vadd.f32 0.0, %v606
      %608 = vmatprep.mubr.f32.mxu0 0.0
      %609 = vmatmul.mubr.f32.gmra.mrb[0].mxu0 %v308
      %v610 = vpop.f32.mrb[0].mxu0
      %v611 = vadd.f32 0.0, %v610
      %v612 = vpop.f32.mrb[0].mxu0
      %v613 = vadd.f32 0.0, %v612
      %614 = vmatprep.mubr.f32.mxu0 0.0
      %615 = vmatmul.mubr.f32.gmra.mrb[0].mxu0 %v309
      %v616 = vpop.f32.mrb[0].mxu0
      %v617 = vadd.f32 0.0, %v616
      %v618 = vpop.f32.mrb[0].mxu0
      %v619 = vadd.f32 0.0, %v618
      %620 = vmatprep.mubr.f32.mxu0 0.0
      %621 = vmatmul.mubr.f32.gmra.mrb[0].mxu0 %v310
      %v622 = vpop.f32.mrb[0].mxu0
      %v623 = vadd.f32 0.0, %v622
      %v624 = vpop.f32.mrb[0].mxu0
      %v625 = vadd.f32 0.0, %v624
      %626 = vmatprep.mubr.f32.mxu0 0.0
      %627 = vmatmul.mubr.f32.gmra.mrb[0].mxu0 %v311
      %v628 = vpop.f32.mrb[0].mxu0
      %v629 = vadd.f32 0.0, %v628
      %v630 = vpop.f32.mrb[0].mxu0
      %v631 = vadd.f32 0.0, %v630
      %632 = vmatprep.mubr.f32.mxu0 0.0
      %633 = vmatmul.mubr.f32.gmra.mrb[0].mxu0 %v312
      %v634 = vpop.f32.mrb[0].mxu0
      %v635 = vadd.f32 0.0, %v634
      %v636 = vpop.f32.mrb[0].mxu0
      %v637 = vadd.f32 0.0, %v636
      %638 = vmatprep.mubr.f32.mxu0 0.0
      %639 = vmatmul.mubr.f32.gmra.mrb[0].mxu0 %v313
      %v640 = vpop.f32.mrb[0].mxu0
      %v641 = vadd.f32 0.0, %v640
      %v642 = vpop.f32.mrb[0].mxu0
      %v643 = vadd.f32 0.0, %v642
      %644 = vmatprep.mubr.f32.mxu0 0.0
      %645 = vmatmul.mubr.f32.gmra.mrb[0].mxu0 %v314
      %v646 = vpop.f32.mrb[0].mxu0
      %v647 = vadd.f32 0.0, %v646
      %v648 = vpop.f32.mrb[0].mxu0
      %v649 = vadd.f32 0.0, %v648
      %650 = vmatprep.mubr.f32.mxu0 0.0
      %651 = vmatmul.mubr.f32.gmra.mrb[0].mxu0 %v315
      %v652 = vpop.f32.mrb[0].mxu0
      %v653 = vadd.f32 0.0, %v652
      %v654 = vpop.f32.mrb[0].mxu0
      %v655 = vadd.f32 0.0, %v654
      %656 = vmatprep.mubr.f32.mxu0 0.0
      %657 = vmatmul.mubr.f32.gmra.mrb[0].mxu0 %v316
      %v658 = vpop.f32.mrb[0].mxu0
      %v659 = vadd.f32 0.0, %v658
      %v660 = vpop.f32.mrb[0].mxu0
      %v661 = vadd.f32 0.0, %v660
      %662 = vmatprep.mubr.f32.mxu0 0.0
      %663 = vmatmul.mubr.f32.gmra.mrb[0].mxu0 %v317
      %v664 = vpop.f32.mrb[0].mxu0
      %v665 = vadd.f32 0.0, %v664
      %v666 = vpop.f32.mrb[0].mxu0
      %v667 = vadd.f32 0.0, %v666
      %668 = vmatprep.mubr.f32.mxu0 0.0
      %669 = vmatmul.mubr.f32.gmra.mrb[0].mxu0 %v318
      %v670 = vpop.f32.mrb[0].mxu0
      %v671 = vadd.f32 0.0, %v670
      %v672 = vpop.f32.mrb[0].mxu0
      %v673 = vadd.f32 0.0, %v672
      %674 = vmatprep.mubr.f32.mxu0 0.0
      %675 = vmatmul.mubr.f32.gmra.mrb[0].mxu0 %v319
      %v676 = vpop.f32.mrb[0].mxu0
      %v677 = vadd.f32 0.0, %v676
      %v678 = vpop.f32.mrb[0].mxu0
      %v679 = vadd.f32 0.0, %v678
      %680 = vmatprep.mubr.f32.mxu0 0.0
      %681 = vmatmul.mubr.f32.gmra.mrb[0].mxu0 %v320
      %v682 = vpop.f32.mrb[0].mxu0
      %v683 = vadd.f32 0.0, %v682
      %v684 = vpop.f32.mrb[0].mxu0
      %v685 = vadd.f32 0.0, %v684
      %686 = vmatprep.mubr.f32.mxu0 0.0
      %687 = vmatmul.mubr.f32.gmra.mrb[0].mxu0 %v321
      %v688 = vpop.f32.mrb[0].mxu0
      %v689 = vadd.f32 0.0, %v688
      %v690 = vpop.f32.mrb[0].mxu0
      %v691 = vadd.f32 0.0, %v690
      %692 = vmatprep.mubr.f32.mxu0 0.0
      %693 = vmatmul.mubr.f32.gmra.mrb[0].mxu0 %v322
      %v694 = vpop.f32.mrb[0].mxu0
      %v695 = vadd.f32 0.0, %v694
      %v696 = vpop.f32.mrb[0].mxu0
      %v697 = vadd.f32 0.0, %v696
      %698 = vmatprep.mubr.f32.mxu0 0.0
      %699 = vmatmul.mubr.f32.gmra.mrb[0].mxu0 %v323
      %v700 = vpop.f32.mrb[0].mxu0
      %v701 = vadd.f32 0.0, %v700
      %v702 = vpop.f32.mrb[0].mxu0
      %v703 = vadd.f32 0.0, %v702
      %704 = vmatprep.mubr.f32.mxu0 0.0
      %705 = vmatmul.mubr.f32.gmra.mrb[0].mxu0 %v324
      %v706 = vpop.f32.mrb[0].mxu0
      %v707 = vadd.f32 0.0, %v706
      %v708 = vpop.f32.mrb[0].mxu0
      %v709 = vadd.f32 0.0, %v708
      %710 = vmatprep.mubr.f32.mxu0 0.0
      %711 = vmatmul.mubr.f32.gmra.mrb[0].mxu0 %v325
      %v712 = vpop.f32.mrb[0].mxu0
      %v713 = vadd.f32 0.0, %v712
      %v714 = vpop.f32.mrb[0].mxu0
      %v715 = vadd.f32 0.0, %v714
      %716 = vmatprep.mubr.f32.mxu0 0.0
      %717 = vmatmul.mubr.f32.gmra.mrb[0].mxu0 %v326
      %v718 = vpop.f32.mrb[0].mxu0
      %v719 = vadd.f32 0.0, %v718
      %v720 = vpop.f32.mrb[0].mxu0
      %v721 = vadd.f32 0.0, %v720
      %722 = vmatprep.mubr.f32.mxu0 0.0
      %723 = vmatmul.mubr.f32.gmra.mrb[0].mxu0 %v327
      %v724 = vpop.f32.mrb[0].mxu0
      %v725 = vadd.f32 0.0, %v724
      %v726 = vpop.f32.mrb[0].mxu0
      %v727 = vadd.f32 0.0, %v726
      %728 = vmatprep.mubr.f32.mxu0 0.0
      %729 = vmatmul.mubr.f32.gmra.mrb[0].mxu0 %v328
      %v730 = vpop.f32.mrb[0].mxu0
      %v731 = vadd.f32 0.0, %v730
      %v732 = vpop.f32.mrb[0].mxu0
      %v733 = vadd.f32 0.0, %v732
      %734 = vmatprep.mubr.f32.mxu0 0.0
      %735 = vmatmul.mubr.f32.gmra.mrb[0].mxu0 %v329
      %v736 = vpop.f32.mrb[0].mxu0
      %v737 = vadd.f32 0.0, %v736
      %v738 = vpop.f32.mrb[0].mxu0
      %v739 = vadd.f32 0.0, %v738
      %740 = vmatprep.mubr.f32.mxu0 0.0
      %741 = vmatmul.mubr.f32.gmra.mrb[0].mxu0 %v330
      %v742 = vpop.f32.mrb[0].mxu0
      %v743 = vadd.f32 0.0, %v742
      %v744 = vpop.f32.mrb[0].mxu0
      %v745 = vadd.f32 0.0, %v744
      %746 = vmatprep.mubr.f32.mxu0 0.0
      %747 = vmatmul.mubr.f32.gmra.mrb[0].mxu0 %v331
      %v748 = vpop.f32.mrb[0].mxu0
      %v749 = vadd.f32 0.0, %v748
      %v750 = vpop.f32.mrb[0].mxu0
      %v751 = vadd.f32 0.0, %v750
      %752 = vmatprep.mubr.f32.mxu0 0.0
      %753 = vmatmul.mubr.f32.gmra.mrb[0].mxu0 %v332
      %v754 = vpop.f32.mrb[0].mxu0
      %v755 = vadd.f32 0.0, %v754
      %v756 = vpop.f32.mrb[0].mxu0
      %v757 = vadd.f32 0.0, %v756
      %758 = vmatprep.mubr.f32.mxu0 0.0
      %759 = vmatmul.mubr.f32.gmra.mrb[0].mxu0 %v333
      %v760 = vpop.f32.mrb[0].mxu0
      %v761 = vadd.f32 0.0, %v760
      %v762 = vpop.f32.mrb[0].mxu0
      %v763 = vadd.f32 0.0, %v762
      %764 = vmatprep.mubr.f32.mxu0 0.0
      %765 = vmatmul.mubr.f32.gmra.mrb[0].mxu0 %v334
      %v766 = vpop.f32.mrb[0].mxu0
      %v767 = vadd.f32 0.0, %v766
      %v768 = vpop.f32.mrb[0].mxu0
      %v769 = vadd.f32 0.0, %v768
      %770 = vmatprep.mubr.f32.mxu0 0.0
      %771 = vmatmul.mubr.f32.gmra.mrb[0].mxu0 %v335
      %v772 = vpop.f32.mrb[0].mxu0
      %v773 = vadd.f32 0.0, %v772
      %v774 = vpop.f32.mrb[0].mxu0
      %v775 = vadd.f32 0.0, %v774
      %776 = vmatprep.mubr.f32.mxu0 0.0
      %777 = vmatmul.mubr.f32.gmra.mrb[0].mxu0 %v336
      %v778 = vpop.f32.mrb[0].mxu0
      %v779 = vadd.f32 0.0, %v778
      %v780 = vpop.f32.mrb[0].mxu0
      %v781 = vadd.f32 0.0, %v780
      %782 = vmatprep.mubr.f32.mxu0 0.0
      %783 = vmatmul.mubr.f32.gmra.mrb[0].mxu0 %v337
      %v784 = vpop.f32.mrb[0].mxu0
      %v785 = vadd.f32 0.0, %v784
      %v786 = vpop.f32.mrb[0].mxu0
      %v787 = vadd.f32 0.0, %v786
      %788 = vmatprep.mubr.f32.mxu0 0.0
      %789 = vmatmul.mubr.f32.gmra.mrb[0].mxu0 %v338
      %v790 = vpop.f32.mrb[0].mxu0
      %v791 = vadd.f32 0.0, %v790
      %v792 = vpop.f32.mrb[0].mxu0
      %v793 = vadd.f32 0.0, %v792
      %794 = vmatprep.mubr.f32.mxu0 0.0
      %795 = vmatmul.mubr.f32.gmra.mrb[0].mxu0 %v339
      %v796 = vpop.f32.mrb[0].mxu0
      %v797 = vadd.f32 0.0, %v796
      %v798 = vpop.f32.mrb[0].mxu0
      %v799 = vadd.f32 0.0, %v798
      %800 = vmatprep.mubr.f32.mxu0 0.0
      %801 = vmatmul.mubr.f32.gmra.mrb[0].mxu0 %v340
      %v802 = vpop.f32.mrb[0].mxu0
      %v803 = vadd.f32 0.0, %v802
      %v804 = vpop.f32.mrb[0].mxu0
      %v805 = vadd.f32 0.0, %v804
      %806 = vmatprep.mubr.f32.mxu0 0.0
      %807 = vmatmul.mubr.f32.gmra.mrb[0].mxu0 %v341
      %v808 = vpop.f32.mrb[0].mxu0
      %v809 = vadd.f32 0.0, %v808
      %v810 = vpop.f32.mrb[0].mxu0
      %v811 = vadd.f32 0.0, %v810
      %812 = vmatprep.mubr.f32.mxu0 0.0
      %813 = vmatmul.mubr.f32.gmra.mrb[0].mxu0 %v342
      %v814 = vpop.f32.mrb[0].mxu0
      %v815 = vadd.f32 0.0, %v814
      %v816 = vpop.f32.mrb[0].mxu0
      %v817 = vadd.f32 0.0, %v816
      %818 = vmatprep.mubr.f32.mxu0 0.0
      %819 = vmatmul.mubr.f32.gmra.mrb[0].mxu0 %v343
      %v820 = vpop.f32.mrb[0].mxu0
      %v821 = vadd.f32 0.0, %v820
      %v822 = vpop.f32.mrb[0].mxu0
      %v823 = vadd.f32 0.0, %v822
      %824 = vdwg.mxu0
      %v825 = vld [vmem:[%s2] sm:$0x3]
      %v827 = vlaneseq
      %v828 = vshrl.u32 %v827, 7
      %v829 = vsub.s32 0, %v828
      %v830 = vrot.slane %v825, %v829
      %v831 = vlaneseq
      %v832 = vshrl.u32 %v831, 7
      %v833 = vsub.s32 1, %v832
      %v834 = vrot.slane %v825, %v833
      %v837 = vadd.f32 %v830, %v443
      %v838 = vadd.f32 %v834, %v445
      %v839 = vadd.f32 %v830, %v449
      %v840 = vadd.f32 %v834, %v451
      %v841 = vadd.f32 %v830, %v455
      %v842 = vadd.f32 %v834, %v457
      %v843 = vadd.f32 %v830, %v461
      %v844 = vadd.f32 %v834, %v463
      %v845 = vadd.f32 %v830, %v467
      %v846 = vadd.f32 %v834, %v469
      %v847 = vadd.f32 %v830, %v473
      %v848 = vadd.f32 %v834, %v475
      %v849 = vadd.f32 %v830, %v479
      %v850 = vadd.f32 %v834, %v481
      %v851 = vadd.f32 %v830, %v485
      %v852 = vadd.f32 %v834, %v487
      %v853 = vadd.f32 %v830, %v491
      %v854 = vadd.f32 %v834, %v493
      %v855 = vadd.f32 %v830, %v497
      %v856 = vadd.f32 %v834, %v499
      %v857 = vadd.f32 %v830, %v503
      %v858 = vadd.f32 %v834, %v505
      %v859 = vadd.f32 %v830, %v509
      %v860 = vadd.f32 %v834, %v511
      %v861 = vadd.f32 %v830, %v515
      %v862 = vadd.f32 %v834, %v517
      %v863 = vadd.f32 %v830, %v521
      %v864 = vadd.f32 %v834, %v523
      %v865 = vadd.f32 %v830, %v527
      %v866 = vadd.f32 %v834, %v529
      %v867 = vadd.f32 %v830, %v533
      %v868 = vadd.f32 %v834, %v535
      %v869 = vadd.f32 %v830, %v539
      %v870 = vadd.f32 %v834, %v541
      %v871 = vadd.f32 %v830, %v545
      %v872 = vadd.f32 %v834, %v547
      %v873 = vadd.f32 %v830, %v551
      %v874 = vadd.f32 %v834, %v553
      %v875 = vadd.f32 %v830, %v557
      %v876 = vadd.f32 %v834, %v559
      %v877 = vadd.f32 %v830, %v563
      %v878 = vadd.f32 %v834, %v565
      %v879 = vadd.f32 %v830, %v569
      %v880 = vadd.f32 %v834, %v571
      %v881 = vadd.f32 %v830, %v575
      %v882 = vadd.f32 %v834, %v577
      %v883 = vadd.f32 %v830, %v581
      %v884 = vadd.f32 %v834, %v583
      %v885 = vadd.f32 %v830, %v587
      %v886 = vadd.f32 %v834, %v589
      %v887 = vadd.f32 %v830, %v593
      %v888 = vadd.f32 %v834, %v595
      %v889 = vadd.f32 %v830, %v599
      %v890 = vadd.f32 %v834, %v601
      %v891 = vadd.f32 %v830, %v605
      %v892 = vadd.f32 %v834, %v607
      %v893 = vadd.f32 %v830, %v611
      %v894 = vadd.f32 %v834, %v613
      %v895 = vadd.f32 %v830, %v617
      %v896 = vadd.f32 %v834, %v619
      %v897 = vadd.f32 %v830, %v623
      %v898 = vadd.f32 %v834, %v625
      %v899 = vadd.f32 %v830, %v629
      %v900 = vadd.f32 %v834, %v631
      %v901 = vadd.f32 %v830, %v635
      %v902 = vadd.f32 %v834, %v637
      %v903 = vadd.f32 %v830, %v641
      %v904 = vadd.f32 %v834, %v643
      %v905 = vadd.f32 %v830, %v647
      %v906 = vadd.f32 %v834, %v649
      %v907 = vadd.f32 %v830, %v653
      %v908 = vadd.f32 %v834, %v655
      %v909 = vadd.f32 %v830, %v659
      %v910 = vadd.f32 %v834, %v661
      %v911 = vadd.f32 %v830, %v665
      %v912 = vadd.f32 %v834, %v667
      %v913 = vadd.f32 %v830, %v671
      %v914 = vadd.f32 %v834, %v673
      %v915 = vadd.f32 %v830, %v677
      %v916 = vadd.f32 %v834, %v679
      %v917 = vadd.f32 %v830, %v683
      %v918 = vadd.f32 %v834, %v685
      %v919 = vadd.f32 %v830, %v689
      %v920 = vadd.f32 %v834, %v691
      %v921 = vadd.f32 %v830, %v695
      %v922 = vadd.f32 %v834, %v697
      %v923 = vadd.f32 %v830, %v701
      %v924 = vadd.f32 %v834, %v703
      %v925 = vadd.f32 %v830, %v707
      %v926 = vadd.f32 %v834, %v709
      %v927 = vadd.f32 %v830, %v713
      %v928 = vadd.f32 %v834, %v715
      %v929 = vadd.f32 %v830, %v719
      %v930 = vadd.f32 %v834, %v721
      %v931 = vadd.f32 %v830, %v725
      %v932 = vadd.f32 %v834, %v727
      %v933 = vadd.f32 %v830, %v731
      %v934 = vadd.f32 %v834, %v733
      %v935 = vadd.f32 %v830, %v737
      %v936 = vadd.f32 %v834, %v739
      %v937 = vadd.f32 %v830, %v743
      %v938 = vadd.f32 %v834, %v745
      %v939 = vadd.f32 %v830, %v749
      %v940 = vadd.f32 %v834, %v751
      %v941 = vadd.f32 %v830, %v755
      %v942 = vadd.f32 %v834, %v757
      %v943 = vadd.f32 %v830, %v761
      %v944 = vadd.f32 %v834, %v763
      %v945 = vadd.f32 %v830, %v767
      %v946 = vadd.f32 %v834, %v769
      %v947 = vadd.f32 %v830, %v773
      %v948 = vadd.f32 %v834, %v775
      %v949 = vadd.f32 %v830, %v779
      %v950 = vadd.f32 %v834, %v781
      %v951 = vadd.f32 %v830, %v785
      %v952 = vadd.f32 %v834, %v787
      %v953 = vadd.f32 %v830, %v791
      %v954 = vadd.f32 %v834, %v793
      %v955 = vadd.f32 %v830, %v797
      %v956 = vadd.f32 %v834, %v799
      %v957 = vadd.f32 %v830, %v803
      %v958 = vadd.f32 %v834, %v805
      %v959 = vadd.f32 %v830, %v809
      %v960 = vadd.f32 %v834, %v811
      %v961 = vadd.f32 %v830, %v815
      %v962 = vadd.f32 %v834, %v817
      %v963 = vadd.f32 %v830, %v821
      %v964 = vadd.f32 %v834, %v823
      %v965 = vlaneseq
      %v966 = vand.u32 %v965, 127
      %v967 = vadd.s32 %v966, 128
      %vm968 = vcmp.lt.s32.totalorder %v966, 128
      %vm969 = vcmp.lt.s32.totalorder %v967, 128
      %v970 = vsel %vm968, %v837, inf
      %v971 = vsel %vm969, %v838, inf
      %v972 = vsel %vm968, %v839, inf
      %v973 = vsel %vm969, %v840, inf
      %v974 = vsel %vm968, %v841, inf
      %v975 = vsel %vm969, %v842, inf
      %v976 = vsel %vm968, %v843, inf
      %v977 = vsel %vm969, %v844, inf
      %v978 = vsel %vm968, %v845, inf
      %v979 = vsel %vm969, %v846, inf
      %v980 = vsel %vm968, %v847, inf
      %v981 = vsel %vm969, %v848, inf
      %v982 = vsel %vm968, %v849, inf
      %v983 = vsel %vm969, %v850, inf
      %v984 = vsel %vm968, %v851, inf
      %v985 = vsel %vm969, %v852, inf
      %v986 = vsel %vm968, %v853, inf
      %v987 = vsel %vm969, %v854, inf
      %v988 = vsel %vm968, %v855, inf
      %v989 = vsel %vm969, %v856, inf
      %v990 = vsel %vm968, %v857, inf
      %v991 = vsel %vm969, %v858, inf
      %v992 = vsel %vm968, %v859, inf
      %v993 = vsel %vm969, %v860, inf
      %v994 = vsel %vm968, %v861, inf
      %v995 = vsel %vm969, %v862, inf
      %v996 = vsel %vm968, %v863, inf
      %v997 = vsel %vm969, %v864, inf
      %v998 = vsel %vm968, %v865, inf
      %v999 = vsel %vm969, %v866, inf
      %v1000 = vsel %vm968, %v867, inf
      %v1001 = vsel %vm969, %v868, inf
      %v1002 = vsel %vm968, %v869, inf
      %v1003 = vsel %vm969, %v870, inf
      %v1004 = vsel %vm968, %v871, inf
      %v1005 = vsel %vm969, %v872, inf
      %v1006 = vsel %vm968, %v873, inf
      %v1007 = vsel %vm969, %v874, inf
      %v1008 = vsel %vm968, %v875, inf
      %v1009 = vsel %vm969, %v876, inf
      %v1010 = vsel %vm968, %v877, inf
      %v1011 = vsel %vm969, %v878, inf
      %v1012 = vsel %vm968, %v879, inf
      %v1013 = vsel %vm969, %v880, inf
      %v1014 = vsel %vm968, %v881, inf
      %v1015 = vsel %vm969, %v882, inf
      %v1016 = vsel %vm968, %v883, inf
      %v1017 = vsel %vm969, %v884, inf
      %v1018 = vsel %vm968, %v885, inf
      %v1019 = vsel %vm969, %v886, inf
      %v1020 = vsel %vm968, %v887, inf
      %v1021 = vsel %vm969, %v888, inf
      %v1022 = vsel %vm968, %v889, inf
      %v1023 = vsel %vm969, %v890, inf
      %v1024 = vsel %vm968, %v891, inf
      %v1025 = vsel %vm969, %v892, inf
      %v1026 = vsel %vm968, %v893, inf
      %v1027 = vsel %vm969, %v894, inf
      %v1028 = vsel %vm968, %v895, inf
      %v1029 = vsel %vm969, %v896, inf
      %v1030 = vsel %vm968, %v897, inf
      %v1031 = vsel %vm969, %v898, inf
      %v1032 = vsel %vm968, %v899, inf
      %v1033 = vsel %vm969, %v900, inf
      %v1034 = vsel %vm968, %v901, inf
      %v1035 = vsel %vm969, %v902, inf
      %v1036 = vsel %vm968, %v903, inf
      %v1037 = vsel %vm969, %v904, inf
      %v1038 = vsel %vm968, %v905, inf
      %v1039 = vsel %vm969, %v906, inf
      %v1040 = vsel %vm968, %v907, inf
      %v1041 = vsel %vm969, %v908, inf
      %v1042 = vsel %vm968, %v909, inf
      %v1043 = vsel %vm969, %v910, inf
      %v1044 = vsel %vm968, %v911, inf
      %v1045 = vsel %vm969, %v912, inf
      %v1046 = vsel %vm968, %v913, inf
      %v1047 = vsel %vm969, %v914, inf
      %v1048 = vsel %vm968, %v915, inf
      %v1049 = vsel %vm969, %v916, inf
      %v1050 = vsel %vm968, %v917, inf
      %v1051 = vsel %vm969, %v918, inf
      %v1052 = vsel %vm968, %v919, inf
      %v1053 = vsel %vm969, %v920, inf
      %v1054 = vsel %vm968, %v921, inf
      %v1055 = vsel %vm969, %v922, inf
      %v1056 = vsel %vm968, %v923, inf
      %v1057 = vsel %vm969, %v924, inf
      %v1058 = vsel %vm968, %v925, inf
      %v1059 = vsel %vm969, %v926, inf
      %v1060 = vsel %vm968, %v927, inf
      %v1061 = vsel %vm969, %v928, inf
      %v1062 = vsel %vm968, %v929, inf
      %v1063 = vsel %vm969, %v930, inf
      %v1064 = vsel %vm968, %v931, inf
      %v1065 = vsel %vm969, %v932, inf
      %v1066 = vsel %vm968, %v933, inf
      %v1067 = vsel %vm969, %v934, inf
      %v1068 = vsel %vm968, %v935, inf
      %v1069 = vsel %vm969, %v936, inf
      %v1070 = vsel %vm968, %v937, inf
      %v1071 = vsel %vm969, %v938, inf
      %v1072 = vsel %vm968, %v939, inf
      %v1073 = vsel %vm969, %v940, inf
      %v1074 = vsel %vm968, %v941, inf
      %v1075 = vsel %vm969, %v942, inf
      %v1076 = vsel %vm968, %v943, inf
      %v1077 = vsel %vm969, %v944, inf
      %v1078 = vsel %vm968, %v945, inf
      %v1079 = vsel %vm969, %v946, inf
      %v1080 = vsel %vm968, %v947, inf
      %v1081 = vsel %vm969, %v948, inf
      %v1082 = vsel %vm968, %v949, inf
      %v1083 = vsel %vm969, %v950, inf
      %v1084 = vsel %vm968, %v951, inf
      %v1085 = vsel %vm969, %v952, inf
      %v1086 = vsel %vm968, %v953, inf
      %v1087 = vsel %vm969, %v954, inf
      %v1088 = vsel %vm968, %v955, inf
      %v1089 = vsel %vm969, %v956, inf
      %v1090 = vsel %vm968, %v957, inf
      %v1091 = vsel %vm969, %v958, inf
      %v1092 = vsel %vm968, %v959, inf
      %v1093 = vsel %vm969, %v960, inf
      %v1094 = vsel %vm968, %v961, inf
      %v1095 = vsel %vm969, %v962, inf
      %v1096 = vsel %vm968, %v963, inf
      %v1097 = vsel %vm969, %v964, inf
      %v1098 = vsel %vm968, inf, %v837
      %v1099 = vsel %vm969, inf, %v838
      %v1100 = vsel %vm968, inf, %v839
      %v1101 = vsel %vm969, inf, %v840
      %v1102 = vsel %vm968, inf, %v841
      %v1103 = vsel %vm969, inf, %v842
      %v1104 = vsel %vm968, inf, %v843
      %v1105 = vsel %vm969, inf, %v844
      %v1106 = vsel %vm968, inf, %v845
      %v1107 = vsel %vm969, inf, %v846
      %v1108 = vsel %vm968, inf, %v847
      %v1109 = vsel %vm969, inf, %v848
      %v1110 = vsel %vm968, inf, %v849
      %v1111 = vsel %vm969, inf, %v850
      %v1112 = vsel %vm968, inf, %v851
      %v1113 = vsel %vm969, inf, %v852
      %v1114 = vsel %vm968, inf, %v853
      %v1115 = vsel %vm969, inf, %v854
      %v1116 = vsel %vm968, inf, %v855
      %v1117 = vsel %vm969, inf, %v856
      %v1118 = vsel %vm968, inf, %v857
      %v1119 = vsel %vm969, inf, %v858
      %v1120 = vsel %vm968, inf, %v859
      %v1121 = vsel %vm969, inf, %v860
      %v1122 = vsel %vm968, inf, %v861
      %v1123 = vsel %vm969, inf, %v862
      %v1124 = vsel %vm968, inf, %v863
      %v1125 = vsel %vm969, inf, %v864
      %v1126 = vsel %vm968, inf, %v865
      %v1127 = vsel %vm969, inf, %v866
      %v1128 = vsel %vm968, inf, %v867
      %v1129 = vsel %vm969, inf, %v868
      %v1130 = vsel %vm968, inf, %v869
      %v1131 = vsel %vm969, inf, %v870
      %v1132 = vsel %vm968, inf, %v871
      %v1133 = vsel %vm969, inf, %v872
      %v1134 = vsel %vm968, inf, %v873
      %v1135 = vsel %vm969, inf, %v874
      %v1136 = vsel %vm968, inf, %v875
      %v1137 = vsel %vm969, inf, %v876
      %v1138 = vsel %vm968, inf, %v877
      %v1139 = vsel %vm969, inf, %v878
      %v1140 = vsel %vm968, inf, %v879
      %v1141 = vsel %vm969, inf, %v880
      %v1142 = vsel %vm968, inf, %v881
      %v1143 = vsel %vm969, inf, %v882
      %v1144 = vsel %vm968, inf, %v883
      %v1145 = vsel %vm969, inf, %v884
      %v1146 = vsel %vm968, inf, %v885
      %v1147 = vsel %vm969, inf, %v886
      %v1148 = vsel %vm968, inf, %v887
      %v1149 = vsel %vm969, inf, %v888
      %v1150 = vsel %vm968, inf, %v889
      %v1151 = vsel %vm969, inf, %v890
      %v1152 = vsel %vm968, inf, %v891
      %v1153 = vsel %vm969, inf, %v892
      %v1154 = vsel %vm968, inf, %v893
      %v1155 = vsel %vm969, inf, %v894
      %v1156 = vsel %vm968, inf, %v895
      %v1157 = vsel %vm969, inf, %v896
      %v1158 = vsel %vm968, inf, %v897
      %v1159 = vsel %vm969, inf, %v898
      %v1160 = vsel %vm968, inf, %v899
      %v1161 = vsel %vm969, inf, %v900
      %v1162 = vsel %vm968, inf, %v901
      %v1163 = vsel %vm969, inf, %v902
      %v1164 = vsel %vm968, inf, %v903
      %v1165 = vsel %vm969, inf, %v904
      %v1166 = vsel %vm968, inf, %v905
      %v1167 = vsel %vm969, inf, %v906
      %v1168 = vsel %vm968, inf, %v907
      %v1169 = vsel %vm969, inf, %v908
      %v1170 = vsel %vm968, inf, %v909
      %v1171 = vsel %vm969, inf, %v910
      %v1172 = vsel %vm968, inf, %v911
      %v1173 = vsel %vm969, inf, %v912
      %v1174 = vsel %vm968, inf, %v913
      %v1175 = vsel %vm969, inf, %v914
      %v1176 = vsel %vm968, inf, %v915
      %v1177 = vsel %vm969, inf, %v916
      %v1178 = vsel %vm968, inf, %v917
      %v1179 = vsel %vm969, inf, %v918
      %v1180 = vsel %vm968, inf, %v919
      %v1181 = vsel %vm969, inf, %v920
      %v1182 = vsel %vm968, inf, %v921
      %v1183 = vsel %vm969, inf, %v922
      %v1184 = vsel %vm968, inf, %v923
      %v1185 = vsel %vm969, inf, %v924
      %v1186 = vsel %vm968, inf, %v925
      %v1187 = vsel %vm969, inf, %v926
      %v1188 = vsel %vm968, inf, %v927
      %v1189 = vsel %vm969, inf, %v928
      %v1190 = vsel %vm968, inf, %v929
      %v1191 = vsel %vm969, inf, %v930
      %v1192 = vsel %vm968, inf, %v931
      %v1193 = vsel %vm969, inf, %v932
      %v1194 = vsel %vm968, inf, %v933
      %v1195 = vsel %vm969, inf, %v934
      %v1196 = vsel %vm968, inf, %v935
      %v1197 = vsel %vm969, inf, %v936
      %v1198 = vsel %vm968, inf, %v937
      %v1199 = vsel %vm969, inf, %v938
      %v1200 = vsel %vm968, inf, %v939
      %v1201 = vsel %vm969, inf, %v940
      %v1202 = vsel %vm968, inf, %v941
      %v1203 = vsel %vm969, inf, %v942
      %v1204 = vsel %vm968, inf, %v943
      %v1205 = vsel %vm969, inf, %v944
      %v1206 = vsel %vm968, inf, %v945
      %v1207 = vsel %vm969, inf, %v946
      %v1208 = vsel %vm968, inf, %v947
      %v1209 = vsel %vm969, inf, %v948
      %v1210 = vsel %vm968, inf, %v949
      %v1211 = vsel %vm969, inf, %v950
      %v1212 = vsel %vm968, inf, %v951
      %v1213 = vsel %vm969, inf, %v952
      %v1214 = vsel %vm968, inf, %v953
      %v1215 = vsel %vm969, inf, %v954
      %v1216 = vsel %vm968, inf, %v955
      %v1217 = vsel %vm969, inf, %v956
      %v1218 = vsel %vm968, inf, %v957
      %v1219 = vsel %vm969, inf, %v958
      %v1220 = vsel %vm968, inf, %v959
      %v1221 = vsel %vm969, inf, %v960
      %v1222 = vsel %vm968, inf, %v961
      %v1223 = vsel %vm969, inf, %v962
      %v1224 = vsel %vm968, inf, %v963
      %v1225 = vsel %vm969, inf, %v964
      %v1226 = vmin.f32 %v970, %v971
      %1227 = vmin.xlane.f32.xlu0 %v1226
      %v1228 = vpop.xlane.xlu0 %1227
      %v1229 = vmin.f32 %v972, %v973
      %1230 = vmin.xlane.f32.xlu0 %v1229
      %v1231 = vpop.xlane.xlu0 %1230
      %v1232 = vmin.f32 %v974, %v975
      %1233 = vmin.xlane.f32.xlu0 %v1232
      %v1234 = vpop.xlane.xlu0 %1233
      %v1235 = vmin.f32 %v976, %v977
      %1236 = vmin.xlane.f32.xlu0 %v1235
      %v1237 = vpop.xlane.xlu0 %1236
      %v1238 = vmin.f32 %v978, %v979
      %1239 = vmin.xlane.f32.xlu0 %v1238
      %v1240 = vpop.xlane.xlu0 %1239
      %v1241 = vmin.f32 %v980, %v981
      %1242 = vmin.xlane.f32.xlu0 %v1241
      %v1243 = vpop.xlane.xlu0 %1242
      %v1244 = vmin.f32 %v982, %v983
      %1245 = vmin.xlane.f32.xlu0 %v1244
      %v1246 = vpop.xlane.xlu0 %1245
      %v1247 = vmin.f32 %v984, %v985
      %1248 = vmin.xlane.f32.xlu0 %v1247
      %v1249 = vpop.xlane.xlu0 %1248
      %v1250 = vmin.f32 %v986, %v987
      %1251 = vmin.xlane.f32.xlu0 %v1250
      %v1252 = vpop.xlane.xlu0 %1251
      %v1253 = vmin.f32 %v988, %v989
      %1254 = vmin.xlane.f32.xlu0 %v1253
      %v1255 = vpop.xlane.xlu0 %1254
      %v1256 = vmin.f32 %v990, %v991
      %1257 = vmin.xlane.f32.xlu0 %v1256
      %v1258 = vpop.xlane.xlu0 %1257
      %v1259 = vmin.f32 %v992, %v993
      %1260 = vmin.xlane.f32.xlu0 %v1259
      %v1261 = vpop.xlane.xlu0 %1260
      %v1262 = vmin.f32 %v994, %v995
      %1263 = vmin.xlane.f32.xlu0 %v1262
      %v1264 = vpop.xlane.xlu0 %1263
      %v1265 = vmin.f32 %v996, %v997
      %1266 = vmin.xlane.f32.xlu0 %v1265
      %v1267 = vpop.xlane.xlu0 %1266
      %v1268 = vmin.f32 %v998, %v999
      %1269 = vmin.xlane.f32.xlu0 %v1268
      %v1270 = vpop.xlane.xlu0 %1269
      %v1271 = vmin.f32 %v1000, %v1001
      %1272 = vmin.xlane.f32.xlu0 %v1271
      %v1273 = vpop.xlane.xlu0 %1272
      %v1274 = vmin.f32 %v1002, %v1003
      %1275 = vmin.xlane.f32.xlu0 %v1274
      %v1276 = vpop.xlane.xlu0 %1275
      %v1277 = vmin.f32 %v1004, %v1005
      %1278 = vmin.xlane.f32.xlu0 %v1277
      %v1279 = vpop.xlane.xlu0 %1278
      %v1280 = vmin.f32 %v1006, %v1007
      %1281 = vmin.xlane.f32.xlu0 %v1280
      %v1282 = vpop.xlane.xlu0 %1281
      %v1283 = vmin.f32 %v1008, %v1009
      %1284 = vmin.xlane.f32.xlu0 %v1283
      %v1285 = vpop.xlane.xlu0 %1284
      %v1286 = vmin.f32 %v1010, %v1011
      %1287 = vmin.xlane.f32.xlu0 %v1286
      %v1288 = vpop.xlane.xlu0 %1287
      %v1289 = vmin.f32 %v1012, %v1013
      %1290 = vmin.xlane.f32.xlu0 %v1289
      %v1291 = vpop.xlane.xlu0 %1290
      %v1292 = vmin.f32 %v1014, %v1015
      %1293 = vmin.xlane.f32.xlu0 %v1292
      %v1294 = vpop.xlane.xlu0 %1293
      %v1295 = vmin.f32 %v1016, %v1017
      %1296 = vmin.xlane.f32.xlu0 %v1295
      %v1297 = vpop.xlane.xlu0 %1296
      %v1298 = vmin.f32 %v1018, %v1019
      %1299 = vmin.xlane.f32.xlu0 %v1298
      %v1300 = vpop.xlane.xlu0 %1299
      %v1301 = vmin.f32 %v1020, %v1021
      %1302 = vmin.xlane.f32.xlu0 %v1301
      %v1303 = vpop.xlane.xlu0 %1302
      %v1304 = vmin.f32 %v1022, %v1023
      %1305 = vmin.xlane.f32.xlu0 %v1304
      %v1306 = vpop.xlane.xlu0 %1305
      %v1307 = vmin.f32 %v1024, %v1025
      %1308 = vmin.xlane.f32.xlu0 %v1307
      %v1309 = vpop.xlane.xlu0 %1308
      %v1310 = vmin.f32 %v1026, %v1027
      %1311 = vmin.xlane.f32.xlu0 %v1310
      %v1312 = vpop.xlane.xlu0 %1311
      %v1313 = vmin.f32 %v1028, %v1029
      %1314 = vmin.xlane.f32.xlu0 %v1313
      %v1315 = vpop.xlane.xlu0 %1314
      %v1316 = vmin.f32 %v1030, %v1031
      %1317 = vmin.xlane.f32.xlu0 %v1316
      %v1318 = vpop.xlane.xlu0 %1317
      %v1319 = vmin.f32 %v1032, %v1033
      %1320 = vmin.xlane.f32.xlu0 %v1319
      %v1321 = vpop.xlane.xlu0 %1320
      %v1322 = vmin.f32 %v1034, %v1035
      %1323 = vmin.xlane.f32.xlu0 %v1322
      %v1324 = vpop.xlane.xlu0 %1323
      %v1325 = vmin.f32 %v1036, %v1037
      %1326 = vmin.xlane.f32.xlu0 %v1325
      %v1327 = vpop.xlane.xlu0 %1326
      %v1328 = vmin.f32 %v1038, %v1039
      %1329 = vmin.xlane.f32.xlu0 %v1328
      %v1330 = vpop.xlane.xlu0 %1329
      %v1331 = vmin.f32 %v1040, %v1041
      %1332 = vmin.xlane.f32.xlu0 %v1331
      %v1333 = vpop.xlane.xlu0 %1332
      %v1334 = vmin.f32 %v1042, %v1043
      %1335 = vmin.xlane.f32.xlu0 %v1334
      %v1336 = vpop.xlane.xlu0 %1335
      %v1337 = vmin.f32 %v1044, %v1045
      %1338 = vmin.xlane.f32.xlu0 %v1337
      %v1339 = vpop.xlane.xlu0 %1338
      %v1340 = vmin.f32 %v1046, %v1047
      %1341 = vmin.xlane.f32.xlu0 %v1340
      %v1342 = vpop.xlane.xlu0 %1341
      %v1343 = vmin.f32 %v1048, %v1049
      %1344 = vmin.xlane.f32.xlu0 %v1343
      %v1345 = vpop.xlane.xlu0 %1344
      %v1346 = vmin.f32 %v1050, %v1051
      %1347 = vmin.xlane.f32.xlu0 %v1346
      %v1348 = vpop.xlane.xlu0 %1347
      %v1349 = vmin.f32 %v1052, %v1053
      %1350 = vmin.xlane.f32.xlu0 %v1349
      %v1351 = vpop.xlane.xlu0 %1350
      %v1352 = vmin.f32 %v1054, %v1055
      %1353 = vmin.xlane.f32.xlu0 %v1352
      %v1354 = vpop.xlane.xlu0 %1353
      %v1355 = vmin.f32 %v1056, %v1057
      %1356 = vmin.xlane.f32.xlu0 %v1355
      %v1357 = vpop.xlane.xlu0 %1356
      %v1358 = vmin.f32 %v1058, %v1059
      %1359 = vmin.xlane.f32.xlu0 %v1358
      %v1360 = vpop.xlane.xlu0 %1359
      %v1361 = vmin.f32 %v1060, %v1061
      %1362 = vmin.xlane.f32.xlu0 %v1361
      %v1363 = vpop.xlane.xlu0 %1362
      %v1364 = vmin.f32 %v1062, %v1063
      %1365 = vmin.xlane.f32.xlu0 %v1364
      %v1366 = vpop.xlane.xlu0 %1365
      %v1367 = vmin.f32 %v1064, %v1065
      %1368 = vmin.xlane.f32.xlu0 %v1367
      %v1369 = vpop.xlane.xlu0 %1368
      %v1370 = vmin.f32 %v1066, %v1067
      %1371 = vmin.xlane.f32.xlu0 %v1370
      %v1372 = vpop.xlane.xlu0 %1371
      %v1373 = vmin.f32 %v1068, %v1069
      %1374 = vmin.xlane.f32.xlu0 %v1373
      %v1375 = vpop.xlane.xlu0 %1374
      %v1376 = vmin.f32 %v1070, %v1071
      %1377 = vmin.xlane.f32.xlu0 %v1376
      %v1378 = vpop.xlane.xlu0 %1377
      %v1379 = vmin.f32 %v1072, %v1073
      %1380 = vmin.xlane.f32.xlu0 %v1379
      %v1381 = vpop.xlane.xlu0 %1380
      %v1382 = vmin.f32 %v1074, %v1075
      %1383 = vmin.xlane.f32.xlu0 %v1382
      %v1384 = vpop.xlane.xlu0 %1383
      %v1385 = vmin.f32 %v1076, %v1077
      %1386 = vmin.xlane.f32.xlu0 %v1385
      %v1387 = vpop.xlane.xlu0 %1386
      %v1388 = vmin.f32 %v1078, %v1079
      %1389 = vmin.xlane.f32.xlu0 %v1388
      %v1390 = vpop.xlane.xlu0 %1389
      %v1391 = vmin.f32 %v1080, %v1081
      %1392 = vmin.xlane.f32.xlu0 %v1391
      %v1393 = vpop.xlane.xlu0 %1392
      %v1394 = vmin.f32 %v1082, %v1083
      %1395 = vmin.xlane.f32.xlu0 %v1394
      %v1396 = vpop.xlane.xlu0 %1395
      %v1397 = vmin.f32 %v1084, %v1085
      %1398 = vmin.xlane.f32.xlu0 %v1397
      %v1399 = vpop.xlane.xlu0 %1398
      %v1400 = vmin.f32 %v1086, %v1087
      %1401 = vmin.xlane.f32.xlu0 %v1400
      %v1402 = vpop.xlane.xlu0 %1401
      %v1403 = vmin.f32 %v1088, %v1089
      %1404 = vmin.xlane.f32.xlu0 %v1403
      %v1405 = vpop.xlane.xlu0 %1404
      %v1406 = vmin.f32 %v1090, %v1091
      %1407 = vmin.xlane.f32.xlu0 %v1406
      %v1408 = vpop.xlane.xlu0 %1407
      %v1409 = vmin.f32 %v1092, %v1093
      %1410 = vmin.xlane.f32.xlu0 %v1409
      %v1411 = vpop.xlane.xlu0 %1410
      %v1412 = vmin.f32 %v1094, %v1095
      %1413 = vmin.xlane.f32.xlu0 %v1412
      %v1414 = vpop.xlane.xlu0 %1413
      %v1415 = vmin.f32 %v1096, %v1097
      %1416 = vmin.xlane.f32.xlu0 %v1415
      %v1417 = vpop.xlane.xlu0 %1416
      %v1418 = vmin.f32 %v1098, %v1099
      %1419 = vmin.xlane.f32.xlu0 %v1418
      %v1420 = vpop.xlane.xlu0 %1419
      %v1421 = vmin.f32 %v1100, %v1101
      %1422 = vmin.xlane.f32.xlu0 %v1421
      %v1423 = vpop.xlane.xlu0 %1422
      %v1424 = vmin.f32 %v1102, %v1103
      %1425 = vmin.xlane.f32.xlu0 %v1424
      %v1426 = vpop.xlane.xlu0 %1425
      %v1427 = vmin.f32 %v1104, %v1105
      %1428 = vmin.xlane.f32.xlu0 %v1427
      %v1429 = vpop.xlane.xlu0 %1428
      %v1430 = vmin.f32 %v1106, %v1107
      %1431 = vmin.xlane.f32.xlu0 %v1430
      %v1432 = vpop.xlane.xlu0 %1431
      %v1433 = vmin.f32 %v1108, %v1109
      %1434 = vmin.xlane.f32.xlu0 %v1433
      %v1435 = vpop.xlane.xlu0 %1434
      %v1436 = vmin.f32 %v1110, %v1111
      %1437 = vmin.xlane.f32.xlu0 %v1436
      %v1438 = vpop.xlane.xlu0 %1437
      %v1439 = vmin.f32 %v1112, %v1113
      %1440 = vmin.xlane.f32.xlu0 %v1439
      %v1441 = vpop.xlane.xlu0 %1440
      %v1442 = vmin.f32 %v1114, %v1115
      %1443 = vmin.xlane.f32.xlu0 %v1442
      %v1444 = vpop.xlane.xlu0 %1443
      %v1445 = vmin.f32 %v1116, %v1117
      %1446 = vmin.xlane.f32.xlu0 %v1445
      %v1447 = vpop.xlane.xlu0 %1446
      %v1448 = vmin.f32 %v1118, %v1119
      %1449 = vmin.xlane.f32.xlu0 %v1448
      %v1450 = vpop.xlane.xlu0 %1449
      %v1451 = vmin.f32 %v1120, %v1121
      %1452 = vmin.xlane.f32.xlu0 %v1451
      %v1453 = vpop.xlane.xlu0 %1452
      %v1454 = vmin.f32 %v1122, %v1123
      %1455 = vmin.xlane.f32.xlu0 %v1454
      %v1456 = vpop.xlane.xlu0 %1455
      %v1457 = vmin.f32 %v1124, %v1125
      %1458 = vmin.xlane.f32.xlu0 %v1457
      %v1459 = vpop.xlane.xlu0 %1458
      %v1460 = vmin.f32 %v1126, %v1127
      %1461 = vmin.xlane.f32.xlu0 %v1460
      %v1462 = vpop.xlane.xlu0 %1461
      %v1463 = vmin.f32 %v1128, %v1129
      %1464 = vmin.xlane.f32.xlu0 %v1463
      %v1465 = vpop.xlane.xlu0 %1464
      %v1466 = vmin.f32 %v1130, %v1131
      %1467 = vmin.xlane.f32.xlu0 %v1466
      %v1468 = vpop.xlane.xlu0 %1467
      %v1469 = vmin.f32 %v1132, %v1133
      %1470 = vmin.xlane.f32.xlu0 %v1469
      %v1471 = vpop.xlane.xlu0 %1470
      %v1472 = vmin.f32 %v1134, %v1135
      %1473 = vmin.xlane.f32.xlu0 %v1472
      %v1474 = vpop.xlane.xlu0 %1473
      %v1475 = vmin.f32 %v1136, %v1137
      %1476 = vmin.xlane.f32.xlu0 %v1475
      %v1477 = vpop.xlane.xlu0 %1476
      %v1478 = vmin.f32 %v1138, %v1139
      %1479 = vmin.xlane.f32.xlu0 %v1478
      %v1480 = vpop.xlane.xlu0 %1479
      %v1481 = vmin.f32 %v1140, %v1141
      %1482 = vmin.xlane.f32.xlu0 %v1481
      %v1483 = vpop.xlane.xlu0 %1482
      %v1484 = vmin.f32 %v1142, %v1143
      %1485 = vmin.xlane.f32.xlu0 %v1484
      %v1486 = vpop.xlane.xlu0 %1485
      %v1487 = vmin.f32 %v1144, %v1145
      %1488 = vmin.xlane.f32.xlu0 %v1487
      %v1489 = vpop.xlane.xlu0 %1488
      %v1490 = vmin.f32 %v1146, %v1147
      %1491 = vmin.xlane.f32.xlu0 %v1490
      %v1492 = vpop.xlane.xlu0 %1491
      %v1493 = vmin.f32 %v1148, %v1149
      %1494 = vmin.xlane.f32.xlu0 %v1493
      %v1495 = vpop.xlane.xlu0 %1494
      %v1496 = vmin.f32 %v1150, %v1151
      %1497 = vmin.xlane.f32.xlu0 %v1496
      %v1498 = vpop.xlane.xlu0 %1497
      %v1499 = vmin.f32 %v1152, %v1153
      %1500 = vmin.xlane.f32.xlu0 %v1499
      %v1501 = vpop.xlane.xlu0 %1500
      %v1502 = vmin.f32 %v1154, %v1155
      %1503 = vmin.xlane.f32.xlu0 %v1502
      %v1504 = vpop.xlane.xlu0 %1503
      %v1505 = vmin.f32 %v1156, %v1157
      %1506 = vmin.xlane.f32.xlu0 %v1505
      %v1507 = vpop.xlane.xlu0 %1506
      %v1508 = vmin.f32 %v1158, %v1159
      %1509 = vmin.xlane.f32.xlu0 %v1508
      %v1510 = vpop.xlane.xlu0 %1509
      %v1511 = vmin.f32 %v1160, %v1161
      %1512 = vmin.xlane.f32.xlu0 %v1511
      %v1513 = vpop.xlane.xlu0 %1512
      %v1514 = vmin.f32 %v1162, %v1163
      %1515 = vmin.xlane.f32.xlu0 %v1514
      %v1516 = vpop.xlane.xlu0 %1515
      %v1517 = vmin.f32 %v1164, %v1165
      %1518 = vmin.xlane.f32.xlu0 %v1517
      %v1519 = vpop.xlane.xlu0 %1518
      %v1520 = vmin.f32 %v1166, %v1167
      %1521 = vmin.xlane.f32.xlu0 %v1520
      %v1522 = vpop.xlane.xlu0 %1521
      %v1523 = vmin.f32 %v1168, %v1169
      %1524 = vmin.xlane.f32.xlu0 %v1523
      %v1525 = vpop.xlane.xlu0 %1524
      %v1526 = vmin.f32 %v1170, %v1171
      %1527 = vmin.xlane.f32.xlu0 %v1526
      %v1528 = vpop.xlane.xlu0 %1527
      %v1529 = vmin.f32 %v1172, %v1173
      %1530 = vmin.xlane.f32.xlu0 %v1529
      %v1531 = vpop.xlane.xlu0 %1530
      %v1532 = vmin.f32 %v1174, %v1175
      %1533 = vmin.xlane.f32.xlu0 %v1532
      %v1534 = vpop.xlane.xlu0 %1533
      %v1535 = vmin.f32 %v1176, %v1177
      %1536 = vmin.xlane.f32.xlu0 %v1535
      %v1537 = vpop.xlane.xlu0 %1536
      %v1538 = vmin.f32 %v1178, %v1179
      %1539 = vmin.xlane.f32.xlu0 %v1538
      %v1540 = vpop.xlane.xlu0 %1539
      %v1541 = vmin.f32 %v1180, %v1181
      %1542 = vmin.xlane.f32.xlu0 %v1541
      %v1543 = vpop.xlane.xlu0 %1542
      %v1544 = vmin.f32 %v1182, %v1183
      %1545 = vmin.xlane.f32.xlu0 %v1544
      %v1546 = vpop.xlane.xlu0 %1545
      %v1547 = vmin.f32 %v1184, %v1185
      %1548 = vmin.xlane.f32.xlu0 %v1547
      %v1549 = vpop.xlane.xlu0 %1548
      %v1550 = vmin.f32 %v1186, %v1187
      %1551 = vmin.xlane.f32.xlu0 %v1550
      %v1552 = vpop.xlane.xlu0 %1551
      %v1553 = vmin.f32 %v1188, %v1189
      %1554 = vmin.xlane.f32.xlu0 %v1553
      %v1555 = vpop.xlane.xlu0 %1554
      %v1556 = vmin.f32 %v1190, %v1191
      %1557 = vmin.xlane.f32.xlu0 %v1556
      %v1558 = vpop.xlane.xlu0 %1557
      %v1559 = vmin.f32 %v1192, %v1193
      %1560 = vmin.xlane.f32.xlu0 %v1559
      %v1561 = vpop.xlane.xlu0 %1560
      %v1562 = vmin.f32 %v1194, %v1195
      %1563 = vmin.xlane.f32.xlu0 %v1562
      %v1564 = vpop.xlane.xlu0 %1563
      %v1565 = vmin.f32 %v1196, %v1197
      %1566 = vmin.xlane.f32.xlu0 %v1565
      %v1567 = vpop.xlane.xlu0 %1566
      %v1568 = vmin.f32 %v1198, %v1199
      %1569 = vmin.xlane.f32.xlu0 %v1568
      %v1570 = vpop.xlane.xlu0 %1569
      %v1571 = vmin.f32 %v1200, %v1201
      %1572 = vmin.xlane.f32.xlu0 %v1571
      %v1573 = vpop.xlane.xlu0 %1572
      %v1574 = vmin.f32 %v1202, %v1203
      %1575 = vmin.xlane.f32.xlu0 %v1574
      %v1576 = vpop.xlane.xlu0 %1575
      %v1577 = vmin.f32 %v1204, %v1205
      %1578 = vmin.xlane.f32.xlu0 %v1577
      %v1579 = vpop.xlane.xlu0 %1578
      %v1580 = vmin.f32 %v1206, %v1207
      %1581 = vmin.xlane.f32.xlu0 %v1580
      %v1582 = vpop.xlane.xlu0 %1581
      %v1583 = vmin.f32 %v1208, %v1209
      %1584 = vmin.xlane.f32.xlu0 %v1583
      %v1585 = vpop.xlane.xlu0 %1584
      %v1586 = vmin.f32 %v1210, %v1211
      %1587 = vmin.xlane.f32.xlu0 %v1586
      %v1588 = vpop.xlane.xlu0 %1587
      %v1589 = vmin.f32 %v1212, %v1213
      %1590 = vmin.xlane.f32.xlu0 %v1589
      %v1591 = vpop.xlane.xlu0 %1590
      %v1592 = vmin.f32 %v1214, %v1215
      %1593 = vmin.xlane.f32.xlu0 %v1592
      %v1594 = vpop.xlane.xlu0 %1593
      %v1595 = vmin.f32 %v1216, %v1217
      %1596 = vmin.xlane.f32.xlu0 %v1595
      %v1597 = vpop.xlane.xlu0 %1596
      %v1598 = vmin.f32 %v1218, %v1219
      %1599 = vmin.xlane.f32.xlu0 %v1598
      %v1600 = vpop.xlane.xlu0 %1599
      %v1601 = vmin.f32 %v1220, %v1221
      %1602 = vmin.xlane.f32.xlu0 %v1601
      %v1603 = vpop.xlane.xlu0 %1602
      %v1604 = vmin.f32 %v1222, %v1223
      %1605 = vmin.xlane.f32.xlu0 %v1604
      %v1606 = vpop.xlane.xlu0 %1605
      %v1607 = vmin.f32 %v1224, %v1225
      %1608 = vmin.xlane.f32.xlu0 %v1607
      %v1609 = vpop.xlane.xlu0 %1608
      %vm1610 = vcmp.eq.f32.partialorder %v970, %v1228
      %vm1611 = vcmp.eq.f32.partialorder %v971, %v1228
      %vm1612 = vcmp.eq.f32.partialorder %v972, %v1231
      %vm1613 = vcmp.eq.f32.partialorder %v973, %v1231
      %vm1614 = vcmp.eq.f32.partialorder %v974, %v1234
      %vm1615 = vcmp.eq.f32.partialorder %v975, %v1234
      %vm1616 = vcmp.eq.f32.partialorder %v976, %v1237
      %vm1617 = vcmp.eq.f32.partialorder %v977, %v1237
      %vm1618 = vcmp.eq.f32.partialorder %v978, %v1240
      %vm1619 = vcmp.eq.f32.partialorder %v979, %v1240
      %vm1620 = vcmp.eq.f32.partialorder %v980, %v1243
      %vm1621 = vcmp.eq.f32.partialorder %v981, %v1243
      %vm1622 = vcmp.eq.f32.partialorder %v982, %v1246
      %vm1623 = vcmp.eq.f32.partialorder %v983, %v1246
      %vm1624 = vcmp.eq.f32.partialorder %v984, %v1249
      %vm1625 = vcmp.eq.f32.partialorder %v985, %v1249
      %vm1626 = vcmp.eq.f32.partialorder %v986, %v1252
      %vm1627 = vcmp.eq.f32.partialorder %v987, %v1252
      %vm1628 = vcmp.eq.f32.partialorder %v988, %v1255
      %vm1629 = vcmp.eq.f32.partialorder %v989, %v1255
      %vm1630 = vcmp.eq.f32.partialorder %v990, %v1258
      %vm1631 = vcmp.eq.f32.partialorder %v991, %v1258
      %vm1632 = vcmp.eq.f32.partialorder %v992, %v1261
      %vm1633 = vcmp.eq.f32.partialorder %v993, %v1261
      %vm1634 = vcmp.eq.f32.partialorder %v994, %v1264
      %vm1635 = vcmp.eq.f32.partialorder %v995, %v1264
      %vm1636 = vcmp.eq.f32.partialorder %v996, %v1267
      %vm1637 = vcmp.eq.f32.partialorder %v997, %v1267
      %vm1638 = vcmp.eq.f32.partialorder %v998, %v1270
      %vm1639 = vcmp.eq.f32.partialorder %v999, %v1270
      %vm1640 = vcmp.eq.f32.partialorder %v1000, %v1273
      %vm1641 = vcmp.eq.f32.partialorder %v1001, %v1273
      %vm1642 = vcmp.eq.f32.partialorder %v1002, %v1276
      %vm1643 = vcmp.eq.f32.partialorder %v1003, %v1276
      %vm1644 = vcmp.eq.f32.partialorder %v1004, %v1279
      %vm1645 = vcmp.eq.f32.partialorder %v1005, %v1279
      %vm1646 = vcmp.eq.f32.partialorder %v1006, %v1282
      %vm1647 = vcmp.eq.f32.partialorder %v1007, %v1282
      %vm1648 = vcmp.eq.f32.partialorder %v1008, %v1285
      %vm1649 = vcmp.eq.f32.partialorder %v1009, %v1285
      %vm1650 = vcmp.eq.f32.partialorder %v1010, %v1288
      %vm1651 = vcmp.eq.f32.partialorder %v1011, %v1288
      %vm1652 = vcmp.eq.f32.partialorder %v1012, %v1291
      %vm1653 = vcmp.eq.f32.partialorder %v1013, %v1291
      %vm1654 = vcmp.eq.f32.partialorder %v1014, %v1294
      %vm1655 = vcmp.eq.f32.partialorder %v1015, %v1294
      %vm1656 = vcmp.eq.f32.partialorder %v1016, %v1297
      %vm1657 = vcmp.eq.f32.partialorder %v1017, %v1297
      %vm1658 = vcmp.eq.f32.partialorder %v1018, %v1300
      %vm1659 = vcmp.eq.f32.partialorder %v1019, %v1300
      %vm1660 = vcmp.eq.f32.partialorder %v1020, %v1303
      %vm1661 = vcmp.eq.f32.partialorder %v1021, %v1303
      %vm1662 = vcmp.eq.f32.partialorder %v1022, %v1306
      %vm1663 = vcmp.eq.f32.partialorder %v1023, %v1306
      %vm1664 = vcmp.eq.f32.partialorder %v1024, %v1309
      %vm1665 = vcmp.eq.f32.partialorder %v1025, %v1309
      %vm1666 = vcmp.eq.f32.partialorder %v1026, %v1312
      %vm1667 = vcmp.eq.f32.partialorder %v1027, %v1312
      %vm1668 = vcmp.eq.f32.partialorder %v1028, %v1315
      %vm1669 = vcmp.eq.f32.partialorder %v1029, %v1315
      %vm1670 = vcmp.eq.f32.partialorder %v1030, %v1318
      %vm1671 = vcmp.eq.f32.partialorder %v1031, %v1318
      %vm1672 = vcmp.eq.f32.partialorder %v1032, %v1321
      %vm1673 = vcmp.eq.f32.partialorder %v1033, %v1321
      %vm1674 = vcmp.eq.f32.partialorder %v1034, %v1324
      %vm1675 = vcmp.eq.f32.partialorder %v1035, %v1324
      %vm1676 = vcmp.eq.f32.partialorder %v1036, %v1327
      %vm1677 = vcmp.eq.f32.partialorder %v1037, %v1327
      %vm1678 = vcmp.eq.f32.partialorder %v1038, %v1330
      %vm1679 = vcmp.eq.f32.partialorder %v1039, %v1330
      %vm1680 = vcmp.eq.f32.partialorder %v1040, %v1333
      %vm1681 = vcmp.eq.f32.partialorder %v1041, %v1333
      %vm1682 = vcmp.eq.f32.partialorder %v1042, %v1336
      %vm1683 = vcmp.eq.f32.partialorder %v1043, %v1336
      %vm1684 = vcmp.eq.f32.partialorder %v1044, %v1339
      %vm1685 = vcmp.eq.f32.partialorder %v1045, %v1339
      %vm1686 = vcmp.eq.f32.partialorder %v1046, %v1342
      %vm1687 = vcmp.eq.f32.partialorder %v1047, %v1342
      %vm1688 = vcmp.eq.f32.partialorder %v1048, %v1345
      %vm1689 = vcmp.eq.f32.partialorder %v1049, %v1345
      %vm1690 = vcmp.eq.f32.partialorder %v1050, %v1348
      %vm1691 = vcmp.eq.f32.partialorder %v1051, %v1348
      %vm1692 = vcmp.eq.f32.partialorder %v1052, %v1351
      %vm1693 = vcmp.eq.f32.partialorder %v1053, %v1351
      %vm1694 = vcmp.eq.f32.partialorder %v1054, %v1354
      %vm1695 = vcmp.eq.f32.partialorder %v1055, %v1354
      %vm1696 = vcmp.eq.f32.partialorder %v1056, %v1357
      %vm1697 = vcmp.eq.f32.partialorder %v1057, %v1357
      %vm1698 = vcmp.eq.f32.partialorder %v1058, %v1360
      %vm1699 = vcmp.eq.f32.partialorder %v1059, %v1360
      %vm1700 = vcmp.eq.f32.partialorder %v1060, %v1363
      %vm1701 = vcmp.eq.f32.partialorder %v1061, %v1363
      %vm1702 = vcmp.eq.f32.partialorder %v1062, %v1366
      %vm1703 = vcmp.eq.f32.partialorder %v1063, %v1366
      %vm1704 = vcmp.eq.f32.partialorder %v1064, %v1369
      %vm1705 = vcmp.eq.f32.partialorder %v1065, %v1369
      %vm1706 = vcmp.eq.f32.partialorder %v1066, %v1372
      %vm1707 = vcmp.eq.f32.partialorder %v1067, %v1372
      %vm1708 = vcmp.eq.f32.partialorder %v1068, %v1375
      %vm1709 = vcmp.eq.f32.partialorder %v1069, %v1375
      %vm1710 = vcmp.eq.f32.partialorder %v1070, %v1378
      %vm1711 = vcmp.eq.f32.partialorder %v1071, %v1378
      %vm1712 = vcmp.eq.f32.partialorder %v1072, %v1381
      %vm1713 = vcmp.eq.f32.partialorder %v1073, %v1381
      %vm1714 = vcmp.eq.f32.partialorder %v1074, %v1384
      %vm1715 = vcmp.eq.f32.partialorder %v1075, %v1384
      %vm1716 = vcmp.eq.f32.partialorder %v1076, %v1387
      %vm1717 = vcmp.eq.f32.partialorder %v1077, %v1387
      %vm1718 = vcmp.eq.f32.partialorder %v1078, %v1390
      %vm1719 = vcmp.eq.f32.partialorder %v1079, %v1390
      %vm1720 = vcmp.eq.f32.partialorder %v1080, %v1393
      %vm1721 = vcmp.eq.f32.partialorder %v1081, %v1393
      %vm1722 = vcmp.eq.f32.partialorder %v1082, %v1396
      %vm1723 = vcmp.eq.f32.partialorder %v1083, %v1396
      %vm1724 = vcmp.eq.f32.partialorder %v1084, %v1399
      %vm1725 = vcmp.eq.f32.partialorder %v1085, %v1399
      %vm1726 = vcmp.eq.f32.partialorder %v1086, %v1402
      %vm1727 = vcmp.eq.f32.partialorder %v1087, %v1402
      %vm1728 = vcmp.eq.f32.partialorder %v1088, %v1405
      %vm1729 = vcmp.eq.f32.partialorder %v1089, %v1405
      %vm1730 = vcmp.eq.f32.partialorder %v1090, %v1408
      %vm1731 = vcmp.eq.f32.partialorder %v1091, %v1408
      %vm1732 = vcmp.eq.f32.partialorder %v1092, %v1411
      %vm1733 = vcmp.eq.f32.partialorder %v1093, %v1411
      %vm1734 = vcmp.eq.f32.partialorder %v1094, %v1414
      %vm1735 = vcmp.eq.f32.partialorder %v1095, %v1414
      %vm1736 = vcmp.eq.f32.partialorder %v1096, %v1417
      %vm1737 = vcmp.eq.f32.partialorder %v1097, %v1417
      %v1738 = vsel %vm1610, %v966, 256
      %v1739 = vsel %vm1611, %v967, 256
      %v1740 = vsel %vm1612, %v966, 256
      %v1741 = vsel %vm1613, %v967, 256
      %v1742 = vsel %vm1614, %v966, 256
      %v1743 = vsel %vm1615, %v967, 256
      %v1744 = vsel %vm1616, %v966, 256
      %v1745 = vsel %vm1617, %v967, 256
      %v1746 = vsel %vm1618, %v966, 256
      %v1747 = vsel %vm1619, %v967, 256
      %v1748 = vsel %vm1620, %v966, 256
      %v1749 = vsel %vm1621, %v967, 256
      %v1750 = vsel %vm1622, %v966, 256
      %v1751 = vsel %vm1623, %v967, 256
      %v1752 = vsel %vm1624, %v966, 256
      %v1753 = vsel %vm1625, %v967, 256
      %v1754 = vsel %vm1626, %v966, 256
      %v1755 = vsel %vm1627, %v967, 256
      %v1756 = vsel %vm1628, %v966, 256
      %v1757 = vsel %vm1629, %v967, 256
      %v1758 = vsel %vm1630, %v966, 256
      %v1759 = vsel %vm1631, %v967, 256
      %v1760 = vsel %vm1632, %v966, 256
      %v1761 = vsel %vm1633, %v967, 256
      %v1762 = vsel %vm1634, %v966, 256
      %v1763 = vsel %vm1635, %v967, 256
      %v1764 = vsel %vm1636, %v966, 256
      %v1765 = vsel %vm1637, %v967, 256
      %v1766 = vsel %vm1638, %v966, 256
      %v1767 = vsel %vm1639, %v967, 256
      %v1768 = vsel %vm1640, %v966, 256
      %v1769 = vsel %vm1641, %v967, 256
      %v1770 = vsel %vm1642, %v966, 256
      %v1771 = vsel %vm1643, %v967, 256
      %v1772 = vsel %vm1644, %v966, 256
      %v1773 = vsel %vm1645, %v967, 256
      %v1774 = vsel %vm1646, %v966, 256
      %v1775 = vsel %vm1647, %v967, 256
      %v1776 = vsel %vm1648, %v966, 256
      %v1777 = vsel %vm1649, %v967, 256
      %v1778 = vsel %vm1650, %v966, 256
      %v1779 = vsel %vm1651, %v967, 256
      %v1780 = vsel %vm1652, %v966, 256
      %v1781 = vsel %vm1653, %v967, 256
      %v1782 = vsel %vm1654, %v966, 256
      %v1783 = vsel %vm1655, %v967, 256
      %v1784 = vsel %vm1656, %v966, 256
      %v1785 = vsel %vm1657, %v967, 256
      %v1786 = vsel %vm1658, %v966, 256
      %v1787 = vsel %vm1659, %v967, 256
      %v1788 = vsel %vm1660, %v966, 256
      %v1789 = vsel %vm1661, %v967, 256
      %v1790 = vsel %vm1662, %v966, 256
      %v1791 = vsel %vm1663, %v967, 256
      %v1792 = vsel %vm1664, %v966, 256
      %v1793 = vsel %vm1665, %v967, 256
      %v1794 = vsel %vm1666, %v966, 256
      %v1795 = vsel %vm1667, %v967, 256
      %v1796 = vsel %vm1668, %v966, 256
      %v1797 = vsel %vm1669, %v967, 256
      %v1798 = vsel %vm1670, %v966, 256
      %v1799 = vsel %vm1671, %v967, 256
      %v1800 = vsel %vm1672, %v966, 256
      %v1801 = vsel %vm1673, %v967, 256
      %v1802 = vsel %vm1674, %v966, 256
      %v1803 = vsel %vm1675, %v967, 256
      %v1804 = vsel %vm1676, %v966, 256
      %v1805 = vsel %vm1677, %v967, 256
      %v1806 = vsel %vm1678, %v966, 256
      %v1807 = vsel %vm1679, %v967, 256
      %v1808 = vsel %vm1680, %v966, 256
      %v1809 = vsel %vm1681, %v967, 256
      %v1810 = vsel %vm1682, %v966, 256
      %v1811 = vsel %vm1683, %v967, 256
      %v1812 = vsel %vm1684, %v966, 256
      %v1813 = vsel %vm1685, %v967, 256
      %v1814 = vsel %vm1686, %v966, 256
      %v1815 = vsel %vm1687, %v967, 256
      %v1816 = vsel %vm1688, %v966, 256
      %v1817 = vsel %vm1689, %v967, 256
      %v1818 = vsel %vm1690, %v966, 256
      %v1819 = vsel %vm1691, %v967, 256
      %v1820 = vsel %vm1692, %v966, 256
      %v1821 = vsel %vm1693, %v967, 256
      %v1822 = vsel %vm1694, %v966, 256
      %v1823 = vsel %vm1695, %v967, 256
      %v1824 = vsel %vm1696, %v966, 256
      %v1825 = vsel %vm1697, %v967, 256
      %v1826 = vsel %vm1698, %v966, 256
      %v1827 = vsel %vm1699, %v967, 256
      %v1828 = vsel %vm1700, %v966, 256
      %v1829 = vsel %vm1701, %v967, 256
      %v1830 = vsel %vm1702, %v966, 256
      %v1831 = vsel %vm1703, %v967, 256
      %v1832 = vsel %vm1704, %v966, 256
      %v1833 = vsel %vm1705, %v967, 256
      %v1834 = vsel %vm1706, %v966, 256
      %v1835 = vsel %vm1707, %v967, 256
      %v1836 = vsel %vm1708, %v966, 256
      %v1837 = vsel %vm1709, %v967, 256
      %v1838 = vsel %vm1710, %v966, 256
      %v1839 = vsel %vm1711, %v967, 256
      %v1840 = vsel %vm1712, %v966, 256
      %v1841 = vsel %vm1713, %v967, 256
      %v1842 = vsel %vm1714, %v966, 256
      %v1843 = vsel %vm1715, %v967, 256
      %v1844 = vsel %vm1716, %v966, 256
      %v1845 = vsel %vm1717, %v967, 256
      %v1846 = vsel %vm1718, %v966, 256
      %v1847 = vsel %vm1719, %v967, 256
      %v1848 = vsel %vm1720, %v966, 256
      %v1849 = vsel %vm1721, %v967, 256
      %v1850 = vsel %vm1722, %v966, 256
      %v1851 = vsel %vm1723, %v967, 256
      %v1852 = vsel %vm1724, %v966, 256
      %v1853 = vsel %vm1725, %v967, 256
      %v1854 = vsel %vm1726, %v966, 256
      %v1855 = vsel %vm1727, %v967, 256
      %v1856 = vsel %vm1728, %v966, 256
      %v1857 = vsel %vm1729, %v967, 256
      %v1858 = vsel %vm1730, %v966, 256
      %v1859 = vsel %vm1731, %v967, 256
      %v1860 = vsel %vm1732, %v966, 256
      %v1861 = vsel %vm1733, %v967, 256
      %v1862 = vsel %vm1734, %v966, 256
      %v1863 = vsel %vm1735, %v967, 256
      %v1864 = vsel %vm1736, %v966, 256
      %v1865 = vsel %vm1737, %v967, 256
      %vm1866 = vcmp.lt.s32.totalorder %v1738, %v1739
      %v1867 = vsel %vm1866, %v1738, %v1739
      %v1868 = vand.u32 %v1867, 65535
      %v1869 = vshra.s32 %v1867, 16
      %v1870 = vcvt.s32.f32 %v1868
      %v1871 = vcvt.s32.f32 %v1869
      %1872 = vmin.xlane.f32.xlu0 %v1871
      %v1873 = vpop.xlane.xlu0 %1872
      %vm1874 = vcmp.eq.f32.partialorder %v1871, %v1873
      %v1875 = vsel %vm1874, %v1870, inf
      %1876 = vmin.xlane.f32.xlu0 %v1875
      %v1877 = vpop.xlane.xlu0 %1876
      %v1878 = vcvt.f32.s32 %v1877
      %v1879 = vcvt.f32.s32 %v1873
      %v1880 = vshll.u32 %v1879, 16
      %v1881 = vadd.s32 %v1880, %v1878
      %vm1882 = vcmp.lt.s32.totalorder %v1740, %v1741
      %v1883 = vsel %vm1882, %v1740, %v1741
      %v1884 = vand.u32 %v1883, 65535
      %v1885 = vshra.s32 %v1883, 16
      %v1886 = vcvt.s32.f32 %v1884
      %v1887 = vcvt.s32.f32 %v1885
      %1888 = vmin.xlane.f32.xlu0 %v1887
      %v1889 = vpop.xlane.xlu0 %1888
      %vm1890 = vcmp.eq.f32.partialorder %v1887, %v1889
      %v1891 = vsel %vm1890, %v1886, inf
      %1892 = vmin.xlane.f32.xlu0 %v1891
      %v1893 = vpop.xlane.xlu0 %1892
      %v1894 = vcvt.f32.s32 %v1893
      %v1895 = vcvt.f32.s32 %v1889
      %v1896 = vshll.u32 %v1895, 16
      %v1897 = vadd.s32 %v1896, %v1894
      %vm1898 = vcmp.lt.s32.totalorder %v1742, %v1743
      %v1899 = vsel %vm1898, %v1742, %v1743
      %v1900 = vand.u32 %v1899, 65535
      %v1901 = vshra.s32 %v1899, 16
      %v1902 = vcvt.s32.f32 %v1900
      %v1903 = vcvt.s32.f32 %v1901
      %1904 = vmin.xlane.f32.xlu0 %v1903
      %v1905 = vpop.xlane.xlu0 %1904
      %vm1906 = vcmp.eq.f32.partialorder %v1903, %v1905
      %v1907 = vsel %vm1906, %v1902, inf
      %1908 = vmin.xlane.f32.xlu0 %v1907
      %v1909 = vpop.xlane.xlu0 %1908
      %v1910 = vcvt.f32.s32 %v1909
      %v1911 = vcvt.f32.s32 %v1905
      %v1912 = vshll.u32 %v1911, 16
      %v1913 = vadd.s32 %v1912, %v1910
      %vm1914 = vcmp.lt.s32.totalorder %v1744, %v1745
      %v1915 = vsel %vm1914, %v1744, %v1745
      %v1916 = vand.u32 %v1915, 65535
      %v1917 = vshra.s32 %v1915, 16
      %v1918 = vcvt.s32.f32 %v1916
      %v1919 = vcvt.s32.f32 %v1917
      %1920 = vmin.xlane.f32.xlu0 %v1919
      %v1921 = vpop.xlane.xlu0 %1920
      %vm1922 = vcmp.eq.f32.partialorder %v1919, %v1921
      %v1923 = vsel %vm1922, %v1918, inf
      %1924 = vmin.xlane.f32.xlu0 %v1923
      %v1925 = vpop.xlane.xlu0 %1924
      %v1926 = vcvt.f32.s32 %v1925
      %v1927 = vcvt.f32.s32 %v1921
      %v1928 = vshll.u32 %v1927, 16
      %v1929 = vadd.s32 %v1928, %v1926
      %vm1930 = vcmp.lt.s32.totalorder %v1746, %v1747
      %v1931 = vsel %vm1930, %v1746, %v1747
      %v1932 = vand.u32 %v1931, 65535
      %v1933 = vshra.s32 %v1931, 16
      %v1934 = vcvt.s32.f32 %v1932
      %v1935 = vcvt.s32.f32 %v1933
      %1936 = vmin.xlane.f32.xlu0 %v1935
      %v1937 = vpop.xlane.xlu0 %1936
      %vm1938 = vcmp.eq.f32.partialorder %v1935, %v1937
      %v1939 = vsel %vm1938, %v1934, inf
      %1940 = vmin.xlane.f32.xlu0 %v1939
      %v1941 = vpop.xlane.xlu0 %1940
      %v1942 = vcvt.f32.s32 %v1941
      %v1943 = vcvt.f32.s32 %v1937
      %v1944 = vshll.u32 %v1943, 16
      %v1945 = vadd.s32 %v1944, %v1942
      %vm1946 = vcmp.lt.s32.totalorder %v1748, %v1749
      %v1947 = vsel %vm1946, %v1748, %v1749
      %v1948 = vand.u32 %v1947, 65535
      %v1949 = vshra.s32 %v1947, 16
      %v1950 = vcvt.s32.f32 %v1948
      %v1951 = vcvt.s32.f32 %v1949
      %1952 = vmin.xlane.f32.xlu0 %v1951
      %v1953 = vpop.xlane.xlu0 %1952
      %vm1954 = vcmp.eq.f32.partialorder %v1951, %v1953
      %v1955 = vsel %vm1954, %v1950, inf
      %1956 = vmin.xlane.f32.xlu0 %v1955
      %v1957 = vpop.xlane.xlu0 %1956
      %v1958 = vcvt.f32.s32 %v1957
      %v1959 = vcvt.f32.s32 %v1953
      %v1960 = vshll.u32 %v1959, 16
      %v1961 = vadd.s32 %v1960, %v1958
      %vm1962 = vcmp.lt.s32.totalorder %v1750, %v1751
      %v1963 = vsel %vm1962, %v1750, %v1751
      %v1964 = vand.u32 %v1963, 65535
      %v1965 = vshra.s32 %v1963, 16
      %v1966 = vcvt.s32.f32 %v1964
      %v1967 = vcvt.s32.f32 %v1965
      %1968 = vmin.xlane.f32.xlu0 %v1967
      %v1969 = vpop.xlane.xlu0 %1968
      %vm1970 = vcmp.eq.f32.partialorder %v1967, %v1969
      %v1971 = vsel %vm1970, %v1966, inf
      %1972 = vmin.xlane.f32.xlu0 %v1971
      %v1973 = vpop.xlane.xlu0 %1972
      %v1974 = vcvt.f32.s32 %v1973
      %v1975 = vcvt.f32.s32 %v1969
      %v1976 = vshll.u32 %v1975, 16
      %v1977 = vadd.s32 %v1976, %v1974
      %vm1978 = vcmp.lt.s32.totalorder %v1752, %v1753
      %v1979 = vsel %vm1978, %v1752, %v1753
      %v1980 = vand.u32 %v1979, 65535
      %v1981 = vshra.s32 %v1979, 16
      %v1982 = vcvt.s32.f32 %v1980
      %v1983 = vcvt.s32.f32 %v1981
      %1984 = vmin.xlane.f32.xlu0 %v1983
      %v1985 = vpop.xlane.xlu0 %1984
      %vm1986 = vcmp.eq.f32.partialorder %v1983, %v1985
      %v1987 = vsel %vm1986, %v1982, inf
      %1988 = vmin.xlane.f32.xlu0 %v1987
      %v1989 = vpop.xlane.xlu0 %1988
      %v1990 = vcvt.f32.s32 %v1989
      %v1991 = vcvt.f32.s32 %v1985
      %v1992 = vshll.u32 %v1991, 16
      %v1993 = vadd.s32 %v1992, %v1990
      %vm1994 = vcmp.lt.s32.totalorder %v1754, %v1755
      %v1995 = vsel %vm1994, %v1754, %v1755
      %v1996 = vand.u32 %v1995, 65535
      %v1997 = vshra.s32 %v1995, 16
      %v1998 = vcvt.s32.f32 %v1996
      %v1999 = vcvt.s32.f32 %v1997
      %2000 = vmin.xlane.f32.xlu0 %v1999
      %v2001 = vpop.xlane.xlu0 %2000
      %vm2002 = vcmp.eq.f32.partialorder %v1999, %v2001
      %v2003 = vsel %vm2002, %v1998, inf
      %2004 = vmin.xlane.f32.xlu0 %v2003
      %v2005 = vpop.xlane.xlu0 %2004
      %v2006 = vcvt.f32.s32 %v2005
      %v2007 = vcvt.f32.s32 %v2001
      %v2008 = vshll.u32 %v2007, 16
      %v2009 = vadd.s32 %v2008, %v2006
      %vm2010 = vcmp.lt.s32.totalorder %v1756, %v1757
      %v2011 = vsel %vm2010, %v1756, %v1757
      %v2012 = vand.u32 %v2011, 65535
      %v2013 = vshra.s32 %v2011, 16
      %v2014 = vcvt.s32.f32 %v2012
      %v2015 = vcvt.s32.f32 %v2013
      %2016 = vmin.xlane.f32.xlu0 %v2015
      %v2017 = vpop.xlane.xlu0 %2016
      %vm2018 = vcmp.eq.f32.partialorder %v2015, %v2017
      %v2019 = vsel %vm2018, %v2014, inf
      %2020 = vmin.xlane.f32.xlu0 %v2019
      %v2021 = vpop.xlane.xlu0 %2020
      %v2022 = vcvt.f32.s32 %v2021
      %v2023 = vcvt.f32.s32 %v2017
      %v2024 = vshll.u32 %v2023, 16
      %v2025 = vadd.s32 %v2024, %v2022
      %vm2026 = vcmp.lt.s32.totalorder %v1758, %v1759
      %v2027 = vsel %vm2026, %v1758, %v1759
      %v2028 = vand.u32 %v2027, 65535
      %v2029 = vshra.s32 %v2027, 16
      %v2030 = vcvt.s32.f32 %v2028
      %v2031 = vcvt.s32.f32 %v2029
      %2032 = vmin.xlane.f32.xlu0 %v2031
      %v2033 = vpop.xlane.xlu0 %2032
      %vm2034 = vcmp.eq.f32.partialorder %v2031, %v2033
      %v2035 = vsel %vm2034, %v2030, inf
      %2036 = vmin.xlane.f32.xlu0 %v2035
      %v2037 = vpop.xlane.xlu0 %2036
      %v2038 = vcvt.f32.s32 %v2037
      %v2039 = vcvt.f32.s32 %v2033
      %v2040 = vshll.u32 %v2039, 16
      %v2041 = vadd.s32 %v2040, %v2038
      %vm2042 = vcmp.lt.s32.totalorder %v1760, %v1761
      %v2043 = vsel %vm2042, %v1760, %v1761
      %v2044 = vand.u32 %v2043, 65535
      %v2045 = vshra.s32 %v2043, 16
      %v2046 = vcvt.s32.f32 %v2044
      %v2047 = vcvt.s32.f32 %v2045
      %2048 = vmin.xlane.f32.xlu0 %v2047
      %v2049 = vpop.xlane.xlu0 %2048
      %vm2050 = vcmp.eq.f32.partialorder %v2047, %v2049
      %v2051 = vsel %vm2050, %v2046, inf
      %2052 = vmin.xlane.f32.xlu0 %v2051
      %v2053 = vpop.xlane.xlu0 %2052
      %v2054 = vcvt.f32.s32 %v2053
      %v2055 = vcvt.f32.s32 %v2049
      %v2056 = vshll.u32 %v2055, 16
      %v2057 = vadd.s32 %v2056, %v2054
      %vm2058 = vcmp.lt.s32.totalorder %v1762, %v1763
      %v2059 = vsel %vm2058, %v1762, %v1763
      %v2060 = vand.u32 %v2059, 65535
      %v2061 = vshra.s32 %v2059, 16
      %v2062 = vcvt.s32.f32 %v2060
      %v2063 = vcvt.s32.f32 %v2061
      %2064 = vmin.xlane.f32.xlu0 %v2063
      %v2065 = vpop.xlane.xlu0 %2064
      %vm2066 = vcmp.eq.f32.partialorder %v2063, %v2065
      %v2067 = vsel %vm2066, %v2062, inf
      %2068 = vmin.xlane.f32.xlu0 %v2067
      %v2069 = vpop.xlane.xlu0 %2068
      %v2070 = vcvt.f32.s32 %v2069
      %v2071 = vcvt.f32.s32 %v2065
      %v2072 = vshll.u32 %v2071, 16
      %v2073 = vadd.s32 %v2072, %v2070
      %vm2074 = vcmp.lt.s32.totalorder %v1764, %v1765
      %v2075 = vsel %vm2074, %v1764, %v1765
      %v2076 = vand.u32 %v2075, 65535
      %v2077 = vshra.s32 %v2075, 16
      %v2078 = vcvt.s32.f32 %v2076
      %v2079 = vcvt.s32.f32 %v2077
      %2080 = vmin.xlane.f32.xlu0 %v2079
      %v2081 = vpop.xlane.xlu0 %2080
      %vm2082 = vcmp.eq.f32.partialorder %v2079, %v2081
      %v2083 = vsel %vm2082, %v2078, inf
      %2084 = vmin.xlane.f32.xlu0 %v2083
      %v2085 = vpop.xlane.xlu0 %2084
      %v2086 = vcvt.f32.s32 %v2085
      %v2087 = vcvt.f32.s32 %v2081
      %v2088 = vshll.u32 %v2087, 16
      %v2089 = vadd.s32 %v2088, %v2086
      %vm2090 = vcmp.lt.s32.totalorder %v1766, %v1767
      %v2091 = vsel %vm2090, %v1766, %v1767
      %v2092 = vand.u32 %v2091, 65535
      %v2093 = vshra.s32 %v2091, 16
      %v2094 = vcvt.s32.f32 %v2092
      %v2095 = vcvt.s32.f32 %v2093
      %2096 = vmin.xlane.f32.xlu0 %v2095
      %v2097 = vpop.xlane.xlu0 %2096
      %vm2098 = vcmp.eq.f32.partialorder %v2095, %v2097
      %v2099 = vsel %vm2098, %v2094, inf
      %2100 = vmin.xlane.f32.xlu0 %v2099
      %v2101 = vpop.xlane.xlu0 %2100
      %v2102 = vcvt.f32.s32 %v2101
      %v2103 = vcvt.f32.s32 %v2097
      %v2104 = vshll.u32 %v2103, 16
      %v2105 = vadd.s32 %v2104, %v2102
      %vm2106 = vcmp.lt.s32.totalorder %v1768, %v1769
      %v2107 = vsel %vm2106, %v1768, %v1769
      %v2108 = vand.u32 %v2107, 65535
      %v2109 = vshra.s32 %v2107, 16
      %v2110 = vcvt.s32.f32 %v2108
      %v2111 = vcvt.s32.f32 %v2109
      %2112 = vmin.xlane.f32.xlu0 %v2111
      %v2113 = vpop.xlane.xlu0 %2112
      %vm2114 = vcmp.eq.f32.partialorder %v2111, %v2113
      %v2115 = vsel %vm2114, %v2110, inf
      %2116 = vmin.xlane.f32.xlu0 %v2115
      %v2117 = vpop.xlane.xlu0 %2116
      %v2118 = vcvt.f32.s32 %v2117
      %v2119 = vcvt.f32.s32 %v2113
      %v2120 = vshll.u32 %v2119, 16
      %v2121 = vadd.s32 %v2120, %v2118
      %vm2122 = vcmp.lt.s32.totalorder %v1770, %v1771
      %v2123 = vsel %vm2122, %v1770, %v1771
      %v2124 = vand.u32 %v2123, 65535
      %v2125 = vshra.s32 %v2123, 16
      %v2126 = vcvt.s32.f32 %v2124
      %v2127 = vcvt.s32.f32 %v2125
      %2128 = vmin.xlane.f32.xlu0 %v2127
      %v2129 = vpop.xlane.xlu0 %2128
      %vm2130 = vcmp.eq.f32.partialorder %v2127, %v2129
      %v2131 = vsel %vm2130, %v2126, inf
      %2132 = vmin.xlane.f32.xlu0 %v2131
      %v2133 = vpop.xlane.xlu0 %2132
      %v2134 = vcvt.f32.s32 %v2133
      %v2135 = vcvt.f32.s32 %v2129
      %v2136 = vshll.u32 %v2135, 16
      %v2137 = vadd.s32 %v2136, %v2134
      %vm2138 = vcmp.lt.s32.totalorder %v1772, %v1773
      %v2139 = vsel %vm2138, %v1772, %v1773
      %v2140 = vand.u32 %v2139, 65535
      %v2141 = vshra.s32 %v2139, 16
      %v2142 = vcvt.s32.f32 %v2140
      %v2143 = vcvt.s32.f32 %v2141
      %2144 = vmin.xlane.f32.xlu0 %v2143
      %v2145 = vpop.xlane.xlu0 %2144
      %vm2146 = vcmp.eq.f32.partialorder %v2143, %v2145
      %v2147 = vsel %vm2146, %v2142, inf
      %2148 = vmin.xlane.f32.xlu0 %v2147
      %v2149 = vpop.xlane.xlu0 %2148
      %v2150 = vcvt.f32.s32 %v2149
      %v2151 = vcvt.f32.s32 %v2145
      %v2152 = vshll.u32 %v2151, 16
      %v2153 = vadd.s32 %v2152, %v2150
      %vm2154 = vcmp.lt.s32.totalorder %v1774, %v1775
      %v2155 = vsel %vm2154, %v1774, %v1775
      %v2156 = vand.u32 %v2155, 65535
      %v2157 = vshra.s32 %v2155, 16
      %v2158 = vcvt.s32.f32 %v2156
      %v2159 = vcvt.s32.f32 %v2157
      %2160 = vmin.xlane.f32.xlu0 %v2159
      %v2161 = vpop.xlane.xlu0 %2160
      %vm2162 = vcmp.eq.f32.partialorder %v2159, %v2161
      %v2163 = vsel %vm2162, %v2158, inf
      %2164 = vmin.xlane.f32.xlu0 %v2163
      %v2165 = vpop.xlane.xlu0 %2164
      %v2166 = vcvt.f32.s32 %v2165
      %v2167 = vcvt.f32.s32 %v2161
      %v2168 = vshll.u32 %v2167, 16
      %v2169 = vadd.s32 %v2168, %v2166
      %vm2170 = vcmp.lt.s32.totalorder %v1776, %v1777
      %v2171 = vsel %vm2170, %v1776, %v1777
      %v2172 = vand.u32 %v2171, 65535
      %v2173 = vshra.s32 %v2171, 16
      %v2174 = vcvt.s32.f32 %v2172
      %v2175 = vcvt.s32.f32 %v2173
      %2176 = vmin.xlane.f32.xlu0 %v2175
      %v2177 = vpop.xlane.xlu0 %2176
      %vm2178 = vcmp.eq.f32.partialorder %v2175, %v2177
      %v2179 = vsel %vm2178, %v2174, inf
      %2180 = vmin.xlane.f32.xlu0 %v2179
      %v2181 = vpop.xlane.xlu0 %2180
      %v2182 = vcvt.f32.s32 %v2181
      %v2183 = vcvt.f32.s32 %v2177
      %v2184 = vshll.u32 %v2183, 16
      %v2185 = vadd.s32 %v2184, %v2182
      %vm2186 = vcmp.lt.s32.totalorder %v1778, %v1779
      %v2187 = vsel %vm2186, %v1778, %v1779
      %v2188 = vand.u32 %v2187, 65535
      %v2189 = vshra.s32 %v2187, 16
      %v2190 = vcvt.s32.f32 %v2188
      %v2191 = vcvt.s32.f32 %v2189
      %2192 = vmin.xlane.f32.xlu0 %v2191
      %v2193 = vpop.xlane.xlu0 %2192
      %vm2194 = vcmp.eq.f32.partialorder %v2191, %v2193
      %v2195 = vsel %vm2194, %v2190, inf
      %2196 = vmin.xlane.f32.xlu0 %v2195
      %v2197 = vpop.xlane.xlu0 %2196
      %v2198 = vcvt.f32.s32 %v2197
      %v2199 = vcvt.f32.s32 %v2193
      %v2200 = vshll.u32 %v2199, 16
      %v2201 = vadd.s32 %v2200, %v2198
      %vm2202 = vcmp.lt.s32.totalorder %v1780, %v1781
      %v2203 = vsel %vm2202, %v1780, %v1781
      %v2204 = vand.u32 %v2203, 65535
      %v2205 = vshra.s32 %v2203, 16
      %v2206 = vcvt.s32.f32 %v2204
      %v2207 = vcvt.s32.f32 %v2205
      %2208 = vmin.xlane.f32.xlu0 %v2207
      %v2209 = vpop.xlane.xlu0 %2208
      %vm2210 = vcmp.eq.f32.partialorder %v2207, %v2209
      %v2211 = vsel %vm2210, %v2206, inf
      %2212 = vmin.xlane.f32.xlu0 %v2211
      %v2213 = vpop.xlane.xlu0 %2212
      %v2214 = vcvt.f32.s32 %v2213
      %v2215 = vcvt.f32.s32 %v2209
      %v2216 = vshll.u32 %v2215, 16
      %v2217 = vadd.s32 %v2216, %v2214
      %vm2218 = vcmp.lt.s32.totalorder %v1782, %v1783
      %v2219 = vsel %vm2218, %v1782, %v1783
      %v2220 = vand.u32 %v2219, 65535
      %v2221 = vshra.s32 %v2219, 16
      %v2222 = vcvt.s32.f32 %v2220
      %v2223 = vcvt.s32.f32 %v2221
      %2224 = vmin.xlane.f32.xlu0 %v2223
      %v2225 = vpop.xlane.xlu0 %2224
      %vm2226 = vcmp.eq.f32.partialorder %v2223, %v2225
      %v2227 = vsel %vm2226, %v2222, inf
      %2228 = vmin.xlane.f32.xlu0 %v2227
      %v2229 = vpop.xlane.xlu0 %2228
      %v2230 = vcvt.f32.s32 %v2229
      %v2231 = vcvt.f32.s32 %v2225
      %v2232 = vshll.u32 %v2231, 16
      %v2233 = vadd.s32 %v2232, %v2230
      %vm2234 = vcmp.lt.s32.totalorder %v1784, %v1785
      %v2235 = vsel %vm2234, %v1784, %v1785
      %v2236 = vand.u32 %v2235, 65535
      %v2237 = vshra.s32 %v2235, 16
      %v2238 = vcvt.s32.f32 %v2236
      %v2239 = vcvt.s32.f32 %v2237
      %2240 = vmin.xlane.f32.xlu0 %v2239
      %v2241 = vpop.xlane.xlu0 %2240
      %vm2242 = vcmp.eq.f32.partialorder %v2239, %v2241
      %v2243 = vsel %vm2242, %v2238, inf
      %2244 = vmin.xlane.f32.xlu0 %v2243
      %v2245 = vpop.xlane.xlu0 %2244
      %v2246 = vcvt.f32.s32 %v2245
      %v2247 = vcvt.f32.s32 %v2241
      %v2248 = vshll.u32 %v2247, 16
      %v2249 = vadd.s32 %v2248, %v2246
      %vm2250 = vcmp.lt.s32.totalorder %v1786, %v1787
      %v2251 = vsel %vm2250, %v1786, %v1787
      %v2252 = vand.u32 %v2251, 65535
      %v2253 = vshra.s32 %v2251, 16
      %v2254 = vcvt.s32.f32 %v2252
      %v2255 = vcvt.s32.f32 %v2253
      %2256 = vmin.xlane.f32.xlu0 %v2255
      %v2257 = vpop.xlane.xlu0 %2256
      %vm2258 = vcmp.eq.f32.partialorder %v2255, %v2257
      %v2259 = vsel %vm2258, %v2254, inf
      %2260 = vmin.xlane.f32.xlu0 %v2259
      %v2261 = vpop.xlane.xlu0 %2260
      %v2262 = vcvt.f32.s32 %v2261
      %v2263 = vcvt.f32.s32 %v2257
      %v2264 = vshll.u32 %v2263, 16
      %v2265 = vadd.s32 %v2264, %v2262
      %vm2266 = vcmp.lt.s32.totalorder %v1788, %v1789
      %v2267 = vsel %vm2266, %v1788, %v1789
      %v2268 = vand.u32 %v2267, 65535
      %v2269 = vshra.s32 %v2267, 16
      %v2270 = vcvt.s32.f32 %v2268
      %v2271 = vcvt.s32.f32 %v2269
      %2272 = vmin.xlane.f32.xlu0 %v2271
      %v2273 = vpop.xlane.xlu0 %2272
      %vm2274 = vcmp.eq.f32.partialorder %v2271, %v2273
      %v2275 = vsel %vm2274, %v2270, inf
      %2276 = vmin.xlane.f32.xlu0 %v2275
      %v2277 = vpop.xlane.xlu0 %2276
      %v2278 = vcvt.f32.s32 %v2277
      %v2279 = vcvt.f32.s32 %v2273
      %v2280 = vshll.u32 %v2279, 16
      %v2281 = vadd.s32 %v2280, %v2278
      %vm2282 = vcmp.lt.s32.totalorder %v1790, %v1791
      %v2283 = vsel %vm2282, %v1790, %v1791
      %v2284 = vand.u32 %v2283, 65535
      %v2285 = vshra.s32 %v2283, 16
      %v2286 = vcvt.s32.f32 %v2284
      %v2287 = vcvt.s32.f32 %v2285
      %2288 = vmin.xlane.f32.xlu0 %v2287
      %v2289 = vpop.xlane.xlu0 %2288
      %vm2290 = vcmp.eq.f32.partialorder %v2287, %v2289
      %v2291 = vsel %vm2290, %v2286, inf
      %2292 = vmin.xlane.f32.xlu0 %v2291
      %v2293 = vpop.xlane.xlu0 %2292
      %v2294 = vcvt.f32.s32 %v2293
      %v2295 = vcvt.f32.s32 %v2289
      %v2296 = vshll.u32 %v2295, 16
      %v2297 = vadd.s32 %v2296, %v2294
      %vm2298 = vcmp.lt.s32.totalorder %v1792, %v1793
      %v2299 = vsel %vm2298, %v1792, %v1793
      %v2300 = vand.u32 %v2299, 65535
      %v2301 = vshra.s32 %v2299, 16
      %v2302 = vcvt.s32.f32 %v2300
      %v2303 = vcvt.s32.f32 %v2301
      %2304 = vmin.xlane.f32.xlu0 %v2303
      %v2305 = vpop.xlane.xlu0 %2304
      %vm2306 = vcmp.eq.f32.partialorder %v2303, %v2305
      %v2307 = vsel %vm2306, %v2302, inf
      %2308 = vmin.xlane.f32.xlu0 %v2307
      %v2309 = vpop.xlane.xlu0 %2308
      %v2310 = vcvt.f32.s32 %v2309
      %v2311 = vcvt.f32.s32 %v2305
      %v2312 = vshll.u32 %v2311, 16
      %v2313 = vadd.s32 %v2312, %v2310
      %vm2314 = vcmp.lt.s32.totalorder %v1794, %v1795
      %v2315 = vsel %vm2314, %v1794, %v1795
      %v2316 = vand.u32 %v2315, 65535
      %v2317 = vshra.s32 %v2315, 16
      %v2318 = vcvt.s32.f32 %v2316
      %v2319 = vcvt.s32.f32 %v2317
      %2320 = vmin.xlane.f32.xlu0 %v2319
      %v2321 = vpop.xlane.xlu0 %2320
      %vm2322 = vcmp.eq.f32.partialorder %v2319, %v2321
      %v2323 = vsel %vm2322, %v2318, inf
      %2324 = vmin.xlane.f32.xlu0 %v2323
      %v2325 = vpop.xlane.xlu0 %2324
      %v2326 = vcvt.f32.s32 %v2325
      %v2327 = vcvt.f32.s32 %v2321
      %v2328 = vshll.u32 %v2327, 16
      %v2329 = vadd.s32 %v2328, %v2326
      %vm2330 = vcmp.lt.s32.totalorder %v1796, %v1797
      %v2331 = vsel %vm2330, %v1796, %v1797
      %v2332 = vand.u32 %v2331, 65535
      %v2333 = vshra.s32 %v2331, 16
      %v2334 = vcvt.s32.f32 %v2332
      %v2335 = vcvt.s32.f32 %v2333
      %2336 = vmin.xlane.f32.xlu0 %v2335
      %v2337 = vpop.xlane.xlu0 %2336
      %vm2338 = vcmp.eq.f32.partialorder %v2335, %v2337
      %v2339 = vsel %vm2338, %v2334, inf
      %2340 = vmin.xlane.f32.xlu0 %v2339
      %v2341 = vpop.xlane.xlu0 %2340
      %v2342 = vcvt.f32.s32 %v2341
      %v2343 = vcvt.f32.s32 %v2337
      %v2344 = vshll.u32 %v2343, 16
      %v2345 = vadd.s32 %v2344, %v2342
      %vm2346 = vcmp.lt.s32.totalorder %v1798, %v1799
      %v2347 = vsel %vm2346, %v1798, %v1799
      %v2348 = vand.u32 %v2347, 65535
      %v2349 = vshra.s32 %v2347, 16
      %v2350 = vcvt.s32.f32 %v2348
      %v2351 = vcvt.s32.f32 %v2349
      %2352 = vmin.xlane.f32.xlu0 %v2351
      %v2353 = vpop.xlane.xlu0 %2352
      %vm2354 = vcmp.eq.f32.partialorder %v2351, %v2353
      %v2355 = vsel %vm2354, %v2350, inf
      %2356 = vmin.xlane.f32.xlu0 %v2355
      %v2357 = vpop.xlane.xlu0 %2356
      %v2358 = vcvt.f32.s32 %v2357
      %v2359 = vcvt.f32.s32 %v2353
      %v2360 = vshll.u32 %v2359, 16
      %v2361 = vadd.s32 %v2360, %v2358
      %vm2362 = vcmp.lt.s32.totalorder %v1800, %v1801
      %v2363 = vsel %vm2362, %v1800, %v1801
      %v2364 = vand.u32 %v2363, 65535
      %v2365 = vshra.s32 %v2363, 16
      %v2366 = vcvt.s32.f32 %v2364
      %v2367 = vcvt.s32.f32 %v2365
      %2368 = vmin.xlane.f32.xlu0 %v2367
      %v2369 = vpop.xlane.xlu0 %2368
      %vm2370 = vcmp.eq.f32.partialorder %v2367, %v2369
      %v2371 = vsel %vm2370, %v2366, inf
      %2372 = vmin.xlane.f32.xlu0 %v2371
      %v2373 = vpop.xlane.xlu0 %2372
      %v2374 = vcvt.f32.s32 %v2373
      %v2375 = vcvt.f32.s32 %v2369
      %v2376 = vshll.u32 %v2375, 16
      %v2377 = vadd.s32 %v2376, %v2374
      %vm2378 = vcmp.lt.s32.totalorder %v1802, %v1803
      %v2379 = vsel %vm2378, %v1802, %v1803
      %v2380 = vand.u32 %v2379, 65535
      %v2381 = vshra.s32 %v2379, 16
      %v2382 = vcvt.s32.f32 %v2380
      %v2383 = vcvt.s32.f32 %v2381
      %2384 = vmin.xlane.f32.xlu0 %v2383
      %v2385 = vpop.xlane.xlu0 %2384
      %vm2386 = vcmp.eq.f32.partialorder %v2383, %v2385
      %v2387 = vsel %vm2386, %v2382, inf
      %2388 = vmin.xlane.f32.xlu0 %v2387
      %v2389 = vpop.xlane.xlu0 %2388
      %v2390 = vcvt.f32.s32 %v2389
      %v2391 = vcvt.f32.s32 %v2385
      %v2392 = vshll.u32 %v2391, 16
      %v2393 = vadd.s32 %v2392, %v2390
      %vm2394 = vcmp.lt.s32.totalorder %v1804, %v1805
      %v2395 = vsel %vm2394, %v1804, %v1805
      %v2396 = vand.u32 %v2395, 65535
      %v2397 = vshra.s32 %v2395, 16
      %v2398 = vcvt.s32.f32 %v2396
      %v2399 = vcvt.s32.f32 %v2397
      %2400 = vmin.xlane.f32.xlu0 %v2399
      %v2401 = vpop.xlane.xlu0 %2400
      %vm2402 = vcmp.eq.f32.partialorder %v2399, %v2401
      %v2403 = vsel %vm2402, %v2398, inf
      %2404 = vmin.xlane.f32.xlu0 %v2403
      %v2405 = vpop.xlane.xlu0 %2404
      %v2406 = vcvt.f32.s32 %v2405
      %v2407 = vcvt.f32.s32 %v2401
      %v2408 = vshll.u32 %v2407, 16
      %v2409 = vadd.s32 %v2408, %v2406
      %vm2410 = vcmp.lt.s32.totalorder %v1806, %v1807
      %v2411 = vsel %vm2410, %v1806, %v1807
      %v2412 = vand.u32 %v2411, 65535
      %v2413 = vshra.s32 %v2411, 16
      %v2414 = vcvt.s32.f32 %v2412
      %v2415 = vcvt.s32.f32 %v2413
      %2416 = vmin.xlane.f32.xlu0 %v2415
      %v2417 = vpop.xlane.xlu0 %2416
      %vm2418 = vcmp.eq.f32.partialorder %v2415, %v2417
      %v2419 = vsel %vm2418, %v2414, inf
      %2420 = vmin.xlane.f32.xlu0 %v2419
      %v2421 = vpop.xlane.xlu0 %2420
      %v2422 = vcvt.f32.s32 %v2421
      %v2423 = vcvt.f32.s32 %v2417
      %v2424 = vshll.u32 %v2423, 16
      %v2425 = vadd.s32 %v2424, %v2422
      %vm2426 = vcmp.lt.s32.totalorder %v1808, %v1809
      %v2427 = vsel %vm2426, %v1808, %v1809
      %v2428 = vand.u32 %v2427, 65535
      %v2429 = vshra.s32 %v2427, 16
      %v2430 = vcvt.s32.f32 %v2428
      %v2431 = vcvt.s32.f32 %v2429
      %2432 = vmin.xlane.f32.xlu0 %v2431
      %v2433 = vpop.xlane.xlu0 %2432
      %vm2434 = vcmp.eq.f32.partialorder %v2431, %v2433
      %v2435 = vsel %vm2434, %v2430, inf
      %2436 = vmin.xlane.f32.xlu0 %v2435
      %v2437 = vpop.xlane.xlu0 %2436
      %v2438 = vcvt.f32.s32 %v2437
      %v2439 = vcvt.f32.s32 %v2433
      %v2440 = vshll.u32 %v2439, 16
      %v2441 = vadd.s32 %v2440, %v2438
      %vm2442 = vcmp.lt.s32.totalorder %v1810, %v1811
      %v2443 = vsel %vm2442, %v1810, %v1811
      %v2444 = vand.u32 %v2443, 65535
      %v2445 = vshra.s32 %v2443, 16
      %v2446 = vcvt.s32.f32 %v2444
      %v2447 = vcvt.s32.f32 %v2445
      %2448 = vmin.xlane.f32.xlu0 %v2447
      %v2449 = vpop.xlane.xlu0 %2448
      %vm2450 = vcmp.eq.f32.partialorder %v2447, %v2449
      %v2451 = vsel %vm2450, %v2446, inf
      %2452 = vmin.xlane.f32.xlu0 %v2451
      %v2453 = vpop.xlane.xlu0 %2452
      %v2454 = vcvt.f32.s32 %v2453
      %v2455 = vcvt.f32.s32 %v2449
      %v2456 = vshll.u32 %v2455, 16
      %v2457 = vadd.s32 %v2456, %v2454
      %vm2458 = vcmp.lt.s32.totalorder %v1812, %v1813
      %v2459 = vsel %vm2458, %v1812, %v1813
      %v2460 = vand.u32 %v2459, 65535
      %v2461 = vshra.s32 %v2459, 16
      %v2462 = vcvt.s32.f32 %v2460
      %v2463 = vcvt.s32.f32 %v2461
      %2464 = vmin.xlane.f32.xlu0 %v2463
      %v2465 = vpop.xlane.xlu0 %2464
      %vm2466 = vcmp.eq.f32.partialorder %v2463, %v2465
      %v2467 = vsel %vm2466, %v2462, inf
      %2468 = vmin.xlane.f32.xlu0 %v2467
      %v2469 = vpop.xlane.xlu0 %2468
      %v2470 = vcvt.f32.s32 %v2469
      %v2471 = vcvt.f32.s32 %v2465
      %v2472 = vshll.u32 %v2471, 16
      %v2473 = vadd.s32 %v2472, %v2470
      %vm2474 = vcmp.lt.s32.totalorder %v1814, %v1815
      %v2475 = vsel %vm2474, %v1814, %v1815
      %v2476 = vand.u32 %v2475, 65535
      %v2477 = vshra.s32 %v2475, 16
      %v2478 = vcvt.s32.f32 %v2476
      %v2479 = vcvt.s32.f32 %v2477
      %2480 = vmin.xlane.f32.xlu0 %v2479
      %v2481 = vpop.xlane.xlu0 %2480
      %vm2482 = vcmp.eq.f32.partialorder %v2479, %v2481
      %v2483 = vsel %vm2482, %v2478, inf
      %2484 = vmin.xlane.f32.xlu0 %v2483
      %v2485 = vpop.xlane.xlu0 %2484
      %v2486 = vcvt.f32.s32 %v2485
      %v2487 = vcvt.f32.s32 %v2481
      %v2488 = vshll.u32 %v2487, 16
      %v2489 = vadd.s32 %v2488, %v2486
      %vm2490 = vcmp.lt.s32.totalorder %v1816, %v1817
      %v2491 = vsel %vm2490, %v1816, %v1817
      %v2492 = vand.u32 %v2491, 65535
      %v2493 = vshra.s32 %v2491, 16
      %v2494 = vcvt.s32.f32 %v2492
      %v2495 = vcvt.s32.f32 %v2493
      %2496 = vmin.xlane.f32.xlu0 %v2495
      %v2497 = vpop.xlane.xlu0 %2496
      %vm2498 = vcmp.eq.f32.partialorder %v2495, %v2497
      %v2499 = vsel %vm2498, %v2494, inf
      %2500 = vmin.xlane.f32.xlu0 %v2499
      %v2501 = vpop.xlane.xlu0 %2500
      %v2502 = vcvt.f32.s32 %v2501
      %v2503 = vcvt.f32.s32 %v2497
      %v2504 = vshll.u32 %v2503, 16
      %v2505 = vadd.s32 %v2504, %v2502
      %vm2506 = vcmp.lt.s32.totalorder %v1818, %v1819
      %v2507 = vsel %vm2506, %v1818, %v1819
      %v2508 = vand.u32 %v2507, 65535
      %v2509 = vshra.s32 %v2507, 16
      %v2510 = vcvt.s32.f32 %v2508
      %v2511 = vcvt.s32.f32 %v2509
      %2512 = vmin.xlane.f32.xlu0 %v2511
      %v2513 = vpop.xlane.xlu0 %2512
      %vm2514 = vcmp.eq.f32.partialorder %v2511, %v2513
      %v2515 = vsel %vm2514, %v2510, inf
      %2516 = vmin.xlane.f32.xlu0 %v2515
      %v2517 = vpop.xlane.xlu0 %2516
      %v2518 = vcvt.f32.s32 %v2517
      %v2519 = vcvt.f32.s32 %v2513
      %v2520 = vshll.u32 %v2519, 16
      %v2521 = vadd.s32 %v2520, %v2518
      %vm2522 = vcmp.lt.s32.totalorder %v1820, %v1821
      %v2523 = vsel %vm2522, %v1820, %v1821
      %v2524 = vand.u32 %v2523, 65535
      %v2525 = vshra.s32 %v2523, 16
      %v2526 = vcvt.s32.f32 %v2524
      %v2527 = vcvt.s32.f32 %v2525
      %2528 = vmin.xlane.f32.xlu0 %v2527
      %v2529 = vpop.xlane.xlu0 %2528
      %vm2530 = vcmp.eq.f32.partialorder %v2527, %v2529
      %v2531 = vsel %vm2530, %v2526, inf
      %2532 = vmin.xlane.f32.xlu0 %v2531
      %v2533 = vpop.xlane.xlu0 %2532
      %v2534 = vcvt.f32.s32 %v2533
      %v2535 = vcvt.f32.s32 %v2529
      %v2536 = vshll.u32 %v2535, 16
      %v2537 = vadd.s32 %v2536, %v2534
      %vm2538 = vcmp.lt.s32.totalorder %v1822, %v1823
      %v2539 = vsel %vm2538, %v1822, %v1823
      %v2540 = vand.u32 %v2539, 65535
      %v2541 = vshra.s32 %v2539, 16
      %v2542 = vcvt.s32.f32 %v2540
      %v2543 = vcvt.s32.f32 %v2541
      %2544 = vmin.xlane.f32.xlu0 %v2543
      %v2545 = vpop.xlane.xlu0 %2544
      %vm2546 = vcmp.eq.f32.partialorder %v2543, %v2545
      %v2547 = vsel %vm2546, %v2542, inf
      %2548 = vmin.xlane.f32.xlu0 %v2547
      %v2549 = vpop.xlane.xlu0 %2548
      %v2550 = vcvt.f32.s32 %v2549
      %v2551 = vcvt.f32.s32 %v2545
      %v2552 = vshll.u32 %v2551, 16
      %v2553 = vadd.s32 %v2552, %v2550
      %vm2554 = vcmp.lt.s32.totalorder %v1824, %v1825
      %v2555 = vsel %vm2554, %v1824, %v1825
      %v2556 = vand.u32 %v2555, 65535
      %v2557 = vshra.s32 %v2555, 16
      %v2558 = vcvt.s32.f32 %v2556
      %v2559 = vcvt.s32.f32 %v2557
      %2560 = vmin.xlane.f32.xlu0 %v2559
      %v2561 = vpop.xlane.xlu0 %2560
      %vm2562 = vcmp.eq.f32.partialorder %v2559, %v2561
      %v2563 = vsel %vm2562, %v2558, inf
      %2564 = vmin.xlane.f32.xlu0 %v2563
      %v2565 = vpop.xlane.xlu0 %2564
      %v2566 = vcvt.f32.s32 %v2565
      %v2567 = vcvt.f32.s32 %v2561
      %v2568 = vshll.u32 %v2567, 16
      %v2569 = vadd.s32 %v2568, %v2566
      %vm2570 = vcmp.lt.s32.totalorder %v1826, %v1827
      %v2571 = vsel %vm2570, %v1826, %v1827
      %v2572 = vand.u32 %v2571, 65535
      %v2573 = vshra.s32 %v2571, 16
      %v2574 = vcvt.s32.f32 %v2572
      %v2575 = vcvt.s32.f32 %v2573
      %2576 = vmin.xlane.f32.xlu0 %v2575
      %v2577 = vpop.xlane.xlu0 %2576
      %vm2578 = vcmp.eq.f32.partialorder %v2575, %v2577
      %v2579 = vsel %vm2578, %v2574, inf
      %2580 = vmin.xlane.f32.xlu0 %v2579
      %v2581 = vpop.xlane.xlu0 %2580
      %v2582 = vcvt.f32.s32 %v2581
      %v2583 = vcvt.f32.s32 %v2577
      %v2584 = vshll.u32 %v2583, 16
      %v2585 = vadd.s32 %v2584, %v2582
      %vm2586 = vcmp.lt.s32.totalorder %v1828, %v1829
      %v2587 = vsel %vm2586, %v1828, %v1829
      %v2588 = vand.u32 %v2587, 65535
      %v2589 = vshra.s32 %v2587, 16
      %v2590 = vcvt.s32.f32 %v2588
      %v2591 = vcvt.s32.f32 %v2589
      %2592 = vmin.xlane.f32.xlu0 %v2591
      %v2593 = vpop.xlane.xlu0 %2592
      %vm2594 = vcmp.eq.f32.partialorder %v2591, %v2593
      %v2595 = vsel %vm2594, %v2590, inf
      %2596 = vmin.xlane.f32.xlu0 %v2595
      %v2597 = vpop.xlane.xlu0 %2596
      %v2598 = vcvt.f32.s32 %v2597
      %v2599 = vcvt.f32.s32 %v2593
      %v2600 = vshll.u32 %v2599, 16
      %v2601 = vadd.s32 %v2600, %v2598
      %vm2602 = vcmp.lt.s32.totalorder %v1830, %v1831
      %v2603 = vsel %vm2602, %v1830, %v1831
      %v2604 = vand.u32 %v2603, 65535
      %v2605 = vshra.s32 %v2603, 16
      %v2606 = vcvt.s32.f32 %v2604
      %v2607 = vcvt.s32.f32 %v2605
      %2608 = vmin.xlane.f32.xlu0 %v2607
      %v2609 = vpop.xlane.xlu0 %2608
      %vm2610 = vcmp.eq.f32.partialorder %v2607, %v2609
      %v2611 = vsel %vm2610, %v2606, inf
      %2612 = vmin.xlane.f32.xlu0 %v2611
      %v2613 = vpop.xlane.xlu0 %2612
      %v2614 = vcvt.f32.s32 %v2613
      %v2615 = vcvt.f32.s32 %v2609
      %v2616 = vshll.u32 %v2615, 16
      %v2617 = vadd.s32 %v2616, %v2614
      %vm2618 = vcmp.lt.s32.totalorder %v1832, %v1833
      %v2619 = vsel %vm2618, %v1832, %v1833
      %v2620 = vand.u32 %v2619, 65535
      %v2621 = vshra.s32 %v2619, 16
      %v2622 = vcvt.s32.f32 %v2620
      %v2623 = vcvt.s32.f32 %v2621
      %2624 = vmin.xlane.f32.xlu0 %v2623
      %v2625 = vpop.xlane.xlu0 %2624
      %vm2626 = vcmp.eq.f32.partialorder %v2623, %v2625
      %v2627 = vsel %vm2626, %v2622, inf
      %2628 = vmin.xlane.f32.xlu0 %v2627
      %v2629 = vpop.xlane.xlu0 %2628
      %v2630 = vcvt.f32.s32 %v2629
      %v2631 = vcvt.f32.s32 %v2625
      %v2632 = vshll.u32 %v2631, 16
      %v2633 = vadd.s32 %v2632, %v2630
      %vm2634 = vcmp.lt.s32.totalorder %v1834, %v1835
      %v2635 = vsel %vm2634, %v1834, %v1835
      %v2636 = vand.u32 %v2635, 65535
      %v2637 = vshra.s32 %v2635, 16
      %v2638 = vcvt.s32.f32 %v2636
      %v2639 = vcvt.s32.f32 %v2637
      %2640 = vmin.xlane.f32.xlu0 %v2639
      %v2641 = vpop.xlane.xlu0 %2640
      %vm2642 = vcmp.eq.f32.partialorder %v2639, %v2641
      %v2643 = vsel %vm2642, %v2638, inf
      %2644 = vmin.xlane.f32.xlu0 %v2643
      %v2645 = vpop.xlane.xlu0 %2644
      %v2646 = vcvt.f32.s32 %v2645
      %v2647 = vcvt.f32.s32 %v2641
      %v2648 = vshll.u32 %v2647, 16
      %v2649 = vadd.s32 %v2648, %v2646
      %vm2650 = vcmp.lt.s32.totalorder %v1836, %v1837
      %v2651 = vsel %vm2650, %v1836, %v1837
      %v2652 = vand.u32 %v2651, 65535
      %v2653 = vshra.s32 %v2651, 16
      %v2654 = vcvt.s32.f32 %v2652
      %v2655 = vcvt.s32.f32 %v2653
      %2656 = vmin.xlane.f32.xlu0 %v2655
      %v2657 = vpop.xlane.xlu0 %2656
      %vm2658 = vcmp.eq.f32.partialorder %v2655, %v2657
      %v2659 = vsel %vm2658, %v2654, inf
      %2660 = vmin.xlane.f32.xlu0 %v2659
      %v2661 = vpop.xlane.xlu0 %2660
      %v2662 = vcvt.f32.s32 %v2661
      %v2663 = vcvt.f32.s32 %v2657
      %v2664 = vshll.u32 %v2663, 16
      %v2665 = vadd.s32 %v2664, %v2662
      %vm2666 = vcmp.lt.s32.totalorder %v1838, %v1839
      %v2667 = vsel %vm2666, %v1838, %v1839
      %v2668 = vand.u32 %v2667, 65535
      %v2669 = vshra.s32 %v2667, 16
      %v2670 = vcvt.s32.f32 %v2668
      %v2671 = vcvt.s32.f32 %v2669
      %2672 = vmin.xlane.f32.xlu0 %v2671
      %v2673 = vpop.xlane.xlu0 %2672
      %vm2674 = vcmp.eq.f32.partialorder %v2671, %v2673
      %v2675 = vsel %vm2674, %v2670, inf
      %2676 = vmin.xlane.f32.xlu0 %v2675
      %v2677 = vpop.xlane.xlu0 %2676
      %v2678 = vcvt.f32.s32 %v2677
      %v2679 = vcvt.f32.s32 %v2673
      %v2680 = vshll.u32 %v2679, 16
      %v2681 = vadd.s32 %v2680, %v2678
      %vm2682 = vcmp.lt.s32.totalorder %v1840, %v1841
      %v2683 = vsel %vm2682, %v1840, %v1841
      %v2684 = vand.u32 %v2683, 65535
      %v2685 = vshra.s32 %v2683, 16
      %v2686 = vcvt.s32.f32 %v2684
      %v2687 = vcvt.s32.f32 %v2685
      %2688 = vmin.xlane.f32.xlu0 %v2687
      %v2689 = vpop.xlane.xlu0 %2688
      %vm2690 = vcmp.eq.f32.partialorder %v2687, %v2689
      %v2691 = vsel %vm2690, %v2686, inf
      %2692 = vmin.xlane.f32.xlu0 %v2691
      %v2693 = vpop.xlane.xlu0 %2692
      %v2694 = vcvt.f32.s32 %v2693
      %v2695 = vcvt.f32.s32 %v2689
      %v2696 = vshll.u32 %v2695, 16
      %v2697 = vadd.s32 %v2696, %v2694
      %vm2698 = vcmp.lt.s32.totalorder %v1842, %v1843
      %v2699 = vsel %vm2698, %v1842, %v1843
      %v2700 = vand.u32 %v2699, 65535
      %v2701 = vshra.s32 %v2699, 16
      %v2702 = vcvt.s32.f32 %v2700
      %v2703 = vcvt.s32.f32 %v2701
      %2704 = vmin.xlane.f32.xlu0 %v2703
      %v2705 = vpop.xlane.xlu0 %2704
      %vm2706 = vcmp.eq.f32.partialorder %v2703, %v2705
      %v2707 = vsel %vm2706, %v2702, inf
      %2708 = vmin.xlane.f32.xlu0 %v2707
      %v2709 = vpop.xlane.xlu0 %2708
      %v2710 = vcvt.f32.s32 %v2709
      %v2711 = vcvt.f32.s32 %v2705
      %v2712 = vshll.u32 %v2711, 16
      %v2713 = vadd.s32 %v2712, %v2710
      %vm2714 = vcmp.lt.s32.totalorder %v1844, %v1845
      %v2715 = vsel %vm2714, %v1844, %v1845
      %v2716 = vand.u32 %v2715, 65535
      %v2717 = vshra.s32 %v2715, 16
      %v2718 = vcvt.s32.f32 %v2716
      %v2719 = vcvt.s32.f32 %v2717
      %2720 = vmin.xlane.f32.xlu0 %v2719
      %v2721 = vpop.xlane.xlu0 %2720
      %vm2722 = vcmp.eq.f32.partialorder %v2719, %v2721
      %v2723 = vsel %vm2722, %v2718, inf
      %2724 = vmin.xlane.f32.xlu0 %v2723
      %v2725 = vpop.xlane.xlu0 %2724
      %v2726 = vcvt.f32.s32 %v2725
      %v2727 = vcvt.f32.s32 %v2721
      %v2728 = vshll.u32 %v2727, 16
      %v2729 = vadd.s32 %v2728, %v2726
      %vm2730 = vcmp.lt.s32.totalorder %v1846, %v1847
      %v2731 = vsel %vm2730, %v1846, %v1847
      %v2732 = vand.u32 %v2731, 65535
      %v2733 = vshra.s32 %v2731, 16
      %v2734 = vcvt.s32.f32 %v2732
      %v2735 = vcvt.s32.f32 %v2733
      %2736 = vmin.xlane.f32.xlu0 %v2735
      %v2737 = vpop.xlane.xlu0 %2736
      %vm2738 = vcmp.eq.f32.partialorder %v2735, %v2737
      %v2739 = vsel %vm2738, %v2734, inf
      %2740 = vmin.xlane.f32.xlu0 %v2739
      %v2741 = vpop.xlane.xlu0 %2740
      %v2742 = vcvt.f32.s32 %v2741
      %v2743 = vcvt.f32.s32 %v2737
      %v2744 = vshll.u32 %v2743, 16
      %v2745 = vadd.s32 %v2744, %v2742
      %vm2746 = vcmp.lt.s32.totalorder %v1848, %v1849
      %v2747 = vsel %vm2746, %v1848, %v1849
      %v2748 = vand.u32 %v2747, 65535
      %v2749 = vshra.s32 %v2747, 16
      %v2750 = vcvt.s32.f32 %v2748
      %v2751 = vcvt.s32.f32 %v2749
      %2752 = vmin.xlane.f32.xlu0 %v2751
      %v2753 = vpop.xlane.xlu0 %2752
      %vm2754 = vcmp.eq.f32.partialorder %v2751, %v2753
      %v2755 = vsel %vm2754, %v2750, inf
      %2756 = vmin.xlane.f32.xlu0 %v2755
      %v2757 = vpop.xlane.xlu0 %2756
      %v2758 = vcvt.f32.s32 %v2757
      %v2759 = vcvt.f32.s32 %v2753
      %v2760 = vshll.u32 %v2759, 16
      %v2761 = vadd.s32 %v2760, %v2758
      %vm2762 = vcmp.lt.s32.totalorder %v1850, %v1851
      %v2763 = vsel %vm2762, %v1850, %v1851
      %v2764 = vand.u32 %v2763, 65535
      %v2765 = vshra.s32 %v2763, 16
      %v2766 = vcvt.s32.f32 %v2764
      %v2767 = vcvt.s32.f32 %v2765
      %2768 = vmin.xlane.f32.xlu0 %v2767
      %v2769 = vpop.xlane.xlu0 %2768
      %vm2770 = vcmp.eq.f32.partialorder %v2767, %v2769
      %v2771 = vsel %vm2770, %v2766, inf
      %2772 = vmin.xlane.f32.xlu0 %v2771
      %v2773 = vpop.xlane.xlu0 %2772
      %v2774 = vcvt.f32.s32 %v2773
      %v2775 = vcvt.f32.s32 %v2769
      %v2776 = vshll.u32 %v2775, 16
      %v2777 = vadd.s32 %v2776, %v2774
      %vm2778 = vcmp.lt.s32.totalorder %v1852, %v1853
      %v2779 = vsel %vm2778, %v1852, %v1853
      %v2780 = vand.u32 %v2779, 65535
      %v2781 = vshra.s32 %v2779, 16
      %v2782 = vcvt.s32.f32 %v2780
      %v2783 = vcvt.s32.f32 %v2781
      %2784 = vmin.xlane.f32.xlu0 %v2783
      %v2785 = vpop.xlane.xlu0 %2784
      %vm2786 = vcmp.eq.f32.partialorder %v2783, %v2785
      %v2787 = vsel %vm2786, %v2782, inf
      %2788 = vmin.xlane.f32.xlu0 %v2787
      %v2789 = vpop.xlane.xlu0 %2788
      %v2790 = vcvt.f32.s32 %v2789
      %v2791 = vcvt.f32.s32 %v2785
      %v2792 = vshll.u32 %v2791, 16
      %v2793 = vadd.s32 %v2792, %v2790
      %vm2794 = vcmp.lt.s32.totalorder %v1854, %v1855
      %v2795 = vsel %vm2794, %v1854, %v1855
      %v2796 = vand.u32 %v2795, 65535
      %v2797 = vshra.s32 %v2795, 16
      %v2798 = vcvt.s32.f32 %v2796
      %v2799 = vcvt.s32.f32 %v2797
      %2800 = vmin.xlane.f32.xlu0 %v2799
      %v2801 = vpop.xlane.xlu0 %2800
      %vm2802 = vcmp.eq.f32.partialorder %v2799, %v2801
      %v2803 = vsel %vm2802, %v2798, inf
      %2804 = vmin.xlane.f32.xlu0 %v2803
      %v2805 = vpop.xlane.xlu0 %2804
      %v2806 = vcvt.f32.s32 %v2805
      %v2807 = vcvt.f32.s32 %v2801
      %v2808 = vshll.u32 %v2807, 16
      %v2809 = vadd.s32 %v2808, %v2806
      %vm2810 = vcmp.lt.s32.totalorder %v1856, %v1857
      %v2811 = vsel %vm2810, %v1856, %v1857
      %v2812 = vand.u32 %v2811, 65535
      %v2813 = vshra.s32 %v2811, 16
      %v2814 = vcvt.s32.f32 %v2812
      %v2815 = vcvt.s32.f32 %v2813
      %2816 = vmin.xlane.f32.xlu0 %v2815
      %v2817 = vpop.xlane.xlu0 %2816
      %vm2818 = vcmp.eq.f32.partialorder %v2815, %v2817
      %v2819 = vsel %vm2818, %v2814, inf
      %2820 = vmin.xlane.f32.xlu0 %v2819
      %v2821 = vpop.xlane.xlu0 %2820
      %v2822 = vcvt.f32.s32 %v2821
      %v2823 = vcvt.f32.s32 %v2817
      %v2824 = vshll.u32 %v2823, 16
      %v2825 = vadd.s32 %v2824, %v2822
      %vm2826 = vcmp.lt.s32.totalorder %v1858, %v1859
      %v2827 = vsel %vm2826, %v1858, %v1859
      %v2828 = vand.u32 %v2827, 65535
      %v2829 = vshra.s32 %v2827, 16
      %v2830 = vcvt.s32.f32 %v2828
      %v2831 = vcvt.s32.f32 %v2829
      %2832 = vmin.xlane.f32.xlu0 %v2831
      %v2833 = vpop.xlane.xlu0 %2832
      %vm2834 = vcmp.eq.f32.partialorder %v2831, %v2833
      %v2835 = vsel %vm2834, %v2830, inf
      %2836 = vmin.xlane.f32.xlu0 %v2835
      %v2837 = vpop.xlane.xlu0 %2836
      %v2838 = vcvt.f32.s32 %v2837
      %v2839 = vcvt.f32.s32 %v2833
      %v2840 = vshll.u32 %v2839, 16
      %v2841 = vadd.s32 %v2840, %v2838
      %vm2842 = vcmp.lt.s32.totalorder %v1860, %v1861
      %v2843 = vsel %vm2842, %v1860, %v1861
      %v2844 = vand.u32 %v2843, 65535
      %v2845 = vshra.s32 %v2843, 16
      %v2846 = vcvt.s32.f32 %v2844
      %v2847 = vcvt.s32.f32 %v2845
      %2848 = vmin.xlane.f32.xlu0 %v2847
      %v2849 = vpop.xlane.xlu0 %2848
      %vm2850 = vcmp.eq.f32.partialorder %v2847, %v2849
      %v2851 = vsel %vm2850, %v2846, inf
      %2852 = vmin.xlane.f32.xlu0 %v2851
      %v2853 = vpop.xlane.xlu0 %2852
      %v2854 = vcvt.f32.s32 %v2853
      %v2855 = vcvt.f32.s32 %v2849
      %v2856 = vshll.u32 %v2855, 16
      %v2857 = vadd.s32 %v2856, %v2854
      %vm2858 = vcmp.lt.s32.totalorder %v1862, %v1863
      %v2859 = vsel %vm2858, %v1862, %v1863
      %v2860 = vand.u32 %v2859, 65535
      %v2861 = vshra.s32 %v2859, 16
      %v2862 = vcvt.s32.f32 %v2860
      %v2863 = vcvt.s32.f32 %v2861
      %2864 = vmin.xlane.f32.xlu0 %v2863
      %v2865 = vpop.xlane.xlu0 %2864
      %vm2866 = vcmp.eq.f32.partialorder %v2863, %v2865
      %v2867 = vsel %vm2866, %v2862, inf
      %2868 = vmin.xlane.f32.xlu0 %v2867
      %v2869 = vpop.xlane.xlu0 %2868
      %v2870 = vcvt.f32.s32 %v2869
      %v2871 = vcvt.f32.s32 %v2865
      %v2872 = vshll.u32 %v2871, 16
      %v2873 = vadd.s32 %v2872, %v2870
      %vm2874 = vcmp.lt.s32.totalorder %v1864, %v1865
      %v2875 = vsel %vm2874, %v1864, %v1865
      %v2876 = vand.u32 %v2875, 65535
      %v2877 = vshra.s32 %v2875, 16
      %v2878 = vcvt.s32.f32 %v2876
      %v2879 = vcvt.s32.f32 %v2877
      %2880 = vmin.xlane.f32.xlu0 %v2879
      %v2881 = vpop.xlane.xlu0 %2880
      %vm2882 = vcmp.eq.f32.partialorder %v2879, %v2881
      %v2883 = vsel %vm2882, %v2878, inf
      %2884 = vmin.xlane.f32.xlu0 %v2883
      %v2885 = vpop.xlane.xlu0 %2884
      %v2886 = vcvt.f32.s32 %v2885
      %v2887 = vcvt.f32.s32 %v2881
      %v2888 = vshll.u32 %v2887, 16
      %v2889 = vadd.s32 %v2888, %v2886
      %vm2890 = vcmp.eq.f32.partialorder %v1098, %v1420
      %vm2891 = vcmp.eq.f32.partialorder %v1099, %v1420
      %vm2892 = vcmp.eq.f32.partialorder %v1100, %v1423
      %vm2893 = vcmp.eq.f32.partialorder %v1101, %v1423
      %vm2894 = vcmp.eq.f32.partialorder %v1102, %v1426
      %vm2895 = vcmp.eq.f32.partialorder %v1103, %v1426
      %vm2896 = vcmp.eq.f32.partialorder %v1104, %v1429
      %vm2897 = vcmp.eq.f32.partialorder %v1105, %v1429
      %vm2898 = vcmp.eq.f32.partialorder %v1106, %v1432
      %vm2899 = vcmp.eq.f32.partialorder %v1107, %v1432
      %vm2900 = vcmp.eq.f32.partialorder %v1108, %v1435
      %vm2901 = vcmp.eq.f32.partialorder %v1109, %v1435
      %vm2902 = vcmp.eq.f32.partialorder %v1110, %v1438
      %vm2903 = vcmp.eq.f32.partialorder %v1111, %v1438
      %vm2904 = vcmp.eq.f32.partialorder %v1112, %v1441
      %vm2905 = vcmp.eq.f32.partialorder %v1113, %v1441
      %vm2906 = vcmp.eq.f32.partialorder %v1114, %v1444
      %vm2907 = vcmp.eq.f32.partialorder %v1115, %v1444
      %vm2908 = vcmp.eq.f32.partialorder %v1116, %v1447
      %vm2909 = vcmp.eq.f32.partialorder %v1117, %v1447
      %vm2910 = vcmp.eq.f32.partialorder %v1118, %v1450
      %vm2911 = vcmp.eq.f32.partialorder %v1119, %v1450
      %vm2912 = vcmp.eq.f32.partialorder %v1120, %v1453
      %vm2913 = vcmp.eq.f32.partialorder %v1121, %v1453
      %vm2914 = vcmp.eq.f32.partialorder %v1122, %v1456
      %vm2915 = vcmp.eq.f32.partialorder %v1123, %v1456
      %vm2916 = vcmp.eq.f32.partialorder %v1124, %v1459
      %vm2917 = vcmp.eq.f32.partialorder %v1125, %v1459
      %vm2918 = vcmp.eq.f32.partialorder %v1126, %v1462
      %vm2919 = vcmp.eq.f32.partialorder %v1127, %v1462
      %vm2920 = vcmp.eq.f32.partialorder %v1128, %v1465
      %vm2921 = vcmp.eq.f32.partialorder %v1129, %v1465
      %vm2922 = vcmp.eq.f32.partialorder %v1130, %v1468
      %vm2923 = vcmp.eq.f32.partialorder %v1131, %v1468
      %vm2924 = vcmp.eq.f32.partialorder %v1132, %v1471
      %vm2925 = vcmp.eq.f32.partialorder %v1133, %v1471
      %vm2926 = vcmp.eq.f32.partialorder %v1134, %v1474
      %vm2927 = vcmp.eq.f32.partialorder %v1135, %v1474
      %vm2928 = vcmp.eq.f32.partialorder %v1136, %v1477
      %vm2929 = vcmp.eq.f32.partialorder %v1137, %v1477
      %vm2930 = vcmp.eq.f32.partialorder %v1138, %v1480
      %vm2931 = vcmp.eq.f32.partialorder %v1139, %v1480
      %vm2932 = vcmp.eq.f32.partialorder %v1140, %v1483
      %vm2933 = vcmp.eq.f32.partialorder %v1141, %v1483
      %vm2934 = vcmp.eq.f32.partialorder %v1142, %v1486
      %vm2935 = vcmp.eq.f32.partialorder %v1143, %v1486
      %vm2936 = vcmp.eq.f32.partialorder %v1144, %v1489
      %vm2937 = vcmp.eq.f32.partialorder %v1145, %v1489
      %vm2938 = vcmp.eq.f32.partialorder %v1146, %v1492
      %vm2939 = vcmp.eq.f32.partialorder %v1147, %v1492
      %vm2940 = vcmp.eq.f32.partialorder %v1148, %v1495
      %vm2941 = vcmp.eq.f32.partialorder %v1149, %v1495
      %vm2942 = vcmp.eq.f32.partialorder %v1150, %v1498
      %vm2943 = vcmp.eq.f32.partialorder %v1151, %v1498
      %vm2944 = vcmp.eq.f32.partialorder %v1152, %v1501
      %vm2945 = vcmp.eq.f32.partialorder %v1153, %v1501
      %vm2946 = vcmp.eq.f32.partialorder %v1154, %v1504
      %vm2947 = vcmp.eq.f32.partialorder %v1155, %v1504
      %vm2948 = vcmp.eq.f32.partialorder %v1156, %v1507
      %vm2949 = vcmp.eq.f32.partialorder %v1157, %v1507
      %vm2950 = vcmp.eq.f32.partialorder %v1158, %v1510
      %vm2951 = vcmp.eq.f32.partialorder %v1159, %v1510
      %vm2952 = vcmp.eq.f32.partialorder %v1160, %v1513
      %vm2953 = vcmp.eq.f32.partialorder %v1161, %v1513
      %vm2954 = vcmp.eq.f32.partialorder %v1162, %v1516
      %vm2955 = vcmp.eq.f32.partialorder %v1163, %v1516
      %vm2956 = vcmp.eq.f32.partialorder %v1164, %v1519
      %vm2957 = vcmp.eq.f32.partialorder %v1165, %v1519
      %vm2958 = vcmp.eq.f32.partialorder %v1166, %v1522
      %vm2959 = vcmp.eq.f32.partialorder %v1167, %v1522
      %vm2960 = vcmp.eq.f32.partialorder %v1168, %v1525
      %vm2961 = vcmp.eq.f32.partialorder %v1169, %v1525
      %vm2962 = vcmp.eq.f32.partialorder %v1170, %v1528
      %vm2963 = vcmp.eq.f32.partialorder %v1171, %v1528
      %vm2964 = vcmp.eq.f32.partialorder %v1172, %v1531
      %vm2965 = vcmp.eq.f32.partialorder %v1173, %v1531
      %vm2966 = vcmp.eq.f32.partialorder %v1174, %v1534
      %vm2967 = vcmp.eq.f32.partialorder %v1175, %v1534
      %vm2968 = vcmp.eq.f32.partialorder %v1176, %v1537
      %vm2969 = vcmp.eq.f32.partialorder %v1177, %v1537
      %vm2970 = vcmp.eq.f32.partialorder %v1178, %v1540
      %vm2971 = vcmp.eq.f32.partialorder %v1179, %v1540
      %vm2972 = vcmp.eq.f32.partialorder %v1180, %v1543
      %vm2973 = vcmp.eq.f32.partialorder %v1181, %v1543
      %vm2974 = vcmp.eq.f32.partialorder %v1182, %v1546
      %vm2975 = vcmp.eq.f32.partialorder %v1183, %v1546
      %vm2976 = vcmp.eq.f32.partialorder %v1184, %v1549
      %vm2977 = vcmp.eq.f32.partialorder %v1185, %v1549
      %vm2978 = vcmp.eq.f32.partialorder %v1186, %v1552
      %vm2979 = vcmp.eq.f32.partialorder %v1187, %v1552
      %vm2980 = vcmp.eq.f32.partialorder %v1188, %v1555
      %vm2981 = vcmp.eq.f32.partialorder %v1189, %v1555
      %vm2982 = vcmp.eq.f32.partialorder %v1190, %v1558
      %vm2983 = vcmp.eq.f32.partialorder %v1191, %v1558
      %vm2984 = vcmp.eq.f32.partialorder %v1192, %v1561
      %vm2985 = vcmp.eq.f32.partialorder %v1193, %v1561
      %vm2986 = vcmp.eq.f32.partialorder %v1194, %v1564
      %vm2987 = vcmp.eq.f32.partialorder %v1195, %v1564
      %vm2988 = vcmp.eq.f32.partialorder %v1196, %v1567
      %vm2989 = vcmp.eq.f32.partialorder %v1197, %v1567
      %vm2990 = vcmp.eq.f32.partialorder %v1198, %v1570
      %vm2991 = vcmp.eq.f32.partialorder %v1199, %v1570
      %vm2992 = vcmp.eq.f32.partialorder %v1200, %v1573
      %vm2993 = vcmp.eq.f32.partialorder %v1201, %v1573
      %vm2994 = vcmp.eq.f32.partialorder %v1202, %v1576
      %vm2995 = vcmp.eq.f32.partialorder %v1203, %v1576
      %vm2996 = vcmp.eq.f32.partialorder %v1204, %v1579
      %vm2997 = vcmp.eq.f32.partialorder %v1205, %v1579
      %vm2998 = vcmp.eq.f32.partialorder %v1206, %v1582
      %vm2999 = vcmp.eq.f32.partialorder %v1207, %v1582
      %vm3000 = vcmp.eq.f32.partialorder %v1208, %v1585
      %vm3001 = vcmp.eq.f32.partialorder %v1209, %v1585
      %vm3002 = vcmp.eq.f32.partialorder %v1210, %v1588
      %vm3003 = vcmp.eq.f32.partialorder %v1211, %v1588
      %vm3004 = vcmp.eq.f32.partialorder %v1212, %v1591
      %vm3005 = vcmp.eq.f32.partialorder %v1213, %v1591
      %vm3006 = vcmp.eq.f32.partialorder %v1214, %v1594
      %vm3007 = vcmp.eq.f32.partialorder %v1215, %v1594
      %vm3008 = vcmp.eq.f32.partialorder %v1216, %v1597
      %vm3009 = vcmp.eq.f32.partialorder %v1217, %v1597
      %vm3010 = vcmp.eq.f32.partialorder %v1218, %v1600
      %vm3011 = vcmp.eq.f32.partialorder %v1219, %v1600
      %vm3012 = vcmp.eq.f32.partialorder %v1220, %v1603
      %vm3013 = vcmp.eq.f32.partialorder %v1221, %v1603
      %vm3014 = vcmp.eq.f32.partialorder %v1222, %v1606
      %vm3015 = vcmp.eq.f32.partialorder %v1223, %v1606
      %vm3016 = vcmp.eq.f32.partialorder %v1224, %v1609
      %vm3017 = vcmp.eq.f32.partialorder %v1225, %v1609
      %v3018 = vsub.s32 %v966, 128
      %v3019 = vsel %vm2890, %v3018, 256
      %v3020 = vsel %vm2891, %v966, 256
      %v3021 = vsel %vm2892, %v3018, 256
      %v3022 = vsel %vm2893, %v966, 256
      %v3023 = vsel %vm2894, %v3018, 256
      %v3024 = vsel %vm2895, %v966, 256
      %v3025 = vsel %vm2896, %v3018, 256
      %v3026 = vsel %vm2897, %v966, 256
      %v3027 = vsel %vm2898, %v3018, 256
      %v3028 = vsel %vm2899, %v966, 256
      %v3029 = vsel %vm2900, %v3018, 256
      %v3030 = vsel %vm2901, %v966, 256
      %v3031 = vsel %vm2902, %v3018, 256
      %v3032 = vsel %vm2903, %v966, 256
      %v3033 = vsel %vm2904, %v3018, 256
      %v3034 = vsel %vm2905, %v966, 256
      %v3035 = vsel %vm2906, %v3018, 256
      %v3036 = vsel %vm2907, %v966, 256
      %v3037 = vsel %vm2908, %v3018, 256
      %v3038 = vsel %vm2909, %v966, 256
      %v3039 = vsel %vm2910, %v3018, 256
      %v3040 = vsel %vm2911, %v966, 256
      %v3041 = vsel %vm2912, %v3018, 256
      %v3042 = vsel %vm2913, %v966, 256
      %v3043 = vsel %vm2914, %v3018, 256
      %v3044 = vsel %vm2915, %v966, 256
      %v3045 = vsel %vm2916, %v3018, 256
      %v3046 = vsel %vm2917, %v966, 256
      %v3047 = vsel %vm2918, %v3018, 256
      %v3048 = vsel %vm2919, %v966, 256
      %v3049 = vsel %vm2920, %v3018, 256
      %v3050 = vsel %vm2921, %v966, 256
      %v3051 = vsel %vm2922, %v3018, 256
      %v3052 = vsel %vm2923, %v966, 256
      %v3053 = vsel %vm2924, %v3018, 256
      %v3054 = vsel %vm2925, %v966, 256
      %v3055 = vsel %vm2926, %v3018, 256
      %v3056 = vsel %vm2927, %v966, 256
      %v3057 = vsel %vm2928, %v3018, 256
      %v3058 = vsel %vm2929, %v966, 256
      %v3059 = vsel %vm2930, %v3018, 256
      %v3060 = vsel %vm2931, %v966, 256
      %v3061 = vsel %vm2932, %v3018, 256
      %v3062 = vsel %vm2933, %v966, 256
      %v3063 = vsel %vm2934, %v3018, 256
      %v3064 = vsel %vm2935, %v966, 256
      %v3065 = vsel %vm2936, %v3018, 256
      %v3066 = vsel %vm2937, %v966, 256
      %v3067 = vsel %vm2938, %v3018, 256
      %v3068 = vsel %vm2939, %v966, 256
      %v3069 = vsel %vm2940, %v3018, 256
      %v3070 = vsel %vm2941, %v966, 256
      %v3071 = vsel %vm2942, %v3018, 256
      %v3072 = vsel %vm2943, %v966, 256
      %v3073 = vsel %vm2944, %v3018, 256
      %v3074 = vsel %vm2945, %v966, 256
      %v3075 = vsel %vm2946, %v3018, 256
      %v3076 = vsel %vm2947, %v966, 256
      %v3077 = vsel %vm2948, %v3018, 256
      %v3078 = vsel %vm2949, %v966, 256
      %v3079 = vsel %vm2950, %v3018, 256
      %v3080 = vsel %vm2951, %v966, 256
      %v3081 = vsel %vm2952, %v3018, 256
      %v3082 = vsel %vm2953, %v966, 256
      %v3083 = vsel %vm2954, %v3018, 256
      %v3084 = vsel %vm2955, %v966, 256
      %v3085 = vsel %vm2956, %v3018, 256
      %v3086 = vsel %vm2957, %v966, 256
      %v3087 = vsel %vm2958, %v3018, 256
      %v3088 = vsel %vm2959, %v966, 256
      %v3089 = vsel %vm2960, %v3018, 256
      %v3090 = vsel %vm2961, %v966, 256
      %v3091 = vsel %vm2962, %v3018, 256
      %v3092 = vsel %vm2963, %v966, 256
      %v3093 = vsel %vm2964, %v3018, 256
      %v3094 = vsel %vm2965, %v966, 256
      %v3095 = vsel %vm2966, %v3018, 256
      %v3096 = vsel %vm2967, %v966, 256
      %v3097 = vsel %vm2968, %v3018, 256
      %v3098 = vsel %vm2969, %v966, 256
      %v3099 = vsel %vm2970, %v3018, 256
      %v3100 = vsel %vm2971, %v966, 256
      %v3101 = vsel %vm2972, %v3018, 256
      %v3102 = vsel %vm2973, %v966, 256
      %v3103 = vsel %vm2974, %v3018, 256
      %v3104 = vsel %vm2975, %v966, 256
      %v3105 = vsel %vm2976, %v3018, 256
      %v3106 = vsel %vm2977, %v966, 256
      %v3107 = vsel %vm2978, %v3018, 256
      %v3108 = vsel %vm2979, %v966, 256
      %v3109 = vsel %vm2980, %v3018, 256
      %v3110 = vsel %vm2981, %v966, 256
      %v3111 = vsel %vm2982, %v3018, 256
      %v3112 = vsel %vm2983, %v966, 256
      %v3113 = vsel %vm2984, %v3018, 256
      %v3114 = vsel %vm2985, %v966, 256
      %v3115 = vsel %vm2986, %v3018, 256
      %v3116 = vsel %vm2987, %v966, 256
      %v3117 = vsel %vm2988, %v3018, 256
      %v3118 = vsel %vm2989, %v966, 256
      %v3119 = vsel %vm2990, %v3018, 256
      %v3120 = vsel %vm2991, %v966, 256
      %v3121 = vsel %vm2992, %v3018, 256
      %v3122 = vsel %vm2993, %v966, 256
      %v3123 = vsel %vm2994, %v3018, 256
      %v3124 = vsel %vm2995, %v966, 256
      %v3125 = vsel %vm2996, %v3018, 256
      %v3126 = vsel %vm2997, %v966, 256
      %v3127 = vsel %vm2998, %v3018, 256
      %v3128 = vsel %vm2999, %v966, 256
      %v3129 = vsel %vm3000, %v3018, 256
      %v3130 = vsel %vm3001, %v966, 256
      %v3131 = vsel %vm3002, %v3018, 256
      %v3132 = vsel %vm3003, %v966, 256
      %v3133 = vsel %vm3004, %v3018, 256
      %v3134 = vsel %vm3005, %v966, 256
      %v3135 = vsel %vm3006, %v3018, 256
      %v3136 = vsel %vm3007, %v966, 256
      %v3137 = vsel %vm3008, %v3018, 256
      %v3138 = vsel %vm3009, %v966, 256
      %v3139 = vsel %vm3010, %v3018, 256
      %v3140 = vsel %vm3011, %v966, 256
      %v3141 = vsel %vm3012, %v3018, 256
      %v3142 = vsel %vm3013, %v966, 256
      %v3143 = vsel %vm3014, %v3018, 256
      %v3144 = vsel %vm3015, %v966, 256
      %v3145 = vsel %vm3016, %v3018, 256
      %v3146 = vsel %vm3017, %v966, 256
      %vm3147 = vcmp.lt.s32.totalorder %v3019, %v3020
      %v3148 = vsel %vm3147, %v3019, %v3020
      %v3149 = vand.u32 %v3148, 65535
      %v3150 = vshra.s32 %v3148, 16
      %v3151 = vcvt.s32.f32 %v3149
      %v3152 = vcvt.s32.f32 %v3150
      %3153 = vmin.xlane.f32.xlu0 %v3152
      %v3154 = vpop.xlane.xlu0 %3153
      %vm3155 = vcmp.eq.f32.partialorder %v3152, %v3154
      %v3156 = vsel %vm3155, %v3151, inf
      %3157 = vmin.xlane.f32.xlu0 %v3156
      %v3158 = vpop.xlane.xlu0 %3157
      %v3159 = vcvt.f32.s32 %v3158
      %v3160 = vcvt.f32.s32 %v3154
      %v3161 = vshll.u32 %v3160, 16
      %v3162 = vadd.s32 %v3161, %v3159
      %vm3163 = vcmp.lt.s32.totalorder %v3021, %v3022
      %v3164 = vsel %vm3163, %v3021, %v3022
      %v3165 = vand.u32 %v3164, 65535
      %v3166 = vshra.s32 %v3164, 16
      %v3167 = vcvt.s32.f32 %v3165
      %v3168 = vcvt.s32.f32 %v3166
      %3169 = vmin.xlane.f32.xlu0 %v3168
      %v3170 = vpop.xlane.xlu0 %3169
      %vm3171 = vcmp.eq.f32.partialorder %v3168, %v3170
      %v3172 = vsel %vm3171, %v3167, inf
      %3173 = vmin.xlane.f32.xlu0 %v3172
      %v3174 = vpop.xlane.xlu0 %3173
      %v3175 = vcvt.f32.s32 %v3174
      %v3176 = vcvt.f32.s32 %v3170
      %v3177 = vshll.u32 %v3176, 16
      %v3178 = vadd.s32 %v3177, %v3175
      %vm3179 = vcmp.lt.s32.totalorder %v3023, %v3024
      %v3180 = vsel %vm3179, %v3023, %v3024
      %v3181 = vand.u32 %v3180, 65535
      %v3182 = vshra.s32 %v3180, 16
      %v3183 = vcvt.s32.f32 %v3181
      %v3184 = vcvt.s32.f32 %v3182
      %3185 = vmin.xlane.f32.xlu0 %v3184
      %v3186 = vpop.xlane.xlu0 %3185
      %vm3187 = vcmp.eq.f32.partialorder %v3184, %v3186
      %v3188 = vsel %vm3187, %v3183, inf
      %3189 = vmin.xlane.f32.xlu0 %v3188
      %v3190 = vpop.xlane.xlu0 %3189
      %v3191 = vcvt.f32.s32 %v3190
      %v3192 = vcvt.f32.s32 %v3186
      %v3193 = vshll.u32 %v3192, 16
      %v3194 = vadd.s32 %v3193, %v3191
      %vm3195 = vcmp.lt.s32.totalorder %v3025, %v3026
      %v3196 = vsel %vm3195, %v3025, %v3026
      %v3197 = vand.u32 %v3196, 65535
      %v3198 = vshra.s32 %v3196, 16
      %v3199 = vcvt.s32.f32 %v3197
      %v3200 = vcvt.s32.f32 %v3198
      %3201 = vmin.xlane.f32.xlu0 %v3200
      %v3202 = vpop.xlane.xlu0 %3201
      %vm3203 = vcmp.eq.f32.partialorder %v3200, %v3202
      %v3204 = vsel %vm3203, %v3199, inf
      %3205 = vmin.xlane.f32.xlu0 %v3204
      %v3206 = vpop.xlane.xlu0 %3205
      %v3207 = vcvt.f32.s32 %v3206
      %v3208 = vcvt.f32.s32 %v3202
      %v3209 = vshll.u32 %v3208, 16
      %v3210 = vadd.s32 %v3209, %v3207
      %vm3211 = vcmp.lt.s32.totalorder %v3027, %v3028
      %v3212 = vsel %vm3211, %v3027, %v3028
      %v3213 = vand.u32 %v3212, 65535
      %v3214 = vshra.s32 %v3212, 16
      %v3215 = vcvt.s32.f32 %v3213
      %v3216 = vcvt.s32.f32 %v3214
      %3217 = vmin.xlane.f32.xlu0 %v3216
      %v3218 = vpop.xlane.xlu0 %3217
      %vm3219 = vcmp.eq.f32.partialorder %v3216, %v3218
      %v3220 = vsel %vm3219, %v3215, inf
      %3221 = vmin.xlane.f32.xlu0 %v3220
      %v3222 = vpop.xlane.xlu0 %3221
      %v3223 = vcvt.f32.s32 %v3222
      %v3224 = vcvt.f32.s32 %v3218
      %v3225 = vshll.u32 %v3224, 16
      %v3226 = vadd.s32 %v3225, %v3223
      %vm3227 = vcmp.lt.s32.totalorder %v3029, %v3030
      %v3228 = vsel %vm3227, %v3029, %v3030
      %v3229 = vand.u32 %v3228, 65535
      %v3230 = vshra.s32 %v3228, 16
      %v3231 = vcvt.s32.f32 %v3229
      %v3232 = vcvt.s32.f32 %v3230
      %3233 = vmin.xlane.f32.xlu0 %v3232
      %v3234 = vpop.xlane.xlu0 %3233
      %vm3235 = vcmp.eq.f32.partialorder %v3232, %v3234
      %v3236 = vsel %vm3235, %v3231, inf
      %3237 = vmin.xlane.f32.xlu0 %v3236
      %v3238 = vpop.xlane.xlu0 %3237
      %v3239 = vcvt.f32.s32 %v3238
      %v3240 = vcvt.f32.s32 %v3234
      %v3241 = vshll.u32 %v3240, 16
      %v3242 = vadd.s32 %v3241, %v3239
      %vm3243 = vcmp.lt.s32.totalorder %v3031, %v3032
      %v3244 = vsel %vm3243, %v3031, %v3032
      %v3245 = vand.u32 %v3244, 65535
      %v3246 = vshra.s32 %v3244, 16
      %v3247 = vcvt.s32.f32 %v3245
      %v3248 = vcvt.s32.f32 %v3246
      %3249 = vmin.xlane.f32.xlu0 %v3248
      %v3250 = vpop.xlane.xlu0 %3249
      %vm3251 = vcmp.eq.f32.partialorder %v3248, %v3250
      %v3252 = vsel %vm3251, %v3247, inf
      %3253 = vmin.xlane.f32.xlu0 %v3252
      %v3254 = vpop.xlane.xlu0 %3253
      %v3255 = vcvt.f32.s32 %v3254
      %v3256 = vcvt.f32.s32 %v3250
      %v3257 = vshll.u32 %v3256, 16
      %v3258 = vadd.s32 %v3257, %v3255
      %vm3259 = vcmp.lt.s32.totalorder %v3033, %v3034
      %v3260 = vsel %vm3259, %v3033, %v3034
      %v3261 = vand.u32 %v3260, 65535
      %v3262 = vshra.s32 %v3260, 16
      %v3263 = vcvt.s32.f32 %v3261
      %v3264 = vcvt.s32.f32 %v3262
      %3265 = vmin.xlane.f32.xlu0 %v3264
      %v3266 = vpop.xlane.xlu0 %3265
      %vm3267 = vcmp.eq.f32.partialorder %v3264, %v3266
      %v3268 = vsel %vm3267, %v3263, inf
      %3269 = vmin.xlane.f32.xlu0 %v3268
      %v3270 = vpop.xlane.xlu0 %3269
      %v3271 = vcvt.f32.s32 %v3270
      %v3272 = vcvt.f32.s32 %v3266
      %v3273 = vshll.u32 %v3272, 16
      %v3274 = vadd.s32 %v3273, %v3271
      %vm3275 = vcmp.lt.s32.totalorder %v3035, %v3036
      %v3276 = vsel %vm3275, %v3035, %v3036
      %v3277 = vand.u32 %v3276, 65535
      %v3278 = vshra.s32 %v3276, 16
      %v3279 = vcvt.s32.f32 %v3277
      %v3280 = vcvt.s32.f32 %v3278
      %3281 = vmin.xlane.f32.xlu0 %v3280
      %v3282 = vpop.xlane.xlu0 %3281
      %vm3283 = vcmp.eq.f32.partialorder %v3280, %v3282
      %v3284 = vsel %vm3283, %v3279, inf
      %3285 = vmin.xlane.f32.xlu0 %v3284
      %v3286 = vpop.xlane.xlu0 %3285
      %v3287 = vcvt.f32.s32 %v3286
      %v3288 = vcvt.f32.s32 %v3282
      %v3289 = vshll.u32 %v3288, 16
      %v3290 = vadd.s32 %v3289, %v3287
      %vm3291 = vcmp.lt.s32.totalorder %v3037, %v3038
      %v3292 = vsel %vm3291, %v3037, %v3038
      %v3293 = vand.u32 %v3292, 65535
      %v3294 = vshra.s32 %v3292, 16
      %v3295 = vcvt.s32.f32 %v3293
      %v3296 = vcvt.s32.f32 %v3294
      %3297 = vmin.xlane.f32.xlu0 %v3296
      %v3298 = vpop.xlane.xlu0 %3297
      %vm3299 = vcmp.eq.f32.partialorder %v3296, %v3298
      %v3300 = vsel %vm3299, %v3295, inf
      %3301 = vmin.xlane.f32.xlu0 %v3300
      %v3302 = vpop.xlane.xlu0 %3301
      %v3303 = vcvt.f32.s32 %v3302
      %v3304 = vcvt.f32.s32 %v3298
      %v3305 = vshll.u32 %v3304, 16
      %v3306 = vadd.s32 %v3305, %v3303
      %vm3307 = vcmp.lt.s32.totalorder %v3039, %v3040
      %v3308 = vsel %vm3307, %v3039, %v3040
      %v3309 = vand.u32 %v3308, 65535
      %v3310 = vshra.s32 %v3308, 16
      %v3311 = vcvt.s32.f32 %v3309
      %v3312 = vcvt.s32.f32 %v3310
      %3313 = vmin.xlane.f32.xlu0 %v3312
      %v3314 = vpop.xlane.xlu0 %3313
      %vm3315 = vcmp.eq.f32.partialorder %v3312, %v3314
      %v3316 = vsel %vm3315, %v3311, inf
      %3317 = vmin.xlane.f32.xlu0 %v3316
      %v3318 = vpop.xlane.xlu0 %3317
      %v3319 = vcvt.f32.s32 %v3318
      %v3320 = vcvt.f32.s32 %v3314
      %v3321 = vshll.u32 %v3320, 16
      %v3322 = vadd.s32 %v3321, %v3319
      %vm3323 = vcmp.lt.s32.totalorder %v3041, %v3042
      %v3324 = vsel %vm3323, %v3041, %v3042
      %v3325 = vand.u32 %v3324, 65535
      %v3326 = vshra.s32 %v3324, 16
      %v3327 = vcvt.s32.f32 %v3325
      %v3328 = vcvt.s32.f32 %v3326
      %3329 = vmin.xlane.f32.xlu0 %v3328
      %v3330 = vpop.xlane.xlu0 %3329
      %vm3331 = vcmp.eq.f32.partialorder %v3328, %v3330
      %v3332 = vsel %vm3331, %v3327, inf
      %3333 = vmin.xlane.f32.xlu0 %v3332
      %v3334 = vpop.xlane.xlu0 %3333
      %v3335 = vcvt.f32.s32 %v3334
      %v3336 = vcvt.f32.s32 %v3330
      %v3337 = vshll.u32 %v3336, 16
      %v3338 = vadd.s32 %v3337, %v3335
      %vm3339 = vcmp.lt.s32.totalorder %v3043, %v3044
      %v3340 = vsel %vm3339, %v3043, %v3044
      %v3341 = vand.u32 %v3340, 65535
      %v3342 = vshra.s32 %v3340, 16
      %v3343 = vcvt.s32.f32 %v3341
      %v3344 = vcvt.s32.f32 %v3342
      %3345 = vmin.xlane.f32.xlu0 %v3344
      %v3346 = vpop.xlane.xlu0 %3345
      %vm3347 = vcmp.eq.f32.partialorder %v3344, %v3346
      %v3348 = vsel %vm3347, %v3343, inf
      %3349 = vmin.xlane.f32.xlu0 %v3348
      %v3350 = vpop.xlane.xlu0 %3349
      %v3351 = vcvt.f32.s32 %v3350
      %v3352 = vcvt.f32.s32 %v3346
      %v3353 = vshll.u32 %v3352, 16
      %v3354 = vadd.s32 %v3353, %v3351
      %vm3355 = vcmp.lt.s32.totalorder %v3045, %v3046
      %v3356 = vsel %vm3355, %v3045, %v3046
      %v3357 = vand.u32 %v3356, 65535
      %v3358 = vshra.s32 %v3356, 16
      %v3359 = vcvt.s32.f32 %v3357
      %v3360 = vcvt.s32.f32 %v3358
      %3361 = vmin.xlane.f32.xlu0 %v3360
      %v3362 = vpop.xlane.xlu0 %3361
      %vm3363 = vcmp.eq.f32.partialorder %v3360, %v3362
      %v3364 = vsel %vm3363, %v3359, inf
      %3365 = vmin.xlane.f32.xlu0 %v3364
      %v3366 = vpop.xlane.xlu0 %3365
      %v3367 = vcvt.f32.s32 %v3366
      %v3368 = vcvt.f32.s32 %v3362
      %v3369 = vshll.u32 %v3368, 16
      %v3370 = vadd.s32 %v3369, %v3367
      %vm3371 = vcmp.lt.s32.totalorder %v3047, %v3048
      %v3372 = vsel %vm3371, %v3047, %v3048
      %v3373 = vand.u32 %v3372, 65535
      %v3374 = vshra.s32 %v3372, 16
      %v3375 = vcvt.s32.f32 %v3373
      %v3376 = vcvt.s32.f32 %v3374
      %3377 = vmin.xlane.f32.xlu0 %v3376
      %v3378 = vpop.xlane.xlu0 %3377
      %vm3379 = vcmp.eq.f32.partialorder %v3376, %v3378
      %v3380 = vsel %vm3379, %v3375, inf
      %3381 = vmin.xlane.f32.xlu0 %v3380
      %v3382 = vpop.xlane.xlu0 %3381
      %v3383 = vcvt.f32.s32 %v3382
      %v3384 = vcvt.f32.s32 %v3378
      %v3385 = vshll.u32 %v3384, 16
      %v3386 = vadd.s32 %v3385, %v3383
      %vm3387 = vcmp.lt.s32.totalorder %v3049, %v3050
      %v3388 = vsel %vm3387, %v3049, %v3050
      %v3389 = vand.u32 %v3388, 65535
      %v3390 = vshra.s32 %v3388, 16
      %v3391 = vcvt.s32.f32 %v3389
      %v3392 = vcvt.s32.f32 %v3390
      %3393 = vmin.xlane.f32.xlu0 %v3392
      %v3394 = vpop.xlane.xlu0 %3393
      %vm3395 = vcmp.eq.f32.partialorder %v3392, %v3394
      %v3396 = vsel %vm3395, %v3391, inf
      %3397 = vmin.xlane.f32.xlu0 %v3396
      %v3398 = vpop.xlane.xlu0 %3397
      %v3399 = vcvt.f32.s32 %v3398
      %v3400 = vcvt.f32.s32 %v3394
      %v3401 = vshll.u32 %v3400, 16
      %v3402 = vadd.s32 %v3401, %v3399
      %vm3403 = vcmp.lt.s32.totalorder %v3051, %v3052
      %v3404 = vsel %vm3403, %v3051, %v3052
      %v3405 = vand.u32 %v3404, 65535
      %v3406 = vshra.s32 %v3404, 16
      %v3407 = vcvt.s32.f32 %v3405
      %v3408 = vcvt.s32.f32 %v3406
      %3409 = vmin.xlane.f32.xlu0 %v3408
      %v3410 = vpop.xlane.xlu0 %3409
      %vm3411 = vcmp.eq.f32.partialorder %v3408, %v3410
      %v3412 = vsel %vm3411, %v3407, inf
      %3413 = vmin.xlane.f32.xlu0 %v3412
      %v3414 = vpop.xlane.xlu0 %3413
      %v3415 = vcvt.f32.s32 %v3414
      %v3416 = vcvt.f32.s32 %v3410
      %v3417 = vshll.u32 %v3416, 16
      %v3418 = vadd.s32 %v3417, %v3415
      %vm3419 = vcmp.lt.s32.totalorder %v3053, %v3054
      %v3420 = vsel %vm3419, %v3053, %v3054
      %v3421 = vand.u32 %v3420, 65535
      %v3422 = vshra.s32 %v3420, 16
      %v3423 = vcvt.s32.f32 %v3421
      %v3424 = vcvt.s32.f32 %v3422
      %3425 = vmin.xlane.f32.xlu0 %v3424
      %v3426 = vpop.xlane.xlu0 %3425
      %vm3427 = vcmp.eq.f32.partialorder %v3424, %v3426
      %v3428 = vsel %vm3427, %v3423, inf
      %3429 = vmin.xlane.f32.xlu0 %v3428
      %v3430 = vpop.xlane.xlu0 %3429
      %v3431 = vcvt.f32.s32 %v3430
      %v3432 = vcvt.f32.s32 %v3426
      %v3433 = vshll.u32 %v3432, 16
      %v3434 = vadd.s32 %v3433, %v3431
      %vm3435 = vcmp.lt.s32.totalorder %v3055, %v3056
      %v3436 = vsel %vm3435, %v3055, %v3056
      %v3437 = vand.u32 %v3436, 65535
      %v3438 = vshra.s32 %v3436, 16
      %v3439 = vcvt.s32.f32 %v3437
      %v3440 = vcvt.s32.f32 %v3438
      %3441 = vmin.xlane.f32.xlu0 %v3440
      %v3442 = vpop.xlane.xlu0 %3441
      %vm3443 = vcmp.eq.f32.partialorder %v3440, %v3442
      %v3444 = vsel %vm3443, %v3439, inf
      %3445 = vmin.xlane.f32.xlu0 %v3444
      %v3446 = vpop.xlane.xlu0 %3445
      %v3447 = vcvt.f32.s32 %v3446
      %v3448 = vcvt.f32.s32 %v3442
      %v3449 = vshll.u32 %v3448, 16
      %v3450 = vadd.s32 %v3449, %v3447
      %vm3451 = vcmp.lt.s32.totalorder %v3057, %v3058
      %v3452 = vsel %vm3451, %v3057, %v3058
      %v3453 = vand.u32 %v3452, 65535
      %v3454 = vshra.s32 %v3452, 16
      %v3455 = vcvt.s32.f32 %v3453
      %v3456 = vcvt.s32.f32 %v3454
      %3457 = vmin.xlane.f32.xlu0 %v3456
      %v3458 = vpop.xlane.xlu0 %3457
      %vm3459 = vcmp.eq.f32.partialorder %v3456, %v3458
      %v3460 = vsel %vm3459, %v3455, inf
      %3461 = vmin.xlane.f32.xlu0 %v3460
      %v3462 = vpop.xlane.xlu0 %3461
      %v3463 = vcvt.f32.s32 %v3462
      %v3464 = vcvt.f32.s32 %v3458
      %v3465 = vshll.u32 %v3464, 16
      %v3466 = vadd.s32 %v3465, %v3463
      %vm3467 = vcmp.lt.s32.totalorder %v3059, %v3060
      %v3468 = vsel %vm3467, %v3059, %v3060
      %v3469 = vand.u32 %v3468, 65535
      %v3470 = vshra.s32 %v3468, 16
      %v3471 = vcvt.s32.f32 %v3469
      %v3472 = vcvt.s32.f32 %v3470
      %3473 = vmin.xlane.f32.xlu0 %v3472
      %v3474 = vpop.xlane.xlu0 %3473
      %vm3475 = vcmp.eq.f32.partialorder %v3472, %v3474
      %v3476 = vsel %vm3475, %v3471, inf
      %3477 = vmin.xlane.f32.xlu0 %v3476
      %v3478 = vpop.xlane.xlu0 %3477
      %v3479 = vcvt.f32.s32 %v3478
      %v3480 = vcvt.f32.s32 %v3474
      %v3481 = vshll.u32 %v3480, 16
      %v3482 = vadd.s32 %v3481, %v3479
      %vm3483 = vcmp.lt.s32.totalorder %v3061, %v3062
      %v3484 = vsel %vm3483, %v3061, %v3062
      %v3485 = vand.u32 %v3484, 65535
      %v3486 = vshra.s32 %v3484, 16
      %v3487 = vcvt.s32.f32 %v3485
      %v3488 = vcvt.s32.f32 %v3486
      %3489 = vmin.xlane.f32.xlu0 %v3488
      %v3490 = vpop.xlane.xlu0 %3489
      %vm3491 = vcmp.eq.f32.partialorder %v3488, %v3490
      %v3492 = vsel %vm3491, %v3487, inf
      %3493 = vmin.xlane.f32.xlu0 %v3492
      %v3494 = vpop.xlane.xlu0 %3493
      %v3495 = vcvt.f32.s32 %v3494
      %v3496 = vcvt.f32.s32 %v3490
      %v3497 = vshll.u32 %v3496, 16
      %v3498 = vadd.s32 %v3497, %v3495
      %vm3499 = vcmp.lt.s32.totalorder %v3063, %v3064
      %v3500 = vsel %vm3499, %v3063, %v3064
      %v3501 = vand.u32 %v3500, 65535
      %v3502 = vshra.s32 %v3500, 16
      %v3503 = vcvt.s32.f32 %v3501
      %v3504 = vcvt.s32.f32 %v3502
      %3505 = vmin.xlane.f32.xlu0 %v3504
      %v3506 = vpop.xlane.xlu0 %3505
      %vm3507 = vcmp.eq.f32.partialorder %v3504, %v3506
      %v3508 = vsel %vm3507, %v3503, inf
      %3509 = vmin.xlane.f32.xlu0 %v3508
      %v3510 = vpop.xlane.xlu0 %3509
      %v3511 = vcvt.f32.s32 %v3510
      %v3512 = vcvt.f32.s32 %v3506
      %v3513 = vshll.u32 %v3512, 16
      %v3514 = vadd.s32 %v3513, %v3511
      %vm3515 = vcmp.lt.s32.totalorder %v3065, %v3066
      %v3516 = vsel %vm3515, %v3065, %v3066
      %v3517 = vand.u32 %v3516, 65535
      %v3518 = vshra.s32 %v3516, 16
      %v3519 = vcvt.s32.f32 %v3517
      %v3520 = vcvt.s32.f32 %v3518
      %3521 = vmin.xlane.f32.xlu0 %v3520
      %v3522 = vpop.xlane.xlu0 %3521
      %vm3523 = vcmp.eq.f32.partialorder %v3520, %v3522
      %v3524 = vsel %vm3523, %v3519, inf
      %3525 = vmin.xlane.f32.xlu0 %v3524
      %v3526 = vpop.xlane.xlu0 %3525
      %v3527 = vcvt.f32.s32 %v3526
      %v3528 = vcvt.f32.s32 %v3522
      %v3529 = vshll.u32 %v3528, 16
      %v3530 = vadd.s32 %v3529, %v3527
      %vm3531 = vcmp.lt.s32.totalorder %v3067, %v3068
      %v3532 = vsel %vm3531, %v3067, %v3068
      %v3533 = vand.u32 %v3532, 65535
      %v3534 = vshra.s32 %v3532, 16
      %v3535 = vcvt.s32.f32 %v3533
      %v3536 = vcvt.s32.f32 %v3534
      %3537 = vmin.xlane.f32.xlu0 %v3536
      %v3538 = vpop.xlane.xlu0 %3537
      %vm3539 = vcmp.eq.f32.partialorder %v3536, %v3538
      %v3540 = vsel %vm3539, %v3535, inf
      %3541 = vmin.xlane.f32.xlu0 %v3540
      %v3542 = vpop.xlane.xlu0 %3541
      %v3543 = vcvt.f32.s32 %v3542
      %v3544 = vcvt.f32.s32 %v3538
      %v3545 = vshll.u32 %v3544, 16
      %v3546 = vadd.s32 %v3545, %v3543
      %vm3547 = vcmp.lt.s32.totalorder %v3069, %v3070
      %v3548 = vsel %vm3547, %v3069, %v3070
      %v3549 = vand.u32 %v3548, 65535
      %v3550 = vshra.s32 %v3548, 16
      %v3551 = vcvt.s32.f32 %v3549
      %v3552 = vcvt.s32.f32 %v3550
      %3553 = vmin.xlane.f32.xlu0 %v3552
      %v3554 = vpop.xlane.xlu0 %3553
      %vm3555 = vcmp.eq.f32.partialorder %v3552, %v3554
      %v3556 = vsel %vm3555, %v3551, inf
      %3557 = vmin.xlane.f32.xlu0 %v3556
      %v3558 = vpop.xlane.xlu0 %3557
      %v3559 = vcvt.f32.s32 %v3558
      %v3560 = vcvt.f32.s32 %v3554
      %v3561 = vshll.u32 %v3560, 16
      %v3562 = vadd.s32 %v3561, %v3559
      %vm3563 = vcmp.lt.s32.totalorder %v3071, %v3072
      %v3564 = vsel %vm3563, %v3071, %v3072
      %v3565 = vand.u32 %v3564, 65535
      %v3566 = vshra.s32 %v3564, 16
      %v3567 = vcvt.s32.f32 %v3565
      %v3568 = vcvt.s32.f32 %v3566
      %3569 = vmin.xlane.f32.xlu0 %v3568
      %v3570 = vpop.xlane.xlu0 %3569
      %vm3571 = vcmp.eq.f32.partialorder %v3568, %v3570
      %v3572 = vsel %vm3571, %v3567, inf
      %3573 = vmin.xlane.f32.xlu0 %v3572
      %v3574 = vpop.xlane.xlu0 %3573
      %v3575 = vcvt.f32.s32 %v3574
      %v3576 = vcvt.f32.s32 %v3570
      %v3577 = vshll.u32 %v3576, 16
      %v3578 = vadd.s32 %v3577, %v3575
      %vm3579 = vcmp.lt.s32.totalorder %v3073, %v3074
      %v3580 = vsel %vm3579, %v3073, %v3074
      %v3581 = vand.u32 %v3580, 65535
      %v3582 = vshra.s32 %v3580, 16
      %v3583 = vcvt.s32.f32 %v3581
      %v3584 = vcvt.s32.f32 %v3582
      %3585 = vmin.xlane.f32.xlu0 %v3584
      %v3586 = vpop.xlane.xlu0 %3585
      %vm3587 = vcmp.eq.f32.partialorder %v3584, %v3586
      %v3588 = vsel %vm3587, %v3583, inf
      %3589 = vmin.xlane.f32.xlu0 %v3588
      %v3590 = vpop.xlane.xlu0 %3589
      %v3591 = vcvt.f32.s32 %v3590
      %v3592 = vcvt.f32.s32 %v3586
      %v3593 = vshll.u32 %v3592, 16
      %v3594 = vadd.s32 %v3593, %v3591
      %vm3595 = vcmp.lt.s32.totalorder %v3075, %v3076
      %v3596 = vsel %vm3595, %v3075, %v3076
      %v3597 = vand.u32 %v3596, 65535
      %v3598 = vshra.s32 %v3596, 16
      %v3599 = vcvt.s32.f32 %v3597
      %v3600 = vcvt.s32.f32 %v3598
      %3601 = vmin.xlane.f32.xlu0 %v3600
      %v3602 = vpop.xlane.xlu0 %3601
      %vm3603 = vcmp.eq.f32.partialorder %v3600, %v3602
      %v3604 = vsel %vm3603, %v3599, inf
      %3605 = vmin.xlane.f32.xlu0 %v3604
      %v3606 = vpop.xlane.xlu0 %3605
      %v3607 = vcvt.f32.s32 %v3606
      %v3608 = vcvt.f32.s32 %v3602
      %v3609 = vshll.u32 %v3608, 16
      %v3610 = vadd.s32 %v3609, %v3607
      %vm3611 = vcmp.lt.s32.totalorder %v3077, %v3078
      %v3612 = vsel %vm3611, %v3077, %v3078
      %v3613 = vand.u32 %v3612, 65535
      %v3614 = vshra.s32 %v3612, 16
      %v3615 = vcvt.s32.f32 %v3613
      %v3616 = vcvt.s32.f32 %v3614
      %3617 = vmin.xlane.f32.xlu0 %v3616
      %v3618 = vpop.xlane.xlu0 %3617
      %vm3619 = vcmp.eq.f32.partialorder %v3616, %v3618
      %v3620 = vsel %vm3619, %v3615, inf
      %3621 = vmin.xlane.f32.xlu0 %v3620
      %v3622 = vpop.xlane.xlu0 %3621
      %v3623 = vcvt.f32.s32 %v3622
      %v3624 = vcvt.f32.s32 %v3618
      %v3625 = vshll.u32 %v3624, 16
      %v3626 = vadd.s32 %v3625, %v3623
      %vm3627 = vcmp.lt.s32.totalorder %v3079, %v3080
      %v3628 = vsel %vm3627, %v3079, %v3080
      %v3629 = vand.u32 %v3628, 65535
      %v3630 = vshra.s32 %v3628, 16
      %v3631 = vcvt.s32.f32 %v3629
      %v3632 = vcvt.s32.f32 %v3630
      %3633 = vmin.xlane.f32.xlu0 %v3632
      %v3634 = vpop.xlane.xlu0 %3633
      %vm3635 = vcmp.eq.f32.partialorder %v3632, %v3634
      %v3636 = vsel %vm3635, %v3631, inf
      %3637 = vmin.xlane.f32.xlu0 %v3636
      %v3638 = vpop.xlane.xlu0 %3637
      %v3639 = vcvt.f32.s32 %v3638
      %v3640 = vcvt.f32.s32 %v3634
      %v3641 = vshll.u32 %v3640, 16
      %v3642 = vadd.s32 %v3641, %v3639
      %vm3643 = vcmp.lt.s32.totalorder %v3081, %v3082
      %v3644 = vsel %vm3643, %v3081, %v3082
      %v3645 = vand.u32 %v3644, 65535
      %v3646 = vshra.s32 %v3644, 16
      %v3647 = vcvt.s32.f32 %v3645
      %v3648 = vcvt.s32.f32 %v3646
      %3649 = vmin.xlane.f32.xlu0 %v3648
      %v3650 = vpop.xlane.xlu0 %3649
      %vm3651 = vcmp.eq.f32.partialorder %v3648, %v3650
      %v3652 = vsel %vm3651, %v3647, inf
      %3653 = vmin.xlane.f32.xlu0 %v3652
      %v3654 = vpop.xlane.xlu0 %3653
      %v3655 = vcvt.f32.s32 %v3654
      %v3656 = vcvt.f32.s32 %v3650
      %v3657 = vshll.u32 %v3656, 16
      %v3658 = vadd.s32 %v3657, %v3655
      %vm3659 = vcmp.lt.s32.totalorder %v3083, %v3084
      %v3660 = vsel %vm3659, %v3083, %v3084
      %v3661 = vand.u32 %v3660, 65535
      %v3662 = vshra.s32 %v3660, 16
      %v3663 = vcvt.s32.f32 %v3661
      %v3664 = vcvt.s32.f32 %v3662
      %3665 = vmin.xlane.f32.xlu0 %v3664
      %v3666 = vpop.xlane.xlu0 %3665
      %vm3667 = vcmp.eq.f32.partialorder %v3664, %v3666
      %v3668 = vsel %vm3667, %v3663, inf
      %3669 = vmin.xlane.f32.xlu0 %v3668
      %v3670 = vpop.xlane.xlu0 %3669
      %v3671 = vcvt.f32.s32 %v3670
      %v3672 = vcvt.f32.s32 %v3666
      %v3673 = vshll.u32 %v3672, 16
      %v3674 = vadd.s32 %v3673, %v3671
      %vm3675 = vcmp.lt.s32.totalorder %v3085, %v3086
      %v3676 = vsel %vm3675, %v3085, %v3086
      %v3677 = vand.u32 %v3676, 65535
      %v3678 = vshra.s32 %v3676, 16
      %v3679 = vcvt.s32.f32 %v3677
      %v3680 = vcvt.s32.f32 %v3678
      %3681 = vmin.xlane.f32.xlu0 %v3680
      %v3682 = vpop.xlane.xlu0 %3681
      %vm3683 = vcmp.eq.f32.partialorder %v3680, %v3682
      %v3684 = vsel %vm3683, %v3679, inf
      %3685 = vmin.xlane.f32.xlu0 %v3684
      %v3686 = vpop.xlane.xlu0 %3685
      %v3687 = vcvt.f32.s32 %v3686
      %v3688 = vcvt.f32.s32 %v3682
      %v3689 = vshll.u32 %v3688, 16
      %v3690 = vadd.s32 %v3689, %v3687
      %vm3691 = vcmp.lt.s32.totalorder %v3087, %v3088
      %v3692 = vsel %vm3691, %v3087, %v3088
      %v3693 = vand.u32 %v3692, 65535
      %v3694 = vshra.s32 %v3692, 16
      %v3695 = vcvt.s32.f32 %v3693
      %v3696 = vcvt.s32.f32 %v3694
      %3697 = vmin.xlane.f32.xlu0 %v3696
      %v3698 = vpop.xlane.xlu0 %3697
      %vm3699 = vcmp.eq.f32.partialorder %v3696, %v3698
      %v3700 = vsel %vm3699, %v3695, inf
      %3701 = vmin.xlane.f32.xlu0 %v3700
      %v3702 = vpop.xlane.xlu0 %3701
      %v3703 = vcvt.f32.s32 %v3702
      %v3704 = vcvt.f32.s32 %v3698
      %v3705 = vshll.u32 %v3704, 16
      %v3706 = vadd.s32 %v3705, %v3703
      %vm3707 = vcmp.lt.s32.totalorder %v3089, %v3090
      %v3708 = vsel %vm3707, %v3089, %v3090
      %v3709 = vand.u32 %v3708, 65535
      %v3710 = vshra.s32 %v3708, 16
      %v3711 = vcvt.s32.f32 %v3709
      %v3712 = vcvt.s32.f32 %v3710
      %3713 = vmin.xlane.f32.xlu0 %v3712
      %v3714 = vpop.xlane.xlu0 %3713
      %vm3715 = vcmp.eq.f32.partialorder %v3712, %v3714
      %v3716 = vsel %vm3715, %v3711, inf
      %3717 = vmin.xlane.f32.xlu0 %v3716
      %v3718 = vpop.xlane.xlu0 %3717
      %v3719 = vcvt.f32.s32 %v3718
      %v3720 = vcvt.f32.s32 %v3714
      %v3721 = vshll.u32 %v3720, 16
      %v3722 = vadd.s32 %v3721, %v3719
      %vm3723 = vcmp.lt.s32.totalorder %v3091, %v3092
      %v3724 = vsel %vm3723, %v3091, %v3092
      %v3725 = vand.u32 %v3724, 65535
      %v3726 = vshra.s32 %v3724, 16
      %v3727 = vcvt.s32.f32 %v3725
      %v3728 = vcvt.s32.f32 %v3726
      %3729 = vmin.xlane.f32.xlu0 %v3728
      %v3730 = vpop.xlane.xlu0 %3729
      %vm3731 = vcmp.eq.f32.partialorder %v3728, %v3730
      %v3732 = vsel %vm3731, %v3727, inf
      %3733 = vmin.xlane.f32.xlu0 %v3732
      %v3734 = vpop.xlane.xlu0 %3733
      %v3735 = vcvt.f32.s32 %v3734
      %v3736 = vcvt.f32.s32 %v3730
      %v3737 = vshll.u32 %v3736, 16
      %v3738 = vadd.s32 %v3737, %v3735
      %vm3739 = vcmp.lt.s32.totalorder %v3093, %v3094
      %v3740 = vsel %vm3739, %v3093, %v3094
      %v3741 = vand.u32 %v3740, 65535
      %v3742 = vshra.s32 %v3740, 16
      %v3743 = vcvt.s32.f32 %v3741
      %v3744 = vcvt.s32.f32 %v3742
      %3745 = vmin.xlane.f32.xlu0 %v3744
      %v3746 = vpop.xlane.xlu0 %3745
      %vm3747 = vcmp.eq.f32.partialorder %v3744, %v3746
      %v3748 = vsel %vm3747, %v3743, inf
      %3749 = vmin.xlane.f32.xlu0 %v3748
      %v3750 = vpop.xlane.xlu0 %3749
      %v3751 = vcvt.f32.s32 %v3750
      %v3752 = vcvt.f32.s32 %v3746
      %v3753 = vshll.u32 %v3752, 16
      %v3754 = vadd.s32 %v3753, %v3751
      %vm3755 = vcmp.lt.s32.totalorder %v3095, %v3096
      %v3756 = vsel %vm3755, %v3095, %v3096
      %v3757 = vand.u32 %v3756, 65535
      %v3758 = vshra.s32 %v3756, 16
      %v3759 = vcvt.s32.f32 %v3757
      %v3760 = vcvt.s32.f32 %v3758
      %3761 = vmin.xlane.f32.xlu0 %v3760
      %v3762 = vpop.xlane.xlu0 %3761
      %vm3763 = vcmp.eq.f32.partialorder %v3760, %v3762
      %v3764 = vsel %vm3763, %v3759, inf
      %3765 = vmin.xlane.f32.xlu0 %v3764
      %v3766 = vpop.xlane.xlu0 %3765
      %v3767 = vcvt.f32.s32 %v3766
      %v3768 = vcvt.f32.s32 %v3762
      %v3769 = vshll.u32 %v3768, 16
      %v3770 = vadd.s32 %v3769, %v3767
      %vm3771 = vcmp.lt.s32.totalorder %v3097, %v3098
      %v3772 = vsel %vm3771, %v3097, %v3098
      %v3773 = vand.u32 %v3772, 65535
      %v3774 = vshra.s32 %v3772, 16
      %v3775 = vcvt.s32.f32 %v3773
      %v3776 = vcvt.s32.f32 %v3774
      %3777 = vmin.xlane.f32.xlu0 %v3776
      %v3778 = vpop.xlane.xlu0 %3777
      %vm3779 = vcmp.eq.f32.partialorder %v3776, %v3778
      %v3780 = vsel %vm3779, %v3775, inf
      %3781 = vmin.xlane.f32.xlu0 %v3780
      %v3782 = vpop.xlane.xlu0 %3781
      %v3783 = vcvt.f32.s32 %v3782
      %v3784 = vcvt.f32.s32 %v3778
      %v3785 = vshll.u32 %v3784, 16
      %v3786 = vadd.s32 %v3785, %v3783
      %vm3787 = vcmp.lt.s32.totalorder %v3099, %v3100
      %v3788 = vsel %vm3787, %v3099, %v3100
      %v3789 = vand.u32 %v3788, 65535
      %v3790 = vshra.s32 %v3788, 16
      %v3791 = vcvt.s32.f32 %v3789
      %v3792 = vcvt.s32.f32 %v3790
      %3793 = vmin.xlane.f32.xlu0 %v3792
      %v3794 = vpop.xlane.xlu0 %3793
      %vm3795 = vcmp.eq.f32.partialorder %v3792, %v3794
      %v3796 = vsel %vm3795, %v3791, inf
      %3797 = vmin.xlane.f32.xlu0 %v3796
      %v3798 = vpop.xlane.xlu0 %3797
      %v3799 = vcvt.f32.s32 %v3798
      %v3800 = vcvt.f32.s32 %v3794
      %v3801 = vshll.u32 %v3800, 16
      %v3802 = vadd.s32 %v3801, %v3799
      %vm3803 = vcmp.lt.s32.totalorder %v3101, %v3102
      %v3804 = vsel %vm3803, %v3101, %v3102
      %v3805 = vand.u32 %v3804, 65535
      %v3806 = vshra.s32 %v3804, 16
      %v3807 = vcvt.s32.f32 %v3805
      %v3808 = vcvt.s32.f32 %v3806
      %3809 = vmin.xlane.f32.xlu0 %v3808
      %v3810 = vpop.xlane.xlu0 %3809
      %vm3811 = vcmp.eq.f32.partialorder %v3808, %v3810
      %v3812 = vsel %vm3811, %v3807, inf
      %3813 = vmin.xlane.f32.xlu0 %v3812
      %v3814 = vpop.xlane.xlu0 %3813
      %v3815 = vcvt.f32.s32 %v3814
      %v3816 = vcvt.f32.s32 %v3810
      %v3817 = vshll.u32 %v3816, 16
      %v3818 = vadd.s32 %v3817, %v3815
      %vm3819 = vcmp.lt.s32.totalorder %v3103, %v3104
      %v3820 = vsel %vm3819, %v3103, %v3104
      %v3821 = vand.u32 %v3820, 65535
      %v3822 = vshra.s32 %v3820, 16
      %v3823 = vcvt.s32.f32 %v3821
      %v3824 = vcvt.s32.f32 %v3822
      %3825 = vmin.xlane.f32.xlu0 %v3824
      %v3826 = vpop.xlane.xlu0 %3825
      %vm3827 = vcmp.eq.f32.partialorder %v3824, %v3826
      %v3828 = vsel %vm3827, %v3823, inf
      %3829 = vmin.xlane.f32.xlu0 %v3828
      %v3830 = vpop.xlane.xlu0 %3829
      %v3831 = vcvt.f32.s32 %v3830
      %v3832 = vcvt.f32.s32 %v3826
      %v3833 = vshll.u32 %v3832, 16
      %v3834 = vadd.s32 %v3833, %v3831
      %vm3835 = vcmp.lt.s32.totalorder %v3105, %v3106
      %v3836 = vsel %vm3835, %v3105, %v3106
      %v3837 = vand.u32 %v3836, 65535
      %v3838 = vshra.s32 %v3836, 16
      %v3839 = vcvt.s32.f32 %v3837
      %v3840 = vcvt.s32.f32 %v3838
      %3841 = vmin.xlane.f32.xlu0 %v3840
      %v3842 = vpop.xlane.xlu0 %3841
      %vm3843 = vcmp.eq.f32.partialorder %v3840, %v3842
      %v3844 = vsel %vm3843, %v3839, inf
      %3845 = vmin.xlane.f32.xlu0 %v3844
      %v3846 = vpop.xlane.xlu0 %3845
      %v3847 = vcvt.f32.s32 %v3846
      %v3848 = vcvt.f32.s32 %v3842
      %v3849 = vshll.u32 %v3848, 16
      %v3850 = vadd.s32 %v3849, %v3847
      %vm3851 = vcmp.lt.s32.totalorder %v3107, %v3108
      %v3852 = vsel %vm3851, %v3107, %v3108
      %v3853 = vand.u32 %v3852, 65535
      %v3854 = vshra.s32 %v3852, 16
      %v3855 = vcvt.s32.f32 %v3853
      %v3856 = vcvt.s32.f32 %v3854
      %3857 = vmin.xlane.f32.xlu0 %v3856
      %v3858 = vpop.xlane.xlu0 %3857
      %vm3859 = vcmp.eq.f32.partialorder %v3856, %v3858
      %v3860 = vsel %vm3859, %v3855, inf
      %3861 = vmin.xlane.f32.xlu0 %v3860
      %v3862 = vpop.xlane.xlu0 %3861
      %v3863 = vcvt.f32.s32 %v3862
      %v3864 = vcvt.f32.s32 %v3858
      %v3865 = vshll.u32 %v3864, 16
      %v3866 = vadd.s32 %v3865, %v3863
      %vm3867 = vcmp.lt.s32.totalorder %v3109, %v3110
      %v3868 = vsel %vm3867, %v3109, %v3110
      %v3869 = vand.u32 %v3868, 65535
      %v3870 = vshra.s32 %v3868, 16
      %v3871 = vcvt.s32.f32 %v3869
      %v3872 = vcvt.s32.f32 %v3870
      %3873 = vmin.xlane.f32.xlu0 %v3872
      %v3874 = vpop.xlane.xlu0 %3873
      %vm3875 = vcmp.eq.f32.partialorder %v3872, %v3874
      %v3876 = vsel %vm3875, %v3871, inf
      %3877 = vmin.xlane.f32.xlu0 %v3876
      %v3878 = vpop.xlane.xlu0 %3877
      %v3879 = vcvt.f32.s32 %v3878
      %v3880 = vcvt.f32.s32 %v3874
      %v3881 = vshll.u32 %v3880, 16
      %v3882 = vadd.s32 %v3881, %v3879
      %vm3883 = vcmp.lt.s32.totalorder %v3111, %v3112
      %v3884 = vsel %vm3883, %v3111, %v3112
      %v3885 = vand.u32 %v3884, 65535
      %v3886 = vshra.s32 %v3884, 16
      %v3887 = vcvt.s32.f32 %v3885
      %v3888 = vcvt.s32.f32 %v3886
      %3889 = vmin.xlane.f32.xlu0 %v3888
      %v3890 = vpop.xlane.xlu0 %3889
      %vm3891 = vcmp.eq.f32.partialorder %v3888, %v3890
      %v3892 = vsel %vm3891, %v3887, inf
      %3893 = vmin.xlane.f32.xlu0 %v3892
      %v3894 = vpop.xlane.xlu0 %3893
      %v3895 = vcvt.f32.s32 %v3894
      %v3896 = vcvt.f32.s32 %v3890
      %v3897 = vshll.u32 %v3896, 16
      %v3898 = vadd.s32 %v3897, %v3895
      %vm3899 = vcmp.lt.s32.totalorder %v3113, %v3114
      %v3900 = vsel %vm3899, %v3113, %v3114
      %v3901 = vand.u32 %v3900, 65535
      %v3902 = vshra.s32 %v3900, 16
      %v3903 = vcvt.s32.f32 %v3901
      %v3904 = vcvt.s32.f32 %v3902
      %3905 = vmin.xlane.f32.xlu0 %v3904
      %v3906 = vpop.xlane.xlu0 %3905
      %vm3907 = vcmp.eq.f32.partialorder %v3904, %v3906
      %v3908 = vsel %vm3907, %v3903, inf
      %3909 = vmin.xlane.f32.xlu0 %v3908
      %v3910 = vpop.xlane.xlu0 %3909
      %v3911 = vcvt.f32.s32 %v3910
      %v3912 = vcvt.f32.s32 %v3906
      %v3913 = vshll.u32 %v3912, 16
      %v3914 = vadd.s32 %v3913, %v3911
      %vm3915 = vcmp.lt.s32.totalorder %v3115, %v3116
      %v3916 = vsel %vm3915, %v3115, %v3116
      %v3917 = vand.u32 %v3916, 65535
      %v3918 = vshra.s32 %v3916, 16
      %v3919 = vcvt.s32.f32 %v3917
      %v3920 = vcvt.s32.f32 %v3918
      %3921 = vmin.xlane.f32.xlu0 %v3920
      %v3922 = vpop.xlane.xlu0 %3921
      %vm3923 = vcmp.eq.f32.partialorder %v3920, %v3922
      %v3924 = vsel %vm3923, %v3919, inf
      %3925 = vmin.xlane.f32.xlu0 %v3924
      %v3926 = vpop.xlane.xlu0 %3925
      %v3927 = vcvt.f32.s32 %v3926
      %v3928 = vcvt.f32.s32 %v3922
      %v3929 = vshll.u32 %v3928, 16
      %v3930 = vadd.s32 %v3929, %v3927
      %vm3931 = vcmp.lt.s32.totalorder %v3117, %v3118
      %v3932 = vsel %vm3931, %v3117, %v3118
      %v3933 = vand.u32 %v3932, 65535
      %v3934 = vshra.s32 %v3932, 16
      %v3935 = vcvt.s32.f32 %v3933
      %v3936 = vcvt.s32.f32 %v3934
      %3937 = vmin.xlane.f32.xlu0 %v3936
      %v3938 = vpop.xlane.xlu0 %3937
      %vm3939 = vcmp.eq.f32.partialorder %v3936, %v3938
      %v3940 = vsel %vm3939, %v3935, inf
      %3941 = vmin.xlane.f32.xlu0 %v3940
      %v3942 = vpop.xlane.xlu0 %3941
      %v3943 = vcvt.f32.s32 %v3942
      %v3944 = vcvt.f32.s32 %v3938
      %v3945 = vshll.u32 %v3944, 16
      %v3946 = vadd.s32 %v3945, %v3943
      %vm3947 = vcmp.lt.s32.totalorder %v3119, %v3120
      %v3948 = vsel %vm3947, %v3119, %v3120
      %v3949 = vand.u32 %v3948, 65535
      %v3950 = vshra.s32 %v3948, 16
      %v3951 = vcvt.s32.f32 %v3949
      %v3952 = vcvt.s32.f32 %v3950
      %3953 = vmin.xlane.f32.xlu0 %v3952
      %v3954 = vpop.xlane.xlu0 %3953
      %vm3955 = vcmp.eq.f32.partialorder %v3952, %v3954
      %v3956 = vsel %vm3955, %v3951, inf
      %3957 = vmin.xlane.f32.xlu0 %v3956
      %v3958 = vpop.xlane.xlu0 %3957
      %v3959 = vcvt.f32.s32 %v3958
      %v3960 = vcvt.f32.s32 %v3954
      %v3961 = vshll.u32 %v3960, 16
      %v3962 = vadd.s32 %v3961, %v3959
      %vm3963 = vcmp.lt.s32.totalorder %v3121, %v3122
      %v3964 = vsel %vm3963, %v3121, %v3122
      %v3965 = vand.u32 %v3964, 65535
      %v3966 = vshra.s32 %v3964, 16
      %v3967 = vcvt.s32.f32 %v3965
      %v3968 = vcvt.s32.f32 %v3966
      %3969 = vmin.xlane.f32.xlu0 %v3968
      %v3970 = vpop.xlane.xlu0 %3969
      %vm3971 = vcmp.eq.f32.partialorder %v3968, %v3970
      %v3972 = vsel %vm3971, %v3967, inf
      %3973 = vmin.xlane.f32.xlu0 %v3972
      %v3974 = vpop.xlane.xlu0 %3973
      %v3975 = vcvt.f32.s32 %v3974
      %v3976 = vcvt.f32.s32 %v3970
      %v3977 = vshll.u32 %v3976, 16
      %v3978 = vadd.s32 %v3977, %v3975
      %vm3979 = vcmp.lt.s32.totalorder %v3123, %v3124
      %v3980 = vsel %vm3979, %v3123, %v3124
      %v3981 = vand.u32 %v3980, 65535
      %v3982 = vshra.s32 %v3980, 16
      %v3983 = vcvt.s32.f32 %v3981
      %v3984 = vcvt.s32.f32 %v3982
      %3985 = vmin.xlane.f32.xlu0 %v3984
      %v3986 = vpop.xlane.xlu0 %3985
      %vm3987 = vcmp.eq.f32.partialorder %v3984, %v3986
      %v3988 = vsel %vm3987, %v3983, inf
      %3989 = vmin.xlane.f32.xlu0 %v3988
      %v3990 = vpop.xlane.xlu0 %3989
      %v3991 = vcvt.f32.s32 %v3990
      %v3992 = vcvt.f32.s32 %v3986
      %v3993 = vshll.u32 %v3992, 16
      %v3994 = vadd.s32 %v3993, %v3991
      %vm3995 = vcmp.lt.s32.totalorder %v3125, %v3126
      %v3996 = vsel %vm3995, %v3125, %v3126
      %v3997 = vand.u32 %v3996, 65535
      %v3998 = vshra.s32 %v3996, 16
      %v3999 = vcvt.s32.f32 %v3997
      %v4000 = vcvt.s32.f32 %v3998
      %4001 = vmin.xlane.f32.xlu0 %v4000
      %v4002 = vpop.xlane.xlu0 %4001
      %vm4003 = vcmp.eq.f32.partialorder %v4000, %v4002
      %v4004 = vsel %vm4003, %v3999, inf
      %4005 = vmin.xlane.f32.xlu0 %v4004
      %v4006 = vpop.xlane.xlu0 %4005
      %v4007 = vcvt.f32.s32 %v4006
      %v4008 = vcvt.f32.s32 %v4002
      %v4009 = vshll.u32 %v4008, 16
      %v4010 = vadd.s32 %v4009, %v4007
      %vm4011 = vcmp.lt.s32.totalorder %v3127, %v3128
      %v4012 = vsel %vm4011, %v3127, %v3128
      %v4013 = vand.u32 %v4012, 65535
      %v4014 = vshra.s32 %v4012, 16
      %v4015 = vcvt.s32.f32 %v4013
      %v4016 = vcvt.s32.f32 %v4014
      %4017 = vmin.xlane.f32.xlu0 %v4016
      %v4018 = vpop.xlane.xlu0 %4017
      %vm4019 = vcmp.eq.f32.partialorder %v4016, %v4018
      %v4020 = vsel %vm4019, %v4015, inf
      %4021 = vmin.xlane.f32.xlu0 %v4020
      %v4022 = vpop.xlane.xlu0 %4021
      %v4023 = vcvt.f32.s32 %v4022
      %v4024 = vcvt.f32.s32 %v4018
      %v4025 = vshll.u32 %v4024, 16
      %v4026 = vadd.s32 %v4025, %v4023
      %vm4027 = vcmp.lt.s32.totalorder %v3129, %v3130
      %v4028 = vsel %vm4027, %v3129, %v3130
      %v4029 = vand.u32 %v4028, 65535
      %v4030 = vshra.s32 %v4028, 16
      %v4031 = vcvt.s32.f32 %v4029
      %v4032 = vcvt.s32.f32 %v4030
      %4033 = vmin.xlane.f32.xlu0 %v4032
      %v4034 = vpop.xlane.xlu0 %4033
      %vm4035 = vcmp.eq.f32.partialorder %v4032, %v4034
      %v4036 = vsel %vm4035, %v4031, inf
      %4037 = vmin.xlane.f32.xlu0 %v4036
      %v4038 = vpop.xlane.xlu0 %4037
      %v4039 = vcvt.f32.s32 %v4038
      %v4040 = vcvt.f32.s32 %v4034
      %v4041 = vshll.u32 %v4040, 16
      %v4042 = vadd.s32 %v4041, %v4039
      %vm4043 = vcmp.lt.s32.totalorder %v3131, %v3132
      %v4044 = vsel %vm4043, %v3131, %v3132
      %v4045 = vand.u32 %v4044, 65535
      %v4046 = vshra.s32 %v4044, 16
      %v4047 = vcvt.s32.f32 %v4045
      %v4048 = vcvt.s32.f32 %v4046
      %4049 = vmin.xlane.f32.xlu0 %v4048
      %v4050 = vpop.xlane.xlu0 %4049
      %vm4051 = vcmp.eq.f32.partialorder %v4048, %v4050
      %v4052 = vsel %vm4051, %v4047, inf
      %4053 = vmin.xlane.f32.xlu0 %v4052
      %v4054 = vpop.xlane.xlu0 %4053
      %v4055 = vcvt.f32.s32 %v4054
      %v4056 = vcvt.f32.s32 %v4050
      %v4057 = vshll.u32 %v4056, 16
      %v4058 = vadd.s32 %v4057, %v4055
      %vm4059 = vcmp.lt.s32.totalorder %v3133, %v3134
      %v4060 = vsel %vm4059, %v3133, %v3134
      %v4061 = vand.u32 %v4060, 65535
      %v4062 = vshra.s32 %v4060, 16
      %v4063 = vcvt.s32.f32 %v4061
      %v4064 = vcvt.s32.f32 %v4062
      %4065 = vmin.xlane.f32.xlu0 %v4064
      %v4066 = vpop.xlane.xlu0 %4065
      %vm4067 = vcmp.eq.f32.partialorder %v4064, %v4066
      %v4068 = vsel %vm4067, %v4063, inf
      %4069 = vmin.xlane.f32.xlu0 %v4068
      %v4070 = vpop.xlane.xlu0 %4069
      %v4071 = vcvt.f32.s32 %v4070
      %v4072 = vcvt.f32.s32 %v4066
      %v4073 = vshll.u32 %v4072, 16
      %v4074 = vadd.s32 %v4073, %v4071
      %vm4075 = vcmp.lt.s32.totalorder %v3135, %v3136
      %v4076 = vsel %vm4075, %v3135, %v3136
      %v4077 = vand.u32 %v4076, 65535
      %v4078 = vshra.s32 %v4076, 16
      %v4079 = vcvt.s32.f32 %v4077
      %v4080 = vcvt.s32.f32 %v4078
      %4081 = vmin.xlane.f32.xlu0 %v4080
      %v4082 = vpop.xlane.xlu0 %4081
      %vm4083 = vcmp.eq.f32.partialorder %v4080, %v4082
      %v4084 = vsel %vm4083, %v4079, inf
      %4085 = vmin.xlane.f32.xlu0 %v4084
      %v4086 = vpop.xlane.xlu0 %4085
      %v4087 = vcvt.f32.s32 %v4086
      %v4088 = vcvt.f32.s32 %v4082
      %v4089 = vshll.u32 %v4088, 16
      %v4090 = vadd.s32 %v4089, %v4087
      %vm4091 = vcmp.lt.s32.totalorder %v3137, %v3138
      %v4092 = vsel %vm4091, %v3137, %v3138
      %v4093 = vand.u32 %v4092, 65535
      %v4094 = vshra.s32 %v4092, 16
      %v4095 = vcvt.s32.f32 %v4093
      %v4096 = vcvt.s32.f32 %v4094
      %4097 = vmin.xlane.f32.xlu0 %v4096
      %v4098 = vpop.xlane.xlu0 %4097
      %vm4099 = vcmp.eq.f32.partialorder %v4096, %v4098
      %v4100 = vsel %vm4099, %v4095, inf
      %4101 = vmin.xlane.f32.xlu0 %v4100
      %v4102 = vpop.xlane.xlu0 %4101
      %v4103 = vcvt.f32.s32 %v4102
      %v4104 = vcvt.f32.s32 %v4098
      %v4105 = vshll.u32 %v4104, 16
      %v4106 = vadd.s32 %v4105, %v4103
      %vm4107 = vcmp.lt.s32.totalorder %v3139, %v3140
      %v4108 = vsel %vm4107, %v3139, %v3140
      %v4109 = vand.u32 %v4108, 65535
      %v4110 = vshra.s32 %v4108, 16
      %v4111 = vcvt.s32.f32 %v4109
      %v4112 = vcvt.s32.f32 %v4110
      %4113 = vmin.xlane.f32.xlu0 %v4112
      %v4114 = vpop.xlane.xlu0 %4113
      %vm4115 = vcmp.eq.f32.partialorder %v4112, %v4114
      %v4116 = vsel %vm4115, %v4111, inf
      %4117 = vmin.xlane.f32.xlu0 %v4116
      %v4118 = vpop.xlane.xlu0 %4117
      %v4119 = vcvt.f32.s32 %v4118
      %v4120 = vcvt.f32.s32 %v4114
      %v4121 = vshll.u32 %v4120, 16
      %v4122 = vadd.s32 %v4121, %v4119
      %vm4123 = vcmp.lt.s32.totalorder %v3141, %v3142
      %v4124 = vsel %vm4123, %v3141, %v3142
      %v4125 = vand.u32 %v4124, 65535
      %v4126 = vshra.s32 %v4124, 16
      %v4127 = vcvt.s32.f32 %v4125
      %v4128 = vcvt.s32.f32 %v4126
      %4129 = vmin.xlane.f32.xlu0 %v4128
      %v4130 = vpop.xlane.xlu0 %4129
      %vm4131 = vcmp.eq.f32.partialorder %v4128, %v4130
      %v4132 = vsel %vm4131, %v4127, inf
      %4133 = vmin.xlane.f32.xlu0 %v4132
      %v4134 = vpop.xlane.xlu0 %4133
      %v4135 = vcvt.f32.s32 %v4134
      %v4136 = vcvt.f32.s32 %v4130
      %v4137 = vshll.u32 %v4136, 16
      %v4138 = vadd.s32 %v4137, %v4135
      %vm4139 = vcmp.lt.s32.totalorder %v3143, %v3144
      %v4140 = vsel %vm4139, %v3143, %v3144
      %v4141 = vand.u32 %v4140, 65535
      %v4142 = vshra.s32 %v4140, 16
      %v4143 = vcvt.s32.f32 %v4141
      %v4144 = vcvt.s32.f32 %v4142
      %4145 = vmin.xlane.f32.xlu0 %v4144
      %v4146 = vpop.xlane.xlu0 %4145
      %vm4147 = vcmp.eq.f32.partialorder %v4144, %v4146
      %v4148 = vsel %vm4147, %v4143, inf
      %4149 = vmin.xlane.f32.xlu0 %v4148
      %v4150 = vpop.xlane.xlu0 %4149
      %v4151 = vcvt.f32.s32 %v4150
      %v4152 = vcvt.f32.s32 %v4146
      %v4153 = vshll.u32 %v4152, 16
      %v4154 = vadd.s32 %v4153, %v4151
      %vm4155 = vcmp.lt.s32.totalorder %v3145, %v3146
      %v4156 = vsel %vm4155, %v3145, %v3146
      %v4157 = vand.u32 %v4156, 65535
      %v4158 = vshra.s32 %v4156, 16
      %v4159 = vcvt.s32.f32 %v4157
      %v4160 = vcvt.s32.f32 %v4158
      %4161 = vmin.xlane.f32.xlu0 %v4160
      %v4162 = vpop.xlane.xlu0 %4161
      %vm4163 = vcmp.eq.f32.partialorder %v4160, %v4162
      %v4164 = vsel %vm4163, %v4159, inf
      %4165 = vmin.xlane.f32.xlu0 %v4164
      %v4166 = vpop.xlane.xlu0 %4165
      %v4167 = vcvt.f32.s32 %v4166
      %v4168 = vcvt.f32.s32 %v4162
      %v4169 = vshll.u32 %v4168, 16
      %v4170 = vadd.s32 %v4169, %v4167
      %vm4171 = vcmp.eq.s32.totalorder %v966, %v1881
      %vm4172 = vcmp.eq.s32.totalorder %v967, %v1881
      %vm4173 = vcmp.eq.s32.totalorder %v966, %v1897
      %vm4174 = vcmp.eq.s32.totalorder %v967, %v1897
      %vm4175 = vcmp.eq.s32.totalorder %v966, %v1913
      %vm4176 = vcmp.eq.s32.totalorder %v967, %v1913
      %vm4177 = vcmp.eq.s32.totalorder %v966, %v1929
      %vm4178 = vcmp.eq.s32.totalorder %v967, %v1929
      %vm4179 = vcmp.eq.s32.totalorder %v966, %v1945
      %vm4180 = vcmp.eq.s32.totalorder %v967, %v1945
      %vm4181 = vcmp.eq.s32.totalorder %v966, %v1961
      %vm4182 = vcmp.eq.s32.totalorder %v967, %v1961
      %vm4183 = vcmp.eq.s32.totalorder %v966, %v1977
      %vm4184 = vcmp.eq.s32.totalorder %v967, %v1977
      %vm4185 = vcmp.eq.s32.totalorder %v966, %v1993
      %vm4186 = vcmp.eq.s32.totalorder %v967, %v1993
      %vm4187 = vcmp.eq.s32.totalorder %v966, %v2009
      %vm4188 = vcmp.eq.s32.totalorder %v967, %v2009
      %vm4189 = vcmp.eq.s32.totalorder %v966, %v2025
      %vm4190 = vcmp.eq.s32.totalorder %v967, %v2025
      %vm4191 = vcmp.eq.s32.totalorder %v966, %v2041
      %vm4192 = vcmp.eq.s32.totalorder %v967, %v2041
      %vm4193 = vcmp.eq.s32.totalorder %v966, %v2057
      %vm4194 = vcmp.eq.s32.totalorder %v967, %v2057
      %vm4195 = vcmp.eq.s32.totalorder %v966, %v2073
      %vm4196 = vcmp.eq.s32.totalorder %v967, %v2073
      %vm4197 = vcmp.eq.s32.totalorder %v966, %v2089
      %vm4198 = vcmp.eq.s32.totalorder %v967, %v2089
      %vm4199 = vcmp.eq.s32.totalorder %v966, %v2105
      %vm4200 = vcmp.eq.s32.totalorder %v967, %v2105
      %vm4201 = vcmp.eq.s32.totalorder %v966, %v2121
      %vm4202 = vcmp.eq.s32.totalorder %v967, %v2121
      %vm4203 = vcmp.eq.s32.totalorder %v966, %v2137
      %vm4204 = vcmp.eq.s32.totalorder %v967, %v2137
      %vm4205 = vcmp.eq.s32.totalorder %v966, %v2153
      %vm4206 = vcmp.eq.s32.totalorder %v967, %v2153
      %vm4207 = vcmp.eq.s32.totalorder %v966, %v2169
      %vm4208 = vcmp.eq.s32.totalorder %v967, %v2169
      %vm4209 = vcmp.eq.s32.totalorder %v966, %v2185
      %vm4210 = vcmp.eq.s32.totalorder %v967, %v2185
      %vm4211 = vcmp.eq.s32.totalorder %v966, %v2201
      %vm4212 = vcmp.eq.s32.totalorder %v967, %v2201
      %vm4213 = vcmp.eq.s32.totalorder %v966, %v2217
      %vm4214 = vcmp.eq.s32.totalorder %v967, %v2217
      %vm4215 = vcmp.eq.s32.totalorder %v966, %v2233
      %vm4216 = vcmp.eq.s32.totalorder %v967, %v2233
      %vm4217 = vcmp.eq.s32.totalorder %v966, %v2249
      %vm4218 = vcmp.eq.s32.totalorder %v967, %v2249
      %vm4219 = vcmp.eq.s32.totalorder %v966, %v2265
      %vm4220 = vcmp.eq.s32.totalorder %v967, %v2265
      %vm4221 = vcmp.eq.s32.totalorder %v966, %v2281
      %vm4222 = vcmp.eq.s32.totalorder %v967, %v2281
      %vm4223 = vcmp.eq.s32.totalorder %v966, %v2297
      %vm4224 = vcmp.eq.s32.totalorder %v967, %v2297
      %vm4225 = vcmp.eq.s32.totalorder %v966, %v2313
      %vm4226 = vcmp.eq.s32.totalorder %v967, %v2313
      %vm4227 = vcmp.eq.s32.totalorder %v966, %v2329
      %vm4228 = vcmp.eq.s32.totalorder %v967, %v2329
      %vm4229 = vcmp.eq.s32.totalorder %v966, %v2345
      %vm4230 = vcmp.eq.s32.totalorder %v967, %v2345
      %vm4231 = vcmp.eq.s32.totalorder %v966, %v2361
      %vm4232 = vcmp.eq.s32.totalorder %v967, %v2361
      %vm4233 = vcmp.eq.s32.totalorder %v966, %v2377
      %vm4234 = vcmp.eq.s32.totalorder %v967, %v2377
      %vm4235 = vcmp.eq.s32.totalorder %v966, %v2393
      %vm4236 = vcmp.eq.s32.totalorder %v967, %v2393
      %vm4237 = vcmp.eq.s32.totalorder %v966, %v2409
      %vm4238 = vcmp.eq.s32.totalorder %v967, %v2409
      %vm4239 = vcmp.eq.s32.totalorder %v966, %v2425
      %vm4240 = vcmp.eq.s32.totalorder %v967, %v2425
      %vm4241 = vcmp.eq.s32.totalorder %v966, %v2441
      %vm4242 = vcmp.eq.s32.totalorder %v967, %v2441
      %vm4243 = vcmp.eq.s32.totalorder %v966, %v2457
      %vm4244 = vcmp.eq.s32.totalorder %v967, %v2457
      %vm4245 = vcmp.eq.s32.totalorder %v966, %v2473
      %vm4246 = vcmp.eq.s32.totalorder %v967, %v2473
      %vm4247 = vcmp.eq.s32.totalorder %v966, %v2489
      %vm4248 = vcmp.eq.s32.totalorder %v967, %v2489
      %vm4249 = vcmp.eq.s32.totalorder %v966, %v2505
      %vm4250 = vcmp.eq.s32.totalorder %v967, %v2505
      %vm4251 = vcmp.eq.s32.totalorder %v966, %v2521
      %vm4252 = vcmp.eq.s32.totalorder %v967, %v2521
      %vm4253 = vcmp.eq.s32.totalorder %v966, %v2537
      %vm4254 = vcmp.eq.s32.totalorder %v967, %v2537
      %vm4255 = vcmp.eq.s32.totalorder %v966, %v2553
      %vm4256 = vcmp.eq.s32.totalorder %v967, %v2553
      %vm4257 = vcmp.eq.s32.totalorder %v966, %v2569
      %vm4258 = vcmp.eq.s32.totalorder %v967, %v2569
      %vm4259 = vcmp.eq.s32.totalorder %v966, %v2585
      %vm4260 = vcmp.eq.s32.totalorder %v967, %v2585
      %vm4261 = vcmp.eq.s32.totalorder %v966, %v2601
      %vm4262 = vcmp.eq.s32.totalorder %v967, %v2601
      %vm4263 = vcmp.eq.s32.totalorder %v966, %v2617
      %vm4264 = vcmp.eq.s32.totalorder %v967, %v2617
      %vm4265 = vcmp.eq.s32.totalorder %v966, %v2633
      %vm4266 = vcmp.eq.s32.totalorder %v967, %v2633
      %vm4267 = vcmp.eq.s32.totalorder %v966, %v2649
      %vm4268 = vcmp.eq.s32.totalorder %v967, %v2649
      %vm4269 = vcmp.eq.s32.totalorder %v966, %v2665
      %vm4270 = vcmp.eq.s32.totalorder %v967, %v2665
      %vm4271 = vcmp.eq.s32.totalorder %v966, %v2681
      %vm4272 = vcmp.eq.s32.totalorder %v967, %v2681
      %vm4273 = vcmp.eq.s32.totalorder %v966, %v2697
      %vm4274 = vcmp.eq.s32.totalorder %v967, %v2697
      %vm4275 = vcmp.eq.s32.totalorder %v966, %v2713
      %vm4276 = vcmp.eq.s32.totalorder %v967, %v2713
      %vm4277 = vcmp.eq.s32.totalorder %v966, %v2729
      %vm4278 = vcmp.eq.s32.totalorder %v967, %v2729
      %vm4279 = vcmp.eq.s32.totalorder %v966, %v2745
      %vm4280 = vcmp.eq.s32.totalorder %v967, %v2745
      %vm4281 = vcmp.eq.s32.totalorder %v966, %v2761
      %vm4282 = vcmp.eq.s32.totalorder %v967, %v2761
      %vm4283 = vcmp.eq.s32.totalorder %v966, %v2777
      %vm4284 = vcmp.eq.s32.totalorder %v967, %v2777
      %vm4285 = vcmp.eq.s32.totalorder %v966, %v2793
      %vm4286 = vcmp.eq.s32.totalorder %v967, %v2793
      %vm4287 = vcmp.eq.s32.totalorder %v966, %v2809
      %vm4288 = vcmp.eq.s32.totalorder %v967, %v2809
      %vm4289 = vcmp.eq.s32.totalorder %v966, %v2825
      %vm4290 = vcmp.eq.s32.totalorder %v967, %v2825
      %vm4291 = vcmp.eq.s32.totalorder %v966, %v2841
      %vm4292 = vcmp.eq.s32.totalorder %v967, %v2841
      %vm4293 = vcmp.eq.s32.totalorder %v966, %v2857
      %vm4294 = vcmp.eq.s32.totalorder %v967, %v2857
      %vm4295 = vcmp.eq.s32.totalorder %v966, %v2873
      %vm4296 = vcmp.eq.s32.totalorder %v967, %v2873
      %vm4297 = vcmp.eq.s32.totalorder %v966, %v2889
      %vm4298 = vcmp.eq.s32.totalorder %v967, %v2889
      %v4299 = vadd.s32 %v3162, 128
      %v4300 = vadd.s32 %v3178, 128
      %v4301 = vadd.s32 %v3194, 128
      %v4302 = vadd.s32 %v3210, 128
      %v4303 = vadd.s32 %v3226, 128
      %v4304 = vadd.s32 %v3242, 128
      %v4305 = vadd.s32 %v3258, 128
      %v4306 = vadd.s32 %v3274, 128
      %v4307 = vadd.s32 %v3290, 128
      %v4308 = vadd.s32 %v3306, 128
      %v4309 = vadd.s32 %v3322, 128
      %v4310 = vadd.s32 %v3338, 128
      %v4311 = vadd.s32 %v3354, 128
      %v4312 = vadd.s32 %v3370, 128
      %v4313 = vadd.s32 %v3386, 128
      %v4314 = vadd.s32 %v3402, 128
      %v4315 = vadd.s32 %v3418, 128
      %v4316 = vadd.s32 %v3434, 128
      %v4317 = vadd.s32 %v3450, 128
      %v4318 = vadd.s32 %v3466, 128
      %v4319 = vadd.s32 %v3482, 128
      %v4320 = vadd.s32 %v3498, 128
      %v4321 = vadd.s32 %v3514, 128
      %v4322 = vadd.s32 %v3530, 128
      %v4323 = vadd.s32 %v3546, 128
      %v4324 = vadd.s32 %v3562, 128
      %v4325 = vadd.s32 %v3578, 128
      %v4326 = vadd.s32 %v3594, 128
      %v4327 = vadd.s32 %v3610, 128
      %v4328 = vadd.s32 %v3626, 128
      %v4329 = vadd.s32 %v3642, 128
      %v4330 = vadd.s32 %v3658, 128
      %v4331 = vadd.s32 %v3674, 128
      %v4332 = vadd.s32 %v3690, 128
      %v4333 = vadd.s32 %v3706, 128
      %v4334 = vadd.s32 %v3722, 128
      %v4335 = vadd.s32 %v3738, 128
      %v4336 = vadd.s32 %v3754, 128
      %v4337 = vadd.s32 %v3770, 128
      %v4338 = vadd.s32 %v3786, 128
      %v4339 = vadd.s32 %v3802, 128
      %v4340 = vadd.s32 %v3818, 128
      %v4341 = vadd.s32 %v3834, 128
      %v4342 = vadd.s32 %v3850, 128
      %v4343 = vadd.s32 %v3866, 128
      %v4344 = vadd.s32 %v3882, 128
      %v4345 = vadd.s32 %v3898, 128
      %v4346 = vadd.s32 %v3914, 128
      %v4347 = vadd.s32 %v3930, 128
      %v4348 = vadd.s32 %v3946, 128
      %v4349 = vadd.s32 %v3962, 128
      %v4350 = vadd.s32 %v3978, 128
      %v4351 = vadd.s32 %v3994, 128
      %v4352 = vadd.s32 %v4010, 128
      %v4353 = vadd.s32 %v4026, 128
      %v4354 = vadd.s32 %v4042, 128
      %v4355 = vadd.s32 %v4058, 128
      %v4356 = vadd.s32 %v4074, 128
      %v4357 = vadd.s32 %v4090, 128
      %v4358 = vadd.s32 %v4106, 128
      %v4359 = vadd.s32 %v4122, 128
      %v4360 = vadd.s32 %v4138, 128
      %v4361 = vadd.s32 %v4154, 128
      %v4362 = vadd.s32 %v4170, 128
      %vm4363 = vcmp.eq.s32.totalorder %v966, %v4299
      %vm4364 = vcmp.eq.s32.totalorder %v967, %v4299
      %vm4365 = vcmp.eq.s32.totalorder %v966, %v4300
      %vm4366 = vcmp.eq.s32.totalorder %v967, %v4300
      %vm4367 = vcmp.eq.s32.totalorder %v966, %v4301
      %vm4368 = vcmp.eq.s32.totalorder %v967, %v4301
      %vm4369 = vcmp.eq.s32.totalorder %v966, %v4302
      %vm4370 = vcmp.eq.s32.totalorder %v967, %v4302
      %vm4371 = vcmp.eq.s32.totalorder %v966, %v4303
      %vm4372 = vcmp.eq.s32.totalorder %v967, %v4303
      %vm4373 = vcmp.eq.s32.totalorder %v966, %v4304
      %vm4374 = vcmp.eq.s32.totalorder %v967, %v4304
      %vm4375 = vcmp.eq.s32.totalorder %v966, %v4305
      %vm4376 = vcmp.eq.s32.totalorder %v967, %v4305
      %vm4377 = vcmp.eq.s32.totalorder %v966, %v4306
      %vm4378 = vcmp.eq.s32.totalorder %v967, %v4306
      %vm4379 = vcmp.eq.s32.totalorder %v966, %v4307
      %vm4380 = vcmp.eq.s32.totalorder %v967, %v4307
      %vm4381 = vcmp.eq.s32.totalorder %v966, %v4308
      %vm4382 = vcmp.eq.s32.totalorder %v967, %v4308
      %vm4383 = vcmp.eq.s32.totalorder %v966, %v4309
      %vm4384 = vcmp.eq.s32.totalorder %v967, %v4309
      %vm4385 = vcmp.eq.s32.totalorder %v966, %v4310
      %vm4386 = vcmp.eq.s32.totalorder %v967, %v4310
      %vm4387 = vcmp.eq.s32.totalorder %v966, %v4311
      %vm4388 = vcmp.eq.s32.totalorder %v967, %v4311
      %vm4389 = vcmp.eq.s32.totalorder %v966, %v4312
      %vm4390 = vcmp.eq.s32.totalorder %v967, %v4312
      %vm4391 = vcmp.eq.s32.totalorder %v966, %v4313
      %vm4392 = vcmp.eq.s32.totalorder %v967, %v4313
      %vm4393 = vcmp.eq.s32.totalorder %v966, %v4314
      %vm4394 = vcmp.eq.s32.totalorder %v967, %v4314
      %vm4395 = vcmp.eq.s32.totalorder %v966, %v4315
      %vm4396 = vcmp.eq.s32.totalorder %v967, %v4315
      %vm4397 = vcmp.eq.s32.totalorder %v966, %v4316
      %vm4398 = vcmp.eq.s32.totalorder %v967, %v4316
      %vm4399 = vcmp.eq.s32.totalorder %v966, %v4317
      %vm4400 = vcmp.eq.s32.totalorder %v967, %v4317
      %vm4401 = vcmp.eq.s32.totalorder %v966, %v4318
      %vm4402 = vcmp.eq.s32.totalorder %v967, %v4318
      %vm4403 = vcmp.eq.s32.totalorder %v966, %v4319
      %vm4404 = vcmp.eq.s32.totalorder %v967, %v4319
      %vm4405 = vcmp.eq.s32.totalorder %v966, %v4320
      %vm4406 = vcmp.eq.s32.totalorder %v967, %v4320
      %vm4407 = vcmp.eq.s32.totalorder %v966, %v4321
      %vm4408 = vcmp.eq.s32.totalorder %v967, %v4321
      %vm4409 = vcmp.eq.s32.totalorder %v966, %v4322
      %vm4410 = vcmp.eq.s32.totalorder %v967, %v4322
      %vm4411 = vcmp.eq.s32.totalorder %v966, %v4323
      %vm4412 = vcmp.eq.s32.totalorder %v967, %v4323
      %vm4413 = vcmp.eq.s32.totalorder %v966, %v4324
      %vm4414 = vcmp.eq.s32.totalorder %v967, %v4324
      %vm4415 = vcmp.eq.s32.totalorder %v966, %v4325
      %vm4416 = vcmp.eq.s32.totalorder %v967, %v4325
      %vm4417 = vcmp.eq.s32.totalorder %v966, %v4326
      %vm4418 = vcmp.eq.s32.totalorder %v967, %v4326
      %vm4419 = vcmp.eq.s32.totalorder %v966, %v4327
      %vm4420 = vcmp.eq.s32.totalorder %v967, %v4327
      %vm4421 = vcmp.eq.s32.totalorder %v966, %v4328
      %vm4422 = vcmp.eq.s32.totalorder %v967, %v4328
      %vm4423 = vcmp.eq.s32.totalorder %v966, %v4329
      %vm4424 = vcmp.eq.s32.totalorder %v967, %v4329
      %vm4425 = vcmp.eq.s32.totalorder %v966, %v4330
      %vm4426 = vcmp.eq.s32.totalorder %v967, %v4330
      %vm4427 = vcmp.eq.s32.totalorder %v966, %v4331
      %vm4428 = vcmp.eq.s32.totalorder %v967, %v4331
      %vm4429 = vcmp.eq.s32.totalorder %v966, %v4332
      %vm4430 = vcmp.eq.s32.totalorder %v967, %v4332
      %vm4431 = vcmp.eq.s32.totalorder %v966, %v4333
      %vm4432 = vcmp.eq.s32.totalorder %v967, %v4333
      %vm4433 = vcmp.eq.s32.totalorder %v966, %v4334
      %vm4434 = vcmp.eq.s32.totalorder %v967, %v4334
      %vm4435 = vcmp.eq.s32.totalorder %v966, %v4335
      %vm4436 = vcmp.eq.s32.totalorder %v967, %v4335
      %vm4437 = vcmp.eq.s32.totalorder %v966, %v4336
      %vm4438 = vcmp.eq.s32.totalorder %v967, %v4336
      %vm4439 = vcmp.eq.s32.totalorder %v966, %v4337
      %vm4440 = vcmp.eq.s32.totalorder %v967, %v4337
      %vm4441 = vcmp.eq.s32.totalorder %v966, %v4338
      %vm4442 = vcmp.eq.s32.totalorder %v967, %v4338
      %vm4443 = vcmp.eq.s32.totalorder %v966, %v4339
      %vm4444 = vcmp.eq.s32.totalorder %v967, %v4339
      %vm4445 = vcmp.eq.s32.totalorder %v966, %v4340
      %vm4446 = vcmp.eq.s32.totalorder %v967, %v4340
      %vm4447 = vcmp.eq.s32.totalorder %v966, %v4341
      %vm4448 = vcmp.eq.s32.totalorder %v967, %v4341
      %vm4449 = vcmp.eq.s32.totalorder %v966, %v4342
      %vm4450 = vcmp.eq.s32.totalorder %v967, %v4342
      %vm4451 = vcmp.eq.s32.totalorder %v966, %v4343
      %vm4452 = vcmp.eq.s32.totalorder %v967, %v4343
      %vm4453 = vcmp.eq.s32.totalorder %v966, %v4344
      %vm4454 = vcmp.eq.s32.totalorder %v967, %v4344
      %vm4455 = vcmp.eq.s32.totalorder %v966, %v4345
      %vm4456 = vcmp.eq.s32.totalorder %v967, %v4345
      %vm4457 = vcmp.eq.s32.totalorder %v966, %v4346
      %vm4458 = vcmp.eq.s32.totalorder %v967, %v4346
      %vm4459 = vcmp.eq.s32.totalorder %v966, %v4347
      %vm4460 = vcmp.eq.s32.totalorder %v967, %v4347
      %vm4461 = vcmp.eq.s32.totalorder %v966, %v4348
      %vm4462 = vcmp.eq.s32.totalorder %v967, %v4348
      %vm4463 = vcmp.eq.s32.totalorder %v966, %v4349
      %vm4464 = vcmp.eq.s32.totalorder %v967, %v4349
      %vm4465 = vcmp.eq.s32.totalorder %v966, %v4350
      %vm4466 = vcmp.eq.s32.totalorder %v967, %v4350
      %vm4467 = vcmp.eq.s32.totalorder %v966, %v4351
      %vm4468 = vcmp.eq.s32.totalorder %v967, %v4351
      %vm4469 = vcmp.eq.s32.totalorder %v966, %v4352
      %vm4470 = vcmp.eq.s32.totalorder %v967, %v4352
      %vm4471 = vcmp.eq.s32.totalorder %v966, %v4353
      %vm4472 = vcmp.eq.s32.totalorder %v967, %v4353
      %vm4473 = vcmp.eq.s32.totalorder %v966, %v4354
      %vm4474 = vcmp.eq.s32.totalorder %v967, %v4354
      %vm4475 = vcmp.eq.s32.totalorder %v966, %v4355
      %vm4476 = vcmp.eq.s32.totalorder %v967, %v4355
      %vm4477 = vcmp.eq.s32.totalorder %v966, %v4356
      %vm4478 = vcmp.eq.s32.totalorder %v967, %v4356
      %vm4479 = vcmp.eq.s32.totalorder %v966, %v4357
      %vm4480 = vcmp.eq.s32.totalorder %v967, %v4357
      %vm4481 = vcmp.eq.s32.totalorder %v966, %v4358
      %vm4482 = vcmp.eq.s32.totalorder %v967, %v4358
      %vm4483 = vcmp.eq.s32.totalorder %v966, %v4359
      %vm4484 = vcmp.eq.s32.totalorder %v967, %v4359
      %vm4485 = vcmp.eq.s32.totalorder %v966, %v4360
      %vm4486 = vcmp.eq.s32.totalorder %v967, %v4360
      %vm4487 = vcmp.eq.s32.totalorder %v966, %v4361
      %vm4488 = vcmp.eq.s32.totalorder %v967, %v4361
      %vm4489 = vcmp.eq.s32.totalorder %v966, %v4362
      %vm4490 = vcmp.eq.s32.totalorder %v967, %v4362
      %vm4491 = vmor %vm4171, %vm4363
      %vm4492 = vmor %vm4172, %vm4364
      %vm4493 = vmor %vm4173, %vm4365
      %vm4494 = vmor %vm4174, %vm4366
      %vm4495 = vmor %vm4175, %vm4367
      %vm4496 = vmor %vm4176, %vm4368
      %vm4497 = vmor %vm4177, %vm4369
      %vm4498 = vmor %vm4178, %vm4370
      %vm4499 = vmor %vm4179, %vm4371
      %vm4500 = vmor %vm4180, %vm4372
      %vm4501 = vmor %vm4181, %vm4373
      %vm4502 = vmor %vm4182, %vm4374
      %vm4503 = vmor %vm4183, %vm4375
      %vm4504 = vmor %vm4184, %vm4376
      %vm4505 = vmor %vm4185, %vm4377
      %vm4506 = vmor %vm4186, %vm4378
      %vm4507 = vmor %vm4187, %vm4379
      %vm4508 = vmor %vm4188, %vm4380
      %vm4509 = vmor %vm4189, %vm4381
      %vm4510 = vmor %vm4190, %vm4382
      %vm4511 = vmor %vm4191, %vm4383
      %vm4512 = vmor %vm4192, %vm4384
      %vm4513 = vmor %vm4193, %vm4385
      %vm4514 = vmor %vm4194, %vm4386
      %vm4515 = vmor %vm4195, %vm4387
      %vm4516 = vmor %vm4196, %vm4388
      %vm4517 = vmor %vm4197, %vm4389
      %vm4518 = vmor %vm4198, %vm4390
      %vm4519 = vmor %vm4199, %vm4391
      %vm4520 = vmor %vm4200, %vm4392
      %vm4521 = vmor %vm4201, %vm4393
      %vm4522 = vmor %vm4202, %vm4394
      %vm4523 = vmor %vm4203, %vm4395
      %vm4524 = vmor %vm4204, %vm4396
      %vm4525 = vmor %vm4205, %vm4397
      %vm4526 = vmor %vm4206, %vm4398
      %vm4527 = vmor %vm4207, %vm4399
      %vm4528 = vmor %vm4208, %vm4400
      %vm4529 = vmor %vm4209, %vm4401
      %vm4530 = vmor %vm4210, %vm4402
      %vm4531 = vmor %vm4211, %vm4403
      %vm4532 = vmor %vm4212, %vm4404
      %vm4533 = vmor %vm4213, %vm4405
      %vm4534 = vmor %vm4214, %vm4406
      %vm4535 = vmor %vm4215, %vm4407
      %vm4536 = vmor %vm4216, %vm4408
      %vm4537 = vmor %vm4217, %vm4409
      %vm4538 = vmor %vm4218, %vm4410
      %vm4539 = vmor %vm4219, %vm4411
      %vm4540 = vmor %vm4220, %vm4412
      %vm4541 = vmor %vm4221, %vm4413
      %vm4542 = vmor %vm4222, %vm4414
      %vm4543 = vmor %vm4223, %vm4415
      %vm4544 = vmor %vm4224, %vm4416
      %vm4545 = vmor %vm4225, %vm4417
      %vm4546 = vmor %vm4226, %vm4418
      %vm4547 = vmor %vm4227, %vm4419
      %vm4548 = vmor %vm4228, %vm4420
      %vm4549 = vmor %vm4229, %vm4421
      %vm4550 = vmor %vm4230, %vm4422
      %vm4551 = vmor %vm4231, %vm4423
      %vm4552 = vmor %vm4232, %vm4424
      %vm4553 = vmor %vm4233, %vm4425
      %vm4554 = vmor %vm4234, %vm4426
      %vm4555 = vmor %vm4235, %vm4427
      %vm4556 = vmor %vm4236, %vm4428
      %vm4557 = vmor %vm4237, %vm4429
      %vm4558 = vmor %vm4238, %vm4430
      %vm4559 = vmor %vm4239, %vm4431
      %vm4560 = vmor %vm4240, %vm4432
      %vm4561 = vmor %vm4241, %vm4433
      %vm4562 = vmor %vm4242, %vm4434
      %vm4563 = vmor %vm4243, %vm4435
      %vm4564 = vmor %vm4244, %vm4436
      %vm4565 = vmor %vm4245, %vm4437
      %vm4566 = vmor %vm4246, %vm4438
      %vm4567 = vmor %vm4247, %vm4439
      %vm4568 = vmor %vm4248, %vm4440
      %vm4569 = vmor %vm4249, %vm4441
      %vm4570 = vmor %vm4250, %vm4442
      %vm4571 = vmor %vm4251, %vm4443
      %vm4572 = vmor %vm4252, %vm4444
      %vm4573 = vmor %vm4253, %vm4445
      %vm4574 = vmor %vm4254, %vm4446
      %vm4575 = vmor %vm4255, %vm4447
      %vm4576 = vmor %vm4256, %vm4448
      %vm4577 = vmor %vm4257, %vm4449
      %vm4578 = vmor %vm4258, %vm4450
      %vm4579 = vmor %vm4259, %vm4451
      %vm4580 = vmor %vm4260, %vm4452
      %vm4581 = vmor %vm4261, %vm4453
      %vm4582 = vmor %vm4262, %vm4454
      %vm4583 = vmor %vm4263, %vm4455
      %vm4584 = vmor %vm4264, %vm4456
      %vm4585 = vmor %vm4265, %vm4457
      %vm4586 = vmor %vm4266, %vm4458
      %vm4587 = vmor %vm4267, %vm4459
      %vm4588 = vmor %vm4268, %vm4460
      %vm4589 = vmor %vm4269, %vm4461
      %vm4590 = vmor %vm4270, %vm4462
      %vm4591 = vmor %vm4271, %vm4463
      %vm4592 = vmor %vm4272, %vm4464
      %vm4593 = vmor %vm4273, %vm4465
      %vm4594 = vmor %vm4274, %vm4466
      %vm4595 = vmor %vm4275, %vm4467
      %vm4596 = vmor %vm4276, %vm4468
      %vm4597 = vmor %vm4277, %vm4469
      %vm4598 = vmor %vm4278, %vm4470
      %vm4599 = vmor %vm4279, %vm4471
      %vm4600 = vmor %vm4280, %vm4472
      %vm4601 = vmor %vm4281, %vm4473
      %vm4602 = vmor %vm4282, %vm4474
      %vm4603 = vmor %vm4283, %vm4475
      %vm4604 = vmor %vm4284, %vm4476
      %vm4605 = vmor %vm4285, %vm4477
      %vm4606 = vmor %vm4286, %vm4478
      %vm4607 = vmor %vm4287, %vm4479
      %vm4608 = vmor %vm4288, %vm4480
      %vm4609 = vmor %vm4289, %vm4481
      %vm4610 = vmor %vm4290, %vm4482
      %vm4611 = vmor %vm4291, %vm4483
      %vm4612 = vmor %vm4292, %vm4484
      %vm4613 = vmor %vm4293, %vm4485
      %vm4614 = vmor %vm4294, %vm4486
      %vm4615 = vmor %vm4295, %vm4487
      %vm4616 = vmor %vm4296, %vm4488
      %vm4617 = vmor %vm4297, %vm4489
      %vm4618 = vmor %vm4298, %vm4490
      %v4619 = vsel %vm4491, 1, 0
      %v4620 = vsel %vm4492, 1, 0
      %v4621 = vsel %vm4493, 1, 0
      %v4622 = vsel %vm4494, 1, 0
      %v4623 = vsel %vm4495, 1, 0
      %v4624 = vsel %vm4496, 1, 0
      %v4625 = vsel %vm4497, 1, 0
      %v4626 = vsel %vm4498, 1, 0
      %v4627 = vsel %vm4499, 1, 0
      %v4628 = vsel %vm4500, 1, 0
      %v4629 = vsel %vm4501, 1, 0
      %v4630 = vsel %vm4502, 1, 0
      %v4631 = vsel %vm4503, 1, 0
      %v4632 = vsel %vm4504, 1, 0
      %v4633 = vsel %vm4505, 1, 0
      %v4634 = vsel %vm4506, 1, 0
      %v4635 = vsel %vm4507, 1, 0
      %v4636 = vsel %vm4508, 1, 0
      %v4637 = vsel %vm4509, 1, 0
      %v4638 = vsel %vm4510, 1, 0
      %v4639 = vsel %vm4511, 1, 0
      %v4640 = vsel %vm4512, 1, 0
      %v4641 = vsel %vm4513, 1, 0
      %v4642 = vsel %vm4514, 1, 0
      %v4643 = vsel %vm4515, 1, 0
      %v4644 = vsel %vm4516, 1, 0
      %v4645 = vsel %vm4517, 1, 0
      %v4646 = vsel %vm4518, 1, 0
      %v4647 = vsel %vm4519, 1, 0
      %v4648 = vsel %vm4520, 1, 0
      %v4649 = vsel %vm4521, 1, 0
      %v4650 = vsel %vm4522, 1, 0
      %v4651 = vsel %vm4523, 1, 0
      %v4652 = vsel %vm4524, 1, 0
      %v4653 = vsel %vm4525, 1, 0
      %v4654 = vsel %vm4526, 1, 0
      %v4655 = vsel %vm4527, 1, 0
      %v4656 = vsel %vm4528, 1, 0
      %v4657 = vsel %vm4529, 1, 0
      %v4658 = vsel %vm4530, 1, 0
      %v4659 = vsel %vm4531, 1, 0
      %v4660 = vsel %vm4532, 1, 0
      %v4661 = vsel %vm4533, 1, 0
      %v4662 = vsel %vm4534, 1, 0
      %v4663 = vsel %vm4535, 1, 0
      %v4664 = vsel %vm4536, 1, 0
      %v4665 = vsel %vm4537, 1, 0
      %v4666 = vsel %vm4538, 1, 0
      %v4667 = vsel %vm4539, 1, 0
      %v4668 = vsel %vm4540, 1, 0
      %v4669 = vsel %vm4541, 1, 0
      %v4670 = vsel %vm4542, 1, 0
      %v4671 = vsel %vm4543, 1, 0
      %v4672 = vsel %vm4544, 1, 0
      %v4673 = vsel %vm4545, 1, 0
      %v4674 = vsel %vm4546, 1, 0
      %v4675 = vsel %vm4547, 1, 0
      %v4676 = vsel %vm4548, 1, 0
      %v4677 = vsel %vm4549, 1, 0
      %v4678 = vsel %vm4550, 1, 0
      %v4679 = vsel %vm4551, 1, 0
      %v4680 = vsel %vm4552, 1, 0
      %v4681 = vsel %vm4553, 1, 0
      %v4682 = vsel %vm4554, 1, 0
      %v4683 = vsel %vm4555, 1, 0
      %v4684 = vsel %vm4556, 1, 0
      %v4685 = vsel %vm4557, 1, 0
      %v4686 = vsel %vm4558, 1, 0
      %v4687 = vsel %vm4559, 1, 0
      %v4688 = vsel %vm4560, 1, 0
      %v4689 = vsel %vm4561, 1, 0
      %v4690 = vsel %vm4562, 1, 0
      %v4691 = vsel %vm4563, 1, 0
      %v4692 = vsel %vm4564, 1, 0
      %v4693 = vsel %vm4565, 1, 0
      %v4694 = vsel %vm4566, 1, 0
      %v4695 = vsel %vm4567, 1, 0
      %v4696 = vsel %vm4568, 1, 0
      %v4697 = vsel %vm4569, 1, 0
      %v4698 = vsel %vm4570, 1, 0
      %v4699 = vsel %vm4571, 1, 0
      %v4700 = vsel %vm4572, 1, 0
      %v4701 = vsel %vm4573, 1, 0
      %v4702 = vsel %vm4574, 1, 0
      %v4703 = vsel %vm4575, 1, 0
      %v4704 = vsel %vm4576, 1, 0
      %v4705 = vsel %vm4577, 1, 0
      %v4706 = vsel %vm4578, 1, 0
      %v4707 = vsel %vm4579, 1, 0
      %v4708 = vsel %vm4580, 1, 0
      %v4709 = vsel %vm4581, 1, 0
      %v4710 = vsel %vm4582, 1, 0
      %v4711 = vsel %vm4583, 1, 0
      %v4712 = vsel %vm4584, 1, 0
      %v4713 = vsel %vm4585, 1, 0
      %v4714 = vsel %vm4586, 1, 0
      %v4715 = vsel %vm4587, 1, 0
      %v4716 = vsel %vm4588, 1, 0
      %v4717 = vsel %vm4589, 1, 0
      %v4718 = vsel %vm4590, 1, 0
      %v4719 = vsel %vm4591, 1, 0
      %v4720 = vsel %vm4592, 1, 0
      %v4721 = vsel %vm4593, 1, 0
      %v4722 = vsel %vm4594, 1, 0
      %v4723 = vsel %vm4595, 1, 0
      %v4724 = vsel %vm4596, 1, 0
      %v4725 = vsel %vm4597, 1, 0
      %v4726 = vsel %vm4598, 1, 0
      %v4727 = vsel %vm4599, 1, 0
      %v4728 = vsel %vm4600, 1, 0
      %v4729 = vsel %vm4601, 1, 0
      %v4730 = vsel %vm4602, 1, 0
      %v4731 = vsel %vm4603, 1, 0
      %v4732 = vsel %vm4604, 1, 0
      %v4733 = vsel %vm4605, 1, 0
      %v4734 = vsel %vm4606, 1, 0
      %v4735 = vsel %vm4607, 1, 0
      %v4736 = vsel %vm4608, 1, 0
      %v4737 = vsel %vm4609, 1, 0
      %v4738 = vsel %vm4610, 1, 0
      %v4739 = vsel %vm4611, 1, 0
      %v4740 = vsel %vm4612, 1, 0
      %v4741 = vsel %vm4613, 1, 0
      %v4742 = vsel %vm4614, 1, 0
      %v4743 = vsel %vm4615, 1, 0
      %v4744 = vsel %vm4616, 1, 0
      %v4745 = vsel %vm4617, 1, 0
      %v4746 = vsel %vm4618, 1, 0
      %v4747 = vcvt.s32.f32 %v4619
      %v4748 = vcvt.s32.f32 %v4620
      %v4749 = vcvt.s32.f32 %v4621
      %v4750 = vcvt.s32.f32 %v4622
      %v4751 = vcvt.s32.f32 %v4623
      %v4752 = vcvt.s32.f32 %v4624
      %v4753 = vcvt.s32.f32 %v4625
      %v4754 = vcvt.s32.f32 %v4626
      %v4755 = vcvt.s32.f32 %v4627
      %v4756 = vcvt.s32.f32 %v4628
      %v4757 = vcvt.s32.f32 %v4629
      %v4758 = vcvt.s32.f32 %v4630
      %v4759 = vcvt.s32.f32 %v4631
      %v4760 = vcvt.s32.f32 %v4632
      %v4761 = vcvt.s32.f32 %v4633
      %v4762 = vcvt.s32.f32 %v4634
      %v4763 = vcvt.s32.f32 %v4635
      %v4764 = vcvt.s32.f32 %v4636
      %v4765 = vcvt.s32.f32 %v4637
      %v4766 = vcvt.s32.f32 %v4638
      %v4767 = vcvt.s32.f32 %v4639
      %v4768 = vcvt.s32.f32 %v4640
      %v4769 = vcvt.s32.f32 %v4641
      %v4770 = vcvt.s32.f32 %v4642
      %v4771 = vcvt.s32.f32 %v4643
      %v4772 = vcvt.s32.f32 %v4644
      %v4773 = vcvt.s32.f32 %v4645
      %v4774 = vcvt.s32.f32 %v4646
      %v4775 = vcvt.s32.f32 %v4647
      %v4776 = vcvt.s32.f32 %v4648
      %v4777 = vcvt.s32.f32 %v4649
      %v4778 = vcvt.s32.f32 %v4650
      %v4779 = vcvt.s32.f32 %v4651
      %v4780 = vcvt.s32.f32 %v4652
      %v4781 = vcvt.s32.f32 %v4653
      %v4782 = vcvt.s32.f32 %v4654
      %v4783 = vcvt.s32.f32 %v4655
      %v4784 = vcvt.s32.f32 %v4656
      %v4785 = vcvt.s32.f32 %v4657
      %v4786 = vcvt.s32.f32 %v4658
      %v4787 = vcvt.s32.f32 %v4659
      %v4788 = vcvt.s32.f32 %v4660
      %v4789 = vcvt.s32.f32 %v4661
      %v4790 = vcvt.s32.f32 %v4662
      %v4791 = vcvt.s32.f32 %v4663
      %v4792 = vcvt.s32.f32 %v4664
      %v4793 = vcvt.s32.f32 %v4665
      %v4794 = vcvt.s32.f32 %v4666
      %v4795 = vcvt.s32.f32 %v4667
      %v4796 = vcvt.s32.f32 %v4668
      %v4797 = vcvt.s32.f32 %v4669
      %v4798 = vcvt.s32.f32 %v4670
      %v4799 = vcvt.s32.f32 %v4671
      %v4800 = vcvt.s32.f32 %v4672
      %v4801 = vcvt.s32.f32 %v4673
      %v4802 = vcvt.s32.f32 %v4674
      %v4803 = vcvt.s32.f32 %v4675
      %v4804 = vcvt.s32.f32 %v4676
      %v4805 = vcvt.s32.f32 %v4677
      %v4806 = vcvt.s32.f32 %v4678
      %v4807 = vcvt.s32.f32 %v4679
      %v4808 = vcvt.s32.f32 %v4680
      %v4809 = vcvt.s32.f32 %v4681
      %v4810 = vcvt.s32.f32 %v4682
      %v4811 = vcvt.s32.f32 %v4683
      %v4812 = vcvt.s32.f32 %v4684
      %v4813 = vcvt.s32.f32 %v4685
      %v4814 = vcvt.s32.f32 %v4686
      %v4815 = vcvt.s32.f32 %v4687
      %v4816 = vcvt.s32.f32 %v4688
      %v4817 = vcvt.s32.f32 %v4689
      %v4818 = vcvt.s32.f32 %v4690
      %v4819 = vcvt.s32.f32 %v4691
      %v4820 = vcvt.s32.f32 %v4692
      %v4821 = vcvt.s32.f32 %v4693
      %v4822 = vcvt.s32.f32 %v4694
      %v4823 = vcvt.s32.f32 %v4695
      %v4824 = vcvt.s32.f32 %v4696
      %v4825 = vcvt.s32.f32 %v4697
      %v4826 = vcvt.s32.f32 %v4698
      %v4827 = vcvt.s32.f32 %v4699
      %v4828 = vcvt.s32.f32 %v4700
      %v4829 = vcvt.s32.f32 %v4701
      %v4830 = vcvt.s32.f32 %v4702
      %v4831 = vcvt.s32.f32 %v4703
      %v4832 = vcvt.s32.f32 %v4704
      %v4833 = vcvt.s32.f32 %v4705
      %v4834 = vcvt.s32.f32 %v4706
      %v4835 = vcvt.s32.f32 %v4707
      %v4836 = vcvt.s32.f32 %v4708
      %v4837 = vcvt.s32.f32 %v4709
      %v4838 = vcvt.s32.f32 %v4710
      %v4839 = vcvt.s32.f32 %v4711
      %v4840 = vcvt.s32.f32 %v4712
      %v4841 = vcvt.s32.f32 %v4713
      %v4842 = vcvt.s32.f32 %v4714
      %v4843 = vcvt.s32.f32 %v4715
      %v4844 = vcvt.s32.f32 %v4716
      %v4845 = vcvt.s32.f32 %v4717
      %v4846 = vcvt.s32.f32 %v4718
      %v4847 = vcvt.s32.f32 %v4719
      %v4848 = vcvt.s32.f32 %v4720
      %v4849 = vcvt.s32.f32 %v4721
      %v4850 = vcvt.s32.f32 %v4722
      %v4851 = vcvt.s32.f32 %v4723
      %v4852 = vcvt.s32.f32 %v4724
      %v4853 = vcvt.s32.f32 %v4725
      %v4854 = vcvt.s32.f32 %v4726
      %v4855 = vcvt.s32.f32 %v4727
      %v4856 = vcvt.s32.f32 %v4728
      %v4857 = vcvt.s32.f32 %v4729
      %v4858 = vcvt.s32.f32 %v4730
      %v4859 = vcvt.s32.f32 %v4731
      %v4860 = vcvt.s32.f32 %v4732
      %v4861 = vcvt.s32.f32 %v4733
      %v4862 = vcvt.s32.f32 %v4734
      %v4863 = vcvt.s32.f32 %v4735
      %v4864 = vcvt.s32.f32 %v4736
      %v4865 = vcvt.s32.f32 %v4737
      %v4866 = vcvt.s32.f32 %v4738
      %v4867 = vcvt.s32.f32 %v4739
      %v4868 = vcvt.s32.f32 %v4740
      %v4869 = vcvt.s32.f32 %v4741
      %v4870 = vcvt.s32.f32 %v4742
      %v4871 = vcvt.s32.f32 %v4743
      %v4872 = vcvt.s32.f32 %v4744
      %v4873 = vcvt.s32.f32 %v4745
      %v4874 = vcvt.s32.f32 %v4746
      %v4875 = vld [vmem:[%s3] sm:$0xff]
      %v4876 = vld [vmem:[%s3 + $0x8] sm:$0xff]
      %v4877 = vld [vmem:[%s3 + $0x10] sm:$0xff]
      %v4878 = vld [vmem:[%s3 + $0x18] sm:$0xff]
      %v4879 = vld [vmem:[%s3 + $0x20] sm:$0xff]
      %v4880 = vld [vmem:[%s3 + $0x28] sm:$0xff]
      %v4881 = vld [vmem:[%s3 + $0x30] sm:$0xff]
      %v4882 = vld [vmem:[%s3 + $0x38] sm:$0xff]
      %v4883 = vld [vmem:[%s3 + $0x40] sm:$0xff]
      %v4884 = vld [vmem:[%s3 + $0x48] sm:$0xff]
      %v4885 = vld [vmem:[%s3 + $0x50] sm:$0xff]
      %v4886 = vld [vmem:[%s3 + $0x58] sm:$0xff]
      %v4887 = vld [vmem:[%s3 + $0x60] sm:$0xff]
      %v4888 = vld [vmem:[%s3 + $0x68] sm:$0xff]
      %v4889 = vld [vmem:[%s3 + $0x70] sm:$0xff]
      %v4890 = vld [vmem:[%s3 + $0x78] sm:$0xff]
      %v4891 = vld [vmem:[%s3 + $0x80] sm:$0xff]
      %v4892 = vld [vmem:[%s3 + $0x88] sm:$0xff]
      %v4893 = vld [vmem:[%s3 + $0x90] sm:$0xff]
      %v4894 = vld [vmem:[%s3 + $0x98] sm:$0xff]
      %v4895 = vld [vmem:[%s3 + $0xa0] sm:$0xff]
      %v4896 = vld [vmem:[%s3 + $0xa8] sm:$0xff]
      %v4897 = vld [vmem:[%s3 + $0xb0] sm:$0xff]
      %v4898 = vld [vmem:[%s3 + $0xb8] sm:$0xff]
      %v4899 = vld [vmem:[%s3 + $0xc0] sm:$0xff]
      %v4900 = vld [vmem:[%s3 + $0xc8] sm:$0xff]
      %v4901 = vld [vmem:[%s3 + $0xd0] sm:$0xff]
      %v4902 = vld [vmem:[%s3 + $0xd8] sm:$0xff]
      %v4903 = vld [vmem:[%s3 + $0xe0] sm:$0xff]
      %v4904 = vld [vmem:[%s3 + $0xe8] sm:$0xff]
      %v4905 = vld [vmem:[%s3 + $0xf0] sm:$0xff]
      %v4906 = vld [vmem:[%s3 + $0xf8] sm:$0xff]
      %4907 = vmatprep.subr.mxu0 0.0
      %4908 = vmatpush1.msra.mxu0 %v4875
      %4909 = vmatprep.subr.mxu0 0.0
      %4910 = vmatpush1.msra.mxu0 %v4876
      %4911 = vmatprep.subr.mxu0 0.0
      %4912 = vmatpush1.msra.mxu0 %v4877
      %4913 = vmatprep.subr.mxu0 0.0
      %4914 = vmatpush1.msra.mxu0 %v4878
      %4915 = vmatprep.subr.mxu0 0.0
      %4916 = vmatpush1.msra.mxu0 %v4879
      %4917 = vmatprep.subr.mxu0 0.0
      %4918 = vmatpush1.msra.mxu0 %v4880
      %4919 = vmatprep.subr.mxu0 0.0
      %4920 = vmatpush1.msra.mxu0 %v4881
      %4921 = vmatprep.subr.mxu0 0.0
      %4922 = vmatpush1.msra.mxu0 %v4882
      %4923 = vmatprep.subr.mxu0 0.0
      %4924 = vmatpush1.msra.mxu0 %v4883
      %4925 = vmatprep.subr.mxu0 0.0
      %4926 = vmatpush1.msra.mxu0 %v4884
      %4927 = vmatprep.subr.mxu0 0.0
      %4928 = vmatpush1.msra.mxu0 %v4885
      %4929 = vmatprep.subr.mxu0 0.0
      %4930 = vmatpush1.msra.mxu0 %v4886
      %4931 = vmatprep.subr.mxu0 0.0
      %4932 = vmatpush1.msra.mxu0 %v4887
      %4933 = vmatprep.subr.mxu0 0.0
      %4934 = vmatpush1.msra.mxu0 %v4888
      %4935 = vmatprep.subr.mxu0 0.0
      %4936 = vmatpush1.msra.mxu0 %v4889
      %4937 = vmatprep.subr.mxu0 0.0
      %4938 = vmatpush1.msra.mxu0 %v4890
      %4939 = vmatprep.subr.mxu0 0.0
      %4940 = vmatpush1.msra.mxu0 %v4891
      %4941 = vmatprep.subr.mxu0 0.0
      %4942 = vmatpush1.msra.mxu0 %v4892
      %4943 = vmatprep.subr.mxu0 0.0
      %4944 = vmatpush1.msra.mxu0 %v4893
      %4945 = vmatprep.subr.mxu0 0.0
      %4946 = vmatpush1.msra.mxu0 %v4894
      %4947 = vmatprep.subr.mxu0 0.0
      %4948 = vmatpush1.msra.mxu0 %v4895
      %4949 = vmatprep.subr.mxu0 0.0
      %4950 = vmatpush1.msra.mxu0 %v4896
      %4951 = vmatprep.subr.mxu0 0.0
      %4952 = vmatpush1.msra.mxu0 %v4897
      %4953 = vmatprep.subr.mxu0 0.0
      %4954 = vmatpush1.msra.mxu0 %v4898
      %4955 = vmatprep.subr.mxu0 0.0
      %4956 = vmatpush1.msra.mxu0 %v4899
      %4957 = vmatprep.subr.mxu0 0.0
      %4958 = vmatpush1.msra.mxu0 %v4900
      %4959 = vmatprep.subr.mxu0 0.0
      %4960 = vmatpush1.msra.mxu0 %v4901
      %4961 = vmatprep.subr.mxu0 0.0
      %4962 = vmatpush1.msra.mxu0 %v4902
      %4963 = vmatprep.subr.mxu0 0.0
      %4964 = vmatpush1.msra.mxu0 %v4903
      %4965 = vmatprep.subr.mxu0 0.0
      %4966 = vmatpush1.msra.mxu0 %v4904
      %4967 = vmatprep.subr.mxu0 0.0
      %4968 = vmatpush1.msra.mxu0 %v4905
      %4969 = vmatprep.subr.mxu0 0.0
      %4970 = vmatpush1.msra.mxu0 %v4906
      %4971 = vmatprep.mubr.f32.mxu0 %v4748
      %4972 = vmatmul.mubr.f32.gmra.mrb[0].mxu0 %v4747
      %v4973 = vpop.f32.mrb[0].mxu0
      %v4974 = vadd.f32 0.0, %v4973
      %v4975 = vpop.f32.mrb[0].mxu0
      %4976 = vmatprep.mubr.f32.mxu0 %v4750
      %4977 = vmatmul.mubr.f32.gmra.mrb[0].mxu0 %v4749
      %v4978 = vpop.f32.mrb[0].mxu0
      %v4979 = vadd.f32 0.0, %v4978
      %v4980 = vpop.f32.mrb[0].mxu0
      %4981 = vmatprep.mubr.f32.mxu0 %v4752
      %4982 = vmatmul.mubr.f32.gmra.mrb[0].mxu0 %v4751
      %v4983 = vpop.f32.mrb[0].mxu0
      %v4984 = vadd.f32 0.0, %v4983
      %v4985 = vpop.f32.mrb[0].mxu0
      %4986 = vmatprep.mubr.f32.mxu0 %v4754
      %4987 = vmatmul.mubr.f32.gmra.mrb[0].mxu0 %v4753
      %v4988 = vpop.f32.mrb[0].mxu0
      %v4989 = vadd.f32 0.0, %v4988
      %v4990 = vpop.f32.mrb[0].mxu0
      %4991 = vmatprep.mubr.f32.mxu0 %v4756
      %4992 = vmatmul.mubr.f32.gmra.mrb[0].mxu0 %v4755
      %v4993 = vpop.f32.mrb[0].mxu0
      %v4994 = vadd.f32 0.0, %v4993
      %v4995 = vpop.f32.mrb[0].mxu0
      %4996 = vmatprep.mubr.f32.mxu0 %v4758
      %4997 = vmatmul.mubr.f32.gmra.mrb[0].mxu0 %v4757
      %v4998 = vpop.f32.mrb[0].mxu0
      %v4999 = vadd.f32 0.0, %v4998
      %v5000 = vpop.f32.mrb[0].mxu0
      %5001 = vmatprep.mubr.f32.mxu0 %v4760
      %5002 = vmatmul.mubr.f32.gmra.mrb[0].mxu0 %v4759
      %v5003 = vpop.f32.mrb[0].mxu0
      %v5004 = vadd.f32 0.0, %v5003
      %v5005 = vpop.f32.mrb[0].mxu0
      %5006 = vmatprep.mubr.f32.mxu0 %v4762
      %5007 = vmatmul.mubr.f32.gmra.mrb[0].mxu0 %v4761
      %v5008 = vpop.f32.mrb[0].mxu0
      %v5009 = vadd.f32 0.0, %v5008
      %v5010 = vpop.f32.mrb[0].mxu0
      %5011 = vmatprep.mubr.f32.mxu0 %v4764
      %5012 = vmatmul.mubr.f32.gmra.mrb[0].mxu0 %v4763
      %v5013 = vpop.f32.mrb[0].mxu0
      %v5014 = vadd.f32 0.0, %v5013
      %v5015 = vpop.f32.mrb[0].mxu0
      %5016 = vmatprep.mubr.f32.mxu0 %v4766
      %5017 = vmatmul.mubr.f32.gmra.mrb[0].mxu0 %v4765
      %v5018 = vpop.f32.mrb[0].mxu0
      %v5019 = vadd.f32 0.0, %v5018
      %v5020 = vpop.f32.mrb[0].mxu0
      %5021 = vmatprep.mubr.f32.mxu0 %v4768
      %5022 = vmatmul.mubr.f32.gmra.mrb[0].mxu0 %v4767
      %v5023 = vpop.f32.mrb[0].mxu0
      %v5024 = vadd.f32 0.0, %v5023
      %v5025 = vpop.f32.mrb[0].mxu0
      %5026 = vmatprep.mubr.f32.mxu0 %v4770
      %5027 = vmatmul.mubr.f32.gmra.mrb[0].mxu0 %v4769
      %v5028 = vpop.f32.mrb[0].mxu0
      %v5029 = vadd.f32 0.0, %v5028
      %v5030 = vpop.f32.mrb[0].mxu0
      %5031 = vmatprep.mubr.f32.mxu0 %v4772
      %5032 = vmatmul.mubr.f32.gmra.mrb[0].mxu0 %v4771
      %v5033 = vpop.f32.mrb[0].mxu0
      %v5034 = vadd.f32 0.0, %v5033
      %v5035 = vpop.f32.mrb[0].mxu0
      %5036 = vmatprep.mubr.f32.mxu0 %v4774
      %5037 = vmatmul.mubr.f32.gmra.mrb[0].mxu0 %v4773
      %v5038 = vpop.f32.mrb[0].mxu0
      %v5039 = vadd.f32 0.0, %v5038
      %v5040 = vpop.f32.mrb[0].mxu0
      %5041 = vmatprep.mubr.f32.mxu0 %v4776
      %5042 = vmatmul.mubr.f32.gmra.mrb[0].mxu0 %v4775
      %v5043 = vpop.f32.mrb[0].mxu0
      %v5044 = vadd.f32 0.0, %v5043
      %v5045 = vpop.f32.mrb[0].mxu0
      %5046 = vmatprep.mubr.f32.mxu0 %v4778
      %5047 = vmatmul.mubr.f32.gmra.mrb[0].mxu0 %v4777
      %v5048 = vpop.f32.mrb[0].mxu0
      %v5049 = vadd.f32 0.0, %v5048
      %v5050 = vpop.f32.mrb[0].mxu0
      %5051 = vmatprep.mubr.f32.mxu0 %v4780
      %5052 = vmatmul.mubr.f32.gmra.mrb[0].mxu0 %v4779
      %v5053 = vpop.f32.mrb[0].mxu0
      %v5054 = vadd.f32 0.0, %v5053
      %v5055 = vpop.f32.mrb[0].mxu0
      %5056 = vmatprep.mubr.f32.mxu0 %v4782
      %5057 = vmatmul.mubr.f32.gmra.mrb[0].mxu0 %v4781
      %v5058 = vpop.f32.mrb[0].mxu0
      %v5059 = vadd.f32 0.0, %v5058
      %v5060 = vpop.f32.mrb[0].mxu0
      %5061 = vmatprep.mubr.f32.mxu0 %v4784
      %5062 = vmatmul.mubr.f32.gmra.mrb[0].mxu0 %v4783
      %v5063 = vpop.f32.mrb[0].mxu0
      %v5064 = vadd.f32 0.0, %v5063
      %v5065 = vpop.f32.mrb[0].mxu0
      %5066 = vmatprep.mubr.f32.mxu0 %v4786
      %5067 = vmatmul.mubr.f32.gmra.mrb[0].mxu0 %v4785
      %v5068 = vpop.f32.mrb[0].mxu0
      %v5069 = vadd.f32 0.0, %v5068
      %v5070 = vpop.f32.mrb[0].mxu0
      %5071 = vmatprep.mubr.f32.mxu0 %v4788
      %5072 = vmatmul.mubr.f32.gmra.mrb[0].mxu0 %v4787
      %v5073 = vpop.f32.mrb[0].mxu0
      %v5074 = vadd.f32 0.0, %v5073
      %v5075 = vpop.f32.mrb[0].mxu0
      %5076 = vmatprep.mubr.f32.mxu0 %v4790
      %5077 = vmatmul.mubr.f32.gmra.mrb[0].mxu0 %v4789
      %v5078 = vpop.f32.mrb[0].mxu0
      %v5079 = vadd.f32 0.0, %v5078
      %v5080 = vpop.f32.mrb[0].mxu0
      %5081 = vmatprep.mubr.f32.mxu0 %v4792
      %5082 = vmatmul.mubr.f32.gmra.mrb[0].mxu0 %v4791
      %v5083 = vpop.f32.mrb[0].mxu0
      %v5084 = vadd.f32 0.0, %v5083
      %v5085 = vpop.f32.mrb[0].mxu0
      %5086 = vmatprep.mubr.f32.mxu0 %v4794
      %5087 = vmatmul.mubr.f32.gmra.mrb[0].mxu0 %v4793
      %v5088 = vpop.f32.mrb[0].mxu0
      %v5089 = vadd.f32 0.0, %v5088
      %v5090 = vpop.f32.mrb[0].mxu0
      %5091 = vmatprep.mubr.f32.mxu0 %v4796
      %5092 = vmatmul.mubr.f32.gmra.mrb[0].mxu0 %v4795
      %v5093 = vpop.f32.mrb[0].mxu0
      %v5094 = vadd.f32 0.0, %v5093
      %v5095 = vpop.f32.mrb[0].mxu0
      %5096 = vmatprep.mubr.f32.mxu0 %v4798
      %5097 = vmatmul.mubr.f32.gmra.mrb[0].mxu0 %v4797
      %v5098 = vpop.f32.mrb[0].mxu0
      %v5099 = vadd.f32 0.0, %v5098
      %v5100 = vpop.f32.mrb[0].mxu0
      %5101 = vmatprep.mubr.f32.mxu0 %v4800
      %5102 = vmatmul.mubr.f32.gmra.mrb[0].mxu0 %v4799
      %v5103 = vpop.f32.mrb[0].mxu0
      %v5104 = vadd.f32 0.0, %v5103
      %v5105 = vpop.f32.mrb[0].mxu0
      %5106 = vmatprep.mubr.f32.mxu0 %v4802
      %5107 = vmatmul.mubr.f32.gmra.mrb[0].mxu0 %v4801
      %v5108 = vpop.f32.mrb[0].mxu0
      %v5109 = vadd.f32 0.0, %v5108
      %v5110 = vpop.f32.mrb[0].mxu0
      %5111 = vmatprep.mubr.f32.mxu0 %v4804
      %5112 = vmatmul.mubr.f32.gmra.mrb[0].mxu0 %v4803
      %v5113 = vpop.f32.mrb[0].mxu0
      %v5114 = vadd.f32 0.0, %v5113
      %v5115 = vpop.f32.mrb[0].mxu0
      %5116 = vmatprep.mubr.f32.mxu0 %v4806
      %5117 = vmatmul.mubr.f32.gmra.mrb[0].mxu0 %v4805
      %v5118 = vpop.f32.mrb[0].mxu0
      %v5119 = vadd.f32 0.0, %v5118
      %v5120 = vpop.f32.mrb[0].mxu0
      %5121 = vmatprep.mubr.f32.mxu0 %v4808
      %5122 = vmatmul.mubr.f32.gmra.mrb[0].mxu0 %v4807
      %v5123 = vpop.f32.mrb[0].mxu0
      %v5124 = vadd.f32 0.0, %v5123
      %v5125 = vpop.f32.mrb[0].mxu0
      %5126 = vmatprep.mubr.f32.mxu0 %v4810
      %5127 = vmatmul.mubr.f32.gmra.mrb[0].mxu0 %v4809
      %v5128 = vpop.f32.mrb[0].mxu0
      %v5129 = vadd.f32 0.0, %v5128
      %v5130 = vpop.f32.mrb[0].mxu0
      %5131 = vmatprep.mubr.f32.mxu0 %v4812
      %5132 = vmatmul.mubr.f32.gmra.mrb[0].mxu0 %v4811
      %v5133 = vpop.f32.mrb[0].mxu0
      %v5134 = vadd.f32 0.0, %v5133
      %v5135 = vpop.f32.mrb[0].mxu0
      %5136 = vmatprep.mubr.f32.mxu0 %v4814
      %5137 = vmatmul.mubr.f32.gmra.mrb[0].mxu0 %v4813
      %v5138 = vpop.f32.mrb[0].mxu0
      %v5139 = vadd.f32 0.0, %v5138
      %v5140 = vpop.f32.mrb[0].mxu0
      %5141 = vmatprep.mubr.f32.mxu0 %v4816
      %5142 = vmatmul.mubr.f32.gmra.mrb[0].mxu0 %v4815
      %v5143 = vpop.f32.mrb[0].mxu0
      %v5144 = vadd.f32 0.0, %v5143
      %v5145 = vpop.f32.mrb[0].mxu0
      %5146 = vmatprep.mubr.f32.mxu0 %v4818
      %5147 = vmatmul.mubr.f32.gmra.mrb[0].mxu0 %v4817
      %v5148 = vpop.f32.mrb[0].mxu0
      %v5149 = vadd.f32 0.0, %v5148
      %v5150 = vpop.f32.mrb[0].mxu0
      %5151 = vmatprep.mubr.f32.mxu0 %v4820
      %5152 = vmatmul.mubr.f32.gmra.mrb[0].mxu0 %v4819
      %v5153 = vpop.f32.mrb[0].mxu0
      %v5154 = vadd.f32 0.0, %v5153
      %v5155 = vpop.f32.mrb[0].mxu0
      %5156 = vmatprep.mubr.f32.mxu0 %v4822
      %5157 = vmatmul.mubr.f32.gmra.mrb[0].mxu0 %v4821
      %v5158 = vpop.f32.mrb[0].mxu0
      %v5159 = vadd.f32 0.0, %v5158
      %v5160 = vpop.f32.mrb[0].mxu0
      %5161 = vmatprep.mubr.f32.mxu0 %v4824
      %5162 = vmatmul.mubr.f32.gmra.mrb[0].mxu0 %v4823
      %v5163 = vpop.f32.mrb[0].mxu0
      %v5164 = vadd.f32 0.0, %v5163
      %v5165 = vpop.f32.mrb[0].mxu0
      %5166 = vmatprep.mubr.f32.mxu0 %v4826
      %5167 = vmatmul.mubr.f32.gmra.mrb[0].mxu0 %v4825
      %v5168 = vpop.f32.mrb[0].mxu0
      %v5169 = vadd.f32 0.0, %v5168
      %v5170 = vpop.f32.mrb[0].mxu0
      %5171 = vmatprep.mubr.f32.mxu0 %v4828
      %5172 = vmatmul.mubr.f32.gmra.mrb[0].mxu0 %v4827
      %v5173 = vpop.f32.mrb[0].mxu0
      %v5174 = vadd.f32 0.0, %v5173
      %v5175 = vpop.f32.mrb[0].mxu0
      %5176 = vmatprep.mubr.f32.mxu0 %v4830
      %5177 = vmatmul.mubr.f32.gmra.mrb[0].mxu0 %v4829
      %v5178 = vpop.f32.mrb[0].mxu0
      %v5179 = vadd.f32 0.0, %v5178
      %v5180 = vpop.f32.mrb[0].mxu0
      %5181 = vmatprep.mubr.f32.mxu0 %v4832
      %5182 = vmatmul.mubr.f32.gmra.mrb[0].mxu0 %v4831
      %v5183 = vpop.f32.mrb[0].mxu0
      %v5184 = vadd.f32 0.0, %v5183
      %v5185 = vpop.f32.mrb[0].mxu0
      %5186 = vmatprep.mubr.f32.mxu0 %v4834
      %5187 = vmatmul.mubr.f32.gmra.mrb[0].mxu0 %v4833
      %v5188 = vpop.f32.mrb[0].mxu0
      %v5189 = vadd.f32 0.0, %v5188
      %v5190 = vpop.f32.mrb[0].mxu0
      %5191 = vmatprep.mubr.f32.mxu0 %v4836
      %5192 = vmatmul.mubr.f32.gmra.mrb[0].mxu0 %v4835
      %v5193 = vpop.f32.mrb[0].mxu0
      %v5194 = vadd.f32 0.0, %v5193
      %v5195 = vpop.f32.mrb[0].mxu0
      %5196 = vmatprep.mubr.f32.mxu0 %v4838
      %5197 = vmatmul.mubr.f32.gmra.mrb[0].mxu0 %v4837
      %v5198 = vpop.f32.mrb[0].mxu0
      %v5199 = vadd.f32 0.0, %v5198
      %v5200 = vpop.f32.mrb[0].mxu0
      %5201 = vmatprep.mubr.f32.mxu0 %v4840
      %5202 = vmatmul.mubr.f32.gmra.mrb[0].mxu0 %v4839
      %v5203 = vpop.f32.mrb[0].mxu0
      %v5204 = vadd.f32 0.0, %v5203
      %v5205 = vpop.f32.mrb[0].mxu0
      %5206 = vmatprep.mubr.f32.mxu0 %v4842
      %5207 = vmatmul.mubr.f32.gmra.mrb[0].mxu0 %v4841
      %v5208 = vpop.f32.mrb[0].mxu0
      %v5209 = vadd.f32 0.0, %v5208
      %v5210 = vpop.f32.mrb[0].mxu0
      %5211 = vmatprep.mubr.f32.mxu0 %v4844
      %5212 = vmatmul.mubr.f32.gmra.mrb[0].mxu0 %v4843
      %v5213 = vpop.f32.mrb[0].mxu0
      %v5214 = vadd.f32 0.0, %v5213
      %v5215 = vpop.f32.mrb[0].mxu0
      %5216 = vmatprep.mubr.f32.mxu0 %v4846
      %5217 = vmatmul.mubr.f32.gmra.mrb[0].mxu0 %v4845
      %v5218 = vpop.f32.mrb[0].mxu0
      %v5219 = vadd.f32 0.0, %v5218
      %v5220 = vpop.f32.mrb[0].mxu0
      %5221 = vmatprep.mubr.f32.mxu0 %v4848
      %5222 = vmatmul.mubr.f32.gmra.mrb[0].mxu0 %v4847
      %v5223 = vpop.f32.mrb[0].mxu0
      %v5224 = vadd.f32 0.0, %v5223
      %v5225 = vpop.f32.mrb[0].mxu0
      %5226 = vmatprep.mubr.f32.mxu0 %v4850
      %5227 = vmatmul.mubr.f32.gmra.mrb[0].mxu0 %v4849
      %v5228 = vpop.f32.mrb[0].mxu0
      %v5229 = vadd.f32 0.0, %v5228
      %v5230 = vpop.f32.mrb[0].mxu0
      %5231 = vmatprep.mubr.f32.mxu0 %v4852
      %5232 = vmatmul.mubr.f32.gmra.mrb[0].mxu0 %v4851
      %v5233 = vpop.f32.mrb[0].mxu0
      %v5234 = vadd.f32 0.0, %v5233
      %v5235 = vpop.f32.mrb[0].mxu0
      %5236 = vmatprep.mubr.f32.mxu0 %v4854
      %5237 = vmatmul.mubr.f32.gmra.mrb[0].mxu0 %v4853
      %v5238 = vpop.f32.mrb[0].mxu0
      %v5239 = vadd.f32 0.0, %v5238
      %v5240 = vpop.f32.mrb[0].mxu0
      %5241 = vmatprep.mubr.f32.mxu0 %v4856
      %5242 = vmatmul.mubr.f32.gmra.mrb[0].mxu0 %v4855
      %v5243 = vpop.f32.mrb[0].mxu0
      %v5244 = vadd.f32 0.0, %v5243
      %v5245 = vpop.f32.mrb[0].mxu0
      %5246 = vmatprep.mubr.f32.mxu0 %v4858
      %5247 = vmatmul.mubr.f32.gmra.mrb[0].mxu0 %v4857
      %v5248 = vpop.f32.mrb[0].mxu0
      %v5249 = vadd.f32 0.0, %v5248
      %v5250 = vpop.f32.mrb[0].mxu0
      %5251 = vmatprep.mubr.f32.mxu0 %v4860
      %5252 = vmatmul.mubr.f32.gmra.mrb[0].mxu0 %v4859
      %v5253 = vpop.f32.mrb[0].mxu0
      %v5254 = vadd.f32 0.0, %v5253
      %v5255 = vpop.f32.mrb[0].mxu0
      %5256 = vmatprep.mubr.f32.mxu0 %v4862
      %5257 = vmatmul.mubr.f32.gmra.mrb[0].mxu0 %v4861
      %v5258 = vpop.f32.mrb[0].mxu0
      %v5259 = vadd.f32 0.0, %v5258
      %v5260 = vpop.f32.mrb[0].mxu0
      %5261 = vmatprep.mubr.f32.mxu0 %v4864
      %5262 = vmatmul.mubr.f32.gmra.mrb[0].mxu0 %v4863
      %v5263 = vpop.f32.mrb[0].mxu0
      %v5264 = vadd.f32 0.0, %v5263
      %v5265 = vpop.f32.mrb[0].mxu0
      %5266 = vmatprep.mubr.f32.mxu0 %v4866
      %5267 = vmatmul.mubr.f32.gmra.mrb[0].mxu0 %v4865
      %v5268 = vpop.f32.mrb[0].mxu0
      %v5269 = vadd.f32 0.0, %v5268
      %v5270 = vpop.f32.mrb[0].mxu0
      %5271 = vmatprep.mubr.f32.mxu0 %v4868
      %5272 = vmatmul.mubr.f32.gmra.mrb[0].mxu0 %v4867
      %v5273 = vpop.f32.mrb[0].mxu0
      %v5274 = vadd.f32 0.0, %v5273
      %v5275 = vpop.f32.mrb[0].mxu0
      %5276 = vmatprep.mubr.f32.mxu0 %v4870
      %5277 = vmatmul.mubr.f32.gmra.mrb[0].mxu0 %v4869
      %v5278 = vpop.f32.mrb[0].mxu0
      %v5279 = vadd.f32 0.0, %v5278
      %v5280 = vpop.f32.mrb[0].mxu0
      %5281 = vmatprep.mubr.f32.mxu0 %v4872
      %5282 = vmatmul.mubr.f32.gmra.mrb[0].mxu0 %v4871
      %v5283 = vpop.f32.mrb[0].mxu0
      %v5284 = vadd.f32 0.0, %v5283
      %v5285 = vpop.f32.mrb[0].mxu0
      %5286 = vmatprep.mubr.f32.mxu0 %v4874
      %5287 = vmatmul.mubr.f32.gmra.mrb[0].mxu0 %v4873
      %v5288 = vpop.f32.mrb[0].mxu0
      %v5289 = vadd.f32 0.0, %v5288
      %v5290 = vpop.f32.mrb[0].mxu0
      %5291 = vdwg.mxu0
      %5292 = vst [vmem:[%s268] sm:$0xff] %v4974
      %5293 = vst [vmem:[%s268 + $0x8] sm:$0xff] %v4979
      %5294 = vst [vmem:[%s268 + $0x10] sm:$0xff] %v4984
      %5295 = vst [vmem:[%s268 + $0x18] sm:$0xff] %v4989
      %5296 = vst [vmem:[%s268 + $0x20] sm:$0xff] %v4994
      %5297 = vst [vmem:[%s268 + $0x28] sm:$0xff] %v4999
      %5298 = vst [vmem:[%s268 + $0x30] sm:$0xff] %v5004
      %5299 = vst [vmem:[%s268 + $0x38] sm:$0xff] %v5009
      %5300 = vst [vmem:[%s268 + $0x40] sm:$0xff] %v5014
      %5301 = vst [vmem:[%s268 + $0x48] sm:$0xff] %v5019
      %5302 = vst [vmem:[%s268 + $0x50] sm:$0xff] %v5024
      %5303 = vst [vmem:[%s268 + $0x58] sm:$0xff] %v5029
      %5304 = vst [vmem:[%s268 + $0x60] sm:$0xff] %v5034
      %5305 = vst [vmem:[%s268 + $0x68] sm:$0xff] %v5039
      %5306 = vst [vmem:[%s268 + $0x70] sm:$0xff] %v5044
      %5307 = vst [vmem:[%s268 + $0x78] sm:$0xff] %v5049
      %5308 = vst [vmem:[%s268 + $0x80] sm:$0xff] %v5054
      %5309 = vst [vmem:[%s268 + $0x88] sm:$0xff] %v5059
      %5310 = vst [vmem:[%s268 + $0x90] sm:$0xff] %v5064
      %5311 = vst [vmem:[%s268 + $0x98] sm:$0xff] %v5069
      %5312 = vst [vmem:[%s268 + $0xa0] sm:$0xff] %v5074
      %5313 = vst [vmem:[%s268 + $0xa8] sm:$0xff] %v5079
      %5314 = vst [vmem:[%s268 + $0xb0] sm:$0xff] %v5084
      %5315 = vst [vmem:[%s268 + $0xb8] sm:$0xff] %v5089
      %5316 = vst [vmem:[%s268 + $0xc0] sm:$0xff] %v5094
      %5317 = vst [vmem:[%s268 + $0xc8] sm:$0xff] %v5099
      %5318 = vst [vmem:[%s268 + $0xd0] sm:$0xff] %v5104
      %5319 = vst [vmem:[%s268 + $0xd8] sm:$0xff] %v5109
      %5320 = vst [vmem:[%s268 + $0xe0] sm:$0xff] %v5114
      %5321 = vst [vmem:[%s268 + $0xe8] sm:$0xff] %v5119
      %5322 = vst [vmem:[%s268 + $0xf0] sm:$0xff] %v5124
      %5323 = vst [vmem:[%s268 + $0xf8] sm:$0xff] %v5129
      %5324 = vst [vmem:[%s268 + $0x100] sm:$0xff] %v5134
      %5325 = vst [vmem:[%s268 + $0x108] sm:$0xff] %v5139
      %5326 = vst [vmem:[%s268 + $0x110] sm:$0xff] %v5144
      %5327 = vst [vmem:[%s268 + $0x118] sm:$0xff] %v5149
      %5328 = vst [vmem:[%s268 + $0x120] sm:$0xff] %v5154
      %5329 = vst [vmem:[%s268 + $0x128] sm:$0xff] %v5159
      %5330 = vst [vmem:[%s268 + $0x130] sm:$0xff] %v5164
      %5331 = vst [vmem:[%s268 + $0x138] sm:$0xff] %v5169
      %5332 = vst [vmem:[%s268 + $0x140] sm:$0xff] %v5174
      %5333 = vst [vmem:[%s268 + $0x148] sm:$0xff] %v5179
      %5334 = vst [vmem:[%s268 + $0x150] sm:$0xff] %v5184
      %5335 = vst [vmem:[%s268 + $0x158] sm:$0xff] %v5189
      %5336 = vst [vmem:[%s268 + $0x160] sm:$0xff] %v5194
      %5337 = vst [vmem:[%s268 + $0x168] sm:$0xff] %v5199
      %5338 = vst [vmem:[%s268 + $0x170] sm:$0xff] %v5204
      %5339 = vst [vmem:[%s268 + $0x178] sm:$0xff] %v5209
      %5340 = vst [vmem:[%s268 + $0x180] sm:$0xff] %v5214
      %5341 = vst [vmem:[%s268 + $0x188] sm:$0xff] %v5219
      %5342 = vst [vmem:[%s268 + $0x190] sm:$0xff] %v5224
      %5343 = vst [vmem:[%s268 + $0x198] sm:$0xff] %v5229
      %5344 = vst [vmem:[%s268 + $0x1a0] sm:$0xff] %v5234
      %5345 = vst [vmem:[%s268 + $0x1a8] sm:$0xff] %v5239
      %5346 = vst [vmem:[%s268 + $0x1b0] sm:$0xff] %v5244
      %5347 = vst [vmem:[%s268 + $0x1b8] sm:$0xff] %v5249
      %5348 = vst [vmem:[%s268 + $0x1c0] sm:$0xff] %v5254
      %5349 = vst [vmem:[%s268 + $0x1c8] sm:$0xff] %v5259
      %5350 = vst [vmem:[%s268 + $0x1d0] sm:$0xff] %v5264
      %5351 = vst [vmem:[%s268 + $0x1d8] sm:$0xff] %v5269
      %5352 = vst [vmem:[%s268 + $0x1e0] sm:$0xff] %v5274
      %5353 = vst [vmem:[%s268 + $0x1e8] sm:$0xff] %v5279
      %5354 = vst [vmem:[%s268 + $0x1f0] sm:$0xff] %v5284
      %5355 = vst [vmem:[%s268 + $0x1f8] sm:$0xff] %v5289
      %v5356 = vlaneseq
      %v5357 = vshrl.u32 %v5356, 7
      %v5358 = vsub.s32 %v966, %v5357
      %v5359 = vrot.slane %v1881, %v5358
      %v5360 = vadd.s32 %v966, 4294967288
      %v5361 = vlaneseq
      %v5362 = vshrl.u32 %v5361, 7
      %v5363 = vsub.s32 %v5360, %v5362
      %v5364 = vrot.slane %v1897, %v5363
      %vm5365 = vcmask 130112
      %v5366 = vsel %vm5365, %v5364, %v5359
      %v5367 = vadd.s32 %v966, 4294967280
      %v5368 = vlaneseq
      %v5369 = vshrl.u32 %v5368, 7
      %v5370 = vsub.s32 %v5367, %v5369
      %v5371 = vrot.slane %v1913, %v5370
      %vm5372 = vcmask 195712
      %v5373 = vsel %vm5372, %v5371, %v5366
      %v5374 = vadd.s32 %v966, 4294967272
      %v5375 = vlaneseq
      %v5376 = vshrl.u32 %v5375, 7
      %v5377 = vsub.s32 %v5374, %v5376
      %v5378 = vrot.slane %v1929, %v5377
      %vm5379 = vcmask 261312
      %v5380 = vsel %vm5379, %v5378, %v5373
      %v5381 = vadd.s32 %v966, 4294967264
      %v5382 = vlaneseq
      %v5383 = vshrl.u32 %v5382, 7
      %v5384 = vsub.s32 %v5381, %v5383
      %v5385 = vrot.slane %v1945, %v5384
      %vm5386 = vcmask 326912
      %v5387 = vsel %vm5386, %v5385, %v5380
      %v5388 = vadd.s32 %v966, 4294967256
      %v5389 = vlaneseq
      %v5390 = vshrl.u32 %v5389, 7
      %v5391 = vsub.s32 %v5388, %v5390
      %v5392 = vrot.slane %v1961, %v5391
      %vm5393 = vcmask 392512
      %v5394 = vsel %vm5393, %v5392, %v5387
      %v5395 = vadd.s32 %v966, 4294967248
      %v5396 = vlaneseq
      %v5397 = vshrl.u32 %v5396, 7
      %v5398 = vsub.s32 %v5395, %v5397
      %v5399 = vrot.slane %v1977, %v5398
      %vm5400 = vcmask 458112
      %v5401 = vsel %vm5400, %v5399, %v5394
      %v5402 = vadd.s32 %v966, 4294967240
      %v5403 = vlaneseq
      %v5404 = vshrl.u32 %v5403, 7
      %v5405 = vsub.s32 %v5402, %v5404
      %v5406 = vrot.slane %v1993, %v5405
      %vm5407 = vcmask 523712
      %v5408 = vsel %vm5407, %v5406, %v5401
      %v5409 = vadd.s32 %v966, 4294967232
      %v5410 = vlaneseq
      %v5411 = vshrl.u32 %v5410, 7
      %v5412 = vsub.s32 %v5409, %v5411
      %v5413 = vrot.slane %v2009, %v5412
      %vm5414 = vcmask 589312
      %v5415 = vsel %vm5414, %v5413, %v5408
      %v5416 = vadd.s32 %v966, 4294967224
      %v5417 = vlaneseq
      %v5418 = vshrl.u32 %v5417, 7
      %v5419 = vsub.s32 %v5416, %v5418
      %v5420 = vrot.slane %v2025, %v5419
      %vm5421 = vcmask 654912
      %v5422 = vsel %vm5421, %v5420, %v5415
      %v5423 = vadd.s32 %v966, 4294967216
      %v5424 = vlaneseq
      %v5425 = vshrl.u32 %v5424, 7
      %v5426 = vsub.s32 %v5423, %v5425
      %v5427 = vrot.slane %v2041, %v5426
      %vm5428 = vcmask 720512
      %v5429 = vsel %vm5428, %v5427, %v5422
      %v5430 = vadd.s32 %v966, 4294967208
      %v5431 = vlaneseq
      %v5432 = vshrl.u32 %v5431, 7
      %v5433 = vsub.s32 %v5430, %v5432
      %v5434 = vrot.slane %v2057, %v5433
      %vm5435 = vcmask 786112
      %v5436 = vsel %vm5435, %v5434, %v5429
      %v5437 = vadd.s32 %v966, 4294967200
      %v5438 = vlaneseq
      %v5439 = vshrl.u32 %v5438, 7
      %v5440 = vsub.s32 %v5437, %v5439
      %v5441 = vrot.slane %v2073, %v5440
      %vm5442 = vcmask 851712
      %v5443 = vsel %vm5442, %v5441, %v5436
      %v5444 = vadd.s32 %v966, 4294967192
      %v5445 = vlaneseq
      %v5446 = vshrl.u32 %v5445, 7
      %v5447 = vsub.s32 %v5444, %v5446
      %v5448 = vrot.slane %v2089, %v5447
      %vm5449 = vcmask 917312
      %v5450 = vsel %vm5449, %v5448, %v5443
      %v5451 = vadd.s32 %v966, 4294967184
      %v5452 = vlaneseq
      %v5453 = vshrl.u32 %v5452, 7
      %v5454 = vsub.s32 %v5451, %v5453
      %v5455 = vrot.slane %v2105, %v5454
      %vm5456 = vcmask 982912
      %v5457 = vsel %vm5456, %v5455, %v5450
      %v5458 = vadd.s32 %v966, 4294967176
      %v5459 = vlaneseq
      %v5460 = vshrl.u32 %v5459, 7
      %v5461 = vsub.s32 %v5458, %v5460
      %v5462 = vrot.slane %v2121, %v5461
      %vm5463 = vcmask 1048512
      %v5464 = vsel %vm5463, %v5462, %v5457
      %5465 = vst [vmem:[%s274] ss:$4 sm:$0x1] %v5464
      %v5466 = vlaneseq
      %v5467 = vshrl.u32 %v5466, 7
      %v5468 = vsub.s32 %v966, %v5467
      %v5469 = vrot.slane %v2137, %v5468
      %v5470 = vlaneseq
      %v5471 = vshrl.u32 %v5470, 7
      %v5472 = vsub.s32 %v5360, %v5471
      %v5473 = vrot.slane %v2153, %v5472
      %v5474 = vsel %vm5365, %v5473, %v5469
      %v5475 = vlaneseq
      %v5476 = vshrl.u32 %v5475, 7
      %v5477 = vsub.s32 %v5367, %v5476
      %v5478 = vrot.slane %v2169, %v5477
      %v5479 = vsel %vm5372, %v5478, %v5474
      %v5480 = vlaneseq
      %v5481 = vshrl.u32 %v5480, 7
      %v5482 = vsub.s32 %v5374, %v5481
      %v5483 = vrot.slane %v2185, %v5482
      %v5484 = vsel %vm5379, %v5483, %v5479
      %v5485 = vlaneseq
      %v5486 = vshrl.u32 %v5485, 7
      %v5487 = vsub.s32 %v5381, %v5486
      %v5488 = vrot.slane %v2201, %v5487
      %v5489 = vsel %vm5386, %v5488, %v5484
      %v5490 = vlaneseq
      %v5491 = vshrl.u32 %v5490, 7
      %v5492 = vsub.s32 %v5388, %v5491
      %v5493 = vrot.slane %v2217, %v5492
      %v5494 = vsel %vm5393, %v5493, %v5489
      %v5495 = vlaneseq
      %v5496 = vshrl.u32 %v5495, 7
      %v5497 = vsub.s32 %v5395, %v5496
      %v5498 = vrot.slane %v2233, %v5497
      %v5499 = vsel %vm5400, %v5498, %v5494
      %v5500 = vlaneseq
      %v5501 = vshrl.u32 %v5500, 7
      %v5502 = vsub.s32 %v5402, %v5501
      %v5503 = vrot.slane %v2249, %v5502
      %v5504 = vsel %vm5407, %v5503, %v5499
      %v5505 = vlaneseq
      %v5506 = vshrl.u32 %v5505, 7
      %v5507 = vsub.s32 %v5409, %v5506
      %v5508 = vrot.slane %v2265, %v5507
      %v5509 = vsel %vm5414, %v5508, %v5504
      %v5510 = vlaneseq
      %v5511 = vshrl.u32 %v5510, 7
      %v5512 = vsub.s32 %v5416, %v5511
      %v5513 = vrot.slane %v2281, %v5512
      %v5514 = vsel %vm5421, %v5513, %v5509
      %v5515 = vlaneseq
      %v5516 = vshrl.u32 %v5515, 7
      %v5517 = vsub.s32 %v5423, %v5516
      %v5518 = vrot.slane %v2297, %v5517
      %v5519 = vsel %vm5428, %v5518, %v5514
      %v5520 = vlaneseq
      %v5521 = vshrl.u32 %v5520, 7
      %v5522 = vsub.s32 %v5430, %v5521
      %v5523 = vrot.slane %v2313, %v5522
      %v5524 = vsel %vm5435, %v5523, %v5519
      %v5525 = vlaneseq
      %v5526 = vshrl.u32 %v5525, 7
      %v5527 = vsub.s32 %v5437, %v5526
      %v5528 = vrot.slane %v2329, %v5527
      %v5529 = vsel %vm5442, %v5528, %v5524
      %v5530 = vlaneseq
      %v5531 = vshrl.u32 %v5530, 7
      %v5532 = vsub.s32 %v5444, %v5531
      %v5533 = vrot.slane %v2345, %v5532
      %v5534 = vsel %vm5449, %v5533, %v5529
      %v5535 = vlaneseq
      %v5536 = vshrl.u32 %v5535, 7
      %v5537 = vsub.s32 %v5451, %v5536
      %v5538 = vrot.slane %v2361, %v5537
      %v5539 = vsel %vm5456, %v5538, %v5534
      %v5540 = vlaneseq
      %v5541 = vshrl.u32 %v5540, 7
      %v5542 = vsub.s32 %v5458, %v5541
      %v5543 = vrot.slane %v2377, %v5542
      %v5544 = vsel %vm5463, %v5543, %v5539
      %s5545 = scalar_lea.vmem %s274, 1
      %5546 = vst [vmem:[%s5545] ss:$4 sm:$0x1] %v5544
      %v5547 = vlaneseq
      %v5548 = vshrl.u32 %v5547, 7
      %v5549 = vsub.s32 %v966, %v5548
      %v5550 = vrot.slane %v2393, %v5549
      %v5551 = vlaneseq
      %v5552 = vshrl.u32 %v5551, 7
      %v5553 = vsub.s32 %v5360, %v5552
      %v5554 = vrot.slane %v2409, %v5553
      %v5555 = vsel %vm5365, %v5554, %v5550
      %v5556 = vlaneseq
      %v5557 = vshrl.u32 %v5556, 7
      %v5558 = vsub.s32 %v5367, %v5557
      %v5559 = vrot.slane %v2425, %v5558
      %v5560 = vsel %vm5372, %v5559, %v5555
      %v5561 = vlaneseq
      %v5562 = vshrl.u32 %v5561, 7
      %v5563 = vsub.s32 %v5374, %v5562
      %v5564 = vrot.slane %v2441, %v5563
      %v5565 = vsel %vm5379, %v5564, %v5560
      %v5566 = vlaneseq
      %v5567 = vshrl.u32 %v5566, 7
      %v5568 = vsub.s32 %v5381, %v5567
      %v5569 = vrot.slane %v2457, %v5568
      %v5570 = vsel %vm5386, %v5569, %v5565
      %v5571 = vlaneseq
      %v5572 = vshrl.u32 %v5571, 7
      %v5573 = vsub.s32 %v5388, %v5572
      %v5574 = vrot.slane %v2473, %v5573
      %v5575 = vsel %vm5393, %v5574, %v5570
      %v5576 = vlaneseq
      %v5577 = vshrl.u32 %v5576, 7
      %v5578 = vsub.s32 %v5395, %v5577
      %v5579 = vrot.slane %v2489, %v5578
      %v5580 = vsel %vm5400, %v5579, %v5575
      %v5581 = vlaneseq
      %v5582 = vshrl.u32 %v5581, 7
      %v5583 = vsub.s32 %v5402, %v5582
      %v5584 = vrot.slane %v2505, %v5583
      %v5585 = vsel %vm5407, %v5584, %v5580
      %v5586 = vlaneseq
      %v5587 = vshrl.u32 %v5586, 7
      %v5588 = vsub.s32 %v5409, %v5587
      %v5589 = vrot.slane %v2521, %v5588
      %v5590 = vsel %vm5414, %v5589, %v5585
      %v5591 = vlaneseq
      %v5592 = vshrl.u32 %v5591, 7
      %v5593 = vsub.s32 %v5416, %v5592
      %v5594 = vrot.slane %v2537, %v5593
      %v5595 = vsel %vm5421, %v5594, %v5590
      %v5596 = vlaneseq
      %v5597 = vshrl.u32 %v5596, 7
      %v5598 = vsub.s32 %v5423, %v5597
      %v5599 = vrot.slane %v2553, %v5598
      %v5600 = vsel %vm5428, %v5599, %v5595
      %v5601 = vlaneseq
      %v5602 = vshrl.u32 %v5601, 7
      %v5603 = vsub.s32 %v5430, %v5602
      %v5604 = vrot.slane %v2569, %v5603
      %v5605 = vsel %vm5435, %v5604, %v5600
      %v5606 = vlaneseq
      %v5607 = vshrl.u32 %v5606, 7
      %v5608 = vsub.s32 %v5437, %v5607
      %v5609 = vrot.slane %v2585, %v5608
      %v5610 = vsel %vm5442, %v5609, %v5605
      %v5611 = vlaneseq
      %v5612 = vshrl.u32 %v5611, 7
      %v5613 = vsub.s32 %v5444, %v5612
      %v5614 = vrot.slane %v2601, %v5613
      %v5615 = vsel %vm5449, %v5614, %v5610
      %v5616 = vlaneseq
      %v5617 = vshrl.u32 %v5616, 7
      %v5618 = vsub.s32 %v5451, %v5617
      %v5619 = vrot.slane %v2617, %v5618
      %v5620 = vsel %vm5456, %v5619, %v5615
      %v5621 = vlaneseq
      %v5622 = vshrl.u32 %v5621, 7
      %v5623 = vsub.s32 %v5458, %v5622
      %v5624 = vrot.slane %v2633, %v5623
      %v5625 = vsel %vm5463, %v5624, %v5620
      %s5626 = scalar_lea.vmem %s274, 2
      %5627 = vst [vmem:[%s5626] ss:$4 sm:$0x1] %v5625
      %v5628 = vlaneseq
      %v5629 = vshrl.u32 %v5628, 7
      %v5630 = vsub.s32 %v966, %v5629
      %v5631 = vrot.slane %v2649, %v5630
      %v5632 = vlaneseq
      %v5633 = vshrl.u32 %v5632, 7
      %v5634 = vsub.s32 %v5360, %v5633
      %v5635 = vrot.slane %v2665, %v5634
      %v5636 = vsel %vm5365, %v5635, %v5631
      %v5637 = vlaneseq
      %v5638 = vshrl.u32 %v5637, 7
      %v5639 = vsub.s32 %v5367, %v5638
      %v5640 = vrot.slane %v2681, %v5639
      %v5641 = vsel %vm5372, %v5640, %v5636
      %v5642 = vlaneseq
      %v5643 = vshrl.u32 %v5642, 7
      %v5644 = vsub.s32 %v5374, %v5643
      %v5645 = vrot.slane %v2697, %v5644
      %v5646 = vsel %vm5379, %v5645, %v5641
      %v5647 = vlaneseq
      %v5648 = vshrl.u32 %v5647, 7
      %v5649 = vsub.s32 %v5381, %v5648
      %v5650 = vrot.slane %v2713, %v5649
      %v5651 = vsel %vm5386, %v5650, %v5646
      %v5652 = vlaneseq
      %v5653 = vshrl.u32 %v5652, 7
      %v5654 = vsub.s32 %v5388, %v5653
      %v5655 = vrot.slane %v2729, %v5654
      %v5656 = vsel %vm5393, %v5655, %v5651
      %v5657 = vlaneseq
      %v5658 = vshrl.u32 %v5657, 7
      %v5659 = vsub.s32 %v5395, %v5658
      %v5660 = vrot.slane %v2745, %v5659
      %v5661 = vsel %vm5400, %v5660, %v5656
      %v5662 = vlaneseq
      %v5663 = vshrl.u32 %v5662, 7
      %v5664 = vsub.s32 %v5402, %v5663
      %v5665 = vrot.slane %v2761, %v5664
      %v5666 = vsel %vm5407, %v5665, %v5661
      %v5667 = vlaneseq
      %v5668 = vshrl.u32 %v5667, 7
      %v5669 = vsub.s32 %v5409, %v5668
      %v5670 = vrot.slane %v2777, %v5669
      %v5671 = vsel %vm5414, %v5670, %v5666
      %v5672 = vlaneseq
      %v5673 = vshrl.u32 %v5672, 7
      %v5674 = vsub.s32 %v5416, %v5673
      %v5675 = vrot.slane %v2793, %v5674
      %v5676 = vsel %vm5421, %v5675, %v5671
      %v5677 = vlaneseq
      %v5678 = vshrl.u32 %v5677, 7
      %v5679 = vsub.s32 %v5423, %v5678
      %v5680 = vrot.slane %v2809, %v5679
      %v5681 = vsel %vm5428, %v5680, %v5676
      %v5682 = vlaneseq
      %v5683 = vshrl.u32 %v5682, 7
      %v5684 = vsub.s32 %v5430, %v5683
      %v5685 = vrot.slane %v2825, %v5684
      %v5686 = vsel %vm5435, %v5685, %v5681
      %v5687 = vlaneseq
      %v5688 = vshrl.u32 %v5687, 7
      %v5689 = vsub.s32 %v5437, %v5688
      %v5690 = vrot.slane %v2841, %v5689
      %v5691 = vsel %vm5442, %v5690, %v5686
      %v5692 = vlaneseq
      %v5693 = vshrl.u32 %v5692, 7
      %v5694 = vsub.s32 %v5444, %v5693
      %v5695 = vrot.slane %v2857, %v5694
      %v5696 = vsel %vm5449, %v5695, %v5691
      %v5697 = vlaneseq
      %v5698 = vshrl.u32 %v5697, 7
      %v5699 = vsub.s32 %v5451, %v5698
      %v5700 = vrot.slane %v2873, %v5699
      %v5701 = vsel %vm5456, %v5700, %v5696
      %v5702 = vlaneseq
      %v5703 = vshrl.u32 %v5702, 7
      %v5704 = vsub.s32 %v5458, %v5703
      %v5705 = vrot.slane %v2889, %v5704
      %v5706 = vsel %vm5463, %v5705, %v5701
      %s5707 = scalar_lea.vmem %s274, 3
      %5708 = vst [vmem:[%s5707] ss:$4 sm:$0x1] %v5706
      %v5709 = vlaneseq
      %v5710 = vshrl.u32 %v5709, 7
      %v5711 = vsub.s32 %v966, %v5710
      %v5712 = vrot.slane %v3162, %v5711
      %v5713 = vlaneseq
      %v5714 = vshrl.u32 %v5713, 7
      %v5715 = vsub.s32 %v5360, %v5714
      %v5716 = vrot.slane %v3178, %v5715
      %v5717 = vsel %vm5365, %v5716, %v5712
      %v5718 = vlaneseq
      %v5719 = vshrl.u32 %v5718, 7
      %v5720 = vsub.s32 %v5367, %v5719
      %v5721 = vrot.slane %v3194, %v5720
      %v5722 = vsel %vm5372, %v5721, %v5717
      %v5723 = vlaneseq
      %v5724 = vshrl.u32 %v5723, 7
      %v5725 = vsub.s32 %v5374, %v5724
      %v5726 = vrot.slane %v3210, %v5725
      %v5727 = vsel %vm5379, %v5726, %v5722
      %v5728 = vlaneseq
      %v5729 = vshrl.u32 %v5728, 7
      %v5730 = vsub.s32 %v5381, %v5729
      %v5731 = vrot.slane %v3226, %v5730
      %v5732 = vsel %vm5386, %v5731, %v5727
      %v5733 = vlaneseq
      %v5734 = vshrl.u32 %v5733, 7
      %v5735 = vsub.s32 %v5388, %v5734
      %v5736 = vrot.slane %v3242, %v5735
      %v5737 = vsel %vm5393, %v5736, %v5732
      %v5738 = vlaneseq
      %v5739 = vshrl.u32 %v5738, 7
      %v5740 = vsub.s32 %v5395, %v5739
      %v5741 = vrot.slane %v3258, %v5740
      %v5742 = vsel %vm5400, %v5741, %v5737
      %v5743 = vlaneseq
      %v5744 = vshrl.u32 %v5743, 7
      %v5745 = vsub.s32 %v5402, %v5744
      %v5746 = vrot.slane %v3274, %v5745
      %v5747 = vsel %vm5407, %v5746, %v5742
      %v5748 = vlaneseq
      %v5749 = vshrl.u32 %v5748, 7
      %v5750 = vsub.s32 %v5409, %v5749
      %v5751 = vrot.slane %v3290, %v5750
      %v5752 = vsel %vm5414, %v5751, %v5747
      %v5753 = vlaneseq
      %v5754 = vshrl.u32 %v5753, 7
      %v5755 = vsub.s32 %v5416, %v5754
      %v5756 = vrot.slane %v3306, %v5755
      %v5757 = vsel %vm5421, %v5756, %v5752
      %v5758 = vlaneseq
      %v5759 = vshrl.u32 %v5758, 7
      %v5760 = vsub.s32 %v5423, %v5759
      %v5761 = vrot.slane %v3322, %v5760
      %v5762 = vsel %vm5428, %v5761, %v5757
      %v5763 = vlaneseq
      %v5764 = vshrl.u32 %v5763, 7
      %v5765 = vsub.s32 %v5430, %v5764
      %v5766 = vrot.slane %v3338, %v5765
      %v5767 = vsel %vm5435, %v5766, %v5762
      %v5768 = vlaneseq
      %v5769 = vshrl.u32 %v5768, 7
      %v5770 = vsub.s32 %v5437, %v5769
      %v5771 = vrot.slane %v3354, %v5770
      %v5772 = vsel %vm5442, %v5771, %v5767
      %v5773 = vlaneseq
      %v5774 = vshrl.u32 %v5773, 7
      %v5775 = vsub.s32 %v5444, %v5774
      %v5776 = vrot.slane %v3370, %v5775
      %v5777 = vsel %vm5449, %v5776, %v5772
      %v5778 = vlaneseq
      %v5779 = vshrl.u32 %v5778, 7
      %v5780 = vsub.s32 %v5451, %v5779
      %v5781 = vrot.slane %v3386, %v5780
      %v5782 = vsel %vm5456, %v5781, %v5777
      %v5783 = vlaneseq
      %v5784 = vshrl.u32 %v5783, 7
      %v5785 = vsub.s32 %v5458, %v5784
      %v5786 = vrot.slane %v3402, %v5785
      %v5787 = vsel %vm5463, %v5786, %v5782
      %s5788 = scalar_lea.vmem %s274, 4
      %5789 = vst [vmem:[%s5788] ss:$4 sm:$0x1] %v5787
      %v5790 = vlaneseq
      %v5791 = vshrl.u32 %v5790, 7
      %v5792 = vsub.s32 %v966, %v5791
      %v5793 = vrot.slane %v3418, %v5792
      %v5794 = vlaneseq
      %v5795 = vshrl.u32 %v5794, 7
      %v5796 = vsub.s32 %v5360, %v5795
      %v5797 = vrot.slane %v3434, %v5796
      %v5798 = vsel %vm5365, %v5797, %v5793
      %v5799 = vlaneseq
      %v5800 = vshrl.u32 %v5799, 7
      %v5801 = vsub.s32 %v5367, %v5800
      %v5802 = vrot.slane %v3450, %v5801
      %v5803 = vsel %vm5372, %v5802, %v5798
      %v5804 = vlaneseq
      %v5805 = vshrl.u32 %v5804, 7
      %v5806 = vsub.s32 %v5374, %v5805
      %v5807 = vrot.slane %v3466, %v5806
      %v5808 = vsel %vm5379, %v5807, %v5803
      %v5809 = vlaneseq
      %v5810 = vshrl.u32 %v5809, 7
      %v5811 = vsub.s32 %v5381, %v5810
      %v5812 = vrot.slane %v3482, %v5811
      %v5813 = vsel %vm5386, %v5812, %v5808
      %v5814 = vlaneseq
      %v5815 = vshrl.u32 %v5814, 7
      %v5816 = vsub.s32 %v5388, %v5815
      %v5817 = vrot.slane %v3498, %v5816
      %v5818 = vsel %vm5393, %v5817, %v5813
      %v5819 = vlaneseq
      %v5820 = vshrl.u32 %v5819, 7
      %v5821 = vsub.s32 %v5395, %v5820
      %v5822 = vrot.slane %v3514, %v5821
      %v5823 = vsel %vm5400, %v5822, %v5818
      %v5824 = vlaneseq
      %v5825 = vshrl.u32 %v5824, 7
      %v5826 = vsub.s32 %v5402, %v5825
      %v5827 = vrot.slane %v3530, %v5826
      %v5828 = vsel %vm5407, %v5827, %v5823
      %v5829 = vlaneseq
      %v5830 = vshrl.u32 %v5829, 7
      %v5831 = vsub.s32 %v5409, %v5830
      %v5832 = vrot.slane %v3546, %v5831
      %v5833 = vsel %vm5414, %v5832, %v5828
      %v5834 = vlaneseq
      %v5835 = vshrl.u32 %v5834, 7
      %v5836 = vsub.s32 %v5416, %v5835
      %v5837 = vrot.slane %v3562, %v5836
      %v5838 = vsel %vm5421, %v5837, %v5833
      %v5839 = vlaneseq
      %v5840 = vshrl.u32 %v5839, 7
      %v5841 = vsub.s32 %v5423, %v5840
      %v5842 = vrot.slane %v3578, %v5841
      %v5843 = vsel %vm5428, %v5842, %v5838
      %v5844 = vlaneseq
      %v5845 = vshrl.u32 %v5844, 7
      %v5846 = vsub.s32 %v5430, %v5845
      %v5847 = vrot.slane %v3594, %v5846
      %v5848 = vsel %vm5435, %v5847, %v5843
      %v5849 = vlaneseq
      %v5850 = vshrl.u32 %v5849, 7
      %v5851 = vsub.s32 %v5437, %v5850
      %v5852 = vrot.slane %v3610, %v5851
      %v5853 = vsel %vm5442, %v5852, %v5848
      %v5854 = vlaneseq
      %v5855 = vshrl.u32 %v5854, 7
      %v5856 = vsub.s32 %v5444, %v5855
      %v5857 = vrot.slane %v3626, %v5856
      %v5858 = vsel %vm5449, %v5857, %v5853
      %v5859 = vlaneseq
      %v5860 = vshrl.u32 %v5859, 7
      %v5861 = vsub.s32 %v5451, %v5860
      %v5862 = vrot.slane %v3642, %v5861
      %v5863 = vsel %vm5456, %v5862, %v5858
      %v5864 = vlaneseq
      %v5865 = vshrl.u32 %v5864, 7
      %v5866 = vsub.s32 %v5458, %v5865
      %v5867 = vrot.slane %v3658, %v5866
      %v5868 = vsel %vm5463, %v5867, %v5863
      %s5869 = scalar_lea.vmem %s274, 5
      %5870 = vst [vmem:[%s5869] ss:$4 sm:$0x1] %v5868
      %v5871 = vlaneseq
      %v5872 = vshrl.u32 %v5871, 7
      %v5873 = vsub.s32 %v966, %v5872
      %v5874 = vrot.slane %v3674, %v5873
      %v5875 = vlaneseq
      %v5876 = vshrl.u32 %v5875, 7
      %v5877 = vsub.s32 %v5360, %v5876
      %v5878 = vrot.slane %v3690, %v5877
      %v5879 = vsel %vm5365, %v5878, %v5874
      %v5880 = vlaneseq
      %v5881 = vshrl.u32 %v5880, 7
      %v5882 = vsub.s32 %v5367, %v5881
      %v5883 = vrot.slane %v3706, %v5882
      %v5884 = vsel %vm5372, %v5883, %v5879
      %v5885 = vlaneseq
      %v5886 = vshrl.u32 %v5885, 7
      %v5887 = vsub.s32 %v5374, %v5886
      %v5888 = vrot.slane %v3722, %v5887
      %v5889 = vsel %vm5379, %v5888, %v5884
      %v5890 = vlaneseq
      %v5891 = vshrl.u32 %v5890, 7
      %v5892 = vsub.s32 %v5381, %v5891
      %v5893 = vrot.slane %v3738, %v5892
      %v5894 = vsel %vm5386, %v5893, %v5889
      %v5895 = vlaneseq
      %v5896 = vshrl.u32 %v5895, 7
      %v5897 = vsub.s32 %v5388, %v5896
      %v5898 = vrot.slane %v3754, %v5897
      %v5899 = vsel %vm5393, %v5898, %v5894
      %v5900 = vlaneseq
      %v5901 = vshrl.u32 %v5900, 7
      %v5902 = vsub.s32 %v5395, %v5901
      %v5903 = vrot.slane %v3770, %v5902
      %v5904 = vsel %vm5400, %v5903, %v5899
      %v5905 = vlaneseq
      %v5906 = vshrl.u32 %v5905, 7
      %v5907 = vsub.s32 %v5402, %v5906
      %v5908 = vrot.slane %v3786, %v5907
      %v5909 = vsel %vm5407, %v5908, %v5904
      %v5910 = vlaneseq
      %v5911 = vshrl.u32 %v5910, 7
      %v5912 = vsub.s32 %v5409, %v5911
      %v5913 = vrot.slane %v3802, %v5912
      %v5914 = vsel %vm5414, %v5913, %v5909
      %v5915 = vlaneseq
      %v5916 = vshrl.u32 %v5915, 7
      %v5917 = vsub.s32 %v5416, %v5916
      %v5918 = vrot.slane %v3818, %v5917
      %v5919 = vsel %vm5421, %v5918, %v5914
      %v5920 = vlaneseq
      %v5921 = vshrl.u32 %v5920, 7
      %v5922 = vsub.s32 %v5423, %v5921
      %v5923 = vrot.slane %v3834, %v5922
      %v5924 = vsel %vm5428, %v5923, %v5919
      %v5925 = vlaneseq
      %v5926 = vshrl.u32 %v5925, 7
      %v5927 = vsub.s32 %v5430, %v5926
      %v5928 = vrot.slane %v3850, %v5927
      %v5929 = vsel %vm5435, %v5928, %v5924
      %v5930 = vlaneseq
      %v5931 = vshrl.u32 %v5930, 7
      %v5932 = vsub.s32 %v5437, %v5931
      %v5933 = vrot.slane %v3866, %v5932
      %v5934 = vsel %vm5442, %v5933, %v5929
      %v5935 = vlaneseq
      %v5936 = vshrl.u32 %v5935, 7
      %v5937 = vsub.s32 %v5444, %v5936
      %v5938 = vrot.slane %v3882, %v5937
      %v5939 = vsel %vm5449, %v5938, %v5934
      %v5940 = vlaneseq
      %v5941 = vshrl.u32 %v5940, 7
      %v5942 = vsub.s32 %v5451, %v5941
      %v5943 = vrot.slane %v3898, %v5942
      %v5944 = vsel %vm5456, %v5943, %v5939
      %v5945 = vlaneseq
      %v5946 = vshrl.u32 %v5945, 7
      %v5947 = vsub.s32 %v5458, %v5946
      %v5948 = vrot.slane %v3914, %v5947
      %v5949 = vsel %vm5463, %v5948, %v5944
      %s5950 = scalar_lea.vmem %s274, 6
      %5951 = vst [vmem:[%s5950] ss:$4 sm:$0x1] %v5949
      %v5952 = vlaneseq
      %v5953 = vshrl.u32 %v5952, 7
      %v5954 = vsub.s32 %v966, %v5953
      %v5955 = vrot.slane %v3930, %v5954
      %v5956 = vlaneseq
      %v5957 = vshrl.u32 %v5956, 7
      %v5958 = vsub.s32 %v5360, %v5957
      %v5959 = vrot.slane %v3946, %v5958
      %v5960 = vsel %vm5365, %v5959, %v5955
      %v5961 = vlaneseq
      %v5962 = vshrl.u32 %v5961, 7
      %v5963 = vsub.s32 %v5367, %v5962
      %v5964 = vrot.slane %v3962, %v5963
      %v5965 = vsel %vm5372, %v5964, %v5960
      %v5966 = vlaneseq
      %v5967 = vshrl.u32 %v5966, 7
      %v5968 = vsub.s32 %v5374, %v5967
      %v5969 = vrot.slane %v3978, %v5968
      %v5970 = vsel %vm5379, %v5969, %v5965
      %v5971 = vlaneseq
      %v5972 = vshrl.u32 %v5971, 7
      %v5973 = vsub.s32 %v5381, %v5972
      %v5974 = vrot.slane %v3994, %v5973
      %v5975 = vsel %vm5386, %v5974, %v5970
      %v5976 = vlaneseq
      %v5977 = vshrl.u32 %v5976, 7
      %v5978 = vsub.s32 %v5388, %v5977
      %v5979 = vrot.slane %v4010, %v5978
      %v5980 = vsel %vm5393, %v5979, %v5975
      %v5981 = vlaneseq
      %v5982 = vshrl.u32 %v5981, 7
      %v5983 = vsub.s32 %v5395, %v5982
      %v5984 = vrot.slane %v4026, %v5983
      %v5985 = vsel %vm5400, %v5984, %v5980
      %v5986 = vlaneseq
      %v5987 = vshrl.u32 %v5986, 7
      %v5988 = vsub.s32 %v5402, %v5987
      %v5989 = vrot.slane %v4042, %v5988
      %v5990 = vsel %vm5407, %v5989, %v5985
      %v5991 = vlaneseq
      %v5992 = vshrl.u32 %v5991, 7
      %v5993 = vsub.s32 %v5409, %v5992
      %v5994 = vrot.slane %v4058, %v5993
      %v5995 = vsel %vm5414, %v5994, %v5990
      %v5996 = vlaneseq
      %v5997 = vshrl.u32 %v5996, 7
      %v5998 = vsub.s32 %v5416, %v5997
      %v5999 = vrot.slane %v4074, %v5998
      %v6000 = vsel %vm5421, %v5999, %v5995
      %v6001 = vlaneseq
      %v6002 = vshrl.u32 %v6001, 7
      %v6003 = vsub.s32 %v5423, %v6002
      %v6004 = vrot.slane %v4090, %v6003
      %v6005 = vsel %vm5428, %v6004, %v6000
      %v6006 = vlaneseq
      %v6007 = vshrl.u32 %v6006, 7
      %v6008 = vsub.s32 %v5430, %v6007
      %v6009 = vrot.slane %v4106, %v6008
      %v6010 = vsel %vm5435, %v6009, %v6005
      %v6011 = vlaneseq
      %v6012 = vshrl.u32 %v6011, 7
      %v6013 = vsub.s32 %v5437, %v6012
      %v6014 = vrot.slane %v4122, %v6013
      %v6015 = vsel %vm5442, %v6014, %v6010
      %v6016 = vlaneseq
      %v6017 = vshrl.u32 %v6016, 7
      %v6018 = vsub.s32 %v5444, %v6017
      %v6019 = vrot.slane %v4138, %v6018
      %v6020 = vsel %vm5449, %v6019, %v6015
      %v6021 = vlaneseq
      %v6022 = vshrl.u32 %v6021, 7
      %v6023 = vsub.s32 %v5451, %v6022
      %v6024 = vrot.slane %v4154, %v6023
      %v6025 = vsel %vm5456, %v6024, %v6020
      %v6026 = vlaneseq
      %v6027 = vshrl.u32 %v6026, 7
      %v6028 = vsub.s32 %v5458, %v6027
      %v6029 = vrot.slane %v4170, %v6028
      %v6030 = vsel %vm5463, %v6029, %v6025
      %s6031 = scalar_lea.vmem %s274, 7
      %6032 = vst [vmem:[%s6031] ss:$4 sm:$0x1] %v6030
      %v6033 = vsub.f32 %v4974, %v280
      %v6034 = vsub.f32 %v4979, %v281
      %v6035 = vsub.f32 %v4984, %v282
      %v6036 = vsub.f32 %v4989, %v283
      %v6037 = vsub.f32 %v4994, %v284
      %v6038 = vsub.f32 %v4999, %v285
      %v6039 = vsub.f32 %v5004, %v286
      %v6040 = vsub.f32 %v5009, %v287
      %v6041 = vsub.f32 %v5014, %v288
      %v6042 = vsub.f32 %v5019, %v289
      %v6043 = vsub.f32 %v5024, %v290
      %v6044 = vsub.f32 %v5029, %v291
      %v6045 = vsub.f32 %v5034, %v292
      %v6046 = vsub.f32 %v5039, %v293
      %v6047 = vsub.f32 %v5044, %v294
      %v6048 = vsub.f32 %v5049, %v295
      %v6049 = vsub.f32 %v5054, %v296
      %v6050 = vsub.f32 %v5059, %v297
      %v6051 = vsub.f32 %v5064, %v298
      %v6052 = vsub.f32 %v5069, %v299
      %v6053 = vsub.f32 %v5074, %v300
      %v6054 = vsub.f32 %v5079, %v301
      %v6055 = vsub.f32 %v5084, %v302
      %v6056 = vsub.f32 %v5089, %v303
      %v6057 = vsub.f32 %v5094, %v304
      %v6058 = vsub.f32 %v5099, %v305
      %v6059 = vsub.f32 %v5104, %v306
      %v6060 = vsub.f32 %v5109, %v307
      %v6061 = vsub.f32 %v5114, %v308
      %v6062 = vsub.f32 %v5119, %v309
      %v6063 = vsub.f32 %v5124, %v310
      %v6064 = vsub.f32 %v5129, %v311
      %v6065 = vsub.f32 %v5134, %v312
      %v6066 = vsub.f32 %v5139, %v313
      %v6067 = vsub.f32 %v5144, %v314
      %v6068 = vsub.f32 %v5149, %v315
      %v6069 = vsub.f32 %v5154, %v316
      %v6070 = vsub.f32 %v5159, %v317
      %v6071 = vsub.f32 %v5164, %v318
      %v6072 = vsub.f32 %v5169, %v319
      %v6073 = vsub.f32 %v5174, %v320
      %v6074 = vsub.f32 %v5179, %v321
      %v6075 = vsub.f32 %v5184, %v322
      %v6076 = vsub.f32 %v5189, %v323
      %v6077 = vsub.f32 %v5194, %v324
      %v6078 = vsub.f32 %v5199, %v325
      %v6079 = vsub.f32 %v5204, %v326
      %v6080 = vsub.f32 %v5209, %v327
      %v6081 = vsub.f32 %v5214, %v328
      %v6082 = vsub.f32 %v5219, %v329
      %v6083 = vsub.f32 %v5224, %v330
      %v6084 = vsub.f32 %v5229, %v331
      %v6085 = vsub.f32 %v5234, %v332
      %v6086 = vsub.f32 %v5239, %v333
      %v6087 = vsub.f32 %v5244, %v334
      %v6088 = vsub.f32 %v5249, %v335
      %v6089 = vsub.f32 %v5254, %v336
      %v6090 = vsub.f32 %v5259, %v337
      %v6091 = vsub.f32 %v5264, %v338
      %v6092 = vsub.f32 %v5269, %v339
      %v6093 = vsub.f32 %v5274, %v340
      %v6094 = vsub.f32 %v5279, %v341
      %v6095 = vsub.f32 %v5284, %v342
      %v6096 = vsub.f32 %v5289, %v343
      %v6097 = vadd.f32 %v4747, %v4749
      %v6098 = vadd.f32 %v6097, %v4751
      %v6099 = vadd.f32 %v6098, %v4753
      %v6100 = vadd.f32 %v6099, %v4755
      %v6101 = vadd.f32 %v6100, %v4757
      %v6102 = vadd.f32 %v6101, %v4759
      %v6103 = vadd.f32 %v6102, %v4761
      %v6104 = vadd.f32 %v6103, %v4763
      %v6105 = vadd.f32 %v6104, %v4765
      %v6106 = vadd.f32 %v6105, %v4767
      %v6107 = vadd.f32 %v6106, %v4769
      %v6108 = vadd.f32 %v6107, %v4771
      %v6109 = vadd.f32 %v6108, %v4773
      %v6110 = vadd.f32 %v6109, %v4775
      %v6111 = vadd.f32 %v6110, %v4777
      %v6112 = vadd.f32 %v6111, %v4779
      %v6113 = vadd.f32 %v6112, %v4781
      %v6114 = vadd.f32 %v6113, %v4783
      %v6115 = vadd.f32 %v6114, %v4785
      %v6116 = vadd.f32 %v6115, %v4787
      %v6117 = vadd.f32 %v6116, %v4789
      %v6118 = vadd.f32 %v6117, %v4791
      %v6119 = vadd.f32 %v6118, %v4793
      %v6120 = vadd.f32 %v6119, %v4795
      %v6121 = vadd.f32 %v6120, %v4797
      %v6122 = vadd.f32 %v6121, %v4799
      %v6123 = vadd.f32 %v6122, %v4801
      %v6124 = vadd.f32 %v6123, %v4803
      %v6125 = vadd.f32 %v6124, %v4805
      %v6126 = vadd.f32 %v6125, %v4807
      %v6127 = vadd.f32 %v6126, %v4809
      %v6128 = vadd.f32 %v6127, %v4811
      %v6129 = vadd.f32 %v6128, %v4813
      %v6130 = vadd.f32 %v6129, %v4815
      %v6131 = vadd.f32 %v6130, %v4817
      %v6132 = vadd.f32 %v6131, %v4819
      %v6133 = vadd.f32 %v6132, %v4821
      %v6134 = vadd.f32 %v6133, %v4823
      %v6135 = vadd.f32 %v6134, %v4825
      %v6136 = vadd.f32 %v6135, %v4827
      %v6137 = vadd.f32 %v6136, %v4829
      %v6138 = vadd.f32 %v6137, %v4831
      %v6139 = vadd.f32 %v6138, %v4833
      %v6140 = vadd.f32 %v6139, %v4835
      %v6141 = vadd.f32 %v6140, %v4837
      %v6142 = vadd.f32 %v6141, %v4839
      %v6143 = vadd.f32 %v6142, %v4841
      %v6144 = vadd.f32 %v6143, %v4843
      %v6145 = vadd.f32 %v6144, %v4845
      %v6146 = vadd.f32 %v6145, %v4847
      %v6147 = vadd.f32 %v6146, %v4849
      %v6148 = vadd.f32 %v6147, %v4851
      %v6149 = vadd.f32 %v6148, %v4853
      %v6150 = vadd.f32 %v6149, %v4855
      %v6151 = vadd.f32 %v6150, %v4857
      %v6152 = vadd.f32 %v6151, %v4859
      %v6153 = vadd.f32 %v6152, %v4861
      %v6154 = vadd.f32 %v6153, %v4863
      %v6155 = vadd.f32 %v6154, %v4865
      %v6156 = vadd.f32 %v6155, %v4867
      %v6157 = vadd.f32 %v6156, %v4869
      %v6158 = vadd.f32 %v6157, %v4871
      %v6159 = vadd.f32 %v6158, %v4873
      %v6160 = vrot.slane %v6159, 4
      %v6161 = vadd.f32 %v6159, %v6160
      %v6162 = vrot.slane %v6161, 2
      %v6163 = vadd.f32 %v6161, %v6162
      %v6164 = vrot.slane %v6163, 1
      %v6165 = vadd.f32 %v6163, %v6164
      %v6166 = vadd.f32 %v4748, %v4750
      %v6167 = vadd.f32 %v6166, %v4752
      %v6168 = vadd.f32 %v6167, %v4754
      %v6169 = vadd.f32 %v6168, %v4756
      %v6170 = vadd.f32 %v6169, %v4758
      %v6171 = vadd.f32 %v6170, %v4760
      %v6172 = vadd.f32 %v6171, %v4762
      %v6173 = vadd.f32 %v6172, %v4764
      %v6174 = vadd.f32 %v6173, %v4766
      %v6175 = vadd.f32 %v6174, %v4768
      %v6176 = vadd.f32 %v6175, %v4770
      %v6177 = vadd.f32 %v6176, %v4772
      %v6178 = vadd.f32 %v6177, %v4774
      %v6179 = vadd.f32 %v6178, %v4776
      %v6180 = vadd.f32 %v6179, %v4778
      %v6181 = vadd.f32 %v6180, %v4780
      %v6182 = vadd.f32 %v6181, %v4782
      %v6183 = vadd.f32 %v6182, %v4784
      %v6184 = vadd.f32 %v6183, %v4786
      %v6185 = vadd.f32 %v6184, %v4788
      %v6186 = vadd.f32 %v6185, %v4790
      %v6187 = vadd.f32 %v6186, %v4792
      %v6188 = vadd.f32 %v6187, %v4794
      %v6189 = vadd.f32 %v6188, %v4796
      %v6190 = vadd.f32 %v6189, %v4798
      %v6191 = vadd.f32 %v6190, %v4800
      %v6192 = vadd.f32 %v6191, %v4802
      %v6193 = vadd.f32 %v6192, %v4804
      %v6194 = vadd.f32 %v6193, %v4806
      %v6195 = vadd.f32 %v6194, %v4808
      %v6196 = vadd.f32 %v6195, %v4810
      %v6197 = vadd.f32 %v6196, %v4812
      %v6198 = vadd.f32 %v6197, %v4814
      %v6199 = vadd.f32 %v6198, %v4816
      %v6200 = vadd.f32 %v6199, %v4818
      %v6201 = vadd.f32 %v6200, %v4820
      %v6202 = vadd.f32 %v6201, %v4822
      %v6203 = vadd.f32 %v6202, %v4824
      %v6204 = vadd.f32 %v6203, %v4826
      %v6205 = vadd.f32 %v6204, %v4828
      %v6206 = vadd.f32 %v6205, %v4830
      %v6207 = vadd.f32 %v6206, %v4832
      %v6208 = vadd.f32 %v6207, %v4834
      %v6209 = vadd.f32 %v6208, %v4836
      %v6210 = vadd.f32 %v6209, %v4838
      %v6211 = vadd.f32 %v6210, %v4840
      %v6212 = vadd.f32 %v6211, %v4842
      %v6213 = vadd.f32 %v6212, %v4844
      %v6214 = vadd.f32 %v6213, %v4846
      %v6215 = vadd.f32 %v6214, %v4848
      %v6216 = vadd.f32 %v6215, %v4850
      %v6217 = vadd.f32 %v6216, %v4852
      %v6218 = vadd.f32 %v6217, %v4854
      %v6219 = vadd.f32 %v6218, %v4856
      %v6220 = vadd.f32 %v6219, %v4858
      %v6221 = vadd.f32 %v6220, %v4860
      %v6222 = vadd.f32 %v6221, %v4862
      %v6223 = vadd.f32 %v6222, %v4864
      %v6224 = vadd.f32 %v6223, %v4866
      %v6225 = vadd.f32 %v6224, %v4868
      %v6226 = vadd.f32 %v6225, %v4870
      %v6227 = vadd.f32 %v6226, %v4872
      %v6228 = vadd.f32 %v6227, %v4874
      %v6229 = vrot.slane %v6228, 4
      %v6230 = vadd.f32 %v6228, %v6229
      %v6231 = vrot.slane %v6230, 2
      %v6232 = vadd.f32 %v6230, %v6231
      %v6233 = vrot.slane %v6232, 1
      %v6234 = vadd.f32 %v6232, %v6233
      %v6235 = vmul.f32 %v6033, %v6033
      %v6236 = vmul.f32 %v6034, %v6034
      %v6237 = vmul.f32 %v6035, %v6035
      %v6238 = vmul.f32 %v6036, %v6036
      %v6239 = vmul.f32 %v6037, %v6037
      %v6240 = vmul.f32 %v6038, %v6038
      %v6241 = vmul.f32 %v6039, %v6039
      %v6242 = vmul.f32 %v6040, %v6040
      %v6243 = vmul.f32 %v6041, %v6041
      %v6244 = vmul.f32 %v6042, %v6042
      %v6245 = vmul.f32 %v6043, %v6043
      %v6246 = vmul.f32 %v6044, %v6044
      %v6247 = vmul.f32 %v6045, %v6045
      %v6248 = vmul.f32 %v6046, %v6046
      %v6249 = vmul.f32 %v6047, %v6047
      %v6250 = vmul.f32 %v6048, %v6048
      %v6251 = vmul.f32 %v6049, %v6049
      %v6252 = vmul.f32 %v6050, %v6050
      %v6253 = vmul.f32 %v6051, %v6051
      %v6254 = vmul.f32 %v6052, %v6052
      %v6255 = vmul.f32 %v6053, %v6053
      %v6256 = vmul.f32 %v6054, %v6054
      %v6257 = vmul.f32 %v6055, %v6055
      %v6258 = vmul.f32 %v6056, %v6056
      %v6259 = vmul.f32 %v6057, %v6057
      %v6260 = vmul.f32 %v6058, %v6058
      %v6261 = vmul.f32 %v6059, %v6059
      %v6262 = vmul.f32 %v6060, %v6060
      %v6263 = vmul.f32 %v6061, %v6061
      %v6264 = vmul.f32 %v6062, %v6062
      %v6265 = vmul.f32 %v6063, %v6063
      %v6266 = vmul.f32 %v6064, %v6064
      %v6267 = vmul.f32 %v6065, %v6065
      %v6268 = vmul.f32 %v6066, %v6066
      %v6269 = vmul.f32 %v6067, %v6067
      %v6270 = vmul.f32 %v6068, %v6068
      %v6271 = vmul.f32 %v6069, %v6069
      %v6272 = vmul.f32 %v6070, %v6070
      %v6273 = vmul.f32 %v6071, %v6071
      %v6274 = vmul.f32 %v6072, %v6072
      %v6275 = vmul.f32 %v6073, %v6073
      %v6276 = vmul.f32 %v6074, %v6074
      %v6277 = vmul.f32 %v6075, %v6075
      %v6278 = vmul.f32 %v6076, %v6076
      %v6279 = vmul.f32 %v6077, %v6077
      %v6280 = vmul.f32 %v6078, %v6078
      %v6281 = vmul.f32 %v6079, %v6079
      %v6282 = vmul.f32 %v6080, %v6080
      %v6283 = vmul.f32 %v6081, %v6081
      %v6284 = vmul.f32 %v6082, %v6082
      %v6285 = vmul.f32 %v6083, %v6083
      %v6286 = vmul.f32 %v6084, %v6084
      %v6287 = vmul.f32 %v6085, %v6085
      %v6288 = vmul.f32 %v6086, %v6086
      %v6289 = vmul.f32 %v6087, %v6087
      %v6290 = vmul.f32 %v6088, %v6088
      %v6291 = vmul.f32 %v6089, %v6089
      %v6292 = vmul.f32 %v6090, %v6090
      %v6293 = vmul.f32 %v6091, %v6091
      %v6294 = vmul.f32 %v6092, %v6092
      %v6295 = vmul.f32 %v6093, %v6093
      %v6296 = vmul.f32 %v6094, %v6094
      %v6297 = vmul.f32 %v6095, %v6095
      %v6298 = vmul.f32 %v6096, %v6096
      %v6299 = vadd.f32 %v6235, %v6236
      %v6300 = vadd.f32 %v6299, %v6237
      %v6301 = vadd.f32 %v6300, %v6238
      %v6302 = vadd.f32 %v6301, %v6239
      %v6303 = vadd.f32 %v6302, %v6240
      %v6304 = vadd.f32 %v6303, %v6241
      %v6305 = vadd.f32 %v6304, %v6242
      %v6306 = vadd.f32 %v6305, %v6243
      %v6307 = vadd.f32 %v6306, %v6244
      %v6308 = vadd.f32 %v6307, %v6245
      %v6309 = vadd.f32 %v6308, %v6246
      %v6310 = vadd.f32 %v6309, %v6247
      %v6311 = vadd.f32 %v6310, %v6248
      %v6312 = vadd.f32 %v6311, %v6249
      %v6313 = vadd.f32 %v6312, %v6250
      %v6314 = vadd.f32 %v6313, %v6251
      %v6315 = vadd.f32 %v6314, %v6252
      %v6316 = vadd.f32 %v6315, %v6253
      %v6317 = vadd.f32 %v6316, %v6254
      %v6318 = vadd.f32 %v6317, %v6255
      %v6319 = vadd.f32 %v6318, %v6256
      %v6320 = vadd.f32 %v6319, %v6257
      %v6321 = vadd.f32 %v6320, %v6258
      %v6322 = vadd.f32 %v6321, %v6259
      %v6323 = vadd.f32 %v6322, %v6260
      %v6324 = vadd.f32 %v6323, %v6261
      %v6325 = vadd.f32 %v6324, %v6262
      %v6326 = vadd.f32 %v6325, %v6263
      %v6327 = vadd.f32 %v6326, %v6264
      %v6328 = vadd.f32 %v6327, %v6265
      %v6329 = vadd.f32 %v6328, %v6266
      %v6330 = vadd.f32 %v6329, %v6267
      %v6331 = vadd.f32 %v6330, %v6268
      %v6332 = vadd.f32 %v6331, %v6269
      %v6333 = vadd.f32 %v6332, %v6270
      %v6334 = vadd.f32 %v6333, %v6271
      %v6335 = vadd.f32 %v6334, %v6272
      %v6336 = vadd.f32 %v6335, %v6273
      %v6337 = vadd.f32 %v6336, %v6274
      %v6338 = vadd.f32 %v6337, %v6275
      %v6339 = vadd.f32 %v6338, %v6276
      %v6340 = vadd.f32 %v6339, %v6277
      %v6341 = vadd.f32 %v6340, %v6278
      %v6342 = vadd.f32 %v6341, %v6279
      %v6343 = vadd.f32 %v6342, %v6280
      %v6344 = vadd.f32 %v6343, %v6281
      %v6345 = vadd.f32 %v6344, %v6282
      %v6346 = vadd.f32 %v6345, %v6283
      %v6347 = vadd.f32 %v6346, %v6284
      %v6348 = vadd.f32 %v6347, %v6285
      %v6349 = vadd.f32 %v6348, %v6286
      %v6350 = vadd.f32 %v6349, %v6287
      %v6351 = vadd.f32 %v6350, %v6288
      %v6352 = vadd.f32 %v6351, %v6289
      %v6353 = vadd.f32 %v6352, %v6290
      %v6354 = vadd.f32 %v6353, %v6291
      %v6355 = vadd.f32 %v6354, %v6292
      %v6356 = vadd.f32 %v6355, %v6293
      %v6357 = vadd.f32 %v6356, %v6294
      %v6358 = vadd.f32 %v6357, %v6295
      %v6359 = vadd.f32 %v6358, %v6296
      %v6360 = vadd.f32 %v6359, %v6297
      %v6361 = vadd.f32 %v6360, %v6298
      %6362 = vadd.xlane.f32.xlu0 %v6361
      %v6363 = vpop.xlane.xlu0 %6362
      %v6364 = vrot.slane %v6363, 4
      %v6365 = vadd.f32 %v6363, %v6364
      %v6366 = vrot.slane %v6365, 2
      %v6367 = vadd.f32 %v6365, %v6366
      %v6368 = vrot.slane %v6367, 1
      %v6369 = vadd.f32 %v6367, %v6368
      %s6370 = vtos %v6369
      %v6371 = vlaneseq
      %v6372 = vshrl.u32 %v6371, 7
      %vm6373 = vcmp.eq.s32.totalorder %v6372, 0
      %v6374 = vstv %s6370
      %v6375 = vsel %vm6373, %v6165, %v6374
      %v6376 = vsel %vm6373, %v6234, %v6374
      %v6379 = vcombine.low %v6375, %v6376
      %v6381 = vunpack.c.l.s4 1983009808
      %v6382 = vunpack.c.0.s8 %v6381
      %v6383 = vlaneseq
      %v6384 = vshrl.u32 %v6383, 7
      %v6385 = vsub.s32 %v6382, %v6384
      %v6386 = vrot.slane %v6379, %v6385
      %6388 = vst [vmem:[%s279] sm:$0xf] %v6386
      %s6389 = smul.u32 64, %s18
      %p6390 = scmp.lt.s32.totalorder %s6389, 127
      %s6391 = scalar_select %p6390, %s6389, 127
      %s6392 = smul.addr %s6391, 8
      %s6393 = scalar_lea.vmem %s4, %s6392
      %p6394 = scmp.lt.s32.totalorder %s18, 1
      %s6395 = scalar_select %p6394, %s18, 1
      %s6396 = smul.addr %s6395, 2
      %s6397 = smul.addr %s6396, 4
      %s6398 = scalar_lea.vmem %s5, %s6397
      %p6399 = scmp.lt.s32.totalorder %s18, 1
      %s6400 = scalar_select %p6399, %s18, 1
      %s6401 = smul.addr %s6400, 2
      %s6402 = smul.addr %s6401, 2
      %s6403 = scalar_lea.vmem %s6, %s6402
      // Predicated region
      $region37: #{vector_quantizer_forward.1} parent=35 // pred_check
        %p6404 = pneg %p125
      $region38: #{vector_quantizer_forward.1} parent=35 // pred_check_branch
        %6406 = sbr.rel (%p6404) target = $region40
      $region39: #{vector_quantizer_forward.1} parent=35 // pred_region
        %s6407 = smul.u32 64, %s18
      $region40: #{vector_quantizer_forward.1} parent=35 // pred_fallthru
        _
      // Predicated region
      $region41: #{vector_quantizer_forward.1} parent=35 // pred_check
        %p6408 = pneg %p151
      $region42: #{vector_quantizer_forward.1} parent=35 // pred_check_branch
        %6410 = sbr.rel (%p6408) target = $region44
      $region43: #{vector_quantizer_forward.1} parent=35 // pred_region
        _
      $region44: #{vector_quantizer_forward.1} parent=35 // pred_fallthru
        _
      // Predicated region
      $region45: #{vector_quantizer_forward.1} parent=35 // pred_check
        %p6411 = pneg %p177
      $region46: #{vector_quantizer_forward.1} parent=35 // pred_check_branch
        %6413 = sbr.rel (%p6411) target = $region48
      $region47: #{vector_quantizer_forward.1} parent=35 // pred_region
        _
      $region48: #{vector_quantizer_forward.1} parent=35 // pred_fallthru
        _
    $region36: #{vector_quantizer_forward.1} parent=5 // pred_fallthru
      _
    %p6414 = scmp.le.s32.totalorder 2, %s13
    // Predicated region
    $region49: #{vector_quantizer_forward.1} parent=5 // pred_check
      %p6415 = pneg %p6414
    $region50: #{vector_quantizer_forward.1} parent=5 // pred_check_branch
      %6417 = sbr.rel (%p6415) target = $region52
    $region51: #{vector_quantizer_forward.1} parent=5 // pred_region
      %s6418 = ssub.s32 %s13, 2
      // Predicated region
      $region53: #{vector_quantizer_forward.1} parent=51 // pred_check
        %p6419 = pneg %p131
      $region54: #{vector_quantizer_forward.1} parent=51 // pred_check_branch
        %6421 = sbr.rel (%p6419) target = $region56
      $region55: #{vector_quantizer_forward.1} parent=51 // pred_region
        %s6422 = smul.u32 64, %s19
        %p6423 = scmp.lt.s32.totalorder %s6422, 127
        %s6424 = scalar_select %p6423, %s6422, 127
        %s6425 = smul.addr %s6424, 8
        %s6426 = scalar_lea.vmem %s4, %s6425
      $region56: #{vector_quantizer_forward.1} parent=51 // pred_fallthru
        _
      // Predicated region
      $region57: #{vector_quantizer_forward.1} parent=51 // pred_check
        %p6427 = pneg %p157
      $region58: #{vector_quantizer_forward.1} parent=51 // pred_check_branch
        %6429 = sbr.rel (%p6427) target = $region60
      $region59: #{vector_quantizer_forward.1} parent=51 // pred_region
        %p6430 = scmp.lt.s32.totalorder %s19, 1
        %s6431 = scalar_select %p6430, %s19, 1
        %s6432 = smul.addr %s6431, 2
        %s6433 = smul.addr %s6432, 4
        %s6434 = scalar_lea.vmem %s5, %s6433
      $region60: #{vector_quantizer_forward.1} parent=51 // pred_fallthru
        _
      // Predicated region
      $region61: #{vector_quantizer_forward.1} parent=51 // pred_check
        %p6435 = pneg %p183
      $region62: #{vector_quantizer_forward.1} parent=51 // pred_check_branch
        %6437 = sbr.rel (%p6435) target = $region64
      $region63: #{vector_quantizer_forward.1} parent=51 // pred_region
        %p6438 = scmp.lt.s32.totalorder %s19, 1
        %s6439 = scalar_select %p6438, %s19, 1
        %s6440 = smul.addr %s6439, 2
        %s6441 = smul.addr %s6440, 2
        %s6442 = scalar_lea.vmem %s6, %s6441
      $region64: #{vector_quantizer_forward.1} parent=51 // pred_fallthru
        _
    $region52: #{vector_quantizer_forward.1} parent=5 // pred_fallthru
      _
  $region6: #{vector_quantizer_forward.1} parent=0 // loop_footer
    %s17 = sadd.s32 1, %s13
  $region7: #{vector_quantizer_forward.1} parent=0 // loop_footer_branch
    %12 = sbr.rel target = $region3
  $region8: #{vector_quantizer_forward.1} parent=0 // loop_exit
    _

</llo_original>
